<compile_context>
chip_gen: v7x
topology: tpu7x:2x2x1
jax: 0.10.0
libtpu: 0.0.40
codegen_flags: <defaults>
</compile_context>

<pallas_src>
import functools

import jax
import jax.numpy as jnp
import numpy as np
from jax.experimental import pallas as pl
from jax.experimental.pallas import tpu as pltpu


def _round_up(x, m):
    return (x + m - 1) // m * m


def _plan_tiles(n):
    """Pick (tm, tk, n_pad): tk up to 512, tm a multiple of tk up to 4*tk.

    Nodes are padded to a multiple of tk (review: the tile-width BW win beats
    the few-% padding cost), and tm is the largest small multiple of tk that
    divides the padded node count, so the grid always divides evenly.
    """
    n128 = _round_up(max(int(n), 1), 128)
    tk = min(512, n128)
    n_pad = _round_up(n128, tk)
    nk = n_pad // tk
    tm = tk * max(f for f in (1, 2, 3, 4) if nk % f == 0)
    return int(tm), int(tk), int(n_pad)


def _pad2(x, rows, cols):
    r, c = x.shape
    return jnp.pad(x, ((0, rows - r), (0, cols - c)))


def _pad_rows(x, rows):
    r = x.shape[0]
    return jnp.pad(x, ((0, rows - r), (0, 0)))


# -----------------------------------------------------------------------------
# Pallas kernel: one propagation hop, batched over views.
#   adj:     [V, N, N]  bf16   streamed in (TM, TK) tiles
#   cur:     [V, N, H]  bf16   VMEM-resident per view (sliced in-kernel over K)
#   hop_in:  [V, N, H]  f32    running hop sum (aliased to output 0)
# outputs:
#   hop_out: [V, N, H]  f32    hop_in + adj @ cur
#   cur_out: [V, N, H]  bf16   bf16(adj @ cur), next-hop operand
# -----------------------------------------------------------------------------
def _spmm_hop_kernel(adj_ref, emb_ref, hop_in_ref, hop_out_ref, cur_ref, acc_ref):
    k = pl.program_id(2)

    @pl.when(k == 0)
    def _():
        acc_ref[...] = jnp.zeros_like(acc_ref)

    tk = adj_ref.shape[1]
    start = pl.multiple_of(k * tk, tk)
    emb_chunk = emb_ref[pl.ds(start, tk), :]  # resident block: no per-k DMA
    acc_ref[...] += jnp.dot(
        adj_ref[...], emb_chunk, preferred_element_type=jnp.float32
    )

    @pl.when(k == pl.num_programs(2) - 1)
    def _():
        acc = acc_ref[...]
        hop_out_ref[...] = hop_in_ref[...] + acc          # in-kernel hop accumulate
        cur_ref[...] = acc.astype(cur_ref.dtype)          # bf16 feed for next hop


def spmm_hop(adj_b, cur_b, hop_acc_b, *, tm, tk):
    """adj_b: [V,N,N] bf16, cur_b: [V,N,H] bf16, hop_acc_b: [V,N,H] f32."""
    v, n, _ = adj_b.shape
    hp = cur_b.shape[-1]
    assert n % tm == 0 and n % tk == 0
    grid = (v, n // tm, n // tk)

    flops = 2 * v * n * n * hp
    bytes_accessed = (
        v * n * n * 2              # adj stream (bf16), once per hop
        + v * n * hp * 2           # resident cur/emb (bf16), once per view
        + v * n * hp * 4 * 2       # hop accumulator: f32 read + aliased f32 write
        + v * n * hp * 2           # bf16 next-hop output
    )

    vmem_need = (
        2 * tm * tk * 2            # adj, double-buffered bf16
        + 2 * n * hp * 2           # resident emb (double-buffered) bf16
        + 2 * 2 * tm * hp * 4      # hop acc in + out, double-buffered f32
        + 2 * tm * hp * 2          # next-hop bf16 out, double-buffered
        + tm * hp * 4              # f32 accumulator scratch
    )
    vmem_limit = int(min(max(2 * vmem_need, 16 * 2**20), 48 * 2**20))

    return pl.pallas_call(
        _spmm_hop_kernel,
        out_shape=(
            jax.ShapeDtypeStruct((v, n, hp), jnp.float32),
            jax.ShapeDtypeStruct((v, n, hp), jnp.bfloat16),
        ),
        grid_spec=pltpu.PrefetchScalarGridSpec(
            num_scalar_prefetch=0,
            grid=grid,
            in_specs=[
                pl.BlockSpec((None, tm, tk), lambda vi, i, k: (vi, i, k)),
                pl.BlockSpec((None, n, hp), lambda vi, i, k: (vi, 0, 0)),
                pl.BlockSpec((None, tm, hp), lambda vi, i, k: (vi, i, 0)),
            ],
            out_specs=[
                pl.BlockSpec((None, tm, hp), lambda vi, i, k: (vi, i, 0)),
                pl.BlockSpec((None, tm, hp), lambda vi, i, k: (vi, i, 0)),
            ],
            scratch_shapes=[pltpu.VMEM((tm, hp), jnp.float32)],
        ),
        compiler_params=pltpu.CompilerParams(
            dimension_semantics=("parallel", "parallel", "arbitrary"),
            vmem_limit_bytes=vmem_limit,
        ),
        input_output_aliases={2: 0},   # hop_acc input aliases hop_out output
        cost_estimate=pl.CostEstimate(
            flops=flops, transcendentals=0, bytes_accessed=bytes_accessed
        ),
    )(adj_b, cur_b, hop_acc_b)


@functools.partial(jax.jit, static_argnames=("hop", "tm", "tk"))
def gcn_propagate(adj_b_bf16, emb_b_f32, *, hop, tm, tk):
    """LightGCN mean over hops, batched over views.

    adj_b_bf16: [V, N, N] bf16 (padded); emb_b_f32: [V, N, H] f32 (row-padded).
    Per-hop matmul inputs are bf16; hop sum is accumulated in f32 in-kernel.
    """
    hop_acc = emb_b_f32
    cur = emb_b_f32.astype(jnp.bfloat16)
    for _ in range(hop):  # hop is a small static int (2-3)
        hop_acc, cur = spmm_hop(adj_b_bf16, cur, hop_acc, tm=tm, tk=tk)
    return hop_acc / jnp.float32(hop + 1)


# -----------------------------------------------------------------------------
# SEPT module (forward pass only), parameters initialized deterministically
# -----------------------------------------------------------------------------
class SEPT:
    def __init__(self, n_users, n_items, hidden, hop, S, RRT, A_dense, key):
        self.n_users = n_users
        self.n_items = n_items
        self.hidden = hidden
        self.hop = hop
        self.hp = int(hidden)  # true hidden width, no 128-lane padding

        n_all = n_users + n_items
        self.tm_s, self.tk_s, self.nu_pad = _plan_tiles(n_users)
        self.tm_a, self.tk_a, self.n_pad = _plan_tiles(n_all)

        # get_social_related_views (plain-JAX setup glue, as in torch __init__).
        # f32 copies are kept ONLY for the reference checks below; production
        # would keep just the padded bf16 kernel operands (HBM residency).
        eye = jnp.eye(n_users, dtype=jnp.float32)
        self.social_mat = (S @ S) * S + eye
        self.sharing_mat = RRT * S + eye
        self.A = A_dense.astype(jnp.float32)

        # Padded bf16 adjacencies, built ONCE (kernel operands).
        self.views_adj_bf16 = jnp.stack(
            [
                _pad2(self.sharing_mat, self.nu_pad, self.nu_pad),
                _pad2(self.social_mat, self.nu_pad, self.nu_pad),
            ]
        ).astype(jnp.bfloat16)                                    # [2, Nu_pad, Nu_pad]
        self.A_bf16 = _pad2(self.A, self.n_pad, self.n_pad)[None].astype(
            jnp.bfloat16
        )                                                         # [1, N_pad, N_pad]

        # Xavier-uniform embedding init (deterministic via PRNGKey)
        ku, ki = jax.random.split(key)
        bu = float(np.sqrt(6.0 / (n_users + hidden)))
        bi = float(np.sqrt(6.0 / (n_items + hidden)))
        self.user_w = jax.random.uniform(ku, (n_users, hidden), jnp.float32, -bu, bu)
        self.item_w = jax.random.uniform(ki, (n_items, hidden), jnp.float32, -bi, bi)

    # ---- propagation wrappers -------------------------------------------------
    def GCN_a(self, users_emb, items_emb):
        all_emb = jnp.concatenate([users_emb, items_emb], axis=0)        # [N, H]
        emb_pad = _pad_rows(all_emb, self.n_pad)[None]                   # [1, Np, H]
        out = gcn_propagate(self.A_bf16, emb_pad,
                            hop=self.hop, tm=self.tm_a, tk=self.tk_a)    # [1, Np, H]
        out = out[0, : self.n_users + self.n_items]
        return out[: self.n_users], out[self.n_users:]

    def GCN_s_fused(self, users_emb):
        # sharing view (idx 0) + friend/social view (idx 1) in one pallas pipeline.
        # The [2, Nu, H] copy of the user embedding is tiny (H = hidden, f32) and
        # diverges after hop 1 anyway, so we keep the explicit broadcast.
        emb_pad = _pad_rows(users_emb, self.nu_pad)                      # [Nu_pad, H]
        emb_b = jnp.broadcast_to(emb_pad[None], (2, self.nu_pad, self.hp))
        out = gcn_propagate(self.views_adj_bf16, emb_b,
                            hop=self.hop, tm=self.tm_s, tk=self.tk_s)    # [2, Nu_pad, H]
        sharing = out[0, : self.n_users]
        friend = out[1, : self.n_users]
        return sharing, friend

    # ---- forward ---------------------------------------------------------------
    def forward(self, users, pos, neg):
        """users:[B] pos:[B] neg:[B, neg] (int32 indices)."""
        rec_user_embs, rec_item_embs = self.GCN_a(self.user_w, self.item_w)
        sharing_view, friend_view = self.GCN_s_fused(self.user_w)
        self.rec_user_embs, self.rec_item_embs = rec_user_embs, rec_item_embs
        self.sharing_view_embs = sharing_view
        self.friend_view_embs = friend_view

        users_emb = jnp.take(rec_user_embs, users, axis=0)          # [B, H]
        pos_emb = jnp.take(rec_item_embs, pos, axis=0)              # [B, H]
        neg_emb = jnp.take(rec_item_embs, neg, axis=0)              # [B, neg, H]
        users_emb_ego = jnp.take(self.user_w, users, axis=0)        # [B, H]
        pos_emb_ego = jnp.take(self.item_w, pos, axis=0)            # [B, H]
        neg_emb_ego = jnp.take(self.item_w, neg, axis=0)            # [B, neg, H]
        return users_emb, pos_emb, neg_emb, users_emb_ego, pos_emb_ego, neg_emb_ego


# -----------------------------------------------------------------------------
# Deterministic synthetic data construction
# -----------------------------------------------------------------------------
def build_graphs(key, n_users, n_items):
    k1, k2 = jax.random.split(key)
    # Social adjacency S: symmetric binary, zero diagonal.
    s_raw = (jax.random.uniform(k1, (n_users, n_users)) < 0.3).astype(jnp.float32)
    S = jnp.clip(s_raw + s_raw.T, 0.0, 1.0) * (1.0 - jnp.eye(n_users, dtype=jnp.float32))
    # User-item interaction R and RRT = R @ R^T.
    R = (jax.random.uniform(k2, (n_users, n_items)) < 0.3).astype(jnp.float32)
    RRT = R @ R.T
    # Bipartite normalized adjacency A = D^-1/2 [[0,R],[R^T,0]] D^-1/2.
    N = n_users + n_items
    A = jnp.zeros((N, N), jnp.float32)
    A = A.at[:n_users, n_users:].set(R)
    A = A.at[n_users:, :n_users].set(R.T)
    deg = jnp.sum(A, axis=1)
    d_inv_sqrt = jnp.where(deg > 0, 1.0 / jnp.sqrt(jnp.maximum(deg, 1e-12)), 0.0)
    A = A * d_inv_sqrt[:, None] * d_inv_sqrt[None, :]
    return S, RRT, A


def _ref_propagate_bf16(adj_f32, emb_f32, hop):
    """Plain-JAX reference mirroring kernel precision: bf16 dot inputs, f32 acc."""
    adj_bf = adj_f32.astype(jnp.bfloat16)
    cur, acc = emb_f32, emb_f32
    for _ in range(hop):
        cur = jnp.dot(adj_bf, cur.astype(jnp.bfloat16),
                      preferred_element_type=jnp.float32)
        acc = acc + cur
    return acc / (hop + 1)


if __name__ == "__main__":
    # Small but tiling-relevant shapes: n_all = 520 -> padded 1024, two K tiles
    # (exercises the in-kernel pl.ds slice and the multi-step accumulator);
    # n_users = 80 -> single-tile 128 path for the fused social views.
    n_users, n_items, hidden, hop = 80, 440, 32, 2
    B, n_neg = 2, 3

    root = jax.random.PRNGKey(0)
    k_graph, k_emb, k_u, k_p, k_n = jax.random.split(root, 5)

    S, RRT, A_dense = build_graphs(k_graph, n_users, n_items)
    model = SEPT(n_users, n_items, hidden, hop, S, RRT, A_dense, k_emb)

    users = jax.random.randint(k_u, (B,), 0, n_users, dtype=jnp.int32)
    pos = jax.random.randint(k_p, (B,), 0, n_items, dtype=jnp.int32)
    neg = jax.random.randint(k_n, (B, n_neg), 0, n_items, dtype=jnp.int32)

    outs = model.forward(users, pos, neg)
    outs = jax.block_until_ready(outs)
    jax.block_until_ready(model.sharing_view_embs)
    jax.block_until_ready(model.friend_view_embs)

    # Correctness checks vs. plain-JAX references (same bf16/f32 mixed precision).
    # Tolerances allow for f32 accumulation-order differences amplified by the
    # per-hop bf16 recast of the intermediate embeddings.
    all_emb = jnp.concatenate([model.user_w, model.item_w], axis=0)
    ref_a = _ref_propagate_bf16(model.A, all_emb, hop)
    got_a = jnp.concatenate([model.rec_user_embs, model.rec_item_embs], axis=0)
    np.testing.assert_allclose(np.asarray(got_a), np.asarray(ref_a),
                               rtol=1e-3, atol=1e-5)

    ref_share = _ref_propagate_bf16(model.sharing_mat, model.user_w, hop)
    ref_friend = _ref_propagate_bf16(model.social_mat, model.user_w, hop)
    np.testing.assert_allclose(np.asarray(model.sharing_view_embs),
                               np.asarray(ref_share), rtol=1e-3, atol=1e-2)
    np.testing.assert_allclose(np.asarray(model.friend_view_embs),
                               np.asarray(ref_friend), rtol=1e-3, atol=1e-2)

    assert outs[0].shape == (B, hidden)
    assert outs[1].shape == (B, hidden)
    assert outs[2].shape == (B, n_neg, hidden)
    assert outs[3].shape == (B, hidden)
    assert outs[5].shape == (B, n_neg, hidden)
    print("KERNEL_OK")
</pallas_src>

<mosaic_0001>
module attributes {stable_mosaic.version = 11 : i64} {
  func.func @_spmm_hop_kernel(%arg0: i32, %arg1: i32, %arg2: i32, %arg3: memref<1x1024x512xbf16, #tpu.memory_space<vmem>>, %arg4: memref<1x1024x32xbf16, #tpu.memory_space<vmem>>, %arg5: memref<1x1024x32xf32, #tpu.memory_space<vmem>>, %arg6: memref<1x1024x32xf32, #tpu.memory_space<vmem>>, %arg7: memref<1x1024x32xbf16, #tpu.memory_space<vmem>>, %arg8: memref<1024x32xf32, #tpu.memory_space<vmem>>) attributes {dimension_semantics = [#tpu.dimension_semantics<parallel>, #tpu.dimension_semantics<parallel>, #tpu.dimension_semantics<arbitrary>], iteration_bounds = array<i64: 1, 1, 2>, scalar_prefetch = 0 : i64, scratch_operands = 1 : i64, tpu.core_type = #tpu.core_type<tc>, window_params = [{transform_indices = @transform_0, window_bounds = array<i64: 1, 1024, 512>}, {transform_indices = @transform_1, window_bounds = array<i64: 1, 1024, 32>}, {transform_indices = @transform_2, window_bounds = array<i64: 1, 1024, 32>}, {transform_indices = @transform_3, window_bounds = array<i64: 1, 1024, 32>}, {transform_indices = @transform_4, window_bounds = array<i64: 1, 1024, 32>}]} {
    %c0_i32 = arith.constant 0 : i32
    %0 = arith.cmpi eq, %arg2, %c0_i32 : i32
    %1 = arith.extui %0 : i1 to i32
    %c0_i32_0 = arith.constant 0 : i32
    %2 = arith.cmpi ne, %1, %c0_i32_0 : i32
    scf.if %2 {
      %cst_10 = arith.constant 0.000000e+00 : f32
      %17 = vector.broadcast %cst_10 : f32 to vector<1024x32xf32>
      %c0_11 = arith.constant 0 : index
      %c0_12 = arith.constant 0 : index
      %18 = vector.load %arg8[%c0_11, %c0_12] : memref<1024x32xf32, #tpu.memory_space<vmem>>, vector<1024x32xf32>
      tpu.vector_store %arg8[%c0_11, %c0_12], %17 {strides = array<i32>} : memref<1024x32xf32, #tpu.memory_space<vmem>>, vector<1024x32xf32>,
    } else {
    }
    %c512_i32 = arith.constant 512 : i32
    %3 = arith.muli %arg2, %c512_i32 : i32
    %4 = tpu.assume_multiple %3, 512 : i32
    %c0 = arith.constant 0 : index
    %5 = arith.index_cast %4 : i32 to index
    %c0_1 = arith.constant 0 : index
    %6 = vector.load %arg4[%c0, %5, %c0_1] : memref<1x1024x32xbf16, #tpu.memory_space<vmem>>, vector<1x512x32xbf16>
    %7 = vector.shape_cast %6 : vector<1x512x32xbf16> to vector<512x32xbf16>
    %c0_2 = arith.constant 0 : index
    %c0_3 = arith.constant 0 : index
    %8 = vector.load %arg8[%c0_2, %c0_3] : memref<1024x32xf32, #tpu.memory_space<vmem>>, vector<1024x32xf32>
    %c0_4 = arith.constant 0 : index
    %c0_5 = arith.constant 0 : index
    %c0_6 = arith.constant 0 : index
    %9 = vector.load %arg3[%c0_4, %c0_5, %c0_6] : memref<1x1024x512xbf16, #tpu.memory_space<vmem>>, vector<1x1024x512xbf16>
    %10 = vector.shape_cast %9 : vector<1x1024x512xbf16> to vector<1024x512xbf16>
    %cst = arith.constant dense<0.000000e+00> : vector<1024x32xf32>
    %11 = tpu.matmul %10, %7, %cst {dimension_numbers = #tpu.dot_dimension_numbers<[1], [0], [0], [1], [0, 0, 1, 1], [], []>} : vector<1024x512xbf16>, vector<512x32xbf16>, vector<1024x32xf32> -> vector<1024x32xf32>
    %12 = arith.addf %8, %11 : vector<1024x32xf32>
    %c0_7 = arith.constant 0 : index
    %c0_8 = arith.constant 0 : index
    %13 = vector.load %arg8[%c0_7, %c0_8] : memref<1024x32xf32, #tpu.memory_space<vmem>>, vector<1024x32xf32>
    tpu.vector_store %arg8[%c0_7, %c0_8], %12 {strides = array<i32>} : memref<1024x32xf32, #tpu.memory_space<vmem>>, vector<1024x32xf32>,
    %c1_i32 = arith.constant 1 : i32
    %14 = arith.cmpi eq, %arg2, %c1_i32 : i32
    %15 = arith.extui %14 : i1 to i32
    %c0_i32_9 = arith.constant 0 : i32
    %16 = arith.cmpi ne, %15, %c0_i32_9 : i32
    scf.if %16 {
      %c0_10 = arith.constant 0 : index
      %c0_11 = arith.constant 0 : index
      %17 = vector.load %arg8[%c0_10, %c0_11] : memref<1024x32xf32, #tpu.memory_space<vmem>>, vector<1024x32xf32>
      %c0_12 = arith.constant 0 : index
      %c0_13 = arith.constant 0 : index
      %c0_14 = arith.constant 0 : index
      %18 = vector.load %arg5[%c0_12, %c0_13, %c0_14] : memref<1x1024x32xf32, #tpu.memory_space<vmem>>, vector<1x1024x32xf32>
      %19 = vector.shape_cast %18 : vector<1x1024x32xf32> to vector<1024x32xf32>
      %20 = arith.addf %19, %17 : vector<1024x32xf32>
      %c0_15 = arith.constant 0 : index
      %c0_16 = arith.constant 0 : index
      %c0_17 = arith.constant 0 : index
      %21 = vector.load %arg6[%c0_15, %c0_16, %c0_17] : memref<1x1024x32xf32, #tpu.memory_space<vmem>>, vector<1x1024x32xf32>
      %22 = vector.shape_cast %21 : vector<1x1024x32xf32> to vector<1024x32xf32>
      %23 = vector.shape_cast %20 : vector<1024x32xf32> to vector<1x1024x32xf32>
      tpu.vector_store %arg6[%c0_15, %c0_16, %c0_17], %23 {strides = array<i32>} : memref<1x1024x32xf32, #tpu.memory_space<vmem>>, vector<1x1024x32xf32>,
      %24 = arith.truncf %17 : vector<1024x32xf32> to vector<1024x32xbf16>
      %c0_18 = arith.constant 0 : index
      %c0_19 = arith.constant 0 : index
      %c0_20 = arith.constant 0 : index
      %25 = vector.load %arg7[%c0_18, %c0_19, %c0_20] : memref<1x1024x32xbf16, #tpu.memory_space<vmem>>, vector<1x1024x32xbf16>
      %26 = vector.shape_cast %25 : vector<1x1024x32xbf16> to vector<1024x32xbf16>
      %27 = vector.shape_cast %24 : vector<1024x32xbf16> to vector<1x1024x32xbf16>
      tpu.vector_store %arg7[%c0_18, %c0_19, %c0_20], %27 {strides = array<i32>} : memref<1x1024x32xbf16, #tpu.memory_space<vmem>>, vector<1x1024x32xbf16>,
    } else {
    }
    return
  }
  func.func @transform_0(%arg0: i32, %arg1: i32, %arg2: i32) -> (i32, i32, i32) {
    %c0_i32 = arith.constant 0 : i32
    return %arg0, %arg1, %arg2 : i32, i32, i32
  }
  func.func @transform_1(%arg0: i32, %arg1: i32, %arg2: i32) -> (i32, i32, i32) {
    %c0_i32 = arith.constant 0 : i32
    %c0_i32_0 = arith.constant 0 : i32
    %c0_i32_1 = arith.constant 0 : i32
    return %arg0, %c0_i32, %c0_i32_0 : i32, i32, i32
  }
  func.func @transform_2(%arg0: i32, %arg1: i32, %arg2: i32) -> (i32, i32, i32) {
    %c0_i32 = arith.constant 0 : i32
    %c0_i32_0 = arith.constant 0 : i32
    return %arg0, %arg1, %c0_i32 : i32, i32, i32
  }
  func.func @transform_3(%arg0: i32, %arg1: i32, %arg2: i32) -> (i32, i32, i32) {
    %c0_i32 = arith.constant 0 : i32
    %c0_i32_0 = arith.constant 0 : i32
    return %arg0, %arg1, %c0_i32 : i32, i32, i32
  }
  func.func @transform_4(%arg0: i32, %arg1: i32, %arg2: i32) -> (i32, i32, i32) {
    %c0_i32 = arith.constant 0 : i32
    %c0_i32_0 = arith.constant 0 : i32
    return %arg0, %arg1, %c0_i32 : i32, i32, i32
  }
}

module attributes {stable_mosaic.version = 11 : i64} {
  func.func @_spmm_hop_kernel(%arg0: i32, %arg1: i32, %arg2: i32, %arg3: memref<1x1024x512xbf16, #tpu.memory_space<vmem>>, %arg4: memref<1x1024x32xbf16, #tpu.memory_space<vmem>>, %arg5: memref<1x1024x32xf32, #tpu.memory_space<vmem>>, %arg6: memref<1x1024x32xf32, #tpu.memory_space<vmem>>, %arg7: memref<1x1024x32xbf16, #tpu.memory_space<vmem>>, %arg8: memref<1024x32xf32, #tpu.memory_space<vmem>>) attributes {dimension_semantics = [#tpu.dimension_semantics<parallel>, #tpu.dimension_semantics<parallel>, #tpu.dimension_semantics<arbitrary>], iteration_bounds = array<i64: 1, 1, 2>, scalar_prefetch = 0 : i64, scratch_operands = 1 : i64, tpu.core_type = #tpu.core_type<tc>, window_params = [{transform_indices = @transform_0, window_bounds = array<i64: 1, 1024, 512>}, {transform_indices = @transform_1, window_bounds = array<i64: 1, 1024, 32>}, {transform_indices = @transform_2, window_bounds = array<i64: 1, 1024, 32>}, {transform_indices = @transform_3, window_bounds = array<i64: 1, 1024, 32>}, {transform_indices = @transform_4, window_bounds = array<i64: 1, 1024, 32>}]} {
    %c0_i32 = arith.constant 0 : i32
    %0 = arith.cmpi eq, %arg2, %c0_i32 : i32
    %1 = arith.extui %0 : i1 to i32
    %c0_i32_0 = arith.constant 0 : i32
    %2 = arith.cmpi ne, %1, %c0_i32_0 : i32
    scf.if %2 {
      %cst_10 = arith.constant 0.000000e+00 : f32
      %17 = vector.broadcast %cst_10 : f32 to vector<1024x32xf32>
      %c0_11 = arith.constant 0 : index
      %c0_12 = arith.constant 0 : index
      %18 = vector.load %arg8[%c0_11, %c0_12] : memref<1024x32xf32, #tpu.memory_space<vmem>>, vector<1024x32xf32>
      tpu.vector_store %arg8[%c0_11, %c0_12], %17 {strides = array<i32>} : memref<1024x32xf32, #tpu.memory_space<vmem>>, vector<1024x32xf32>,
    } else {
    }
    %c512_i32 = arith.constant 512 : i32
    %3 = arith.muli %arg2, %c512_i32 : i32
    %4 = tpu.assume_multiple %3, 512 : i32
    %c0 = arith.constant 0 : index
    %5 = arith.index_cast %4 : i32 to index
    %c0_1 = arith.constant 0 : index
    %6 = vector.load %arg4[%c0, %5, %c0_1] : memref<1x1024x32xbf16, #tpu.memory_space<vmem>>, vector<1x512x32xbf16>
    %7 = vector.shape_cast %6 : vector<1x512x32xbf16> to vector<512x32xbf16>
    %c0_2 = arith.constant 0 : index
    %c0_3 = arith.constant 0 : index
    %8 = vector.load %arg8[%c0_2, %c0_3] : memref<1024x32xf32, #tpu.memory_space<vmem>>, vector<1024x32xf32>
    %c0_4 = arith.constant 0 : index
    %c0_5 = arith.constant 0 : index
    %c0_6 = arith.constant 0 : index
    %9 = vector.load %arg3[%c0_4, %c0_5, %c0_6] : memref<1x1024x512xbf16, #tpu.memory_space<vmem>>, vector<1x1024x512xbf16>
    %10 = vector.shape_cast %9 : vector<1x1024x512xbf16> to vector<1024x512xbf16>
    %cst = arith.constant dense<0.000000e+00> : vector<1024x32xf32>
    %11 = tpu.matmul %10, %7, %cst {dimension_numbers = #tpu.dot_dimension_numbers<[1], [0], [0], [1], [0, 0, 1, 1], [], []>} : vector<1024x512xbf16>, vector<512x32xbf16>, vector<1024x32xf32> -> vector<1024x32xf32>
    %12 = arith.addf %8, %11 : vector<1024x32xf32>
    %c0_7 = arith.constant 0 : index
    %c0_8 = arith.constant 0 : index
    %13 = vector.load %arg8[%c0_7, %c0_8] : memref<1024x32xf32, #tpu.memory_space<vmem>>, vector<1024x32xf32>
    tpu.vector_store %arg8[%c0_7, %c0_8], %12 {strides = array<i32>} : memref<1024x32xf32, #tpu.memory_space<vmem>>, vector<1024x32xf32>,
    %c1_i32 = arith.constant 1 : i32
    %14 = arith.cmpi eq, %arg2, %c1_i32 : i32
    %15 = arith.extui %14 : i1 to i32
    %c0_i32_9 = arith.constant 0 : i32
    %16 = arith.cmpi ne, %15, %c0_i32_9 : i32
    scf.if %16 {
      %c0_10 = arith.constant 0 : index
      %c0_11 = arith.constant 0 : index
      %17 = vector.load %arg8[%c0_10, %c0_11] : memref<1024x32xf32, #tpu.memory_space<vmem>>, vector<1024x32xf32>
      %c0_12 = arith.constant 0 : index
      %c0_13 = arith.constant 0 : index
      %c0_14 = arith.constant 0 : index
      %18 = vector.load %arg5[%c0_12, %c0_13, %c0_14] : memref<1x1024x32xf32, #tpu.memory_space<vmem>>, vector<1x1024x32xf32>
      %19 = vector.shape_cast %18 : vector<1x1024x32xf32> to vector<1024x32xf32>
      %20 = arith.addf %19, %17 : vector<1024x32xf32>
      %c0_15 = arith.constant 0 : index
      %c0_16 = arith.constant 0 : index
      %c0_17 = arith.constant 0 : index
      %21 = vector.load %arg6[%c0_15, %c0_16, %c0_17] : memref<1x1024x32xf32, #tpu.memory_space<vmem>>, vector<1x1024x32xf32>
      %22 = vector.shape_cast %21 : vector<1x1024x32xf32> to vector<1024x32xf32>
      %23 = vector.shape_cast %20 : vector<1024x32xf32> to vector<1x1024x32xf32>
      tpu.vector_store %arg6[%c0_15, %c0_16, %c0_17], %23 {strides = array<i32>} : memref<1x1024x32xf32, #tpu.memory_space<vmem>>, vector<1x1024x32xf32>,
      %24 = arith.truncf %17 : vector<1024x32xf32> to vector<1024x32xbf16>
      %c0_18 = arith.constant 0 : index
      %c0_19 = arith.constant 0 : index
      %c0_20 = arith.constant 0 : index
      %25 = vector.load %arg7[%c0_18, %c0_19, %c0_20] : memref<1x1024x32xbf16, #tpu.memory_space<vmem>>, vector<1x1024x32xbf16>
      %26 = vector.shape_cast %25 : vector<1x1024x32xbf16> to vector<1024x32xbf16>
      %27 = vector.shape_cast %24 : vector<1024x32xbf16> to vector<1x1024x32xbf16>
      tpu.vector_store %arg7[%c0_18, %c0_19, %c0_20], %27 {strides = array<i32>} : memref<1x1024x32xbf16, #tpu.memory_space<vmem>>, vector<1x1024x32xbf16>,
    } else {
    }
    return
  }
  func.func @transform_0(%arg0: i32, %arg1: i32, %arg2: i32) -> (i32, i32, i32) {
    %c0_i32 = arith.constant 0 : i32
    return %arg0, %arg1, %arg2 : i32, i32, i32
  }
  func.func @transform_1(%arg0: i32, %arg1: i32, %arg2: i32) -> (i32, i32, i32) {
    %c0_i32 = arith.constant 0 : i32
    %c0_i32_0 = arith.constant 0 : i32
    %c0_i32_1 = arith.constant 0 : i32
    return %arg0, %c0_i32, %c0_i32_0 : i32, i32, i32
  }
  func.func @transform_2(%arg0: i32, %arg1: i32, %arg2: i32) -> (i32, i32, i32) {
    %c0_i32 = arith.constant 0 : i32
    %c0_i32_0 = arith.constant 0 : i32
    return %arg0, %arg1, %c0_i32 : i32, i32, i32
  }
  func.func @transform_3(%arg0: i32, %arg1: i32, %arg2: i32) -> (i32, i32, i32) {
    %c0_i32 = arith.constant 0 : i32
    %c0_i32_0 = arith.constant 0 : i32
    return %arg0, %arg1, %c0_i32 : i32, i32, i32
  }
  func.func @transform_4(%arg0: i32, %arg1: i32, %arg2: i32) -> (i32, i32, i32) {
    %c0_i32 = arith.constant 0 : i32
    %c0_i32_0 = arith.constant 0 : i32
    return %arg0, %arg1, %c0_i32 : i32, i32, i32
  }
}

</mosaic_0001>

<llo_original>
// kernel: gcn_propagate.2
$region0: #{gcn_propagate.2}
  #allocation0 [shape = 'u32[]', space=smem, size = 0x4, offset = 0x4, fixed_abs, tag = 'smem constant byte address 0x4 - core index']
  #allocation1 [shape = 'u32[144,128]{1,0:T(1,128)}', space=vmem, size = 0x12000, scoped, tag = 'internal scratch']
  #allocation2 [shape = 'f32[1024,32]{1,0:T(8,128)}', space=vmem, size = 0x80000, scoped, tag = 'scratch operand']
  %s0 = inlined_call_operand.hbm [shape: bf16[1,1024,1024], index: 0, kind: input, shape index: {}]
  %s1 = inlined_call_operand.vmem [shape: bf16[1,1024,32], index: 1, kind: input, shape index: {}]
  %s2 = inlined_call_operand.vmem [shape: f32[1,1024,32], index: 2, kind: input, shape index: {}, may-alias: {2,3}]
  %s3 = inlined_call_operand.vmem [shape: f32[1,1024,32], index: 3, kind: output, shape index: {0}, may-alias: {2,3}]
  %s4 = inlined_call_operand.vmem [shape: bf16[1,1024,32], index: 4, kind: output, shape index: {1}]
  %5 = xla_tuple %s3, %s4
  %s6 = sld [smem:[#allocation0]]
  $region65: #{gcn_propagate.2} parent=0
    _
  %s8 = ssub.s32 1, %s6
  %s9 = scalar_select 0, %s8, %s6
  $region1: #{gcn_propagate.2} parent=0
    #allocation3 [shape = 'u8[2097152]{0}', space=vmem, size = 0x200000, scoped, tag = 'input window, operand 0']
    #allocation4 [shape = 's32[2]{0}', space=sflag, size = 0x8, scoped, tag = 'scoped memory for gcn_propagate.2']
    %10 = vsyncpa [#allocation4], 0
    %s11 = scalar_lea.sflag [#allocation4], 1
    %12 = vsyncpa %s11, 0
    loop: start=0, step=1, limit=4
    $region2: #{gcn_propagate.2} parent=1 // loop_pre_header
      _
    $region3: #{gcn_propagate.2} parent=1 // loop_header
      %s14 = sphi 0, %s18
      %p15 = scmp.ge.s32.totalorder %s14, 4
      %s21 = sphi 0, %s40
      %s22 = sphi 0, %s36
      %s23 = sphi 0, %s32
      %s24 = sphi 0, %s21
      %s25 = sphi 0, %s22
      %s26 = sphi 0, %s23
      %s27 = sphi 0, %s24
      %s28 = sphi 0, %s25
      %s29 = sphi 0, %s26
      %s47 = sphi 0, %s49
      %s50 = sphi 0, %s47
      %s51 = sphi 0, %s50
      %s67 = sphi 0, %s51
      %s73 = sphi 0, %s75
      %s76 = sphi 0, %s73
      %s77 = sphi 0, %s76
      %s93 = sphi 0, %s77
      %s101 = sphi 0, %s103
      %s104 = sphi 0, %s101
      %s105 = sphi 0, %s104
      %s121 = sphi 0, %s105
      %s129 = sphi 0, %s131
      %s132 = sphi 0, %s129
      %s133 = sphi 0, %s132
      %s149 = sphi 0, %s133
      %s157 = sphi 0, %s159
      %s160 = sphi 0, %s157
      %s161 = sphi 0, %s160
      %s177 = sphi 0, %s161
    $region4: #{gcn_propagate.2} parent=1 // loop_header_branch
      %17 = sbr.rel (%p15) target = $region8
    $region5: #{gcn_propagate.2} parent=1 // loop_body
      %s19 = ssub.s32 %s14, 1
      %s20 = ssub.s32 %s14, 2
      %s30 = sadd.s32 1, %s23
      %p31 = scmp.ge.s32.totalorder %s30, 2
      %s32 = scalar_select %p31, 0, %s30
      %s33 = sadd.s32 1, %s22
      %s34 = scalar_select %p31, %s33, %s22
      %p35 = scmp.ge.s32.totalorder %s34, 1
      %s36 = scalar_select %p35, 0, %s34
      %s37 = sadd.s32 1, %s21
      %s38 = scalar_select %p35, %s37, %s21
      %p39 = scmp.ge.s32.totalorder %s38, 1
      %s40 = scalar_select %p39, 0, %s38
      %s41 = ssub.s32 %s21, %s40
      %s42 = ssub.s32 %s22, %s36
      %s43 = sor.u32 %s41, %s42
      %s44 = ssub.s32 %s23, %s32
      %s45 = sor.u32 %s43, %s44
      %p46 = scmp.eq.s32.totalorder %s45, 0
      %s48 = sadd.s32 %s47, 1
      %s49 = scalar_select %p46, %s47, %s48
      %p52 = pneg %p46
      %p53 = scmp.eq.s32.totalorder %s14, 1
      %p54 = por %p52, %p53
      %p55 = scmp.ne.s32.totalorder %s47, %s50
      %p56 = scmp.eq.s32.totalorder %s14, 0
      %p57 = por %p55, %p56
      %p58 = scmp.ne.s32.totalorder %s47, %s50
      %p59 = scmp.eq.s32.totalorder %s19, 1
      %p60 = por %p58, %p59
      %p61 = scmp.ne.s32.totalorder %s50, %s51
      %p62 = scmp.eq.s32.totalorder %s19, 0
      %p63 = por %p61, %p62
      %p64 = scmp.ne.s32.totalorder %s50, %s51
      %p65 = scmp.eq.s32.totalorder %s20, 1
      %p66 = por %p64, %p65
      %p68 = scmp.ne.s32.totalorder %s51, %s67
      %p69 = scmp.eq.s32.totalorder %s20, 0
      %p70 = por %p68, %p69
      %s71 = ssub.s32 %s21, %s40
      %p72 = scmp.eq.s32.totalorder %s71, 0
      %s74 = sadd.s32 %s73, 1
      %s75 = scalar_select %p72, %s73, %s74
      %p78 = pneg %p72
      %p79 = scmp.eq.s32.totalorder %s14, 1
      %p80 = por %p78, %p79
      %p81 = scmp.ne.s32.totalorder %s73, %s76
      %p82 = scmp.eq.s32.totalorder %s14, 0
      %p83 = por %p81, %p82
      %p84 = scmp.ne.s32.totalorder %s73, %s76
      %p85 = scmp.eq.s32.totalorder %s19, 1
      %p86 = por %p84, %p85
      %p87 = scmp.ne.s32.totalorder %s76, %s77
      %p88 = scmp.eq.s32.totalorder %s19, 0
      %p89 = por %p87, %p88
      %p90 = scmp.ne.s32.totalorder %s76, %s77
      %p91 = scmp.eq.s32.totalorder %s20, 1
      %p92 = por %p90, %p91
      %p94 = scmp.ne.s32.totalorder %s77, %s93
      %p95 = scmp.eq.s32.totalorder %s20, 0
      %p96 = por %p94, %p95
      %s97 = ssub.s32 %s21, %s40
      %s98 = ssub.s32 %s22, %s36
      %s99 = sor.u32 %s97, %s98
      %p100 = scmp.eq.s32.totalorder %s99, 0
      %s102 = sadd.s32 %s101, 1
      %s103 = scalar_select %p100, %s101, %s102
      %p106 = pneg %p100
      %p107 = scmp.eq.s32.totalorder %s14, 1
      %p108 = por %p106, %p107
      %p109 = scmp.ne.s32.totalorder %s101, %s104
      %p110 = scmp.eq.s32.totalorder %s14, 0
      %p111 = por %p109, %p110
      %p112 = scmp.ne.s32.totalorder %s101, %s104
      %p113 = scmp.eq.s32.totalorder %s19, 1
      %p114 = por %p112, %p113
      %p115 = scmp.ne.s32.totalorder %s104, %s105
      %p116 = scmp.eq.s32.totalorder %s19, 0
      %p117 = por %p115, %p116
      %p118 = scmp.ne.s32.totalorder %s104, %s105
      %p119 = scmp.eq.s32.totalorder %s20, 1
      %p120 = por %p118, %p119
      %p122 = scmp.ne.s32.totalorder %s105, %s121
      %p123 = scmp.eq.s32.totalorder %s20, 0
      %p124 = por %p122, %p123
      %s125 = ssub.s32 %s21, %s40
      %s126 = ssub.s32 %s22, %s36
      %s127 = sor.u32 %s125, %s126
      %p128 = scmp.eq.s32.totalorder %s127, 0
      %s130 = sadd.s32 %s129, 1
      %s131 = scalar_select %p128, %s129, %s130
      %p134 = pneg %p128
      %p135 = scmp.eq.s32.totalorder %s14, 1
      %p136 = por %p134, %p135
      %p137 = scmp.ne.s32.totalorder %s129, %s132
      %p138 = scmp.eq.s32.totalorder %s14, 0
      %p139 = por %p137, %p138
      %p140 = scmp.ne.s32.totalorder %s129, %s132
      %p141 = scmp.eq.s32.totalorder %s19, 1
      %p142 = por %p140, %p141
      %p143 = scmp.ne.s32.totalorder %s132, %s133
      %p144 = scmp.eq.s32.totalorder %s19, 0
      %p145 = por %p143, %p144
      %p146 = scmp.ne.s32.totalorder %s132, %s133
      %p147 = scmp.eq.s32.totalorder %s20, 1
      %p148 = por %p146, %p147
      %p150 = scmp.ne.s32.totalorder %s133, %s149
      %p151 = scmp.eq.s32.totalorder %s20, 0
      %p152 = por %p150, %p151
      %s153 = ssub.s32 %s21, %s40
      %s154 = ssub.s32 %s22, %s36
      %s155 = sor.u32 %s153, %s154
      %p156 = scmp.eq.s32.totalorder %s155, 0
      %s158 = sadd.s32 %s157, 1
      %s159 = scalar_select %p156, %s157, %s158
      %p162 = pneg %p156
      %p163 = scmp.eq.s32.totalorder %s14, 1
      %p164 = por %p162, %p163
      %p165 = scmp.ne.s32.totalorder %s157, %s160
      %p166 = scmp.eq.s32.totalorder %s14, 0
      %p167 = por %p165, %p166
      %p168 = scmp.ne.s32.totalorder %s157, %s160
      %p169 = scmp.eq.s32.totalorder %s19, 1
      %p170 = por %p168, %p169
      %p171 = scmp.ne.s32.totalorder %s160, %s161
      %p172 = scmp.eq.s32.totalorder %s19, 0
      %p173 = por %p171, %p172
      %p174 = scmp.ne.s32.totalorder %s160, %s161
      %p175 = scmp.eq.s32.totalorder %s20, 1
      %p176 = por %p174, %p175
      %p178 = scmp.ne.s32.totalorder %s161, %s177
      %p179 = scmp.eq.s32.totalorder %s20, 0
      %p180 = por %p178, %p179
      %p181 = scmp.le.s32.totalorder 1, %s14
      %p182 = scmp.lt.s32.totalorder %s14, 3
      %p183 = pnand %p181, %p182
      %p184 = pneg %p183
      // Predicated region
      $region9: #{gcn_propagate.2} parent=5 // pred_check
        _
      $region10: #{gcn_propagate.2} parent=5 // pred_check_branch
        %186 = sbr.rel (%p183) target = $region12
      $region11: #{gcn_propagate.2} parent=5 // pred_region
        %s187 = ssub.s32 %s14, 1
        // Predicated region
        $region13: #{gcn_propagate.2} parent=11 // pred_check
          %p188 = pneg %p89
        $region14: #{gcn_propagate.2} parent=11 // pred_check_branch
          %190 = sbr.rel (%p188) target = $region16
        $region15: #{gcn_propagate.2} parent=11 // pred_region
          %p191 = scmp.lt.s32.totalorder %s24, 0
          %s192 = scalar_select %p191, %s24, 0
          %s193 = smul.addr %s192, 128
          %s194 = smul.addr %s193, 4
          %s195 = scalar_lea.vmem %s1, %s194
        $region16: #{gcn_propagate.2} parent=11 // pred_fallthru
          _
        // Predicated region
        $region17: #{gcn_propagate.2} parent=11 // pred_check
          %p196 = pneg %p117
        $region18: #{gcn_propagate.2} parent=11 // pred_check_branch
          %198 = sbr.rel (%p196) target = $region20
        $region19: #{gcn_propagate.2} parent=11 // pred_region
          %s199 = smul.u32 128, %s25
          %p200 = scmp.lt.s32.totalorder %s24, 0
          %s201 = scalar_select %p200, %s24, 0
          %p202 = scmp.lt.s32.totalorder %s199, 127
          %s203 = scalar_select %p202, %s199, 127
          %s204 = smul.addr %s201, 128
          %s205 = sadd.s32 %s203, %s204
          %s206 = smul.addr %s205, 8
          %s207 = scalar_lea.vmem %s2, %s206
          %s208 = smul.u32 128, %s25
        $region20: #{gcn_propagate.2} parent=11 // pred_fallthru
          _
      $region12: #{gcn_propagate.2} parent=5 // pred_fallthru
        _
      %p209 = scmp.lt.s32.totalorder %s14, 2
      // Predicated region
      $region21: #{gcn_propagate.2} parent=5 // pred_check
        %p210 = pneg %p209
      $region22: #{gcn_propagate.2} parent=5 // pred_check_branch
        %212 = sbr.rel (%p210) target = $region24
      $region23: #{gcn_propagate.2} parent=5 // pred_region
        // Predicated region
        $region25: #{gcn_propagate.2} parent=23 // pred_check
          %p213 = pneg %p57
        $region26: #{gcn_propagate.2} parent=23 // pred_check_branch
          %215 = sbr.rel (%p213) target = $region28
        $region27: #{gcn_propagate.2} parent=23 // pred_region
          %s216 = sand.u32 %s47, 1
          %s217 = scalar_lea.sflag [#allocation4], %s216
          %s218 = sand.u32 %s47, 1
          %s219 = smul.addr %s218, 2048
          %s220 = scalar_lea.vmem [#allocation3], %s219
          %s221 = smul.u32 128, %s22
          %s222 = smul.u32 4, %s23
          %s224 = ssub.s32 32768, 32768
          %225 = vsyncadd %s217, %s224
          %s226 = smul.addr %s221, 8
          %s227 = sadd.s32 %s222, %s226
          %s228 = smul.addr %s21, 1024
          %s229 = sadd.s32 %s227, %s228
          %s230 = smul.addr %s229, 64
          %s231 = scalar_lea.hbm %s0, %s230
          %s232 = sshll.u32 %s220, 4
          %s233 = int_to_ptr.vmem [resolvable:$true] %s232
          %238 = dma.hbm_to_vmem [thread:$0]  %s231, 32768, %s233, %s217, 512, 256, 16
        $region28: #{gcn_propagate.2} parent=23 // pred_fallthru
          _
      $region24: #{gcn_propagate.2} parent=5 // pred_fallthru
        _
      %p239 = scmp.le.s32.totalorder 1, %s14
      %p240 = scmp.lt.s32.totalorder %s14, 3
      %p241 = pnand %p239, %p240
      %p242 = pneg %p241
      // Predicated region
      $region29: #{gcn_propagate.2} parent=5 // pred_check
        _
      $region30: #{gcn_propagate.2} parent=5 // pred_check_branch
        %244 = sbr.rel (%p241) target = $region32
      $region31: #{gcn_propagate.2} parent=5 // pred_region
        %s245 = ssub.s32 %s14, 1
        %s246 = sand.u32 %s50, 1
        %s247 = scalar_lea.sflag [#allocation4], %s246
        %s248 = sand.u32 %s50, 1
        %s249 = smul.addr %s248, 2048
        %s250 = scalar_lea.vmem [#allocation3], %s249
        // Predicated region
        $region33: #{gcn_propagate.2} parent=31 // pred_check
          %p251 = pneg %p63
        $region34: #{gcn_propagate.2} parent=31 // pred_check_branch
          %253 = sbr.rel (%p251) target = $region36
        $region35: #{gcn_propagate.2} parent=31 // pred_region
          %254 = dma.done %s247, 32768
        $region36: #{gcn_propagate.2} parent=31 // pred_fallthru
          _
        %s255 = sand.u32 %s50, 1
        %s256 = scalar_lea.sflag [#allocation4], %s255
        %s257 = sand.u32 %s50, 1
        %s258 = smul.addr %s257, 2048
        %s259 = scalar_lea.vmem [#allocation3], %s258
        %p260 = pneg %p63
        %p261 = pneg %p60
        %p262 = scmp.lt.s32.totalorder %s24, 0
        %s263 = scalar_select %p262, %s24, 0
        %s264 = smul.addr %s263, 128
        %s265 = smul.addr %s264, 4
        %s266 = scalar_lea.vmem %s1, %s265
        %p267 = pneg %p89
        %p268 = pneg %p86
        %s269 = smul.u32 128, %s25
        %p270 = scmp.lt.s32.totalorder %s24, 0
        %s271 = scalar_select %p270, %s24, 0
        %p272 = scmp.lt.s32.totalorder %s269, 127
        %s273 = scalar_select %p272, %s269, 127
        %s274 = smul.addr %s271, 128
        %s275 = sadd.s32 %s273, %s274
        %s276 = smul.addr %s275, 8
        %s277 = scalar_lea.vmem %s2, %s276
        %p278 = pneg %p117
        %p279 = pneg %p114
        %p280 = pneg %p145
        %p281 = pneg %p142
        %s282 = smul.u32 128, %s25
        %p283 = scmp.lt.s32.totalorder %s24, 0
        %s284 = scalar_select %p283, %s24, 0
        %p285 = scmp.lt.s32.totalorder %s282, 127
        %s286 = scalar_select %p285, %s282, 127
        %s287 = smul.addr %s284, 128
        %s288 = sadd.s32 %s286, %s287
        %s289 = smul.addr %s288, 8
        %s290 = scalar_lea.vmem %s3, %s289
        %p291 = pneg %p173
        %p292 = pneg %p170
        %s293 = smul.u32 128, %s25
        %p294 = scmp.lt.s32.totalorder %s24, 0
        %s295 = scalar_select %p294, %s24, 0
        %p296 = scmp.lt.s32.totalorder %s293, 127
        %s297 = scalar_select %p296, %s293, 127
        %s298 = smul.addr %s295, 128
        %s299 = sadd.s32 %s297, %s298
        %s300 = smul.addr %s299, 4
        %s301 = scalar_lea.vmem %s4, %s300
        %s302 = smul.u32 128, %s25
        %s303 = smul.u32 4, %s26
        %p304 = scmp.lt.s32.totalorder %s24, 0
        %s305 = scalar_select %p304, %s24, 0
        %s306 = smul.addr %s305, 128
        %s307 = smul.addr %s306, 4
        %s308 = scalar_lea.vmem %s1, %s307
        %s309 = smul.u32 128, %s25
        %p310 = scmp.lt.s32.totalorder %s24, 0
        %s311 = scalar_select %p310, %s24, 0
        %p312 = scmp.lt.s32.totalorder %s309, 127
        %s313 = scalar_select %p312, %s309, 127
        %s314 = smul.addr %s311, 128
        %s315 = sadd.s32 %s313, %s314
        %s316 = smul.addr %s315, 8
        %s317 = scalar_lea.vmem %s2, %s316
        %s318 = smul.u32 128, %s25
        %s319 = smul.u32 128, %s25
        %p320 = scmp.lt.s32.totalorder %s24, 0
        %s321 = scalar_select %p320, %s24, 0
        %p322 = scmp.lt.s32.totalorder %s319, 127
        %s323 = scalar_select %p322, %s319, 127
        %s324 = smul.addr %s321, 128
        %s325 = sadd.s32 %s323, %s324
        %s326 = smul.addr %s325, 8
        %s327 = scalar_lea.vmem %s3, %s326
        %s328 = smul.u32 128, %s25
        %s329 = smul.u32 128, %s25
        %p330 = scmp.lt.s32.totalorder %s24, 0
        %s331 = scalar_select %p330, %s24, 0
        %p332 = scmp.lt.s32.totalorder %s329, 127
        %s333 = scalar_select %p332, %s329, 127
        %s334 = smul.addr %s331, 128
        %s335 = sadd.s32 %s333, %s334
        %s336 = smul.addr %s335, 4
        %s337 = scalar_lea.vmem %s4, %s336
        %s338 = smul.u32 128, %s25
        %p340 = scmp.eq.s32.totalorder %s26, 0
        // Predicated region
        $region37: #{gcn_propagate.2} parent=31 // pred_check
          %p341 = pneg %p340
        $region38: #{gcn_propagate.2} parent=31 // pred_check_branch
          %343 = sbr.rel (%p341) target = $region40
        $region39: #{gcn_propagate.2} parent=31 // pred_region
          %vm344 = vcmask 261120
          %345 = vst.msk [vmem:[#allocation2] sm:$0xff] %vm344, 0.0
          %346 = vst.msk [vmem:[#allocation2 + $0x8] sm:$0xff] %vm344, 0.0
          %347 = vst.msk [vmem:[#allocation2 + $0x10] sm:$0xff] %vm344, 0.0
          %348 = vst.msk [vmem:[#allocation2 + $0x18] sm:$0xff] %vm344, 0.0
          %349 = vst.msk [vmem:[#allocation2 + $0x20] sm:$0xff] %vm344, 0.0
          %350 = vst.msk [vmem:[#allocation2 + $0x28] sm:$0xff] %vm344, 0.0
          %351 = vst.msk [vmem:[#allocation2 + $0x30] sm:$0xff] %vm344, 0.0
          %352 = vst.msk [vmem:[#allocation2 + $0x38] sm:$0xff] %vm344, 0.0
          %353 = vst.msk [vmem:[#allocation2 + $0x40] sm:$0xff] %vm344, 0.0
          %354 = vst.msk [vmem:[#allocation2 + $0x48] sm:$0xff] %vm344, 0.0
          %355 = vst.msk [vmem:[#allocation2 + $0x50] sm:$0xff] %vm344, 0.0
          %356 = vst.msk [vmem:[#allocation2 + $0x58] sm:$0xff] %vm344, 0.0
          %357 = vst.msk [vmem:[#allocation2 + $0x60] sm:$0xff] %vm344, 0.0
          %358 = vst.msk [vmem:[#allocation2 + $0x68] sm:$0xff] %vm344, 0.0
          %359 = vst.msk [vmem:[#allocation2 + $0x70] sm:$0xff] %vm344, 0.0
          %360 = vst.msk [vmem:[#allocation2 + $0x78] sm:$0xff] %vm344, 0.0
          %361 = vst.msk [vmem:[#allocation2 + $0x80] sm:$0xff] %vm344, 0.0
          %362 = vst.msk [vmem:[#allocation2 + $0x88] sm:$0xff] %vm344, 0.0
          %363 = vst.msk [vmem:[#allocation2 + $0x90] sm:$0xff] %vm344, 0.0
          %364 = vst.msk [vmem:[#allocation2 + $0x98] sm:$0xff] %vm344, 0.0
          %365 = vst.msk [vmem:[#allocation2 + $0xa0] sm:$0xff] %vm344, 0.0
          %366 = vst.msk [vmem:[#allocation2 + $0xa8] sm:$0xff] %vm344, 0.0
          %367 = vst.msk [vmem:[#allocation2 + $0xb0] sm:$0xff] %vm344, 0.0
          %368 = vst.msk [vmem:[#allocation2 + $0xb8] sm:$0xff] %vm344, 0.0
          %369 = vst.msk [vmem:[#allocation2 + $0xc0] sm:$0xff] %vm344, 0.0
          %370 = vst.msk [vmem:[#allocation2 + $0xc8] sm:$0xff] %vm344, 0.0
          %371 = vst.msk [vmem:[#allocation2 + $0xd0] sm:$0xff] %vm344, 0.0
          %372 = vst.msk [vmem:[#allocation2 + $0xd8] sm:$0xff] %vm344, 0.0
          %373 = vst.msk [vmem:[#allocation2 + $0xe0] sm:$0xff] %vm344, 0.0
          %374 = vst.msk [vmem:[#allocation2 + $0xe8] sm:$0xff] %vm344, 0.0
          %375 = vst.msk [vmem:[#allocation2 + $0xf0] sm:$0xff] %vm344, 0.0
          %376 = vst.msk [vmem:[#allocation2 + $0xf8] sm:$0xff] %vm344, 0.0
          %377 = vst.msk [vmem:[#allocation2 + $0x100] sm:$0xff] %vm344, 0.0
          %378 = vst.msk [vmem:[#allocation2 + $0x108] sm:$0xff] %vm344, 0.0
          %379 = vst.msk [vmem:[#allocation2 + $0x110] sm:$0xff] %vm344, 0.0
          %380 = vst.msk [vmem:[#allocation2 + $0x118] sm:$0xff] %vm344, 0.0
          %381 = vst.msk [vmem:[#allocation2 + $0x120] sm:$0xff] %vm344, 0.0
          %382 = vst.msk [vmem:[#allocation2 + $0x128] sm:$0xff] %vm344, 0.0
          %383 = vst.msk [vmem:[#allocation2 + $0x130] sm:$0xff] %vm344, 0.0
          %384 = vst.msk [vmem:[#allocation2 + $0x138] sm:$0xff] %vm344, 0.0
          %385 = vst.msk [vmem:[#allocation2 + $0x140] sm:$0xff] %vm344, 0.0
          %386 = vst.msk [vmem:[#allocation2 + $0x148] sm:$0xff] %vm344, 0.0
          %387 = vst.msk [vmem:[#allocation2 + $0x150] sm:$0xff] %vm344, 0.0
          %388 = vst.msk [vmem:[#allocation2 + $0x158] sm:$0xff] %vm344, 0.0
          %389 = vst.msk [vmem:[#allocation2 + $0x160] sm:$0xff] %vm344, 0.0
          %390 = vst.msk [vmem:[#allocation2 + $0x168] sm:$0xff] %vm344, 0.0
          %391 = vst.msk [vmem:[#allocation2 + $0x170] sm:$0xff] %vm344, 0.0
          %392 = vst.msk [vmem:[#allocation2 + $0x178] sm:$0xff] %vm344, 0.0
          %393 = vst.msk [vmem:[#allocation2 + $0x180] sm:$0xff] %vm344, 0.0
          %394 = vst.msk [vmem:[#allocation2 + $0x188] sm:$0xff] %vm344, 0.0
          %395 = vst.msk [vmem:[#allocation2 + $0x190] sm:$0xff] %vm344, 0.0
          %396 = vst.msk [vmem:[#allocation2 + $0x198] sm:$0xff] %vm344, 0.0
          %397 = vst.msk [vmem:[#allocation2 + $0x1a0] sm:$0xff] %vm344, 0.0
          %398 = vst.msk [vmem:[#allocation2 + $0x1a8] sm:$0xff] %vm344, 0.0
          %399 = vst.msk [vmem:[#allocation2 + $0x1b0] sm:$0xff] %vm344, 0.0
          %400 = vst.msk [vmem:[#allocation2 + $0x1b8] sm:$0xff] %vm344, 0.0
          %401 = vst.msk [vmem:[#allocation2 + $0x1c0] sm:$0xff] %vm344, 0.0
          %402 = vst.msk [vmem:[#allocation2 + $0x1c8] sm:$0xff] %vm344, 0.0
          %403 = vst.msk [vmem:[#allocation2 + $0x1d0] sm:$0xff] %vm344, 0.0
          %404 = vst.msk [vmem:[#allocation2 + $0x1d8] sm:$0xff] %vm344, 0.0
          %405 = vst.msk [vmem:[#allocation2 + $0x1e0] sm:$0xff] %vm344, 0.0
          %406 = vst.msk [vmem:[#allocation2 + $0x1e8] sm:$0xff] %vm344, 0.0
          %407 = vst.msk [vmem:[#allocation2 + $0x1f0] sm:$0xff] %vm344, 0.0
          %408 = vst.msk [vmem:[#allocation2 + $0x1f8] sm:$0xff] %vm344, 0.0
          %409 = vst.msk [vmem:[#allocation2 + $0x200] sm:$0xff] %vm344, 0.0
          %410 = vst.msk [vmem:[#allocation2 + $0x208] sm:$0xff] %vm344, 0.0
          %411 = vst.msk [vmem:[#allocation2 + $0x210] sm:$0xff] %vm344, 0.0
          %412 = vst.msk [vmem:[#allocation2 + $0x218] sm:$0xff] %vm344, 0.0
          %413 = vst.msk [vmem:[#allocation2 + $0x220] sm:$0xff] %vm344, 0.0
          %414 = vst.msk [vmem:[#allocation2 + $0x228] sm:$0xff] %vm344, 0.0
          %415 = vst.msk [vmem:[#allocation2 + $0x230] sm:$0xff] %vm344, 0.0
          %416 = vst.msk [vmem:[#allocation2 + $0x238] sm:$0xff] %vm344, 0.0
          %417 = vst.msk [vmem:[#allocation2 + $0x240] sm:$0xff] %vm344, 0.0
          %418 = vst.msk [vmem:[#allocation2 + $0x248] sm:$0xff] %vm344, 0.0
          %419 = vst.msk [vmem:[#allocation2 + $0x250] sm:$0xff] %vm344, 0.0
          %420 = vst.msk [vmem:[#allocation2 + $0x258] sm:$0xff] %vm344, 0.0
          %421 = vst.msk [vmem:[#allocation2 + $0x260] sm:$0xff] %vm344, 0.0
          %422 = vst.msk [vmem:[#allocation2 + $0x268] sm:$0xff] %vm344, 0.0
          %423 = vst.msk [vmem:[#allocation2 + $0x270] sm:$0xff] %vm344, 0.0
          %424 = vst.msk [vmem:[#allocation2 + $0x278] sm:$0xff] %vm344, 0.0
          %425 = vst.msk [vmem:[#allocation2 + $0x280] sm:$0xff] %vm344, 0.0
          %426 = vst.msk [vmem:[#allocation2 + $0x288] sm:$0xff] %vm344, 0.0
          %427 = vst.msk [vmem:[#allocation2 + $0x290] sm:$0xff] %vm344, 0.0
          %428 = vst.msk [vmem:[#allocation2 + $0x298] sm:$0xff] %vm344, 0.0
          %429 = vst.msk [vmem:[#allocation2 + $0x2a0] sm:$0xff] %vm344, 0.0
          %430 = vst.msk [vmem:[#allocation2 + $0x2a8] sm:$0xff] %vm344, 0.0
          %431 = vst.msk [vmem:[#allocation2 + $0x2b0] sm:$0xff] %vm344, 0.0
          %432 = vst.msk [vmem:[#allocation2 + $0x2b8] sm:$0xff] %vm344, 0.0
          %433 = vst.msk [vmem:[#allocation2 + $0x2c0] sm:$0xff] %vm344, 0.0
          %434 = vst.msk [vmem:[#allocation2 + $0x2c8] sm:$0xff] %vm344, 0.0
          %435 = vst.msk [vmem:[#allocation2 + $0x2d0] sm:$0xff] %vm344, 0.0
          %436 = vst.msk [vmem:[#allocation2 + $0x2d8] sm:$0xff] %vm344, 0.0
          %437 = vst.msk [vmem:[#allocation2 + $0x2e0] sm:$0xff] %vm344, 0.0
          %438 = vst.msk [vmem:[#allocation2 + $0x2e8] sm:$0xff] %vm344, 0.0
          %439 = vst.msk [vmem:[#allocation2 + $0x2f0] sm:$0xff] %vm344, 0.0
          %440 = vst.msk [vmem:[#allocation2 + $0x2f8] sm:$0xff] %vm344, 0.0
          %441 = vst.msk [vmem:[#allocation2 + $0x300] sm:$0xff] %vm344, 0.0
          %442 = vst.msk [vmem:[#allocation2 + $0x308] sm:$0xff] %vm344, 0.0
          %443 = vst.msk [vmem:[#allocation2 + $0x310] sm:$0xff] %vm344, 0.0
          %444 = vst.msk [vmem:[#allocation2 + $0x318] sm:$0xff] %vm344, 0.0
          %445 = vst.msk [vmem:[#allocation2 + $0x320] sm:$0xff] %vm344, 0.0
          %446 = vst.msk [vmem:[#allocation2 + $0x328] sm:$0xff] %vm344, 0.0
          %447 = vst.msk [vmem:[#allocation2 + $0x330] sm:$0xff] %vm344, 0.0
          %448 = vst.msk [vmem:[#allocation2 + $0x338] sm:$0xff] %vm344, 0.0
          %449 = vst.msk [vmem:[#allocation2 + $0x340] sm:$0xff] %vm344, 0.0
          %450 = vst.msk [vmem:[#allocation2 + $0x348] sm:$0xff] %vm344, 0.0
          %451 = vst.msk [vmem:[#allocation2 + $0x350] sm:$0xff] %vm344, 0.0
          %452 = vst.msk [vmem:[#allocation2 + $0x358] sm:$0xff] %vm344, 0.0
          %453 = vst.msk [vmem:[#allocation2 + $0x360] sm:$0xff] %vm344, 0.0
          %454 = vst.msk [vmem:[#allocation2 + $0x368] sm:$0xff] %vm344, 0.0
          %455 = vst.msk [vmem:[#allocation2 + $0x370] sm:$0xff] %vm344, 0.0
          %456 = vst.msk [vmem:[#allocation2 + $0x378] sm:$0xff] %vm344, 0.0
          %457 = vst.msk [vmem:[#allocation2 + $0x380] sm:$0xff] %vm344, 0.0
          %458 = vst.msk [vmem:[#allocation2 + $0x388] sm:$0xff] %vm344, 0.0
          %459 = vst.msk [vmem:[#allocation2 + $0x390] sm:$0xff] %vm344, 0.0
          %460 = vst.msk [vmem:[#allocation2 + $0x398] sm:$0xff] %vm344, 0.0
          %461 = vst.msk [vmem:[#allocation2 + $0x3a0] sm:$0xff] %vm344, 0.0
          %462 = vst.msk [vmem:[#allocation2 + $0x3a8] sm:$0xff] %vm344, 0.0
          %463 = vst.msk [vmem:[#allocation2 + $0x3b0] sm:$0xff] %vm344, 0.0
          %464 = vst.msk [vmem:[#allocation2 + $0x3b8] sm:$0xff] %vm344, 0.0
          %465 = vst.msk [vmem:[#allocation2 + $0x3c0] sm:$0xff] %vm344, 0.0
          %466 = vst.msk [vmem:[#allocation2 + $0x3c8] sm:$0xff] %vm344, 0.0
          %467 = vst.msk [vmem:[#allocation2 + $0x3d0] sm:$0xff] %vm344, 0.0
          %468 = vst.msk [vmem:[#allocation2 + $0x3d8] sm:$0xff] %vm344, 0.0
          %469 = vst.msk [vmem:[#allocation2 + $0x3e0] sm:$0xff] %vm344, 0.0
          %470 = vst.msk [vmem:[#allocation2 + $0x3e8] sm:$0xff] %vm344, 0.0
          %471 = vst.msk [vmem:[#allocation2 + $0x3f0] sm:$0xff] %vm344, 0.0
          %472 = vst.msk [vmem:[#allocation2 + $0x3f8] sm:$0xff] %vm344, 0.0
        $region40: #{gcn_propagate.2} parent=31 // pred_fallthru
          _
        %s473 = smul.u32 %s26, 512
        %s474 = sshra.s32 %s473, 3
        %s475 = sand.u32 %s473, 7
        %s476 = smul.addr %s474, 4
        %s477 = scalar_lea.vmem %s308, %s476
        %v478 = vld [vmem:[%s477] sm:$0xf]
        %v479 = vld [vmem:[%s477 + $0x4] sm:$0xf]
        %v480 = vld [vmem:[%s477 + $0x8] sm:$0xf]
        %v481 = vld [vmem:[%s477 + $0xc] sm:$0xf]
        %v482 = vld [vmem:[%s477 + $0x10] sm:$0xf]
        %v483 = vld [vmem:[%s477 + $0x14] sm:$0xf]
        %v484 = vld [vmem:[%s477 + $0x18] sm:$0xf]
        %v485 = vld [vmem:[%s477 + $0x1c] sm:$0xf]
        %v486 = vld [vmem:[%s477 + $0x20] sm:$0xf]
        %v487 = vld [vmem:[%s477 + $0x24] sm:$0xf]
        %v488 = vld [vmem:[%s477 + $0x28] sm:$0xf]
        %v489 = vld [vmem:[%s477 + $0x2c] sm:$0xf]
        %v490 = vld [vmem:[%s477 + $0x30] sm:$0xf]
        %v491 = vld [vmem:[%s477 + $0x34] sm:$0xf]
        %v492 = vld [vmem:[%s477 + $0x38] sm:$0xf]
        %v493 = vld [vmem:[%s477 + $0x3c] sm:$0xf]
        %v494 = vld [vmem:[%s477 + $0x40] sm:$0xf]
        %v495 = vld [vmem:[%s477 + $0x44] sm:$0xf]
        %v496 = vld [vmem:[%s477 + $0x48] sm:$0xf]
        %v497 = vld [vmem:[%s477 + $0x4c] sm:$0xf]
        %v498 = vld [vmem:[%s477 + $0x50] sm:$0xf]
        %v499 = vld [vmem:[%s477 + $0x54] sm:$0xf]
        %v500 = vld [vmem:[%s477 + $0x58] sm:$0xf]
        %v501 = vld [vmem:[%s477 + $0x5c] sm:$0xf]
        %v502 = vld [vmem:[%s477 + $0x60] sm:$0xf]
        %v503 = vld [vmem:[%s477 + $0x64] sm:$0xf]
        %v504 = vld [vmem:[%s477 + $0x68] sm:$0xf]
        %v505 = vld [vmem:[%s477 + $0x6c] sm:$0xf]
        %v506 = vld [vmem:[%s477 + $0x70] sm:$0xf]
        %v507 = vld [vmem:[%s477 + $0x74] sm:$0xf]
        %v508 = vld [vmem:[%s477 + $0x78] sm:$0xf]
        %v509 = vld [vmem:[%s477 + $0x7c] sm:$0xf]
        %v510 = vld [vmem:[%s477 + $0x80] sm:$0xf]
        %v511 = vld [vmem:[%s477 + $0x84] sm:$0xf]
        %v512 = vld [vmem:[%s477 + $0x88] sm:$0xf]
        %v513 = vld [vmem:[%s477 + $0x8c] sm:$0xf]
        %v514 = vld [vmem:[%s477 + $0x90] sm:$0xf]
        %v515 = vld [vmem:[%s477 + $0x94] sm:$0xf]
        %v516 = vld [vmem:[%s477 + $0x98] sm:$0xf]
        %v517 = vld [vmem:[%s477 + $0x9c] sm:$0xf]
        %v518 = vld [vmem:[%s477 + $0xa0] sm:$0xf]
        %v519 = vld [vmem:[%s477 + $0xa4] sm:$0xf]
        %v520 = vld [vmem:[%s477 + $0xa8] sm:$0xf]
        %v521 = vld [vmem:[%s477 + $0xac] sm:$0xf]
        %v522 = vld [vmem:[%s477 + $0xb0] sm:$0xf]
        %v523 = vld [vmem:[%s477 + $0xb4] sm:$0xf]
        %v524 = vld [vmem:[%s477 + $0xb8] sm:$0xf]
        %v525 = vld [vmem:[%s477 + $0xbc] sm:$0xf]
        %v526 = vld [vmem:[%s477 + $0xc0] sm:$0xf]
        %v527 = vld [vmem:[%s477 + $0xc4] sm:$0xf]
        %v528 = vld [vmem:[%s477 + $0xc8] sm:$0xf]
        %v529 = vld [vmem:[%s477 + $0xcc] sm:$0xf]
        %v530 = vld [vmem:[%s477 + $0xd0] sm:$0xf]
        %v531 = vld [vmem:[%s477 + $0xd4] sm:$0xf]
        %v532 = vld [vmem:[%s477 + $0xd8] sm:$0xf]
        %v533 = vld [vmem:[%s477 + $0xdc] sm:$0xf]
        %v534 = vld [vmem:[%s477 + $0xe0] sm:$0xf]
        %v535 = vld [vmem:[%s477 + $0xe4] sm:$0xf]
        %v536 = vld [vmem:[%s477 + $0xe8] sm:$0xf]
        %v537 = vld [vmem:[%s477 + $0xec] sm:$0xf]
        %v538 = vld [vmem:[%s477 + $0xf0] sm:$0xf]
        %v539 = vld [vmem:[%s477 + $0xf4] sm:$0xf]
        %v540 = vld [vmem:[%s477 + $0xf8] sm:$0xf]
        %v541 = vld [vmem:[%s477 + $0xfc] sm:$0xf]
        %v542 = vld [vmem:[#allocation2] sm:$0xff]
        %v543 = vld [vmem:[#allocation2 + $0x8] sm:$0xff]
        %v544 = vld [vmem:[#allocation2 + $0x10] sm:$0xff]
        %v545 = vld [vmem:[#allocation2 + $0x18] sm:$0xff]
        %v546 = vld [vmem:[#allocation2 + $0x20] sm:$0xff]
        %v547 = vld [vmem:[#allocation2 + $0x28] sm:$0xff]
        %v548 = vld [vmem:[#allocation2 + $0x30] sm:$0xff]
        %v549 = vld [vmem:[#allocation2 + $0x38] sm:$0xff]
        %v550 = vld [vmem:[#allocation2 + $0x40] sm:$0xff]
        %v551 = vld [vmem:[#allocation2 + $0x48] sm:$0xff]
        %v552 = vld [vmem:[#allocation2 + $0x50] sm:$0xff]
        %v553 = vld [vmem:[#allocation2 + $0x58] sm:$0xff]
        %v554 = vld [vmem:[#allocation2 + $0x60] sm:$0xff]
        %v555 = vld [vmem:[#allocation2 + $0x68] sm:$0xff]
        %v556 = vld [vmem:[#allocation2 + $0x70] sm:$0xff]
        %v557 = vld [vmem:[#allocation2 + $0x78] sm:$0xff]
        %v558 = vld [vmem:[#allocation2 + $0x80] sm:$0xff]
        %v559 = vld [vmem:[#allocation2 + $0x88] sm:$0xff]
        %v560 = vld [vmem:[#allocation2 + $0x90] sm:$0xff]
        %v561 = vld [vmem:[#allocation2 + $0x98] sm:$0xff]
        %v562 = vld [vmem:[#allocation2 + $0xa0] sm:$0xff]
        %v563 = vld [vmem:[#allocation2 + $0xa8] sm:$0xff]
        %v564 = vld [vmem:[#allocation2 + $0xb0] sm:$0xff]
        %v565 = vld [vmem:[#allocation2 + $0xb8] sm:$0xff]
        %v566 = vld [vmem:[#allocation2 + $0xc0] sm:$0xff]
        %v567 = vld [vmem:[#allocation2 + $0xc8] sm:$0xff]
        %v568 = vld [vmem:[#allocation2 + $0xd0] sm:$0xff]
        %v569 = vld [vmem:[#allocation2 + $0xd8] sm:$0xff]
        %v570 = vld [vmem:[#allocation2 + $0xe0] sm:$0xff]
        %v571 = vld [vmem:[#allocation2 + $0xe8] sm:$0xff]
        %v572 = vld [vmem:[#allocation2 + $0xf0] sm:$0xff]
        %v573 = vld [vmem:[#allocation2 + $0xf8] sm:$0xff]
        %v574 = vld [vmem:[#allocation2 + $0x100] sm:$0xff]
        %v575 = vld [vmem:[#allocation2 + $0x108] sm:$0xff]
        %v576 = vld [vmem:[#allocation2 + $0x110] sm:$0xff]
        %v577 = vld [vmem:[#allocation2 + $0x118] sm:$0xff]
        %v578 = vld [vmem:[#allocation2 + $0x120] sm:$0xff]
        %v579 = vld [vmem:[#allocation2 + $0x128] sm:$0xff]
        %v580 = vld [vmem:[#allocation2 + $0x130] sm:$0xff]
        %v581 = vld [vmem:[#allocation2 + $0x138] sm:$0xff]
        %v582 = vld [vmem:[#allocation2 + $0x140] sm:$0xff]
        %v583 = vld [vmem:[#allocation2 + $0x148] sm:$0xff]
        %v584 = vld [vmem:[#allocation2 + $0x150] sm:$0xff]
        %v585 = vld [vmem:[#allocation2 + $0x158] sm:$0xff]
        %v586 = vld [vmem:[#allocation2 + $0x160] sm:$0xff]
        %v587 = vld [vmem:[#allocation2 + $0x168] sm:$0xff]
        %v588 = vld [vmem:[#allocation2 + $0x170] sm:$0xff]
        %v589 = vld [vmem:[#allocation2 + $0x178] sm:$0xff]
        %v590 = vld [vmem:[#allocation2 + $0x180] sm:$0xff]
        %v591 = vld [vmem:[#allocation2 + $0x188] sm:$0xff]
        %v592 = vld [vmem:[#allocation2 + $0x190] sm:$0xff]
        %v593 = vld [vmem:[#allocation2 + $0x198] sm:$0xff]
        %v594 = vld [vmem:[#allocation2 + $0x1a0] sm:$0xff]
        %v595 = vld [vmem:[#allocation2 + $0x1a8] sm:$0xff]
        %v596 = vld [vmem:[#allocation2 + $0x1b0] sm:$0xff]
        %v597 = vld [vmem:[#allocation2 + $0x1b8] sm:$0xff]
        %v598 = vld [vmem:[#allocation2 + $0x1c0] sm:$0xff]
        %v599 = vld [vmem:[#allocation2 + $0x1c8] sm:$0xff]
        %v600 = vld [vmem:[#allocation2 + $0x1d0] sm:$0xff]
        %v601 = vld [vmem:[#allocation2 + $0x1d8] sm:$0xff]
        %v602 = vld [vmem:[#allocation2 + $0x1e0] sm:$0xff]
        %v603 = vld [vmem:[#allocation2 + $0x1e8] sm:$0xff]
        %v604 = vld [vmem:[#allocation2 + $0x1f0] sm:$0xff]
        %v605 = vld [vmem:[#allocation2 + $0x1f8] sm:$0xff]
        %v606 = vld [vmem:[#allocation2 + $0x200] sm:$0xff]
        %v607 = vld [vmem:[#allocation2 + $0x208] sm:$0xff]
        %v608 = vld [vmem:[#allocation2 + $0x210] sm:$0xff]
        %v609 = vld [vmem:[#allocation2 + $0x218] sm:$0xff]
        %v610 = vld [vmem:[#allocation2 + $0x220] sm:$0xff]
        %v611 = vld [vmem:[#allocation2 + $0x228] sm:$0xff]
        %v612 = vld [vmem:[#allocation2 + $0x230] sm:$0xff]
        %v613 = vld [vmem:[#allocation2 + $0x238] sm:$0xff]
        %v614 = vld [vmem:[#allocation2 + $0x240] sm:$0xff]
        %v615 = vld [vmem:[#allocation2 + $0x248] sm:$0xff]
        %v616 = vld [vmem:[#allocation2 + $0x250] sm:$0xff]
        %v617 = vld [vmem:[#allocation2 + $0x258] sm:$0xff]
        %v618 = vld [vmem:[#allocation2 + $0x260] sm:$0xff]
        %v619 = vld [vmem:[#allocation2 + $0x268] sm:$0xff]
        %v620 = vld [vmem:[#allocation2 + $0x270] sm:$0xff]
        %v621 = vld [vmem:[#allocation2 + $0x278] sm:$0xff]
        %v622 = vld [vmem:[#allocation2 + $0x280] sm:$0xff]
        %v623 = vld [vmem:[#allocation2 + $0x288] sm:$0xff]
        %v624 = vld [vmem:[#allocation2 + $0x290] sm:$0xff]
        %v625 = vld [vmem:[#allocation2 + $0x298] sm:$0xff]
        %v626 = vld [vmem:[#allocation2 + $0x2a0] sm:$0xff]
        %v627 = vld [vmem:[#allocation2 + $0x2a8] sm:$0xff]
        %v628 = vld [vmem:[#allocation2 + $0x2b0] sm:$0xff]
        %v629 = vld [vmem:[#allocation2 + $0x2b8] sm:$0xff]
        %v630 = vld [vmem:[#allocation2 + $0x2c0] sm:$0xff]
        %v631 = vld [vmem:[#allocation2 + $0x2c8] sm:$0xff]
        %v632 = vld [vmem:[#allocation2 + $0x2d0] sm:$0xff]
        %v633 = vld [vmem:[#allocation2 + $0x2d8] sm:$0xff]
        %v634 = vld [vmem:[#allocation2 + $0x2e0] sm:$0xff]
        %v635 = vld [vmem:[#allocation2 + $0x2e8] sm:$0xff]
        %v636 = vld [vmem:[#allocation2 + $0x2f0] sm:$0xff]
        %v637 = vld [vmem:[#allocation2 + $0x2f8] sm:$0xff]
        %v638 = vld [vmem:[#allocation2 + $0x300] sm:$0xff]
        %v639 = vld [vmem:[#allocation2 + $0x308] sm:$0xff]
        %v640 = vld [vmem:[#allocation2 + $0x310] sm:$0xff]
        %v641 = vld [vmem:[#allocation2 + $0x318] sm:$0xff]
        %v642 = vld [vmem:[#allocation2 + $0x320] sm:$0xff]
        %v643 = vld [vmem:[#allocation2 + $0x328] sm:$0xff]
        %v644 = vld [vmem:[#allocation2 + $0x330] sm:$0xff]
        %v645 = vld [vmem:[#allocation2 + $0x338] sm:$0xff]
        %v646 = vld [vmem:[#allocation2 + $0x340] sm:$0xff]
        %v647 = vld [vmem:[#allocation2 + $0x348] sm:$0xff]
        %v648 = vld [vmem:[#allocation2 + $0x350] sm:$0xff]
        %v649 = vld [vmem:[#allocation2 + $0x358] sm:$0xff]
        %v650 = vld [vmem:[#allocation2 + $0x360] sm:$0xff]
        %v651 = vld [vmem:[#allocation2 + $0x368] sm:$0xff]
        %v652 = vld [vmem:[#allocation2 + $0x370] sm:$0xff]
        %v653 = vld [vmem:[#allocation2 + $0x378] sm:$0xff]
        %v654 = vld [vmem:[#allocation2 + $0x380] sm:$0xff]
        %v655 = vld [vmem:[#allocation2 + $0x388] sm:$0xff]
        %v656 = vld [vmem:[#allocation2 + $0x390] sm:$0xff]
        %v657 = vld [vmem:[#allocation2 + $0x398] sm:$0xff]
        %v658 = vld [vmem:[#allocation2 + $0x3a0] sm:$0xff]
        %v659 = vld [vmem:[#allocation2 + $0x3a8] sm:$0xff]
        %v660 = vld [vmem:[#allocation2 + $0x3b0] sm:$0xff]
        %v661 = vld [vmem:[#allocation2 + $0x3b8] sm:$0xff]
        %v662 = vld [vmem:[#allocation2 + $0x3c0] sm:$0xff]
        %v663 = vld [vmem:[#allocation2 + $0x3c8] sm:$0xff]
        %v664 = vld [vmem:[#allocation2 + $0x3d0] sm:$0xff]
        %v665 = vld [vmem:[#allocation2 + $0x3d8] sm:$0xff]
        %v666 = vld [vmem:[#allocation2 + $0x3e0] sm:$0xff]
        %v667 = vld [vmem:[#allocation2 + $0x3e8] sm:$0xff]
        %v668 = vld [vmem:[#allocation2 + $0x3f0] sm:$0xff]
        %v669 = vld [vmem:[#allocation2 + $0x3f8] sm:$0xff]
        %v670 = vld [vmem:[%s250] sm:$0xff]
        %v671 = vld [vmem:[%s250 + $0x8] sm:$0xff]
        %v672 = vld [vmem:[%s250 + $0x10] sm:$0xff]
        %v673 = vld [vmem:[%s250 + $0x18] sm:$0xff]
        %v674 = vld [vmem:[%s250 + $0x20] sm:$0xff]
        %v675 = vld [vmem:[%s250 + $0x28] sm:$0xff]
        %v676 = vld [vmem:[%s250 + $0x30] sm:$0xff]
        %v677 = vld [vmem:[%s250 + $0x38] sm:$0xff]
        %v678 = vld [vmem:[%s250 + $0x40] sm:$0xff]
        %v679 = vld [vmem:[%s250 + $0x48] sm:$0xff]
        %v680 = vld [vmem:[%s250 + $0x50] sm:$0xff]
        %v681 = vld [vmem:[%s250 + $0x58] sm:$0xff]
        %v682 = vld [vmem:[%s250 + $0x60] sm:$0xff]
        %v683 = vld [vmem:[%s250 + $0x68] sm:$0xff]
        %v684 = vld [vmem:[%s250 + $0x70] sm:$0xff]
        %v685 = vld [vmem:[%s250 + $0x78] sm:$0xff]
        %v686 = vld [vmem:[%s250 + $0x80] sm:$0xff]
        %v687 = vld [vmem:[%s250 + $0x88] sm:$0xff]
        %v688 = vld [vmem:[%s250 + $0x90] sm:$0xff]
        %v689 = vld [vmem:[%s250 + $0x98] sm:$0xff]
        %v690 = vld [vmem:[%s250 + $0xa0] sm:$0xff]
        %v691 = vld [vmem:[%s250 + $0xa8] sm:$0xff]
        %v692 = vld [vmem:[%s250 + $0xb0] sm:$0xff]
        %v693 = vld [vmem:[%s250 + $0xb8] sm:$0xff]
        %v694 = vld [vmem:[%s250 + $0xc0] sm:$0xff]
        %v695 = vld [vmem:[%s250 + $0xc8] sm:$0xff]
        %v696 = vld [vmem:[%s250 + $0xd0] sm:$0xff]
        %v697 = vld [vmem:[%s250 + $0xd8] sm:$0xff]
        %v698 = vld [vmem:[%s250 + $0xe0] sm:$0xff]
        %v699 = vld [vmem:[%s250 + $0xe8] sm:$0xff]
        %v700 = vld [vmem:[%s250 + $0xf0] sm:$0xff]
        %v701 = vld [vmem:[%s250 + $0xf8] sm:$0xff]
        %v702 = vld [vmem:[%s250 + $0x100] sm:$0xff]
        %v703 = vld [vmem:[%s250 + $0x108] sm:$0xff]
        %v704 = vld [vmem:[%s250 + $0x110] sm:$0xff]
        %v705 = vld [vmem:[%s250 + $0x118] sm:$0xff]
        %v706 = vld [vmem:[%s250 + $0x120] sm:$0xff]
        %v707 = vld [vmem:[%s250 + $0x128] sm:$0xff]
        %v708 = vld [vmem:[%s250 + $0x130] sm:$0xff]
        %v709 = vld [vmem:[%s250 + $0x138] sm:$0xff]
        %v710 = vld [vmem:[%s250 + $0x140] sm:$0xff]
        %v711 = vld [vmem:[%s250 + $0x148] sm:$0xff]
        %v712 = vld [vmem:[%s250 + $0x150] sm:$0xff]
        %v713 = vld [vmem:[%s250 + $0x158] sm:$0xff]
        %v714 = vld [vmem:[%s250 + $0x160] sm:$0xff]
        %v715 = vld [vmem:[%s250 + $0x168] sm:$0xff]
        %v716 = vld [vmem:[%s250 + $0x170] sm:$0xff]
        %v717 = vld [vmem:[%s250 + $0x178] sm:$0xff]
        %v718 = vld [vmem:[%s250 + $0x180] sm:$0xff]
        %v719 = vld [vmem:[%s250 + $0x188] sm:$0xff]
        %v720 = vld [vmem:[%s250 + $0x190] sm:$0xff]
        %v721 = vld [vmem:[%s250 + $0x198] sm:$0xff]
        %v722 = vld [vmem:[%s250 + $0x1a0] sm:$0xff]
        %v723 = vld [vmem:[%s250 + $0x1a8] sm:$0xff]
        %v724 = vld [vmem:[%s250 + $0x1b0] sm:$0xff]
        %v725 = vld [vmem:[%s250 + $0x1b8] sm:$0xff]
        %v726 = vld [vmem:[%s250 + $0x1c0] sm:$0xff]
        %v727 = vld [vmem:[%s250 + $0x1c8] sm:$0xff]
        %v728 = vld [vmem:[%s250 + $0x1d0] sm:$0xff]
        %v729 = vld [vmem:[%s250 + $0x1d8] sm:$0xff]
        %v730 = vld [vmem:[%s250 + $0x1e0] sm:$0xff]
        %v731 = vld [vmem:[%s250 + $0x1e8] sm:$0xff]
        %v732 = vld [vmem:[%s250 + $0x1f0] sm:$0xff]
        %v733 = vld [vmem:[%s250 + $0x1f8] sm:$0xff]
        %v734 = vld [vmem:[%s250 + $0x200] sm:$0xff]
        %v735 = vld [vmem:[%s250 + $0x208] sm:$0xff]
        %v736 = vld [vmem:[%s250 + $0x210] sm:$0xff]
        %v737 = vld [vmem:[%s250 + $0x218] sm:$0xff]
        %v738 = vld [vmem:[%s250 + $0x220] sm:$0xff]
        %v739 = vld [vmem:[%s250 + $0x228] sm:$0xff]
        %v740 = vld [vmem:[%s250 + $0x230] sm:$0xff]
        %v741 = vld [vmem:[%s250 + $0x238] sm:$0xff]
        %v742 = vld [vmem:[%s250 + $0x240] sm:$0xff]
        %v743 = vld [vmem:[%s250 + $0x248] sm:$0xff]
        %v744 = vld [vmem:[%s250 + $0x250] sm:$0xff]
        %v745 = vld [vmem:[%s250 + $0x258] sm:$0xff]
        %v746 = vld [vmem:[%s250 + $0x260] sm:$0xff]
        %v747 = vld [vmem:[%s250 + $0x268] sm:$0xff]
        %v748 = vld [vmem:[%s250 + $0x270] sm:$0xff]
        %v749 = vld [vmem:[%s250 + $0x278] sm:$0xff]
        %v750 = vld [vmem:[%s250 + $0x280] sm:$0xff]
        %v751 = vld [vmem:[%s250 + $0x288] sm:$0xff]
        %v752 = vld [vmem:[%s250 + $0x290] sm:$0xff]
        %v753 = vld [vmem:[%s250 + $0x298] sm:$0xff]
        %v754 = vld [vmem:[%s250 + $0x2a0] sm:$0xff]
        %v755 = vld [vmem:[%s250 + $0x2a8] sm:$0xff]
        %v756 = vld [vmem:[%s250 + $0x2b0] sm:$0xff]
        %v757 = vld [vmem:[%s250 + $0x2b8] sm:$0xff]
        %v758 = vld [vmem:[%s250 + $0x2c0] sm:$0xff]
        %v759 = vld [vmem:[%s250 + $0x2c8] sm:$0xff]
        %v760 = vld [vmem:[%s250 + $0x2d0] sm:$0xff]
        %v761 = vld [vmem:[%s250 + $0x2d8] sm:$0xff]
        %v762 = vld [vmem:[%s250 + $0x2e0] sm:$0xff]
        %v763 = vld [vmem:[%s250 + $0x2e8] sm:$0xff]
        %v764 = vld [vmem:[%s250 + $0x2f0] sm:$0xff]
        %v765 = vld [vmem:[%s250 + $0x2f8] sm:$0xff]
        %v766 = vld [vmem:[%s250 + $0x300] sm:$0xff]
        %v767 = vld [vmem:[%s250 + $0x308] sm:$0xff]
        %v768 = vld [vmem:[%s250 + $0x310] sm:$0xff]
        %v769 = vld [vmem:[%s250 + $0x318] sm:$0xff]
        %v770 = vld [vmem:[%s250 + $0x320] sm:$0xff]
        %v771 = vld [vmem:[%s250 + $0x328] sm:$0xff]
        %v772 = vld [vmem:[%s250 + $0x330] sm:$0xff]
        %v773 = vld [vmem:[%s250 + $0x338] sm:$0xff]
        %v774 = vld [vmem:[%s250 + $0x340] sm:$0xff]
        %v775 = vld [vmem:[%s250 + $0x348] sm:$0xff]
        %v776 = vld [vmem:[%s250 + $0x350] sm:$0xff]
        %v777 = vld [vmem:[%s250 + $0x358] sm:$0xff]
        %v778 = vld [vmem:[%s250 + $0x360] sm:$0xff]
        %v779 = vld [vmem:[%s250 + $0x368] sm:$0xff]
        %v780 = vld [vmem:[%s250 + $0x370] sm:$0xff]
        %v781 = vld [vmem:[%s250 + $0x378] sm:$0xff]
        %v782 = vld [vmem:[%s250 + $0x380] sm:$0xff]
        %v783 = vld [vmem:[%s250 + $0x388] sm:$0xff]
        %v784 = vld [vmem:[%s250 + $0x390] sm:$0xff]
        %v785 = vld [vmem:[%s250 + $0x398] sm:$0xff]
        %v786 = vld [vmem:[%s250 + $0x3a0] sm:$0xff]
        %v787 = vld [vmem:[%s250 + $0x3a8] sm:$0xff]
        %v788 = vld [vmem:[%s250 + $0x3b0] sm:$0xff]
        %v789 = vld [vmem:[%s250 + $0x3b8] sm:$0xff]
        %v790 = vld [vmem:[%s250 + $0x3c0] sm:$0xff]
        %v791 = vld [vmem:[%s250 + $0x3c8] sm:$0xff]
        %v792 = vld [vmem:[%s250 + $0x3d0] sm:$0xff]
        %v793 = vld [vmem:[%s250 + $0x3d8] sm:$0xff]
        %v794 = vld [vmem:[%s250 + $0x3e0] sm:$0xff]
        %v795 = vld [vmem:[%s250 + $0x3e8] sm:$0xff]
        %v796 = vld [vmem:[%s250 + $0x3f0] sm:$0xff]
        %v797 = vld [vmem:[%s250 + $0x3f8] sm:$0xff]
        %v798 = vld [vmem:[%s250 + $0x400] sm:$0xff]
        %v799 = vld [vmem:[%s250 + $0x408] sm:$0xff]
        %v800 = vld [vmem:[%s250 + $0x410] sm:$0xff]
        %v801 = vld [vmem:[%s250 + $0x418] sm:$0xff]
        %v802 = vld [vmem:[%s250 + $0x420] sm:$0xff]
        %v803 = vld [vmem:[%s250 + $0x428] sm:$0xff]
        %v804 = vld [vmem:[%s250 + $0x430] sm:$0xff]
        %v805 = vld [vmem:[%s250 + $0x438] sm:$0xff]
        %v806 = vld [vmem:[%s250 + $0x440] sm:$0xff]
        %v807 = vld [vmem:[%s250 + $0x448] sm:$0xff]
        %v808 = vld [vmem:[%s250 + $0x450] sm:$0xff]
        %v809 = vld [vmem:[%s250 + $0x458] sm:$0xff]
        %v810 = vld [vmem:[%s250 + $0x460] sm:$0xff]
        %v811 = vld [vmem:[%s250 + $0x468] sm:$0xff]
        %v812 = vld [vmem:[%s250 + $0x470] sm:$0xff]
        %v813 = vld [vmem:[%s250 + $0x478] sm:$0xff]
        %v814 = vld [vmem:[%s250 + $0x480] sm:$0xff]
        %v815 = vld [vmem:[%s250 + $0x488] sm:$0xff]
        %v816 = vld [vmem:[%s250 + $0x490] sm:$0xff]
        %v817 = vld [vmem:[%s250 + $0x498] sm:$0xff]
        %v818 = vld [vmem:[%s250 + $0x4a0] sm:$0xff]
        %v819 = vld [vmem:[%s250 + $0x4a8] sm:$0xff]
        %v820 = vld [vmem:[%s250 + $0x4b0] sm:$0xff]
        %v821 = vld [vmem:[%s250 + $0x4b8] sm:$0xff]
        %v822 = vld [vmem:[%s250 + $0x4c0] sm:$0xff]
        %v823 = vld [vmem:[%s250 + $0x4c8] sm:$0xff]
        %v824 = vld [vmem:[%s250 + $0x4d0] sm:$0xff]
        %v825 = vld [vmem:[%s250 + $0x4d8] sm:$0xff]
        %v826 = vld [vmem:[%s250 + $0x4e0] sm:$0xff]
        %v827 = vld [vmem:[%s250 + $0x4e8] sm:$0xff]
        %v828 = vld [vmem:[%s250 + $0x4f0] sm:$0xff]
        %v829 = vld [vmem:[%s250 + $0x4f8] sm:$0xff]
        %v830 = vld [vmem:[%s250 + $0x500] sm:$0xff]
        %v831 = vld [vmem:[%s250 + $0x508] sm:$0xff]
        %v832 = vld [vmem:[%s250 + $0x510] sm:$0xff]
        %v833 = vld [vmem:[%s250 + $0x518] sm:$0xff]
        %v834 = vld [vmem:[%s250 + $0x520] sm:$0xff]
        %v835 = vld [vmem:[%s250 + $0x528] sm:$0xff]
        %v836 = vld [vmem:[%s250 + $0x530] sm:$0xff]
        %v837 = vld [vmem:[%s250 + $0x538] sm:$0xff]
        %v838 = vld [vmem:[%s250 + $0x540] sm:$0xff]
        %v839 = vld [vmem:[%s250 + $0x548] sm:$0xff]
        %v840 = vld [vmem:[%s250 + $0x550] sm:$0xff]
        %v841 = vld [vmem:[%s250 + $0x558] sm:$0xff]
        %v842 = vld [vmem:[%s250 + $0x560] sm:$0xff]
        %v843 = vld [vmem:[%s250 + $0x568] sm:$0xff]
        %v844 = vld [vmem:[%s250 + $0x570] sm:$0xff]
        %v845 = vld [vmem:[%s250 + $0x578] sm:$0xff]
        %v846 = vld [vmem:[%s250 + $0x580] sm:$0xff]
        %v847 = vld [vmem:[%s250 + $0x588] sm:$0xff]
        %v848 = vld [vmem:[%s250 + $0x590] sm:$0xff]
        %v849 = vld [vmem:[%s250 + $0x598] sm:$0xff]
        %v850 = vld [vmem:[%s250 + $0x5a0] sm:$0xff]
        %v851 = vld [vmem:[%s250 + $0x5a8] sm:$0xff]
        %v852 = vld [vmem:[%s250 + $0x5b0] sm:$0xff]
        %v853 = vld [vmem:[%s250 + $0x5b8] sm:$0xff]
        %v854 = vld [vmem:[%s250 + $0x5c0] sm:$0xff]
        %v855 = vld [vmem:[%s250 + $0x5c8] sm:$0xff]
        %v856 = vld [vmem:[%s250 + $0x5d0] sm:$0xff]
        %v857 = vld [vmem:[%s250 + $0x5d8] sm:$0xff]
        %v858 = vld [vmem:[%s250 + $0x5e0] sm:$0xff]
        %v859 = vld [vmem:[%s250 + $0x5e8] sm:$0xff]
        %v860 = vld [vmem:[%s250 + $0x5f0] sm:$0xff]
        %v861 = vld [vmem:[%s250 + $0x5f8] sm:$0xff]
        %v862 = vld [vmem:[%s250 + $0x600] sm:$0xff]
        %v863 = vld [vmem:[%s250 + $0x608] sm:$0xff]
        %v864 = vld [vmem:[%s250 + $0x610] sm:$0xff]
        %v865 = vld [vmem:[%s250 + $0x618] sm:$0xff]
        %v866 = vld [vmem:[%s250 + $0x620] sm:$0xff]
        %v867 = vld [vmem:[%s250 + $0x628] sm:$0xff]
        %v868 = vld [vmem:[%s250 + $0x630] sm:$0xff]
        %v869 = vld [vmem:[%s250 + $0x638] sm:$0xff]
        %v870 = vld [vmem:[%s250 + $0x640] sm:$0xff]
        %v871 = vld [vmem:[%s250 + $0x648] sm:$0xff]
        %v872 = vld [vmem:[%s250 + $0x650] sm:$0xff]
        %v873 = vld [vmem:[%s250 + $0x658] sm:$0xff]
        %v874 = vld [vmem:[%s250 + $0x660] sm:$0xff]
        %v875 = vld [vmem:[%s250 + $0x668] sm:$0xff]
        %v876 = vld [vmem:[%s250 + $0x670] sm:$0xff]
        %v877 = vld [vmem:[%s250 + $0x678] sm:$0xff]
        %v878 = vld [vmem:[%s250 + $0x680] sm:$0xff]
        %v879 = vld [vmem:[%s250 + $0x688] sm:$0xff]
        %v880 = vld [vmem:[%s250 + $0x690] sm:$0xff]
        %v881 = vld [vmem:[%s250 + $0x698] sm:$0xff]
        %v882 = vld [vmem:[%s250 + $0x6a0] sm:$0xff]
        %v883 = vld [vmem:[%s250 + $0x6a8] sm:$0xff]
        %v884 = vld [vmem:[%s250 + $0x6b0] sm:$0xff]
        %v885 = vld [vmem:[%s250 + $0x6b8] sm:$0xff]
        %v886 = vld [vmem:[%s250 + $0x6c0] sm:$0xff]
        %v887 = vld [vmem:[%s250 + $0x6c8] sm:$0xff]
        %v888 = vld [vmem:[%s250 + $0x6d0] sm:$0xff]
        %v889 = vld [vmem:[%s250 + $0x6d8] sm:$0xff]
        %v890 = vld [vmem:[%s250 + $0x6e0] sm:$0xff]
        %v891 = vld [vmem:[%s250 + $0x6e8] sm:$0xff]
        %v892 = vld [vmem:[%s250 + $0x6f0] sm:$0xff]
        %v893 = vld [vmem:[%s250 + $0x6f8] sm:$0xff]
        %v894 = vld [vmem:[%s250 + $0x700] sm:$0xff]
        %v895 = vld [vmem:[%s250 + $0x708] sm:$0xff]
        %v896 = vld [vmem:[%s250 + $0x710] sm:$0xff]
        %v897 = vld [vmem:[%s250 + $0x718] sm:$0xff]
        %v898 = vld [vmem:[%s250 + $0x720] sm:$0xff]
        %v899 = vld [vmem:[%s250 + $0x728] sm:$0xff]
        %v900 = vld [vmem:[%s250 + $0x730] sm:$0xff]
        %v901 = vld [vmem:[%s250 + $0x738] sm:$0xff]
        %v902 = vld [vmem:[%s250 + $0x740] sm:$0xff]
        %v903 = vld [vmem:[%s250 + $0x748] sm:$0xff]
        %v904 = vld [vmem:[%s250 + $0x750] sm:$0xff]
        %v905 = vld [vmem:[%s250 + $0x758] sm:$0xff]
        %v906 = vld [vmem:[%s250 + $0x760] sm:$0xff]
        %v907 = vld [vmem:[%s250 + $0x768] sm:$0xff]
        %v908 = vld [vmem:[%s250 + $0x770] sm:$0xff]
        %v909 = vld [vmem:[%s250 + $0x778] sm:$0xff]
        %v910 = vld [vmem:[%s250 + $0x780] sm:$0xff]
        %v911 = vld [vmem:[%s250 + $0x788] sm:$0xff]
        %v912 = vld [vmem:[%s250 + $0x790] sm:$0xff]
        %v913 = vld [vmem:[%s250 + $0x798] sm:$0xff]
        %v914 = vld [vmem:[%s250 + $0x7a0] sm:$0xff]
        %v915 = vld [vmem:[%s250 + $0x7a8] sm:$0xff]
        %v916 = vld [vmem:[%s250 + $0x7b0] sm:$0xff]
        %v917 = vld [vmem:[%s250 + $0x7b8] sm:$0xff]
        %v918 = vld [vmem:[%s250 + $0x7c0] sm:$0xff]
        %v919 = vld [vmem:[%s250 + $0x7c8] sm:$0xff]
        %v920 = vld [vmem:[%s250 + $0x7d0] sm:$0xff]
        %v921 = vld [vmem:[%s250 + $0x7d8] sm:$0xff]
        %v922 = vld [vmem:[%s250 + $0x7e0] sm:$0xff]
        %v923 = vld [vmem:[%s250 + $0x7e8] sm:$0xff]
        %v924 = vld [vmem:[%s250 + $0x7f0] sm:$0xff]
        %v925 = vld [vmem:[%s250 + $0x7f8] sm:$0xff]
        %v1182 = vunpack.c.l.b16 %v670
        %v1183 = vunpack.c.h.b16 %v670
        %v1184 = vunpack.c.l.b16 %v671
        %v1185 = vunpack.c.h.b16 %v671
        %v1186 = vunpack.c.l.b16 %v672
        %v1187 = vunpack.c.h.b16 %v672
        %v1188 = vunpack.c.l.b16 %v673
        %v1189 = vunpack.c.h.b16 %v673
        %v1190 = vunpack.c.l.b16 %v674
        %v1191 = vunpack.c.h.b16 %v674
        %v1192 = vunpack.c.l.b16 %v675
        %v1193 = vunpack.c.h.b16 %v675
        %v1194 = vunpack.c.l.b16 %v676
        %v1195 = vunpack.c.h.b16 %v676
        %v1196 = vunpack.c.l.b16 %v677
        %v1197 = vunpack.c.h.b16 %v677
        %v1198 = vunpack.c.l.b16 %v678
        %v1199 = vunpack.c.h.b16 %v678
        %v1200 = vunpack.c.l.b16 %v679
        %v1201 = vunpack.c.h.b16 %v679
        %v1202 = vunpack.c.l.b16 %v680
        %v1203 = vunpack.c.h.b16 %v680
        %v1204 = vunpack.c.l.b16 %v681
        %v1205 = vunpack.c.h.b16 %v681
        %v1206 = vunpack.c.l.b16 %v682
        %v1207 = vunpack.c.h.b16 %v682
        %v1208 = vunpack.c.l.b16 %v683
        %v1209 = vunpack.c.h.b16 %v683
        %v1210 = vunpack.c.l.b16 %v684
        %v1211 = vunpack.c.h.b16 %v684
        %v1212 = vunpack.c.l.b16 %v685
        %v1213 = vunpack.c.h.b16 %v685
        %v1214 = vunpack.c.l.b16 %v686
        %v1215 = vunpack.c.h.b16 %v686
        %v1216 = vunpack.c.l.b16 %v687
        %v1217 = vunpack.c.h.b16 %v687
        %v1218 = vunpack.c.l.b16 %v688
        %v1219 = vunpack.c.h.b16 %v688
        %v1220 = vunpack.c.l.b16 %v689
        %v1221 = vunpack.c.h.b16 %v689
        %v1222 = vunpack.c.l.b16 %v690
        %v1223 = vunpack.c.h.b16 %v690
        %v1224 = vunpack.c.l.b16 %v691
        %v1225 = vunpack.c.h.b16 %v691
        %v1226 = vunpack.c.l.b16 %v692
        %v1227 = vunpack.c.h.b16 %v692
        %v1228 = vunpack.c.l.b16 %v693
        %v1229 = vunpack.c.h.b16 %v693
        %v1230 = vunpack.c.l.b16 %v694
        %v1231 = vunpack.c.h.b16 %v694
        %v1232 = vunpack.c.l.b16 %v695
        %v1233 = vunpack.c.h.b16 %v695
        %v1234 = vunpack.c.l.b16 %v696
        %v1235 = vunpack.c.h.b16 %v696
        %v1236 = vunpack.c.l.b16 %v697
        %v1237 = vunpack.c.h.b16 %v697
        %v1238 = vunpack.c.l.b16 %v698
        %v1239 = vunpack.c.h.b16 %v698
        %v1240 = vunpack.c.l.b16 %v699
        %v1241 = vunpack.c.h.b16 %v699
        %v1242 = vunpack.c.l.b16 %v700
        %v1243 = vunpack.c.h.b16 %v700
        %v1244 = vunpack.c.l.b16 %v701
        %v1245 = vunpack.c.h.b16 %v701
        %v1246 = vunpack.c.l.b16 %v702
        %v1247 = vunpack.c.h.b16 %v702
        %v1248 = vunpack.c.l.b16 %v703
        %v1249 = vunpack.c.h.b16 %v703
        %v1250 = vunpack.c.l.b16 %v704
        %v1251 = vunpack.c.h.b16 %v704
        %v1252 = vunpack.c.l.b16 %v705
        %v1253 = vunpack.c.h.b16 %v705
        %v1254 = vunpack.c.l.b16 %v706
        %v1255 = vunpack.c.h.b16 %v706
        %v1256 = vunpack.c.l.b16 %v707
        %v1257 = vunpack.c.h.b16 %v707
        %v1258 = vunpack.c.l.b16 %v708
        %v1259 = vunpack.c.h.b16 %v708
        %v1260 = vunpack.c.l.b16 %v709
        %v1261 = vunpack.c.h.b16 %v709
        %v1262 = vunpack.c.l.b16 %v710
        %v1263 = vunpack.c.h.b16 %v710
        %v1264 = vunpack.c.l.b16 %v711
        %v1265 = vunpack.c.h.b16 %v711
        %v1266 = vunpack.c.l.b16 %v712
        %v1267 = vunpack.c.h.b16 %v712
        %v1268 = vunpack.c.l.b16 %v713
        %v1269 = vunpack.c.h.b16 %v713
        %v1270 = vunpack.c.l.b16 %v714
        %v1271 = vunpack.c.h.b16 %v714
        %v1272 = vunpack.c.l.b16 %v715
        %v1273 = vunpack.c.h.b16 %v715
        %v1274 = vunpack.c.l.b16 %v716
        %v1275 = vunpack.c.h.b16 %v716
        %v1276 = vunpack.c.l.b16 %v717
        %v1277 = vunpack.c.h.b16 %v717
        %v1278 = vunpack.c.l.b16 %v718
        %v1279 = vunpack.c.h.b16 %v718
        %v1280 = vunpack.c.l.b16 %v719
        %v1281 = vunpack.c.h.b16 %v719
        %v1282 = vunpack.c.l.b16 %v720
        %v1283 = vunpack.c.h.b16 %v720
        %v1284 = vunpack.c.l.b16 %v721
        %v1285 = vunpack.c.h.b16 %v721
        %v1286 = vunpack.c.l.b16 %v722
        %v1287 = vunpack.c.h.b16 %v722
        %v1288 = vunpack.c.l.b16 %v723
        %v1289 = vunpack.c.h.b16 %v723
        %v1290 = vunpack.c.l.b16 %v724
        %v1291 = vunpack.c.h.b16 %v724
        %v1292 = vunpack.c.l.b16 %v725
        %v1293 = vunpack.c.h.b16 %v725
        %v1294 = vunpack.c.l.b16 %v726
        %v1295 = vunpack.c.h.b16 %v726
        %v1296 = vunpack.c.l.b16 %v727
        %v1297 = vunpack.c.h.b16 %v727
        %v1298 = vunpack.c.l.b16 %v728
        %v1299 = vunpack.c.h.b16 %v728
        %v1300 = vunpack.c.l.b16 %v729
        %v1301 = vunpack.c.h.b16 %v729
        %v1302 = vunpack.c.l.b16 %v730
        %v1303 = vunpack.c.h.b16 %v730
        %v1304 = vunpack.c.l.b16 %v731
        %v1305 = vunpack.c.h.b16 %v731
        %v1306 = vunpack.c.l.b16 %v732
        %v1307 = vunpack.c.h.b16 %v732
        %v1308 = vunpack.c.l.b16 %v733
        %v1309 = vunpack.c.h.b16 %v733
        %v1310 = vunpack.c.l.b16 %v734
        %v1311 = vunpack.c.h.b16 %v734
        %v1312 = vunpack.c.l.b16 %v735
        %v1313 = vunpack.c.h.b16 %v735
        %v1314 = vunpack.c.l.b16 %v736
        %v1315 = vunpack.c.h.b16 %v736
        %v1316 = vunpack.c.l.b16 %v737
        %v1317 = vunpack.c.h.b16 %v737
        %v1318 = vunpack.c.l.b16 %v738
        %v1319 = vunpack.c.h.b16 %v738
        %v1320 = vunpack.c.l.b16 %v739
        %v1321 = vunpack.c.h.b16 %v739
        %v1322 = vunpack.c.l.b16 %v740
        %v1323 = vunpack.c.h.b16 %v740
        %v1324 = vunpack.c.l.b16 %v741
        %v1325 = vunpack.c.h.b16 %v741
        %v1326 = vunpack.c.l.b16 %v742
        %v1327 = vunpack.c.h.b16 %v742
        %v1328 = vunpack.c.l.b16 %v743
        %v1329 = vunpack.c.h.b16 %v743
        %v1330 = vunpack.c.l.b16 %v744
        %v1331 = vunpack.c.h.b16 %v744
        %v1332 = vunpack.c.l.b16 %v745
        %v1333 = vunpack.c.h.b16 %v745
        %v1334 = vunpack.c.l.b16 %v746
        %v1335 = vunpack.c.h.b16 %v746
        %v1336 = vunpack.c.l.b16 %v747
        %v1337 = vunpack.c.h.b16 %v747
        %v1338 = vunpack.c.l.b16 %v748
        %v1339 = vunpack.c.h.b16 %v748
        %v1340 = vunpack.c.l.b16 %v749
        %v1341 = vunpack.c.h.b16 %v749
        %v1342 = vunpack.c.l.b16 %v750
        %v1343 = vunpack.c.h.b16 %v750
        %v1344 = vunpack.c.l.b16 %v751
        %v1345 = vunpack.c.h.b16 %v751
        %v1346 = vunpack.c.l.b16 %v752
        %v1347 = vunpack.c.h.b16 %v752
        %v1348 = vunpack.c.l.b16 %v753
        %v1349 = vunpack.c.h.b16 %v753
        %v1350 = vunpack.c.l.b16 %v754
        %v1351 = vunpack.c.h.b16 %v754
        %v1352 = vunpack.c.l.b16 %v755
        %v1353 = vunpack.c.h.b16 %v755
        %v1354 = vunpack.c.l.b16 %v756
        %v1355 = vunpack.c.h.b16 %v756
        %v1356 = vunpack.c.l.b16 %v757
        %v1357 = vunpack.c.h.b16 %v757
        %v1358 = vunpack.c.l.b16 %v758
        %v1359 = vunpack.c.h.b16 %v758
        %v1360 = vunpack.c.l.b16 %v759
        %v1361 = vunpack.c.h.b16 %v759
        %v1362 = vunpack.c.l.b16 %v760
        %v1363 = vunpack.c.h.b16 %v760
        %v1364 = vunpack.c.l.b16 %v761
        %v1365 = vunpack.c.h.b16 %v761
        %v1366 = vunpack.c.l.b16 %v762
        %v1367 = vunpack.c.h.b16 %v762
        %v1368 = vunpack.c.l.b16 %v763
        %v1369 = vunpack.c.h.b16 %v763
        %v1370 = vunpack.c.l.b16 %v764
        %v1371 = vunpack.c.h.b16 %v764
        %v1372 = vunpack.c.l.b16 %v765
        %v1373 = vunpack.c.h.b16 %v765
        %v1374 = vunpack.c.l.b16 %v766
        %v1375 = vunpack.c.h.b16 %v766
        %v1376 = vunpack.c.l.b16 %v767
        %v1377 = vunpack.c.h.b16 %v767
        %v1378 = vunpack.c.l.b16 %v768
        %v1379 = vunpack.c.h.b16 %v768
        %v1380 = vunpack.c.l.b16 %v769
        %v1381 = vunpack.c.h.b16 %v769
        %v1382 = vunpack.c.l.b16 %v770
        %v1383 = vunpack.c.h.b16 %v770
        %v1384 = vunpack.c.l.b16 %v771
        %v1385 = vunpack.c.h.b16 %v771
        %v1386 = vunpack.c.l.b16 %v772
        %v1387 = vunpack.c.h.b16 %v772
        %v1388 = vunpack.c.l.b16 %v773
        %v1389 = vunpack.c.h.b16 %v773
        %v1390 = vunpack.c.l.b16 %v774
        %v1391 = vunpack.c.h.b16 %v774
        %v1392 = vunpack.c.l.b16 %v775
        %v1393 = vunpack.c.h.b16 %v775
        %v1394 = vunpack.c.l.b16 %v776
        %v1395 = vunpack.c.h.b16 %v776
        %v1396 = vunpack.c.l.b16 %v777
        %v1397 = vunpack.c.h.b16 %v777
        %v1398 = vunpack.c.l.b16 %v778
        %v1399 = vunpack.c.h.b16 %v778
        %v1400 = vunpack.c.l.b16 %v779
        %v1401 = vunpack.c.h.b16 %v779
        %v1402 = vunpack.c.l.b16 %v780
        %v1403 = vunpack.c.h.b16 %v780
        %v1404 = vunpack.c.l.b16 %v781
        %v1405 = vunpack.c.h.b16 %v781
        %v1406 = vunpack.c.l.b16 %v782
        %v1407 = vunpack.c.h.b16 %v782
        %v1408 = vunpack.c.l.b16 %v783
        %v1409 = vunpack.c.h.b16 %v783
        %v1410 = vunpack.c.l.b16 %v784
        %v1411 = vunpack.c.h.b16 %v784
        %v1412 = vunpack.c.l.b16 %v785
        %v1413 = vunpack.c.h.b16 %v785
        %v1414 = vunpack.c.l.b16 %v786
        %v1415 = vunpack.c.h.b16 %v786
        %v1416 = vunpack.c.l.b16 %v787
        %v1417 = vunpack.c.h.b16 %v787
        %v1418 = vunpack.c.l.b16 %v788
        %v1419 = vunpack.c.h.b16 %v788
        %v1420 = vunpack.c.l.b16 %v789
        %v1421 = vunpack.c.h.b16 %v789
        %v1422 = vunpack.c.l.b16 %v790
        %v1423 = vunpack.c.h.b16 %v790
        %v1424 = vunpack.c.l.b16 %v791
        %v1425 = vunpack.c.h.b16 %v791
        %v1426 = vunpack.c.l.b16 %v792
        %v1427 = vunpack.c.h.b16 %v792
        %v1428 = vunpack.c.l.b16 %v793
        %v1429 = vunpack.c.h.b16 %v793
        %v1430 = vunpack.c.l.b16 %v794
        %v1431 = vunpack.c.h.b16 %v794
        %v1432 = vunpack.c.l.b16 %v795
        %v1433 = vunpack.c.h.b16 %v795
        %v1434 = vunpack.c.l.b16 %v796
        %v1435 = vunpack.c.h.b16 %v796
        %v1436 = vunpack.c.l.b16 %v797
        %v1437 = vunpack.c.h.b16 %v797
        %v1438 = vunpack.c.l.b16 %v798
        %v1439 = vunpack.c.h.b16 %v798
        %v1440 = vunpack.c.l.b16 %v799
        %v1441 = vunpack.c.h.b16 %v799
        %v1442 = vunpack.c.l.b16 %v800
        %v1443 = vunpack.c.h.b16 %v800
        %v1444 = vunpack.c.l.b16 %v801
        %v1445 = vunpack.c.h.b16 %v801
        %v1446 = vunpack.c.l.b16 %v802
        %v1447 = vunpack.c.h.b16 %v802
        %v1448 = vunpack.c.l.b16 %v803
        %v1449 = vunpack.c.h.b16 %v803
        %v1450 = vunpack.c.l.b16 %v804
        %v1451 = vunpack.c.h.b16 %v804
        %v1452 = vunpack.c.l.b16 %v805
        %v1453 = vunpack.c.h.b16 %v805
        %v1454 = vunpack.c.l.b16 %v806
        %v1455 = vunpack.c.h.b16 %v806
        %v1456 = vunpack.c.l.b16 %v807
        %v1457 = vunpack.c.h.b16 %v807
        %v1458 = vunpack.c.l.b16 %v808
        %v1459 = vunpack.c.h.b16 %v808
        %v1460 = vunpack.c.l.b16 %v809
        %v1461 = vunpack.c.h.b16 %v809
        %v1462 = vunpack.c.l.b16 %v810
        %v1463 = vunpack.c.h.b16 %v810
        %v1464 = vunpack.c.l.b16 %v811
        %v1465 = vunpack.c.h.b16 %v811
        %v1466 = vunpack.c.l.b16 %v812
        %v1467 = vunpack.c.h.b16 %v812
        %v1468 = vunpack.c.l.b16 %v813
        %v1469 = vunpack.c.h.b16 %v813
        %v1470 = vunpack.c.l.b16 %v814
        %v1471 = vunpack.c.h.b16 %v814
        %v1472 = vunpack.c.l.b16 %v815
        %v1473 = vunpack.c.h.b16 %v815
        %v1474 = vunpack.c.l.b16 %v816
        %v1475 = vunpack.c.h.b16 %v816
        %v1476 = vunpack.c.l.b16 %v817
        %v1477 = vunpack.c.h.b16 %v817
        %v1478 = vunpack.c.l.b16 %v818
        %v1479 = vunpack.c.h.b16 %v818
        %v1480 = vunpack.c.l.b16 %v819
        %v1481 = vunpack.c.h.b16 %v819
        %v1482 = vunpack.c.l.b16 %v820
        %v1483 = vunpack.c.h.b16 %v820
        %v1484 = vunpack.c.l.b16 %v821
        %v1485 = vunpack.c.h.b16 %v821
        %v1486 = vunpack.c.l.b16 %v822
        %v1487 = vunpack.c.h.b16 %v822
        %v1488 = vunpack.c.l.b16 %v823
        %v1489 = vunpack.c.h.b16 %v823
        %v1490 = vunpack.c.l.b16 %v824
        %v1491 = vunpack.c.h.b16 %v824
        %v1492 = vunpack.c.l.b16 %v825
        %v1493 = vunpack.c.h.b16 %v825
        %v1494 = vunpack.c.l.b16 %v826
        %v1495 = vunpack.c.h.b16 %v826
        %v1496 = vunpack.c.l.b16 %v827
        %v1497 = vunpack.c.h.b16 %v827
        %v1498 = vunpack.c.l.b16 %v828
        %v1499 = vunpack.c.h.b16 %v828
        %v1500 = vunpack.c.l.b16 %v829
        %v1501 = vunpack.c.h.b16 %v829
        %v1502 = vunpack.c.l.b16 %v830
        %v1503 = vunpack.c.h.b16 %v830
        %v1504 = vunpack.c.l.b16 %v831
        %v1505 = vunpack.c.h.b16 %v831
        %v1506 = vunpack.c.l.b16 %v832
        %v1507 = vunpack.c.h.b16 %v832
        %v1508 = vunpack.c.l.b16 %v833
        %v1509 = vunpack.c.h.b16 %v833
        %v1510 = vunpack.c.l.b16 %v834
        %v1511 = vunpack.c.h.b16 %v834
        %v1512 = vunpack.c.l.b16 %v835
        %v1513 = vunpack.c.h.b16 %v835
        %v1514 = vunpack.c.l.b16 %v836
        %v1515 = vunpack.c.h.b16 %v836
        %v1516 = vunpack.c.l.b16 %v837
        %v1517 = vunpack.c.h.b16 %v837
        %v1518 = vunpack.c.l.b16 %v838
        %v1519 = vunpack.c.h.b16 %v838
        %v1520 = vunpack.c.l.b16 %v839
        %v1521 = vunpack.c.h.b16 %v839
        %v1522 = vunpack.c.l.b16 %v840
        %v1523 = vunpack.c.h.b16 %v840
        %v1524 = vunpack.c.l.b16 %v841
        %v1525 = vunpack.c.h.b16 %v841
        %v1526 = vunpack.c.l.b16 %v842
        %v1527 = vunpack.c.h.b16 %v842
        %v1528 = vunpack.c.l.b16 %v843
        %v1529 = vunpack.c.h.b16 %v843
        %v1530 = vunpack.c.l.b16 %v844
        %v1531 = vunpack.c.h.b16 %v844
        %v1532 = vunpack.c.l.b16 %v845
        %v1533 = vunpack.c.h.b16 %v845
        %v1534 = vunpack.c.l.b16 %v846
        %v1535 = vunpack.c.h.b16 %v846
        %v1536 = vunpack.c.l.b16 %v847
        %v1537 = vunpack.c.h.b16 %v847
        %v1538 = vunpack.c.l.b16 %v848
        %v1539 = vunpack.c.h.b16 %v848
        %v1540 = vunpack.c.l.b16 %v849
        %v1541 = vunpack.c.h.b16 %v849
        %v1542 = vunpack.c.l.b16 %v850
        %v1543 = vunpack.c.h.b16 %v850
        %v1544 = vunpack.c.l.b16 %v851
        %v1545 = vunpack.c.h.b16 %v851
        %v1546 = vunpack.c.l.b16 %v852
        %v1547 = vunpack.c.h.b16 %v852
        %v1548 = vunpack.c.l.b16 %v853
        %v1549 = vunpack.c.h.b16 %v853
        %v1550 = vunpack.c.l.b16 %v854
        %v1551 = vunpack.c.h.b16 %v854
        %v1552 = vunpack.c.l.b16 %v855
        %v1553 = vunpack.c.h.b16 %v855
        %v1554 = vunpack.c.l.b16 %v856
        %v1555 = vunpack.c.h.b16 %v856
        %v1556 = vunpack.c.l.b16 %v857
        %v1557 = vunpack.c.h.b16 %v857
        %v1558 = vunpack.c.l.b16 %v858
        %v1559 = vunpack.c.h.b16 %v858
        %v1560 = vunpack.c.l.b16 %v859
        %v1561 = vunpack.c.h.b16 %v859
        %v1562 = vunpack.c.l.b16 %v860
        %v1563 = vunpack.c.h.b16 %v860
        %v1564 = vunpack.c.l.b16 %v861
        %v1565 = vunpack.c.h.b16 %v861
        %v1566 = vunpack.c.l.b16 %v862
        %v1567 = vunpack.c.h.b16 %v862
        %v1568 = vunpack.c.l.b16 %v863
        %v1569 = vunpack.c.h.b16 %v863
        %v1570 = vunpack.c.l.b16 %v864
        %v1571 = vunpack.c.h.b16 %v864
        %v1572 = vunpack.c.l.b16 %v865
        %v1573 = vunpack.c.h.b16 %v865
        %v1574 = vunpack.c.l.b16 %v866
        %v1575 = vunpack.c.h.b16 %v866
        %v1576 = vunpack.c.l.b16 %v867
        %v1577 = vunpack.c.h.b16 %v867
        %v1578 = vunpack.c.l.b16 %v868
        %v1579 = vunpack.c.h.b16 %v868
        %v1580 = vunpack.c.l.b16 %v869
        %v1581 = vunpack.c.h.b16 %v869
        %v1582 = vunpack.c.l.b16 %v870
        %v1583 = vunpack.c.h.b16 %v870
        %v1584 = vunpack.c.l.b16 %v871
        %v1585 = vunpack.c.h.b16 %v871
        %v1586 = vunpack.c.l.b16 %v872
        %v1587 = vunpack.c.h.b16 %v872
        %v1588 = vunpack.c.l.b16 %v873
        %v1589 = vunpack.c.h.b16 %v873
        %v1590 = vunpack.c.l.b16 %v874
        %v1591 = vunpack.c.h.b16 %v874
        %v1592 = vunpack.c.l.b16 %v875
        %v1593 = vunpack.c.h.b16 %v875
        %v1594 = vunpack.c.l.b16 %v876
        %v1595 = vunpack.c.h.b16 %v876
        %v1596 = vunpack.c.l.b16 %v877
        %v1597 = vunpack.c.h.b16 %v877
        %v1598 = vunpack.c.l.b16 %v878
        %v1599 = vunpack.c.h.b16 %v878
        %v1600 = vunpack.c.l.b16 %v879
        %v1601 = vunpack.c.h.b16 %v879
        %v1602 = vunpack.c.l.b16 %v880
        %v1603 = vunpack.c.h.b16 %v880
        %v1604 = vunpack.c.l.b16 %v881
        %v1605 = vunpack.c.h.b16 %v881
        %v1606 = vunpack.c.l.b16 %v882
        %v1607 = vunpack.c.h.b16 %v882
        %v1608 = vunpack.c.l.b16 %v883
        %v1609 = vunpack.c.h.b16 %v883
        %v1610 = vunpack.c.l.b16 %v884
        %v1611 = vunpack.c.h.b16 %v884
        %v1612 = vunpack.c.l.b16 %v885
        %v1613 = vunpack.c.h.b16 %v885
        %v1614 = vunpack.c.l.b16 %v886
        %v1615 = vunpack.c.h.b16 %v886
        %v1616 = vunpack.c.l.b16 %v887
        %v1617 = vunpack.c.h.b16 %v887
        %v1618 = vunpack.c.l.b16 %v888
        %v1619 = vunpack.c.h.b16 %v888
        %v1620 = vunpack.c.l.b16 %v889
        %v1621 = vunpack.c.h.b16 %v889
        %v1622 = vunpack.c.l.b16 %v890
        %v1623 = vunpack.c.h.b16 %v890
        %v1624 = vunpack.c.l.b16 %v891
        %v1625 = vunpack.c.h.b16 %v891
        %v1626 = vunpack.c.l.b16 %v892
        %v1627 = vunpack.c.h.b16 %v892
        %v1628 = vunpack.c.l.b16 %v893
        %v1629 = vunpack.c.h.b16 %v893
        %v1630 = vunpack.c.l.b16 %v894
        %v1631 = vunpack.c.h.b16 %v894
        %v1632 = vunpack.c.l.b16 %v895
        %v1633 = vunpack.c.h.b16 %v895
        %v1634 = vunpack.c.l.b16 %v896
        %v1635 = vunpack.c.h.b16 %v896
        %v1636 = vunpack.c.l.b16 %v897
        %v1637 = vunpack.c.h.b16 %v897
        %v1638 = vunpack.c.l.b16 %v898
        %v1639 = vunpack.c.h.b16 %v898
        %v1640 = vunpack.c.l.b16 %v899
        %v1641 = vunpack.c.h.b16 %v899
        %v1642 = vunpack.c.l.b16 %v900
        %v1643 = vunpack.c.h.b16 %v900
        %v1644 = vunpack.c.l.b16 %v901
        %v1645 = vunpack.c.h.b16 %v901
        %v1646 = vunpack.c.l.b16 %v902
        %v1647 = vunpack.c.h.b16 %v902
        %v1648 = vunpack.c.l.b16 %v903
        %v1649 = vunpack.c.h.b16 %v903
        %v1650 = vunpack.c.l.b16 %v904
        %v1651 = vunpack.c.h.b16 %v904
        %v1652 = vunpack.c.l.b16 %v905
        %v1653 = vunpack.c.h.b16 %v905
        %v1654 = vunpack.c.l.b16 %v906
        %v1655 = vunpack.c.h.b16 %v906
        %v1656 = vunpack.c.l.b16 %v907
        %v1657 = vunpack.c.h.b16 %v907
        %v1658 = vunpack.c.l.b16 %v908
        %v1659 = vunpack.c.h.b16 %v908
        %v1660 = vunpack.c.l.b16 %v909
        %v1661 = vunpack.c.h.b16 %v909
        %v1662 = vunpack.c.l.b16 %v910
        %v1663 = vunpack.c.h.b16 %v910
        %v1664 = vunpack.c.l.b16 %v911
        %v1665 = vunpack.c.h.b16 %v911
        %v1666 = vunpack.c.l.b16 %v912
        %v1667 = vunpack.c.h.b16 %v912
        %v1668 = vunpack.c.l.b16 %v913
        %v1669 = vunpack.c.h.b16 %v913
        %v1670 = vunpack.c.l.b16 %v914
        %v1671 = vunpack.c.h.b16 %v914
        %v1672 = vunpack.c.l.b16 %v915
        %v1673 = vunpack.c.h.b16 %v915
        %v1674 = vunpack.c.l.b16 %v916
        %v1675 = vunpack.c.h.b16 %v916
        %v1676 = vunpack.c.l.b16 %v917
        %v1677 = vunpack.c.h.b16 %v917
        %v1678 = vunpack.c.l.b16 %v918
        %v1679 = vunpack.c.h.b16 %v918
        %v1680 = vunpack.c.l.b16 %v919
        %v1681 = vunpack.c.h.b16 %v919
        %v1682 = vunpack.c.l.b16 %v920
        %v1683 = vunpack.c.h.b16 %v920
        %v1684 = vunpack.c.l.b16 %v921
        %v1685 = vunpack.c.h.b16 %v921
        %v1686 = vunpack.c.l.b16 %v922
        %v1687 = vunpack.c.h.b16 %v922
        %v1688 = vunpack.c.l.b16 %v923
        %v1689 = vunpack.c.h.b16 %v923
        %v1690 = vunpack.c.l.b16 %v924
        %v1691 = vunpack.c.h.b16 %v924
        %v1692 = vunpack.c.l.b16 %v925
        %v1693 = vunpack.c.h.b16 %v925
        %v1694 = vpack.c.b16 %v1186, %v1182
        %v1695 = vpack.c.b16 %v1187, %v1183
        %v1696 = vpack.c.b16 %v1188, %v1184
        %v1697 = vpack.c.b16 %v1189, %v1185
        %v1698 = vpack.c.b16 %v1194, %v1190
        %v1699 = vpack.c.b16 %v1195, %v1191
        %v1700 = vpack.c.b16 %v1196, %v1192
        %v1701 = vpack.c.b16 %v1197, %v1193
        %v1702 = vpack.c.b16 %v1202, %v1198
        %v1703 = vpack.c.b16 %v1203, %v1199
        %v1704 = vpack.c.b16 %v1204, %v1200
        %v1705 = vpack.c.b16 %v1205, %v1201
        %v1706 = vpack.c.b16 %v1210, %v1206
        %v1707 = vpack.c.b16 %v1211, %v1207
        %v1708 = vpack.c.b16 %v1212, %v1208
        %v1709 = vpack.c.b16 %v1213, %v1209
        %v1710 = vpack.c.b16 %v1218, %v1214
        %v1711 = vpack.c.b16 %v1219, %v1215
        %v1712 = vpack.c.b16 %v1220, %v1216
        %v1713 = vpack.c.b16 %v1221, %v1217
        %v1714 = vpack.c.b16 %v1226, %v1222
        %v1715 = vpack.c.b16 %v1227, %v1223
        %v1716 = vpack.c.b16 %v1228, %v1224
        %v1717 = vpack.c.b16 %v1229, %v1225
        %v1718 = vpack.c.b16 %v1234, %v1230
        %v1719 = vpack.c.b16 %v1235, %v1231
        %v1720 = vpack.c.b16 %v1236, %v1232
        %v1721 = vpack.c.b16 %v1237, %v1233
        %v1722 = vpack.c.b16 %v1242, %v1238
        %v1723 = vpack.c.b16 %v1243, %v1239
        %v1724 = vpack.c.b16 %v1244, %v1240
        %v1725 = vpack.c.b16 %v1245, %v1241
        %v1726 = vpack.c.b16 %v1250, %v1246
        %v1727 = vpack.c.b16 %v1251, %v1247
        %v1728 = vpack.c.b16 %v1252, %v1248
        %v1729 = vpack.c.b16 %v1253, %v1249
        %v1730 = vpack.c.b16 %v1258, %v1254
        %v1731 = vpack.c.b16 %v1259, %v1255
        %v1732 = vpack.c.b16 %v1260, %v1256
        %v1733 = vpack.c.b16 %v1261, %v1257
        %v1734 = vpack.c.b16 %v1266, %v1262
        %v1735 = vpack.c.b16 %v1267, %v1263
        %v1736 = vpack.c.b16 %v1268, %v1264
        %v1737 = vpack.c.b16 %v1269, %v1265
        %v1738 = vpack.c.b16 %v1274, %v1270
        %v1739 = vpack.c.b16 %v1275, %v1271
        %v1740 = vpack.c.b16 %v1276, %v1272
        %v1741 = vpack.c.b16 %v1277, %v1273
        %v1742 = vpack.c.b16 %v1282, %v1278
        %v1743 = vpack.c.b16 %v1283, %v1279
        %v1744 = vpack.c.b16 %v1284, %v1280
        %v1745 = vpack.c.b16 %v1285, %v1281
        %v1746 = vpack.c.b16 %v1290, %v1286
        %v1747 = vpack.c.b16 %v1291, %v1287
        %v1748 = vpack.c.b16 %v1292, %v1288
        %v1749 = vpack.c.b16 %v1293, %v1289
        %v1750 = vpack.c.b16 %v1298, %v1294
        %v1751 = vpack.c.b16 %v1299, %v1295
        %v1752 = vpack.c.b16 %v1300, %v1296
        %v1753 = vpack.c.b16 %v1301, %v1297
        %v1754 = vpack.c.b16 %v1306, %v1302
        %v1755 = vpack.c.b16 %v1307, %v1303
        %v1756 = vpack.c.b16 %v1308, %v1304
        %v1757 = vpack.c.b16 %v1309, %v1305
        %v1758 = vpack.c.b16 %v1314, %v1310
        %v1759 = vpack.c.b16 %v1315, %v1311
        %v1760 = vpack.c.b16 %v1316, %v1312
        %v1761 = vpack.c.b16 %v1317, %v1313
        %v1762 = vpack.c.b16 %v1322, %v1318
        %v1763 = vpack.c.b16 %v1323, %v1319
        %v1764 = vpack.c.b16 %v1324, %v1320
        %v1765 = vpack.c.b16 %v1325, %v1321
        %v1766 = vpack.c.b16 %v1330, %v1326
        %v1767 = vpack.c.b16 %v1331, %v1327
        %v1768 = vpack.c.b16 %v1332, %v1328
        %v1769 = vpack.c.b16 %v1333, %v1329
        %v1770 = vpack.c.b16 %v1338, %v1334
        %v1771 = vpack.c.b16 %v1339, %v1335
        %v1772 = vpack.c.b16 %v1340, %v1336
        %v1773 = vpack.c.b16 %v1341, %v1337
        %v1774 = vpack.c.b16 %v1346, %v1342
        %v1775 = vpack.c.b16 %v1347, %v1343
        %v1776 = vpack.c.b16 %v1348, %v1344
        %v1777 = vpack.c.b16 %v1349, %v1345
        %v1778 = vpack.c.b16 %v1354, %v1350
        %v1779 = vpack.c.b16 %v1355, %v1351
        %v1780 = vpack.c.b16 %v1356, %v1352
        %v1781 = vpack.c.b16 %v1357, %v1353
        %v1782 = vpack.c.b16 %v1362, %v1358
        %v1783 = vpack.c.b16 %v1363, %v1359
        %v1784 = vpack.c.b16 %v1364, %v1360
        %v1785 = vpack.c.b16 %v1365, %v1361
        %v1786 = vpack.c.b16 %v1370, %v1366
        %v1787 = vpack.c.b16 %v1371, %v1367
        %v1788 = vpack.c.b16 %v1372, %v1368
        %v1789 = vpack.c.b16 %v1373, %v1369
        %v1790 = vpack.c.b16 %v1378, %v1374
        %v1791 = vpack.c.b16 %v1379, %v1375
        %v1792 = vpack.c.b16 %v1380, %v1376
        %v1793 = vpack.c.b16 %v1381, %v1377
        %v1794 = vpack.c.b16 %v1386, %v1382
        %v1795 = vpack.c.b16 %v1387, %v1383
        %v1796 = vpack.c.b16 %v1388, %v1384
        %v1797 = vpack.c.b16 %v1389, %v1385
        %v1798 = vpack.c.b16 %v1394, %v1390
        %v1799 = vpack.c.b16 %v1395, %v1391
        %v1800 = vpack.c.b16 %v1396, %v1392
        %v1801 = vpack.c.b16 %v1397, %v1393
        %v1802 = vpack.c.b16 %v1402, %v1398
        %v1803 = vpack.c.b16 %v1403, %v1399
        %v1804 = vpack.c.b16 %v1404, %v1400
        %v1805 = vpack.c.b16 %v1405, %v1401
        %v1806 = vpack.c.b16 %v1410, %v1406
        %v1807 = vpack.c.b16 %v1411, %v1407
        %v1808 = vpack.c.b16 %v1412, %v1408
        %v1809 = vpack.c.b16 %v1413, %v1409
        %v1810 = vpack.c.b16 %v1418, %v1414
        %v1811 = vpack.c.b16 %v1419, %v1415
        %v1812 = vpack.c.b16 %v1420, %v1416
        %v1813 = vpack.c.b16 %v1421, %v1417
        %v1814 = vpack.c.b16 %v1426, %v1422
        %v1815 = vpack.c.b16 %v1427, %v1423
        %v1816 = vpack.c.b16 %v1428, %v1424
        %v1817 = vpack.c.b16 %v1429, %v1425
        %v1818 = vpack.c.b16 %v1434, %v1430
        %v1819 = vpack.c.b16 %v1435, %v1431
        %v1820 = vpack.c.b16 %v1436, %v1432
        %v1821 = vpack.c.b16 %v1437, %v1433
        %v1822 = vpack.c.b16 %v1442, %v1438
        %v1823 = vpack.c.b16 %v1443, %v1439
        %v1824 = vpack.c.b16 %v1444, %v1440
        %v1825 = vpack.c.b16 %v1445, %v1441
        %v1826 = vpack.c.b16 %v1450, %v1446
        %v1827 = vpack.c.b16 %v1451, %v1447
        %v1828 = vpack.c.b16 %v1452, %v1448
        %v1829 = vpack.c.b16 %v1453, %v1449
        %v1830 = vpack.c.b16 %v1458, %v1454
        %v1831 = vpack.c.b16 %v1459, %v1455
        %v1832 = vpack.c.b16 %v1460, %v1456
        %v1833 = vpack.c.b16 %v1461, %v1457
        %v1834 = vpack.c.b16 %v1466, %v1462
        %v1835 = vpack.c.b16 %v1467, %v1463
        %v1836 = vpack.c.b16 %v1468, %v1464
        %v1837 = vpack.c.b16 %v1469, %v1465
        %v1838 = vpack.c.b16 %v1474, %v1470
        %v1839 = vpack.c.b16 %v1475, %v1471
        %v1840 = vpack.c.b16 %v1476, %v1472
        %v1841 = vpack.c.b16 %v1477, %v1473
        %v1842 = vpack.c.b16 %v1482, %v1478
        %v1843 = vpack.c.b16 %v1483, %v1479
        %v1844 = vpack.c.b16 %v1484, %v1480
        %v1845 = vpack.c.b16 %v1485, %v1481
        %v1846 = vpack.c.b16 %v1490, %v1486
        %v1847 = vpack.c.b16 %v1491, %v1487
        %v1848 = vpack.c.b16 %v1492, %v1488
        %v1849 = vpack.c.b16 %v1493, %v1489
        %v1850 = vpack.c.b16 %v1498, %v1494
        %v1851 = vpack.c.b16 %v1499, %v1495
        %v1852 = vpack.c.b16 %v1500, %v1496
        %v1853 = vpack.c.b16 %v1501, %v1497
        %v1854 = vpack.c.b16 %v1506, %v1502
        %v1855 = vpack.c.b16 %v1507, %v1503
        %v1856 = vpack.c.b16 %v1508, %v1504
        %v1857 = vpack.c.b16 %v1509, %v1505
        %v1858 = vpack.c.b16 %v1514, %v1510
        %v1859 = vpack.c.b16 %v1515, %v1511
        %v1860 = vpack.c.b16 %v1516, %v1512
        %v1861 = vpack.c.b16 %v1517, %v1513
        %v1862 = vpack.c.b16 %v1522, %v1518
        %v1863 = vpack.c.b16 %v1523, %v1519
        %v1864 = vpack.c.b16 %v1524, %v1520
        %v1865 = vpack.c.b16 %v1525, %v1521
        %v1866 = vpack.c.b16 %v1530, %v1526
        %v1867 = vpack.c.b16 %v1531, %v1527
        %v1868 = vpack.c.b16 %v1532, %v1528
        %v1869 = vpack.c.b16 %v1533, %v1529
        %v1870 = vpack.c.b16 %v1538, %v1534
        %v1871 = vpack.c.b16 %v1539, %v1535
        %v1872 = vpack.c.b16 %v1540, %v1536
        %v1873 = vpack.c.b16 %v1541, %v1537
        %v1874 = vpack.c.b16 %v1546, %v1542
        %v1875 = vpack.c.b16 %v1547, %v1543
        %v1876 = vpack.c.b16 %v1548, %v1544
        %v1877 = vpack.c.b16 %v1549, %v1545
        %v1878 = vpack.c.b16 %v1554, %v1550
        %v1879 = vpack.c.b16 %v1555, %v1551
        %v1880 = vpack.c.b16 %v1556, %v1552
        %v1881 = vpack.c.b16 %v1557, %v1553
        %v1882 = vpack.c.b16 %v1562, %v1558
        %v1883 = vpack.c.b16 %v1563, %v1559
        %v1884 = vpack.c.b16 %v1564, %v1560
        %v1885 = vpack.c.b16 %v1565, %v1561
        %v1886 = vpack.c.b16 %v1570, %v1566
        %v1887 = vpack.c.b16 %v1571, %v1567
        %v1888 = vpack.c.b16 %v1572, %v1568
        %v1889 = vpack.c.b16 %v1573, %v1569
        %v1890 = vpack.c.b16 %v1578, %v1574
        %v1891 = vpack.c.b16 %v1579, %v1575
        %v1892 = vpack.c.b16 %v1580, %v1576
        %v1893 = vpack.c.b16 %v1581, %v1577
        %v1894 = vpack.c.b16 %v1586, %v1582
        %v1895 = vpack.c.b16 %v1587, %v1583
        %v1896 = vpack.c.b16 %v1588, %v1584
        %v1897 = vpack.c.b16 %v1589, %v1585
        %v1898 = vpack.c.b16 %v1594, %v1590
        %v1899 = vpack.c.b16 %v1595, %v1591
        %v1900 = vpack.c.b16 %v1596, %v1592
        %v1901 = vpack.c.b16 %v1597, %v1593
        %v1902 = vpack.c.b16 %v1602, %v1598
        %v1903 = vpack.c.b16 %v1603, %v1599
        %v1904 = vpack.c.b16 %v1604, %v1600
        %v1905 = vpack.c.b16 %v1605, %v1601
        %v1906 = vpack.c.b16 %v1610, %v1606
        %v1907 = vpack.c.b16 %v1611, %v1607
        %v1908 = vpack.c.b16 %v1612, %v1608
        %v1909 = vpack.c.b16 %v1613, %v1609
        %v1910 = vpack.c.b16 %v1618, %v1614
        %v1911 = vpack.c.b16 %v1619, %v1615
        %v1912 = vpack.c.b16 %v1620, %v1616
        %v1913 = vpack.c.b16 %v1621, %v1617
        %v1914 = vpack.c.b16 %v1626, %v1622
        %v1915 = vpack.c.b16 %v1627, %v1623
        %v1916 = vpack.c.b16 %v1628, %v1624
        %v1917 = vpack.c.b16 %v1629, %v1625
        %v1918 = vpack.c.b16 %v1634, %v1630
        %v1919 = vpack.c.b16 %v1635, %v1631
        %v1920 = vpack.c.b16 %v1636, %v1632
        %v1921 = vpack.c.b16 %v1637, %v1633
        %v1922 = vpack.c.b16 %v1642, %v1638
        %v1923 = vpack.c.b16 %v1643, %v1639
        %v1924 = vpack.c.b16 %v1644, %v1640
        %v1925 = vpack.c.b16 %v1645, %v1641
        %v1926 = vpack.c.b16 %v1650, %v1646
        %v1927 = vpack.c.b16 %v1651, %v1647
        %v1928 = vpack.c.b16 %v1652, %v1648
        %v1929 = vpack.c.b16 %v1653, %v1649
        %v1930 = vpack.c.b16 %v1658, %v1654
        %v1931 = vpack.c.b16 %v1659, %v1655
        %v1932 = vpack.c.b16 %v1660, %v1656
        %v1933 = vpack.c.b16 %v1661, %v1657
        %v1934 = vpack.c.b16 %v1666, %v1662
        %v1935 = vpack.c.b16 %v1667, %v1663
        %v1936 = vpack.c.b16 %v1668, %v1664
        %v1937 = vpack.c.b16 %v1669, %v1665
        %v1938 = vpack.c.b16 %v1674, %v1670
        %v1939 = vpack.c.b16 %v1675, %v1671
        %v1940 = vpack.c.b16 %v1676, %v1672
        %v1941 = vpack.c.b16 %v1677, %v1673
        %v1942 = vpack.c.b16 %v1682, %v1678
        %v1943 = vpack.c.b16 %v1683, %v1679
        %v1944 = vpack.c.b16 %v1684, %v1680
        %v1945 = vpack.c.b16 %v1685, %v1681
        %v1946 = vpack.c.b16 %v1690, %v1686
        %v1947 = vpack.c.b16 %v1691, %v1687
        %v1948 = vpack.c.b16 %v1692, %v1688
        %v1949 = vpack.c.b16 %v1693, %v1689
        %v2270 = vunpack.c.l.b16 %v478
        %v2271 = vunpack.c.l.b16 %v479
        %v2272 = vunpack.c.l.b16 %v480
        %v2273 = vunpack.c.l.b16 %v481
        %v2274 = vunpack.c.l.b16 %v482
        %v2275 = vunpack.c.l.b16 %v483
        %v2276 = vunpack.c.l.b16 %v484
        %v2277 = vunpack.c.l.b16 %v485
        %v2278 = vunpack.c.l.b16 %v486
        %v2279 = vunpack.c.l.b16 %v487
        %v2280 = vunpack.c.l.b16 %v488
        %v2281 = vunpack.c.l.b16 %v489
        %v2282 = vunpack.c.l.b16 %v490
        %v2283 = vunpack.c.l.b16 %v491
        %v2284 = vunpack.c.l.b16 %v492
        %v2285 = vunpack.c.l.b16 %v493
        %v2286 = vunpack.c.l.b16 %v494
        %v2287 = vunpack.c.l.b16 %v495
        %v2288 = vunpack.c.l.b16 %v496
        %v2289 = vunpack.c.l.b16 %v497
        %v2290 = vunpack.c.l.b16 %v498
        %v2291 = vunpack.c.l.b16 %v499
        %v2292 = vunpack.c.l.b16 %v500
        %v2293 = vunpack.c.l.b16 %v501
        %v2294 = vunpack.c.l.b16 %v502
        %v2295 = vunpack.c.l.b16 %v503
        %v2296 = vunpack.c.l.b16 %v504
        %v2297 = vunpack.c.l.b16 %v505
        %v2298 = vunpack.c.l.b16 %v506
        %v2299 = vunpack.c.l.b16 %v507
        %v2300 = vunpack.c.l.b16 %v508
        %v2301 = vunpack.c.l.b16 %v509
        %v2302 = vunpack.c.l.b16 %v510
        %v2303 = vunpack.c.l.b16 %v511
        %v2304 = vunpack.c.l.b16 %v512
        %v2305 = vunpack.c.l.b16 %v513
        %v2306 = vunpack.c.l.b16 %v514
        %v2307 = vunpack.c.l.b16 %v515
        %v2308 = vunpack.c.l.b16 %v516
        %v2309 = vunpack.c.l.b16 %v517
        %v2310 = vunpack.c.l.b16 %v518
        %v2311 = vunpack.c.l.b16 %v519
        %v2312 = vunpack.c.l.b16 %v520
        %v2313 = vunpack.c.l.b16 %v521
        %v2314 = vunpack.c.l.b16 %v522
        %v2315 = vunpack.c.l.b16 %v523
        %v2316 = vunpack.c.l.b16 %v524
        %v2317 = vunpack.c.l.b16 %v525
        %v2318 = vunpack.c.l.b16 %v526
        %v2319 = vunpack.c.l.b16 %v527
        %v2320 = vunpack.c.l.b16 %v528
        %v2321 = vunpack.c.l.b16 %v529
        %v2322 = vunpack.c.l.b16 %v530
        %v2323 = vunpack.c.l.b16 %v531
        %v2324 = vunpack.c.l.b16 %v532
        %v2325 = vunpack.c.l.b16 %v533
        %v2326 = vunpack.c.l.b16 %v534
        %v2327 = vunpack.c.l.b16 %v535
        %v2328 = vunpack.c.l.b16 %v536
        %v2329 = vunpack.c.l.b16 %v537
        %v2330 = vunpack.c.l.b16 %v538
        %v2331 = vunpack.c.l.b16 %v539
        %v2332 = vunpack.c.l.b16 %v540
        %v2333 = vunpack.c.l.b16 %v541
        %v2334 = vpack.c.b16 %v2271, %v2270
        %v2335 = vpack.c.b16 %v2273, %v2272
        %v2336 = vpack.c.b16 %v2275, %v2274
        %v2337 = vpack.c.b16 %v2277, %v2276
        %v2338 = vpack.c.b16 %v2279, %v2278
        %v2339 = vpack.c.b16 %v2281, %v2280
        %v2340 = vpack.c.b16 %v2283, %v2282
        %v2341 = vpack.c.b16 %v2285, %v2284
        %v2342 = vpack.c.b16 %v2287, %v2286
        %v2343 = vpack.c.b16 %v2289, %v2288
        %v2344 = vpack.c.b16 %v2291, %v2290
        %v2345 = vpack.c.b16 %v2293, %v2292
        %v2346 = vpack.c.b16 %v2295, %v2294
        %v2347 = vpack.c.b16 %v2297, %v2296
        %v2348 = vpack.c.b16 %v2299, %v2298
        %v2349 = vpack.c.b16 %v2301, %v2300
        %v2350 = vpack.c.b16 %v2303, %v2302
        %v2351 = vpack.c.b16 %v2305, %v2304
        %v2352 = vpack.c.b16 %v2307, %v2306
        %v2353 = vpack.c.b16 %v2309, %v2308
        %v2354 = vpack.c.b16 %v2311, %v2310
        %v2355 = vpack.c.b16 %v2313, %v2312
        %v2356 = vpack.c.b16 %v2315, %v2314
        %v2357 = vpack.c.b16 %v2317, %v2316
        %v2358 = vpack.c.b16 %v2319, %v2318
        %v2359 = vpack.c.b16 %v2321, %v2320
        %v2360 = vpack.c.b16 %v2323, %v2322
        %v2361 = vpack.c.b16 %v2325, %v2324
        %v2362 = vpack.c.b16 %v2327, %v2326
        %v2363 = vpack.c.b16 %v2329, %v2328
        %v2364 = vpack.c.b16 %v2331, %v2330
        %v2365 = vpack.c.b16 %v2333, %v2332
        %2398 = vmatprep.subr.bf16.mxu0 0
        %2399 = vmatpush1.bf16.msra.mxu0 %v2334
        %2400 = vmatprep.subr.bf16.mxu0 0
        %2401 = vmatpush1.bf16.msra.mxu0 %v2335
        %2402 = vmatprep.subr.bf16.mxu0 0
        %2403 = vmatpush1.bf16.msra.mxu0 %v2336
        %2404 = vmatprep.subr.bf16.mxu0 0
        %2405 = vmatpush1.bf16.msra.mxu0 %v2337
        %2406 = vmatprep.subr.bf16.mxu0 0
        %2407 = vmatpush1.bf16.msra.mxu0 %v2338
        %2408 = vmatprep.subr.bf16.mxu0 0
        %2409 = vmatpush1.bf16.msra.mxu0 %v2339
        %2410 = vmatprep.subr.bf16.mxu0 0
        %2411 = vmatpush1.bf16.msra.mxu0 %v2340
        %2412 = vmatprep.subr.bf16.mxu0 0
        %2413 = vmatpush1.bf16.msra.mxu0 %v2341
        %2414 = vmatprep.subr.bf16.mxu0 0
        %2415 = vmatpush1.bf16.msra.mxu0 %v2342
        %2416 = vmatprep.subr.bf16.mxu0 0
        %2417 = vmatpush1.bf16.msra.mxu0 %v2343
        %2418 = vmatprep.subr.bf16.mxu0 0
        %2419 = vmatpush1.bf16.msra.mxu0 %v2344
        %2420 = vmatprep.subr.bf16.mxu0 0
        %2421 = vmatpush1.bf16.msra.mxu0 %v2345
        %2422 = vmatprep.subr.bf16.mxu0 0
        %2423 = vmatpush1.bf16.msra.mxu0 %v2346
        %2424 = vmatprep.subr.bf16.mxu0 0
        %2425 = vmatpush1.bf16.msra.mxu0 %v2347
        %2426 = vmatprep.subr.bf16.mxu0 0
        %2427 = vmatpush1.bf16.msra.mxu0 %v2348
        %2428 = vmatprep.subr.bf16.mxu0 0
        %2429 = vmatpush1.bf16.msra.mxu0 %v2349
        %2430 = vmatprep.mubr.bf16.mxu0 %v1695
        %2431 = vmatmul.mubr.bf16.gmra.mrb[0].mxu0 %v1694
        %v2432 = vpop.f32.mrb[0].mxu0
        %v2433 = vadd.f32 0.0, %v2432
        %v2434 = vpop.f32.mrb[0].mxu0
        %v2435 = vpop.f32.mrb[0].mxu0
        %v2436 = vadd.f32 0.0, %v2435
        %v2437 = vpop.f32.mrb[0].mxu0
        %2438 = vmatprep.mubr.bf16.mxu0 %v1699
        %2439 = vmatmul.mubr.bf16.gmra.mrb[0].mxu0 %v1698
        %v2440 = vpop.f32.mrb[0].mxu0
        %v2441 = vadd.f32 0.0, %v2440
        %v2442 = vpop.f32.mrb[0].mxu0
        %v2443 = vpop.f32.mrb[0].mxu0
        %v2444 = vadd.f32 0.0, %v2443
        %v2445 = vpop.f32.mrb[0].mxu0
        %2446 = vmatprep.mubr.bf16.mxu0 %v1703
        %2447 = vmatmul.mubr.bf16.gmra.mrb[0].mxu0 %v1702
        %v2448 = vpop.f32.mrb[0].mxu0
        %v2449 = vadd.f32 0.0, %v2448
        %v2450 = vpop.f32.mrb[0].mxu0
        %v2451 = vpop.f32.mrb[0].mxu0
        %v2452 = vadd.f32 0.0, %v2451
        %v2453 = vpop.f32.mrb[0].mxu0
        %2454 = vmatprep.mubr.bf16.mxu0 %v1707
        %2455 = vmatmul.mubr.bf16.gmra.mrb[0].mxu0 %v1706
        %v2456 = vpop.f32.mrb[0].mxu0
        %v2457 = vadd.f32 0.0, %v2456
        %v2458 = vpop.f32.mrb[0].mxu0
        %v2459 = vpop.f32.mrb[0].mxu0
        %v2460 = vadd.f32 0.0, %v2459
        %v2461 = vpop.f32.mrb[0].mxu0
        %2462 = vmatprep.mubr.bf16.mxu0 %v1711
        %2463 = vmatmul.mubr.bf16.gmra.mrb[0].mxu0 %v1710
        %v2464 = vpop.f32.mrb[0].mxu0
        %v2465 = vadd.f32 0.0, %v2464
        %v2466 = vpop.f32.mrb[0].mxu0
        %v2467 = vpop.f32.mrb[0].mxu0
        %v2468 = vadd.f32 0.0, %v2467
        %v2469 = vpop.f32.mrb[0].mxu0
        %2470 = vmatprep.mubr.bf16.mxu0 %v1715
        %2471 = vmatmul.mubr.bf16.gmra.mrb[0].mxu0 %v1714
        %v2472 = vpop.f32.mrb[0].mxu0
        %v2473 = vadd.f32 0.0, %v2472
        %v2474 = vpop.f32.mrb[0].mxu0
        %v2475 = vpop.f32.mrb[0].mxu0
        %v2476 = vadd.f32 0.0, %v2475
        %v2477 = vpop.f32.mrb[0].mxu0
        %2478 = vmatprep.mubr.bf16.mxu0 %v1719
        %2479 = vmatmul.mubr.bf16.gmra.mrb[0].mxu0 %v1718
        %v2480 = vpop.f32.mrb[0].mxu0
        %v2481 = vadd.f32 0.0, %v2480
        %v2482 = vpop.f32.mrb[0].mxu0
        %v2483 = vpop.f32.mrb[0].mxu0
        %v2484 = vadd.f32 0.0, %v2483
        %v2485 = vpop.f32.mrb[0].mxu0
        %2486 = vmatprep.mubr.bf16.mxu0 %v1723
        %2487 = vmatmul.mubr.bf16.gmra.mrb[0].mxu0 %v1722
        %v2488 = vpop.f32.mrb[0].mxu0
        %v2489 = vadd.f32 0.0, %v2488
        %v2490 = vpop.f32.mrb[0].mxu0
        %v2491 = vpop.f32.mrb[0].mxu0
        %v2492 = vadd.f32 0.0, %v2491
        %v2493 = vpop.f32.mrb[0].mxu0
        %2494 = vmatprep.mubr.bf16.mxu0 %v1727
        %2495 = vmatmul.mubr.bf16.gmra.mrb[0].mxu0 %v1726
        %v2496 = vpop.f32.mrb[0].mxu0
        %v2497 = vadd.f32 0.0, %v2496
        %v2498 = vpop.f32.mrb[0].mxu0
        %v2499 = vpop.f32.mrb[0].mxu0
        %v2500 = vadd.f32 0.0, %v2499
        %v2501 = vpop.f32.mrb[0].mxu0
        %2502 = vmatprep.mubr.bf16.mxu0 %v1731
        %2503 = vmatmul.mubr.bf16.gmra.mrb[0].mxu0 %v1730
        %v2504 = vpop.f32.mrb[0].mxu0
        %v2505 = vadd.f32 0.0, %v2504
        %v2506 = vpop.f32.mrb[0].mxu0
        %v2507 = vpop.f32.mrb[0].mxu0
        %v2508 = vadd.f32 0.0, %v2507
        %v2509 = vpop.f32.mrb[0].mxu0
        %2510 = vmatprep.mubr.bf16.mxu0 %v1735
        %2511 = vmatmul.mubr.bf16.gmra.mrb[0].mxu0 %v1734
        %v2512 = vpop.f32.mrb[0].mxu0
        %v2513 = vadd.f32 0.0, %v2512
        %v2514 = vpop.f32.mrb[0].mxu0
        %v2515 = vpop.f32.mrb[0].mxu0
        %v2516 = vadd.f32 0.0, %v2515
        %v2517 = vpop.f32.mrb[0].mxu0
        %2518 = vmatprep.mubr.bf16.mxu0 %v1739
        %2519 = vmatmul.mubr.bf16.gmra.mrb[0].mxu0 %v1738
        %v2520 = vpop.f32.mrb[0].mxu0
        %v2521 = vadd.f32 0.0, %v2520
        %v2522 = vpop.f32.mrb[0].mxu0
        %v2523 = vpop.f32.mrb[0].mxu0
        %v2524 = vadd.f32 0.0, %v2523
        %v2525 = vpop.f32.mrb[0].mxu0
        %2526 = vmatprep.mubr.bf16.mxu0 %v1743
        %2527 = vmatmul.mubr.bf16.gmra.mrb[0].mxu0 %v1742
        %v2528 = vpop.f32.mrb[0].mxu0
        %v2529 = vadd.f32 0.0, %v2528
        %v2530 = vpop.f32.mrb[0].mxu0
        %v2531 = vpop.f32.mrb[0].mxu0
        %v2532 = vadd.f32 0.0, %v2531
        %v2533 = vpop.f32.mrb[0].mxu0
        %2534 = vmatprep.mubr.bf16.mxu0 %v1747
        %2535 = vmatmul.mubr.bf16.gmra.mrb[0].mxu0 %v1746
        %v2536 = vpop.f32.mrb[0].mxu0
        %v2537 = vadd.f32 0.0, %v2536
        %v2538 = vpop.f32.mrb[0].mxu0
        %v2539 = vpop.f32.mrb[0].mxu0
        %v2540 = vadd.f32 0.0, %v2539
        %v2541 = vpop.f32.mrb[0].mxu0
        %2542 = vmatprep.mubr.bf16.mxu0 %v1751
        %2543 = vmatmul.mubr.bf16.gmra.mrb[0].mxu0 %v1750
        %v2544 = vpop.f32.mrb[0].mxu0
        %v2545 = vadd.f32 0.0, %v2544
        %v2546 = vpop.f32.mrb[0].mxu0
        %v2547 = vpop.f32.mrb[0].mxu0
        %v2548 = vadd.f32 0.0, %v2547
        %v2549 = vpop.f32.mrb[0].mxu0
        %2550 = vmatprep.mubr.bf16.mxu0 %v1755
        %2551 = vmatmul.mubr.bf16.gmra.mrb[0].mxu0 %v1754
        %v2552 = vpop.f32.mrb[0].mxu0
        %v2553 = vadd.f32 0.0, %v2552
        %v2554 = vpop.f32.mrb[0].mxu0
        %v2555 = vpop.f32.mrb[0].mxu0
        %v2556 = vadd.f32 0.0, %v2555
        %v2557 = vpop.f32.mrb[0].mxu0
        %2558 = vmatprep.mubr.bf16.mxu0 %v1759
        %2559 = vmatmul.mubr.bf16.gmra.mrb[0].mxu0 %v1758
        %v2560 = vpop.f32.mrb[0].mxu0
        %v2561 = vadd.f32 0.0, %v2560
        %v2562 = vpop.f32.mrb[0].mxu0
        %v2563 = vpop.f32.mrb[0].mxu0
        %v2564 = vadd.f32 0.0, %v2563
        %v2565 = vpop.f32.mrb[0].mxu0
        %2566 = vmatprep.mubr.bf16.mxu0 %v1763
        %2567 = vmatmul.mubr.bf16.gmra.mrb[0].mxu0 %v1762
        %v2568 = vpop.f32.mrb[0].mxu0
        %v2569 = vadd.f32 0.0, %v2568
        %v2570 = vpop.f32.mrb[0].mxu0
        %v2571 = vpop.f32.mrb[0].mxu0
        %v2572 = vadd.f32 0.0, %v2571
        %v2573 = vpop.f32.mrb[0].mxu0
        %2574 = vmatprep.mubr.bf16.mxu0 %v1767
        %2575 = vmatmul.mubr.bf16.gmra.mrb[0].mxu0 %v1766
        %v2576 = vpop.f32.mrb[0].mxu0
        %v2577 = vadd.f32 0.0, %v2576
        %v2578 = vpop.f32.mrb[0].mxu0
        %v2579 = vpop.f32.mrb[0].mxu0
        %v2580 = vadd.f32 0.0, %v2579
        %v2581 = vpop.f32.mrb[0].mxu0
        %2582 = vmatprep.mubr.bf16.mxu0 %v1771
        %2583 = vmatmul.mubr.bf16.gmra.mrb[0].mxu0 %v1770
        %v2584 = vpop.f32.mrb[0].mxu0
        %v2585 = vadd.f32 0.0, %v2584
        %v2586 = vpop.f32.mrb[0].mxu0
        %v2587 = vpop.f32.mrb[0].mxu0
        %v2588 = vadd.f32 0.0, %v2587
        %v2589 = vpop.f32.mrb[0].mxu0
        %2590 = vmatprep.mubr.bf16.mxu0 %v1775
        %2591 = vmatmul.mubr.bf16.gmra.mrb[0].mxu0 %v1774
        %v2592 = vpop.f32.mrb[0].mxu0
        %v2593 = vadd.f32 0.0, %v2592
        %v2594 = vpop.f32.mrb[0].mxu0
        %v2595 = vpop.f32.mrb[0].mxu0
        %v2596 = vadd.f32 0.0, %v2595
        %v2597 = vpop.f32.mrb[0].mxu0
        %2598 = vmatprep.mubr.bf16.mxu0 %v1779
        %2599 = vmatmul.mubr.bf16.gmra.mrb[0].mxu0 %v1778
        %v2600 = vpop.f32.mrb[0].mxu0
        %v2601 = vadd.f32 0.0, %v2600
        %v2602 = vpop.f32.mrb[0].mxu0
        %v2603 = vpop.f32.mrb[0].mxu0
        %v2604 = vadd.f32 0.0, %v2603
        %v2605 = vpop.f32.mrb[0].mxu0
        %2606 = vmatprep.mubr.bf16.mxu0 %v1783
        %2607 = vmatmul.mubr.bf16.gmra.mrb[0].mxu0 %v1782
        %v2608 = vpop.f32.mrb[0].mxu0
        %v2609 = vadd.f32 0.0, %v2608
        %v2610 = vpop.f32.mrb[0].mxu0
        %v2611 = vpop.f32.mrb[0].mxu0
        %v2612 = vadd.f32 0.0, %v2611
        %v2613 = vpop.f32.mrb[0].mxu0
        %2614 = vmatprep.mubr.bf16.mxu0 %v1787
        %2615 = vmatmul.mubr.bf16.gmra.mrb[0].mxu0 %v1786
        %v2616 = vpop.f32.mrb[0].mxu0
        %v2617 = vadd.f32 0.0, %v2616
        %v2618 = vpop.f32.mrb[0].mxu0
        %v2619 = vpop.f32.mrb[0].mxu0
        %v2620 = vadd.f32 0.0, %v2619
        %v2621 = vpop.f32.mrb[0].mxu0
        %2622 = vmatprep.mubr.bf16.mxu0 %v1791
        %2623 = vmatmul.mubr.bf16.gmra.mrb[0].mxu0 %v1790
        %v2624 = vpop.f32.mrb[0].mxu0
        %v2625 = vadd.f32 0.0, %v2624
        %v2626 = vpop.f32.mrb[0].mxu0
        %v2627 = vpop.f32.mrb[0].mxu0
        %v2628 = vadd.f32 0.0, %v2627
        %v2629 = vpop.f32.mrb[0].mxu0
        %2630 = vmatprep.mubr.bf16.mxu0 %v1795
        %2631 = vmatmul.mubr.bf16.gmra.mrb[0].mxu0 %v1794
        %v2632 = vpop.f32.mrb[0].mxu0
        %v2633 = vadd.f32 0.0, %v2632
        %v2634 = vpop.f32.mrb[0].mxu0
        %v2635 = vpop.f32.mrb[0].mxu0
        %v2636 = vadd.f32 0.0, %v2635
        %v2637 = vpop.f32.mrb[0].mxu0
        %2638 = vmatprep.mubr.bf16.mxu0 %v1799
        %2639 = vmatmul.mubr.bf16.gmra.mrb[0].mxu0 %v1798
        %v2640 = vpop.f32.mrb[0].mxu0
        %v2641 = vadd.f32 0.0, %v2640
        %v2642 = vpop.f32.mrb[0].mxu0
        %v2643 = vpop.f32.mrb[0].mxu0
        %v2644 = vadd.f32 0.0, %v2643
        %v2645 = vpop.f32.mrb[0].mxu0
        %2646 = vmatprep.mubr.bf16.mxu0 %v1803
        %2647 = vmatmul.mubr.bf16.gmra.mrb[0].mxu0 %v1802
        %v2648 = vpop.f32.mrb[0].mxu0
        %v2649 = vadd.f32 0.0, %v2648
        %v2650 = vpop.f32.mrb[0].mxu0
        %v2651 = vpop.f32.mrb[0].mxu0
        %v2652 = vadd.f32 0.0, %v2651
        %v2653 = vpop.f32.mrb[0].mxu0
        %2654 = vmatprep.mubr.bf16.mxu0 %v1807
        %2655 = vmatmul.mubr.bf16.gmra.mrb[0].mxu0 %v1806
        %v2656 = vpop.f32.mrb[0].mxu0
        %v2657 = vadd.f32 0.0, %v2656
        %v2658 = vpop.f32.mrb[0].mxu0
        %v2659 = vpop.f32.mrb[0].mxu0
        %v2660 = vadd.f32 0.0, %v2659
        %v2661 = vpop.f32.mrb[0].mxu0
        %2662 = vmatprep.mubr.bf16.mxu0 %v1811
        %2663 = vmatmul.mubr.bf16.gmra.mrb[0].mxu0 %v1810
        %v2664 = vpop.f32.mrb[0].mxu0
        %v2665 = vadd.f32 0.0, %v2664
        %v2666 = vpop.f32.mrb[0].mxu0
        %v2667 = vpop.f32.mrb[0].mxu0
        %v2668 = vadd.f32 0.0, %v2667
        %v2669 = vpop.f32.mrb[0].mxu0
        %2670 = vmatprep.mubr.bf16.mxu0 %v1815
        %2671 = vmatmul.mubr.bf16.gmra.mrb[0].mxu0 %v1814
        %v2672 = vpop.f32.mrb[0].mxu0
        %v2673 = vadd.f32 0.0, %v2672
        %v2674 = vpop.f32.mrb[0].mxu0
        %v2675 = vpop.f32.mrb[0].mxu0
        %v2676 = vadd.f32 0.0, %v2675
        %v2677 = vpop.f32.mrb[0].mxu0
        %2678 = vmatprep.mubr.bf16.mxu0 %v1819
        %2679 = vmatmul.mubr.bf16.gmra.mrb[0].mxu0 %v1818
        %v2680 = vpop.f32.mrb[0].mxu0
        %v2681 = vadd.f32 0.0, %v2680
        %v2682 = vpop.f32.mrb[0].mxu0
        %v2683 = vpop.f32.mrb[0].mxu0
        %v2684 = vadd.f32 0.0, %v2683
        %v2685 = vpop.f32.mrb[0].mxu0
        %2686 = vmatprep.mubr.bf16.mxu0 %v1823
        %2687 = vmatmul.mubr.bf16.gmra.mrb[0].mxu0 %v1822
        %v2688 = vpop.f32.mrb[0].mxu0
        %v2689 = vadd.f32 0.0, %v2688
        %v2690 = vpop.f32.mrb[0].mxu0
        %v2691 = vpop.f32.mrb[0].mxu0
        %v2692 = vadd.f32 0.0, %v2691
        %v2693 = vpop.f32.mrb[0].mxu0
        %2694 = vmatprep.mubr.bf16.mxu0 %v1827
        %2695 = vmatmul.mubr.bf16.gmra.mrb[0].mxu0 %v1826
        %v2696 = vpop.f32.mrb[0].mxu0
        %v2697 = vadd.f32 0.0, %v2696
        %v2698 = vpop.f32.mrb[0].mxu0
        %v2699 = vpop.f32.mrb[0].mxu0
        %v2700 = vadd.f32 0.0, %v2699
        %v2701 = vpop.f32.mrb[0].mxu0
        %2702 = vmatprep.mubr.bf16.mxu0 %v1831
        %2703 = vmatmul.mubr.bf16.gmra.mrb[0].mxu0 %v1830
        %v2704 = vpop.f32.mrb[0].mxu0
        %v2705 = vadd.f32 0.0, %v2704
        %v2706 = vpop.f32.mrb[0].mxu0
        %v2707 = vpop.f32.mrb[0].mxu0
        %v2708 = vadd.f32 0.0, %v2707
        %v2709 = vpop.f32.mrb[0].mxu0
        %2710 = vmatprep.mubr.bf16.mxu0 %v1835
        %2711 = vmatmul.mubr.bf16.gmra.mrb[0].mxu0 %v1834
        %v2712 = vpop.f32.mrb[0].mxu0
        %v2713 = vadd.f32 0.0, %v2712
        %v2714 = vpop.f32.mrb[0].mxu0
        %v2715 = vpop.f32.mrb[0].mxu0
        %v2716 = vadd.f32 0.0, %v2715
        %v2717 = vpop.f32.mrb[0].mxu0
        %2718 = vmatprep.mubr.bf16.mxu0 %v1839
        %2719 = vmatmul.mubr.bf16.gmra.mrb[0].mxu0 %v1838
        %v2720 = vpop.f32.mrb[0].mxu0
        %v2721 = vadd.f32 0.0, %v2720
        %v2722 = vpop.f32.mrb[0].mxu0
        %v2723 = vpop.f32.mrb[0].mxu0
        %v2724 = vadd.f32 0.0, %v2723
        %v2725 = vpop.f32.mrb[0].mxu0
        %2726 = vmatprep.mubr.bf16.mxu0 %v1843
        %2727 = vmatmul.mubr.bf16.gmra.mrb[0].mxu0 %v1842
        %v2728 = vpop.f32.mrb[0].mxu0
        %v2729 = vadd.f32 0.0, %v2728
        %v2730 = vpop.f32.mrb[0].mxu0
        %v2731 = vpop.f32.mrb[0].mxu0
        %v2732 = vadd.f32 0.0, %v2731
        %v2733 = vpop.f32.mrb[0].mxu0
        %2734 = vmatprep.mubr.bf16.mxu0 %v1847
        %2735 = vmatmul.mubr.bf16.gmra.mrb[0].mxu0 %v1846
        %v2736 = vpop.f32.mrb[0].mxu0
        %v2737 = vadd.f32 0.0, %v2736
        %v2738 = vpop.f32.mrb[0].mxu0
        %v2739 = vpop.f32.mrb[0].mxu0
        %v2740 = vadd.f32 0.0, %v2739
        %v2741 = vpop.f32.mrb[0].mxu0
        %2742 = vmatprep.mubr.bf16.mxu0 %v1851
        %2743 = vmatmul.mubr.bf16.gmra.mrb[0].mxu0 %v1850
        %v2744 = vpop.f32.mrb[0].mxu0
        %v2745 = vadd.f32 0.0, %v2744
        %v2746 = vpop.f32.mrb[0].mxu0
        %v2747 = vpop.f32.mrb[0].mxu0
        %v2748 = vadd.f32 0.0, %v2747
        %v2749 = vpop.f32.mrb[0].mxu0
        %2750 = vmatprep.mubr.bf16.mxu0 %v1855
        %2751 = vmatmul.mubr.bf16.gmra.mrb[0].mxu0 %v1854
        %v2752 = vpop.f32.mrb[0].mxu0
        %v2753 = vadd.f32 0.0, %v2752
        %v2754 = vpop.f32.mrb[0].mxu0
        %v2755 = vpop.f32.mrb[0].mxu0
        %v2756 = vadd.f32 0.0, %v2755
        %v2757 = vpop.f32.mrb[0].mxu0
        %2758 = vmatprep.mubr.bf16.mxu0 %v1859
        %2759 = vmatmul.mubr.bf16.gmra.mrb[0].mxu0 %v1858
        %v2760 = vpop.f32.mrb[0].mxu0
        %v2761 = vadd.f32 0.0, %v2760
        %v2762 = vpop.f32.mrb[0].mxu0
        %v2763 = vpop.f32.mrb[0].mxu0
        %v2764 = vadd.f32 0.0, %v2763
        %v2765 = vpop.f32.mrb[0].mxu0
        %2766 = vmatprep.mubr.bf16.mxu0 %v1863
        %2767 = vmatmul.mubr.bf16.gmra.mrb[0].mxu0 %v1862
        %v2768 = vpop.f32.mrb[0].mxu0
        %v2769 = vadd.f32 0.0, %v2768
        %v2770 = vpop.f32.mrb[0].mxu0
        %v2771 = vpop.f32.mrb[0].mxu0
        %v2772 = vadd.f32 0.0, %v2771
        %v2773 = vpop.f32.mrb[0].mxu0
        %2774 = vmatprep.mubr.bf16.mxu0 %v1867
        %2775 = vmatmul.mubr.bf16.gmra.mrb[0].mxu0 %v1866
        %v2776 = vpop.f32.mrb[0].mxu0
        %v2777 = vadd.f32 0.0, %v2776
        %v2778 = vpop.f32.mrb[0].mxu0
        %v2779 = vpop.f32.mrb[0].mxu0
        %v2780 = vadd.f32 0.0, %v2779
        %v2781 = vpop.f32.mrb[0].mxu0
        %2782 = vmatprep.mubr.bf16.mxu0 %v1871
        %2783 = vmatmul.mubr.bf16.gmra.mrb[0].mxu0 %v1870
        %v2784 = vpop.f32.mrb[0].mxu0
        %v2785 = vadd.f32 0.0, %v2784
        %v2786 = vpop.f32.mrb[0].mxu0
        %v2787 = vpop.f32.mrb[0].mxu0
        %v2788 = vadd.f32 0.0, %v2787
        %v2789 = vpop.f32.mrb[0].mxu0
        %2790 = vmatprep.mubr.bf16.mxu0 %v1875
        %2791 = vmatmul.mubr.bf16.gmra.mrb[0].mxu0 %v1874
        %v2792 = vpop.f32.mrb[0].mxu0
        %v2793 = vadd.f32 0.0, %v2792
        %v2794 = vpop.f32.mrb[0].mxu0
        %v2795 = vpop.f32.mrb[0].mxu0
        %v2796 = vadd.f32 0.0, %v2795
        %v2797 = vpop.f32.mrb[0].mxu0
        %2798 = vmatprep.mubr.bf16.mxu0 %v1879
        %2799 = vmatmul.mubr.bf16.gmra.mrb[0].mxu0 %v1878
        %v2800 = vpop.f32.mrb[0].mxu0
        %v2801 = vadd.f32 0.0, %v2800
        %v2802 = vpop.f32.mrb[0].mxu0
        %v2803 = vpop.f32.mrb[0].mxu0
        %v2804 = vadd.f32 0.0, %v2803
        %v2805 = vpop.f32.mrb[0].mxu0
        %2806 = vmatprep.mubr.bf16.mxu0 %v1883
        %2807 = vmatmul.mubr.bf16.gmra.mrb[0].mxu0 %v1882
        %v2808 = vpop.f32.mrb[0].mxu0
        %v2809 = vadd.f32 0.0, %v2808
        %v2810 = vpop.f32.mrb[0].mxu0
        %v2811 = vpop.f32.mrb[0].mxu0
        %v2812 = vadd.f32 0.0, %v2811
        %v2813 = vpop.f32.mrb[0].mxu0
        %2814 = vmatprep.mubr.bf16.mxu0 %v1887
        %2815 = vmatmul.mubr.bf16.gmra.mrb[0].mxu0 %v1886
        %v2816 = vpop.f32.mrb[0].mxu0
        %v2817 = vadd.f32 0.0, %v2816
        %v2818 = vpop.f32.mrb[0].mxu0
        %v2819 = vpop.f32.mrb[0].mxu0
        %v2820 = vadd.f32 0.0, %v2819
        %v2821 = vpop.f32.mrb[0].mxu0
        %2822 = vmatprep.mubr.bf16.mxu0 %v1891
        %2823 = vmatmul.mubr.bf16.gmra.mrb[0].mxu0 %v1890
        %v2824 = vpop.f32.mrb[0].mxu0
        %v2825 = vadd.f32 0.0, %v2824
        %v2826 = vpop.f32.mrb[0].mxu0
        %v2827 = vpop.f32.mrb[0].mxu0
        %v2828 = vadd.f32 0.0, %v2827
        %v2829 = vpop.f32.mrb[0].mxu0
        %2830 = vmatprep.mubr.bf16.mxu0 %v1895
        %2831 = vmatmul.mubr.bf16.gmra.mrb[0].mxu0 %v1894
        %v2832 = vpop.f32.mrb[0].mxu0
        %v2833 = vadd.f32 0.0, %v2832
        %v2834 = vpop.f32.mrb[0].mxu0
        %v2835 = vpop.f32.mrb[0].mxu0
        %v2836 = vadd.f32 0.0, %v2835
        %v2837 = vpop.f32.mrb[0].mxu0
        %2838 = vmatprep.mubr.bf16.mxu0 %v1899
        %2839 = vmatmul.mubr.bf16.gmra.mrb[0].mxu0 %v1898
        %v2840 = vpop.f32.mrb[0].mxu0
        %v2841 = vadd.f32 0.0, %v2840
        %v2842 = vpop.f32.mrb[0].mxu0
        %v2843 = vpop.f32.mrb[0].mxu0
        %v2844 = vadd.f32 0.0, %v2843
        %v2845 = vpop.f32.mrb[0].mxu0
        %2846 = vmatprep.mubr.bf16.mxu0 %v1903
        %2847 = vmatmul.mubr.bf16.gmra.mrb[0].mxu0 %v1902
        %v2848 = vpop.f32.mrb[0].mxu0
        %v2849 = vadd.f32 0.0, %v2848
        %v2850 = vpop.f32.mrb[0].mxu0
        %v2851 = vpop.f32.mrb[0].mxu0
        %v2852 = vadd.f32 0.0, %v2851
        %v2853 = vpop.f32.mrb[0].mxu0
        %2854 = vmatprep.mubr.bf16.mxu0 %v1907
        %2855 = vmatmul.mubr.bf16.gmra.mrb[0].mxu0 %v1906
        %v2856 = vpop.f32.mrb[0].mxu0
        %v2857 = vadd.f32 0.0, %v2856
        %v2858 = vpop.f32.mrb[0].mxu0
        %v2859 = vpop.f32.mrb[0].mxu0
        %v2860 = vadd.f32 0.0, %v2859
        %v2861 = vpop.f32.mrb[0].mxu0
        %2862 = vmatprep.mubr.bf16.mxu0 %v1911
        %2863 = vmatmul.mubr.bf16.gmra.mrb[0].mxu0 %v1910
        %v2864 = vpop.f32.mrb[0].mxu0
        %v2865 = vadd.f32 0.0, %v2864
        %v2866 = vpop.f32.mrb[0].mxu0
        %v2867 = vpop.f32.mrb[0].mxu0
        %v2868 = vadd.f32 0.0, %v2867
        %v2869 = vpop.f32.mrb[0].mxu0
        %2870 = vmatprep.mubr.bf16.mxu0 %v1915
        %2871 = vmatmul.mubr.bf16.gmra.mrb[0].mxu0 %v1914
        %v2872 = vpop.f32.mrb[0].mxu0
        %v2873 = vadd.f32 0.0, %v2872
        %v2874 = vpop.f32.mrb[0].mxu0
        %v2875 = vpop.f32.mrb[0].mxu0
        %v2876 = vadd.f32 0.0, %v2875
        %v2877 = vpop.f32.mrb[0].mxu0
        %2878 = vmatprep.mubr.bf16.mxu0 %v1919
        %2879 = vmatmul.mubr.bf16.gmra.mrb[0].mxu0 %v1918
        %v2880 = vpop.f32.mrb[0].mxu0
        %v2881 = vadd.f32 0.0, %v2880
        %v2882 = vpop.f32.mrb[0].mxu0
        %v2883 = vpop.f32.mrb[0].mxu0
        %v2884 = vadd.f32 0.0, %v2883
        %v2885 = vpop.f32.mrb[0].mxu0
        %2886 = vmatprep.mubr.bf16.mxu0 %v1923
        %2887 = vmatmul.mubr.bf16.gmra.mrb[0].mxu0 %v1922
        %v2888 = vpop.f32.mrb[0].mxu0
        %v2889 = vadd.f32 0.0, %v2888
        %v2890 = vpop.f32.mrb[0].mxu0
        %v2891 = vpop.f32.mrb[0].mxu0
        %v2892 = vadd.f32 0.0, %v2891
        %v2893 = vpop.f32.mrb[0].mxu0
        %2894 = vmatprep.mubr.bf16.mxu0 %v1927
        %2895 = vmatmul.mubr.bf16.gmra.mrb[0].mxu0 %v1926
        %v2896 = vpop.f32.mrb[0].mxu0
        %v2897 = vadd.f32 0.0, %v2896
        %v2898 = vpop.f32.mrb[0].mxu0
        %v2899 = vpop.f32.mrb[0].mxu0
        %v2900 = vadd.f32 0.0, %v2899
        %v2901 = vpop.f32.mrb[0].mxu0
        %2902 = vmatprep.mubr.bf16.mxu0 %v1931
        %2903 = vmatmul.mubr.bf16.gmra.mrb[0].mxu0 %v1930
        %v2904 = vpop.f32.mrb[0].mxu0
        %v2905 = vadd.f32 0.0, %v2904
        %v2906 = vpop.f32.mrb[0].mxu0
        %v2907 = vpop.f32.mrb[0].mxu0
        %v2908 = vadd.f32 0.0, %v2907
        %v2909 = vpop.f32.mrb[0].mxu0
        %2910 = vmatprep.mubr.bf16.mxu0 %v1935
        %2911 = vmatmul.mubr.bf16.gmra.mrb[0].mxu0 %v1934
        %v2912 = vpop.f32.mrb[0].mxu0
        %v2913 = vadd.f32 0.0, %v2912
        %v2914 = vpop.f32.mrb[0].mxu0
        %v2915 = vpop.f32.mrb[0].mxu0
        %v2916 = vadd.f32 0.0, %v2915
        %v2917 = vpop.f32.mrb[0].mxu0
        %2918 = vmatprep.mubr.bf16.mxu0 %v1939
        %2919 = vmatmul.mubr.bf16.gmra.mrb[0].mxu0 %v1938
        %v2920 = vpop.f32.mrb[0].mxu0
        %v2921 = vadd.f32 0.0, %v2920
        %v2922 = vpop.f32.mrb[0].mxu0
        %v2923 = vpop.f32.mrb[0].mxu0
        %v2924 = vadd.f32 0.0, %v2923
        %v2925 = vpop.f32.mrb[0].mxu0
        %2926 = vmatprep.mubr.bf16.mxu0 %v1943
        %2927 = vmatmul.mubr.bf16.gmra.mrb[0].mxu0 %v1942
        %v2928 = vpop.f32.mrb[0].mxu0
        %v2929 = vadd.f32 0.0, %v2928
        %v2930 = vpop.f32.mrb[0].mxu0
        %v2931 = vpop.f32.mrb[0].mxu0
        %v2932 = vadd.f32 0.0, %v2931
        %v2933 = vpop.f32.mrb[0].mxu0
        %2934 = vmatprep.mubr.bf16.mxu0 %v1947
        %2935 = vmatmul.mubr.bf16.gmra.mrb[0].mxu0 %v1946
        %v2936 = vpop.f32.mrb[0].mxu0
        %v2937 = vadd.f32 0.0, %v2936
        %v2938 = vpop.f32.mrb[0].mxu0
        %v2939 = vpop.f32.mrb[0].mxu0
        %v2940 = vadd.f32 0.0, %v2939
        %v2941 = vpop.f32.mrb[0].mxu0
        %2942 = vdwg.mxu0
        %2943 = vmatprep.subr.bf16.mxu0 0
        %2944 = vmatpush1.bf16.msra.mxu0 %v2350
        %2945 = vmatprep.subr.bf16.mxu0 0
        %2946 = vmatpush1.bf16.msra.mxu0 %v2351
        %2947 = vmatprep.subr.bf16.mxu0 0
        %2948 = vmatpush1.bf16.msra.mxu0 %v2352
        %2949 = vmatprep.subr.bf16.mxu0 0
        %2950 = vmatpush1.bf16.msra.mxu0 %v2353
        %2951 = vmatprep.subr.bf16.mxu0 0
        %2952 = vmatpush1.bf16.msra.mxu0 %v2354
        %2953 = vmatprep.subr.bf16.mxu0 0
        %2954 = vmatpush1.bf16.msra.mxu0 %v2355
        %2955 = vmatprep.subr.bf16.mxu0 0
        %2956 = vmatpush1.bf16.msra.mxu0 %v2356
        %2957 = vmatprep.subr.bf16.mxu0 0
        %2958 = vmatpush1.bf16.msra.mxu0 %v2357
        %2959 = vmatprep.subr.bf16.mxu0 0
        %2960 = vmatpush1.bf16.msra.mxu0 %v2358
        %2961 = vmatprep.subr.bf16.mxu0 0
        %2962 = vmatpush1.bf16.msra.mxu0 %v2359
        %2963 = vmatprep.subr.bf16.mxu0 0
        %2964 = vmatpush1.bf16.msra.mxu0 %v2360
        %2965 = vmatprep.subr.bf16.mxu0 0
        %2966 = vmatpush1.bf16.msra.mxu0 %v2361
        %2967 = vmatprep.subr.bf16.mxu0 0
        %2968 = vmatpush1.bf16.msra.mxu0 %v2362
        %2969 = vmatprep.subr.bf16.mxu0 0
        %2970 = vmatpush1.bf16.msra.mxu0 %v2363
        %2971 = vmatprep.subr.bf16.mxu0 0
        %2972 = vmatpush1.bf16.msra.mxu0 %v2364
        %2973 = vmatprep.subr.bf16.mxu0 0
        %2974 = vmatpush1.bf16.msra.mxu0 %v2365
        %2975 = vmatprep.mubr.bf16.mxu0 %v1697
        %2976 = vmatmul.mubr.bf16.gmra.mrb[0].mxu0 %v1696
        %v2977 = vpop.f32.mrb[0].mxu0
        %v2978 = vadd.f32 %v2433, %v2977
        %v2979 = vpop.f32.mrb[0].mxu0
        %v2980 = vpop.f32.mrb[0].mxu0
        %v2981 = vadd.f32 %v2436, %v2980
        %v2982 = vpop.f32.mrb[0].mxu0
        %2983 = vmatprep.mubr.bf16.mxu0 %v1701
        %2984 = vmatmul.mubr.bf16.gmra.mrb[0].mxu0 %v1700
        %v2985 = vpop.f32.mrb[0].mxu0
        %v2986 = vadd.f32 %v2441, %v2985
        %v2987 = vpop.f32.mrb[0].mxu0
        %v2988 = vpop.f32.mrb[0].mxu0
        %v2989 = vadd.f32 %v2444, %v2988
        %v2990 = vpop.f32.mrb[0].mxu0
        %2991 = vmatprep.mubr.bf16.mxu0 %v1705
        %2992 = vmatmul.mubr.bf16.gmra.mrb[0].mxu0 %v1704
        %v2993 = vpop.f32.mrb[0].mxu0
        %v2994 = vadd.f32 %v2449, %v2993
        %v2995 = vpop.f32.mrb[0].mxu0
        %v2996 = vpop.f32.mrb[0].mxu0
        %v2997 = vadd.f32 %v2452, %v2996
        %v2998 = vpop.f32.mrb[0].mxu0
        %2999 = vmatprep.mubr.bf16.mxu0 %v1709
        %3000 = vmatmul.mubr.bf16.gmra.mrb[0].mxu0 %v1708
        %v3001 = vpop.f32.mrb[0].mxu0
        %v3002 = vadd.f32 %v2457, %v3001
        %v3003 = vpop.f32.mrb[0].mxu0
        %v3004 = vpop.f32.mrb[0].mxu0
        %v3005 = vadd.f32 %v2460, %v3004
        %v3006 = vpop.f32.mrb[0].mxu0
        %3007 = vmatprep.mubr.bf16.mxu0 %v1713
        %3008 = vmatmul.mubr.bf16.gmra.mrb[0].mxu0 %v1712
        %v3009 = vpop.f32.mrb[0].mxu0
        %v3010 = vadd.f32 %v2465, %v3009
        %v3011 = vpop.f32.mrb[0].mxu0
        %v3012 = vpop.f32.mrb[0].mxu0
        %v3013 = vadd.f32 %v2468, %v3012
        %v3014 = vpop.f32.mrb[0].mxu0
        %3015 = vmatprep.mubr.bf16.mxu0 %v1717
        %3016 = vmatmul.mubr.bf16.gmra.mrb[0].mxu0 %v1716
        %v3017 = vpop.f32.mrb[0].mxu0
        %v3018 = vadd.f32 %v2473, %v3017
        %v3019 = vpop.f32.mrb[0].mxu0
        %v3020 = vpop.f32.mrb[0].mxu0
        %v3021 = vadd.f32 %v2476, %v3020
        %v3022 = vpop.f32.mrb[0].mxu0
        %3023 = vmatprep.mubr.bf16.mxu0 %v1721
        %3024 = vmatmul.mubr.bf16.gmra.mrb[0].mxu0 %v1720
        %v3025 = vpop.f32.mrb[0].mxu0
        %v3026 = vadd.f32 %v2481, %v3025
        %v3027 = vpop.f32.mrb[0].mxu0
        %v3028 = vpop.f32.mrb[0].mxu0
        %v3029 = vadd.f32 %v2484, %v3028
        %v3030 = vpop.f32.mrb[0].mxu0
        %3031 = vmatprep.mubr.bf16.mxu0 %v1725
        %3032 = vmatmul.mubr.bf16.gmra.mrb[0].mxu0 %v1724
        %v3033 = vpop.f32.mrb[0].mxu0
        %v3034 = vadd.f32 %v2489, %v3033
        %v3035 = vpop.f32.mrb[0].mxu0
        %v3036 = vpop.f32.mrb[0].mxu0
        %v3037 = vadd.f32 %v2492, %v3036
        %v3038 = vpop.f32.mrb[0].mxu0
        %3039 = vmatprep.mubr.bf16.mxu0 %v1729
        %3040 = vmatmul.mubr.bf16.gmra.mrb[0].mxu0 %v1728
        %v3041 = vpop.f32.mrb[0].mxu0
        %v3042 = vadd.f32 %v2497, %v3041
        %v3043 = vpop.f32.mrb[0].mxu0
        %v3044 = vpop.f32.mrb[0].mxu0
        %v3045 = vadd.f32 %v2500, %v3044
        %v3046 = vpop.f32.mrb[0].mxu0
        %3047 = vmatprep.mubr.bf16.mxu0 %v1733
        %3048 = vmatmul.mubr.bf16.gmra.mrb[0].mxu0 %v1732
        %v3049 = vpop.f32.mrb[0].mxu0
        %v3050 = vadd.f32 %v2505, %v3049
        %v3051 = vpop.f32.mrb[0].mxu0
        %v3052 = vpop.f32.mrb[0].mxu0
        %v3053 = vadd.f32 %v2508, %v3052
        %v3054 = vpop.f32.mrb[0].mxu0
        %3055 = vmatprep.mubr.bf16.mxu0 %v1737
        %3056 = vmatmul.mubr.bf16.gmra.mrb[0].mxu0 %v1736
        %v3057 = vpop.f32.mrb[0].mxu0
        %v3058 = vadd.f32 %v2513, %v3057
        %v3059 = vpop.f32.mrb[0].mxu0
        %v3060 = vpop.f32.mrb[0].mxu0
        %v3061 = vadd.f32 %v2516, %v3060
        %v3062 = vpop.f32.mrb[0].mxu0
        %3063 = vmatprep.mubr.bf16.mxu0 %v1741
        %3064 = vmatmul.mubr.bf16.gmra.mrb[0].mxu0 %v1740
        %v3065 = vpop.f32.mrb[0].mxu0
        %v3066 = vadd.f32 %v2521, %v3065
        %v3067 = vpop.f32.mrb[0].mxu0
        %v3068 = vpop.f32.mrb[0].mxu0
        %v3069 = vadd.f32 %v2524, %v3068
        %v3070 = vpop.f32.mrb[0].mxu0
        %3071 = vmatprep.mubr.bf16.mxu0 %v1745
        %3072 = vmatmul.mubr.bf16.gmra.mrb[0].mxu0 %v1744
        %v3073 = vpop.f32.mrb[0].mxu0
        %v3074 = vadd.f32 %v2529, %v3073
        %v3075 = vpop.f32.mrb[0].mxu0
        %v3076 = vpop.f32.mrb[0].mxu0
        %v3077 = vadd.f32 %v2532, %v3076
        %v3078 = vpop.f32.mrb[0].mxu0
        %3079 = vmatprep.mubr.bf16.mxu0 %v1749
        %3080 = vmatmul.mubr.bf16.gmra.mrb[0].mxu0 %v1748
        %v3081 = vpop.f32.mrb[0].mxu0
        %v3082 = vadd.f32 %v2537, %v3081
        %v3083 = vpop.f32.mrb[0].mxu0
        %v3084 = vpop.f32.mrb[0].mxu0
        %v3085 = vadd.f32 %v2540, %v3084
        %v3086 = vpop.f32.mrb[0].mxu0
        %3087 = vmatprep.mubr.bf16.mxu0 %v1753
        %3088 = vmatmul.mubr.bf16.gmra.mrb[0].mxu0 %v1752
        %v3089 = vpop.f32.mrb[0].mxu0
        %v3090 = vadd.f32 %v2545, %v3089
        %v3091 = vpop.f32.mrb[0].mxu0
        %v3092 = vpop.f32.mrb[0].mxu0
        %v3093 = vadd.f32 %v2548, %v3092
        %v3094 = vpop.f32.mrb[0].mxu0
        %3095 = vmatprep.mubr.bf16.mxu0 %v1757
        %3096 = vmatmul.mubr.bf16.gmra.mrb[0].mxu0 %v1756
        %v3097 = vpop.f32.mrb[0].mxu0
        %v3098 = vadd.f32 %v2553, %v3097
        %v3099 = vpop.f32.mrb[0].mxu0
        %v3100 = vpop.f32.mrb[0].mxu0
        %v3101 = vadd.f32 %v2556, %v3100
        %v3102 = vpop.f32.mrb[0].mxu0
        %3103 = vmatprep.mubr.bf16.mxu0 %v1761
        %3104 = vmatmul.mubr.bf16.gmra.mrb[0].mxu0 %v1760
        %v3105 = vpop.f32.mrb[0].mxu0
        %v3106 = vadd.f32 %v2561, %v3105
        %v3107 = vpop.f32.mrb[0].mxu0
        %v3108 = vpop.f32.mrb[0].mxu0
        %v3109 = vadd.f32 %v2564, %v3108
        %v3110 = vpop.f32.mrb[0].mxu0
        %3111 = vmatprep.mubr.bf16.mxu0 %v1765
        %3112 = vmatmul.mubr.bf16.gmra.mrb[0].mxu0 %v1764
        %v3113 = vpop.f32.mrb[0].mxu0
        %v3114 = vadd.f32 %v2569, %v3113
        %v3115 = vpop.f32.mrb[0].mxu0
        %v3116 = vpop.f32.mrb[0].mxu0
        %v3117 = vadd.f32 %v2572, %v3116
        %v3118 = vpop.f32.mrb[0].mxu0
        %3119 = vmatprep.mubr.bf16.mxu0 %v1769
        %3120 = vmatmul.mubr.bf16.gmra.mrb[0].mxu0 %v1768
        %v3121 = vpop.f32.mrb[0].mxu0
        %v3122 = vadd.f32 %v2577, %v3121
        %v3123 = vpop.f32.mrb[0].mxu0
        %v3124 = vpop.f32.mrb[0].mxu0
        %v3125 = vadd.f32 %v2580, %v3124
        %v3126 = vpop.f32.mrb[0].mxu0
        %3127 = vmatprep.mubr.bf16.mxu0 %v1773
        %3128 = vmatmul.mubr.bf16.gmra.mrb[0].mxu0 %v1772
        %v3129 = vpop.f32.mrb[0].mxu0
        %v3130 = vadd.f32 %v2585, %v3129
        %v3131 = vpop.f32.mrb[0].mxu0
        %v3132 = vpop.f32.mrb[0].mxu0
        %v3133 = vadd.f32 %v2588, %v3132
        %v3134 = vpop.f32.mrb[0].mxu0
        %3135 = vmatprep.mubr.bf16.mxu0 %v1777
        %3136 = vmatmul.mubr.bf16.gmra.mrb[0].mxu0 %v1776
        %v3137 = vpop.f32.mrb[0].mxu0
        %v3138 = vadd.f32 %v2593, %v3137
        %v3139 = vpop.f32.mrb[0].mxu0
        %v3140 = vpop.f32.mrb[0].mxu0
        %v3141 = vadd.f32 %v2596, %v3140
        %v3142 = vpop.f32.mrb[0].mxu0
        %3143 = vmatprep.mubr.bf16.mxu0 %v1781
        %3144 = vmatmul.mubr.bf16.gmra.mrb[0].mxu0 %v1780
        %v3145 = vpop.f32.mrb[0].mxu0
        %v3146 = vadd.f32 %v2601, %v3145
        %v3147 = vpop.f32.mrb[0].mxu0
        %v3148 = vpop.f32.mrb[0].mxu0
        %v3149 = vadd.f32 %v2604, %v3148
        %v3150 = vpop.f32.mrb[0].mxu0
        %3151 = vmatprep.mubr.bf16.mxu0 %v1785
        %3152 = vmatmul.mubr.bf16.gmra.mrb[0].mxu0 %v1784
        %v3153 = vpop.f32.mrb[0].mxu0
        %v3154 = vadd.f32 %v2609, %v3153
        %v3155 = vpop.f32.mrb[0].mxu0
        %v3156 = vpop.f32.mrb[0].mxu0
        %v3157 = vadd.f32 %v2612, %v3156
        %v3158 = vpop.f32.mrb[0].mxu0
        %3159 = vmatprep.mubr.bf16.mxu0 %v1789
        %3160 = vmatmul.mubr.bf16.gmra.mrb[0].mxu0 %v1788
        %v3161 = vpop.f32.mrb[0].mxu0
        %v3162 = vadd.f32 %v2617, %v3161
        %v3163 = vpop.f32.mrb[0].mxu0
        %v3164 = vpop.f32.mrb[0].mxu0
        %v3165 = vadd.f32 %v2620, %v3164
        %v3166 = vpop.f32.mrb[0].mxu0
        %3167 = vmatprep.mubr.bf16.mxu0 %v1793
        %3168 = vmatmul.mubr.bf16.gmra.mrb[0].mxu0 %v1792
        %v3169 = vpop.f32.mrb[0].mxu0
        %v3170 = vadd.f32 %v2625, %v3169
        %v3171 = vpop.f32.mrb[0].mxu0
        %v3172 = vpop.f32.mrb[0].mxu0
        %v3173 = vadd.f32 %v2628, %v3172
        %v3174 = vpop.f32.mrb[0].mxu0
        %3175 = vmatprep.mubr.bf16.mxu0 %v1797
        %3176 = vmatmul.mubr.bf16.gmra.mrb[0].mxu0 %v1796
        %v3177 = vpop.f32.mrb[0].mxu0
        %v3178 = vadd.f32 %v2633, %v3177
        %v3179 = vpop.f32.mrb[0].mxu0
        %v3180 = vpop.f32.mrb[0].mxu0
        %v3181 = vadd.f32 %v2636, %v3180
        %v3182 = vpop.f32.mrb[0].mxu0
        %3183 = vmatprep.mubr.bf16.mxu0 %v1801
        %3184 = vmatmul.mubr.bf16.gmra.mrb[0].mxu0 %v1800
        %v3185 = vpop.f32.mrb[0].mxu0
        %v3186 = vadd.f32 %v2641, %v3185
        %v3187 = vpop.f32.mrb[0].mxu0
        %v3188 = vpop.f32.mrb[0].mxu0
        %v3189 = vadd.f32 %v2644, %v3188
        %v3190 = vpop.f32.mrb[0].mxu0
        %3191 = vmatprep.mubr.bf16.mxu0 %v1805
        %3192 = vmatmul.mubr.bf16.gmra.mrb[0].mxu0 %v1804
        %v3193 = vpop.f32.mrb[0].mxu0
        %v3194 = vadd.f32 %v2649, %v3193
        %v3195 = vpop.f32.mrb[0].mxu0
        %v3196 = vpop.f32.mrb[0].mxu0
        %v3197 = vadd.f32 %v2652, %v3196
        %v3198 = vpop.f32.mrb[0].mxu0
        %3199 = vmatprep.mubr.bf16.mxu0 %v1809
        %3200 = vmatmul.mubr.bf16.gmra.mrb[0].mxu0 %v1808
        %v3201 = vpop.f32.mrb[0].mxu0
        %v3202 = vadd.f32 %v2657, %v3201
        %v3203 = vpop.f32.mrb[0].mxu0
        %v3204 = vpop.f32.mrb[0].mxu0
        %v3205 = vadd.f32 %v2660, %v3204
        %v3206 = vpop.f32.mrb[0].mxu0
        %3207 = vmatprep.mubr.bf16.mxu0 %v1813
        %3208 = vmatmul.mubr.bf16.gmra.mrb[0].mxu0 %v1812
        %v3209 = vpop.f32.mrb[0].mxu0
        %v3210 = vadd.f32 %v2665, %v3209
        %v3211 = vpop.f32.mrb[0].mxu0
        %v3212 = vpop.f32.mrb[0].mxu0
        %v3213 = vadd.f32 %v2668, %v3212
        %v3214 = vpop.f32.mrb[0].mxu0
        %3215 = vmatprep.mubr.bf16.mxu0 %v1817
        %3216 = vmatmul.mubr.bf16.gmra.mrb[0].mxu0 %v1816
        %v3217 = vpop.f32.mrb[0].mxu0
        %v3218 = vadd.f32 %v2673, %v3217
        %v3219 = vpop.f32.mrb[0].mxu0
        %v3220 = vpop.f32.mrb[0].mxu0
        %v3221 = vadd.f32 %v2676, %v3220
        %v3222 = vpop.f32.mrb[0].mxu0
        %3223 = vmatprep.mubr.bf16.mxu0 %v1821
        %3224 = vmatmul.mubr.bf16.gmra.mrb[0].mxu0 %v1820
        %v3225 = vpop.f32.mrb[0].mxu0
        %v3226 = vadd.f32 %v2681, %v3225
        %v3227 = vpop.f32.mrb[0].mxu0
        %v3228 = vpop.f32.mrb[0].mxu0
        %v3229 = vadd.f32 %v2684, %v3228
        %v3230 = vpop.f32.mrb[0].mxu0
        %3231 = vmatprep.mubr.bf16.mxu0 %v1825
        %3232 = vmatmul.mubr.bf16.gmra.mrb[0].mxu0 %v1824
        %v3233 = vpop.f32.mrb[0].mxu0
        %v3234 = vadd.f32 %v2689, %v3233
        %v3235 = vpop.f32.mrb[0].mxu0
        %v3236 = vpop.f32.mrb[0].mxu0
        %v3237 = vadd.f32 %v2692, %v3236
        %v3238 = vpop.f32.mrb[0].mxu0
        %3239 = vmatprep.mubr.bf16.mxu0 %v1829
        %3240 = vmatmul.mubr.bf16.gmra.mrb[0].mxu0 %v1828
        %v3241 = vpop.f32.mrb[0].mxu0
        %v3242 = vadd.f32 %v2697, %v3241
        %v3243 = vpop.f32.mrb[0].mxu0
        %v3244 = vpop.f32.mrb[0].mxu0
        %v3245 = vadd.f32 %v2700, %v3244
        %v3246 = vpop.f32.mrb[0].mxu0
        %3247 = vmatprep.mubr.bf16.mxu0 %v1833
        %3248 = vmatmul.mubr.bf16.gmra.mrb[0].mxu0 %v1832
        %v3249 = vpop.f32.mrb[0].mxu0
        %v3250 = vadd.f32 %v2705, %v3249
        %v3251 = vpop.f32.mrb[0].mxu0
        %v3252 = vpop.f32.mrb[0].mxu0
        %v3253 = vadd.f32 %v2708, %v3252
        %v3254 = vpop.f32.mrb[0].mxu0
        %3255 = vmatprep.mubr.bf16.mxu0 %v1837
        %3256 = vmatmul.mubr.bf16.gmra.mrb[0].mxu0 %v1836
        %v3257 = vpop.f32.mrb[0].mxu0
        %v3258 = vadd.f32 %v2713, %v3257
        %v3259 = vpop.f32.mrb[0].mxu0
        %v3260 = vpop.f32.mrb[0].mxu0
        %v3261 = vadd.f32 %v2716, %v3260
        %v3262 = vpop.f32.mrb[0].mxu0
        %3263 = vmatprep.mubr.bf16.mxu0 %v1841
        %3264 = vmatmul.mubr.bf16.gmra.mrb[0].mxu0 %v1840
        %v3265 = vpop.f32.mrb[0].mxu0
        %v3266 = vadd.f32 %v2721, %v3265
        %v3267 = vpop.f32.mrb[0].mxu0
        %v3268 = vpop.f32.mrb[0].mxu0
        %v3269 = vadd.f32 %v2724, %v3268
        %v3270 = vpop.f32.mrb[0].mxu0
        %3271 = vmatprep.mubr.bf16.mxu0 %v1845
        %3272 = vmatmul.mubr.bf16.gmra.mrb[0].mxu0 %v1844
        %v3273 = vpop.f32.mrb[0].mxu0
        %v3274 = vadd.f32 %v2729, %v3273
        %v3275 = vpop.f32.mrb[0].mxu0
        %v3276 = vpop.f32.mrb[0].mxu0
        %v3277 = vadd.f32 %v2732, %v3276
        %v3278 = vpop.f32.mrb[0].mxu0
        %3279 = vmatprep.mubr.bf16.mxu0 %v1849
        %3280 = vmatmul.mubr.bf16.gmra.mrb[0].mxu0 %v1848
        %v3281 = vpop.f32.mrb[0].mxu0
        %v3282 = vadd.f32 %v2737, %v3281
        %v3283 = vpop.f32.mrb[0].mxu0
        %v3284 = vpop.f32.mrb[0].mxu0
        %v3285 = vadd.f32 %v2740, %v3284
        %v3286 = vpop.f32.mrb[0].mxu0
        %3287 = vmatprep.mubr.bf16.mxu0 %v1853
        %3288 = vmatmul.mubr.bf16.gmra.mrb[0].mxu0 %v1852
        %v3289 = vpop.f32.mrb[0].mxu0
        %v3290 = vadd.f32 %v2745, %v3289
        %v3291 = vpop.f32.mrb[0].mxu0
        %v3292 = vpop.f32.mrb[0].mxu0
        %v3293 = vadd.f32 %v2748, %v3292
        %v3294 = vpop.f32.mrb[0].mxu0
        %3295 = vmatprep.mubr.bf16.mxu0 %v1857
        %3296 = vmatmul.mubr.bf16.gmra.mrb[0].mxu0 %v1856
        %v3297 = vpop.f32.mrb[0].mxu0
        %v3298 = vadd.f32 %v2753, %v3297
        %v3299 = vpop.f32.mrb[0].mxu0
        %v3300 = vpop.f32.mrb[0].mxu0
        %v3301 = vadd.f32 %v2756, %v3300
        %v3302 = vpop.f32.mrb[0].mxu0
        %3303 = vmatprep.mubr.bf16.mxu0 %v1861
        %3304 = vmatmul.mubr.bf16.gmra.mrb[0].mxu0 %v1860
        %v3305 = vpop.f32.mrb[0].mxu0
        %v3306 = vadd.f32 %v2761, %v3305
        %v3307 = vpop.f32.mrb[0].mxu0
        %v3308 = vpop.f32.mrb[0].mxu0
        %v3309 = vadd.f32 %v2764, %v3308
        %v3310 = vpop.f32.mrb[0].mxu0
        %3311 = vmatprep.mubr.bf16.mxu0 %v1865
        %3312 = vmatmul.mubr.bf16.gmra.mrb[0].mxu0 %v1864
        %v3313 = vpop.f32.mrb[0].mxu0
        %v3314 = vadd.f32 %v2769, %v3313
        %v3315 = vpop.f32.mrb[0].mxu0
        %v3316 = vpop.f32.mrb[0].mxu0
        %v3317 = vadd.f32 %v2772, %v3316
        %v3318 = vpop.f32.mrb[0].mxu0
        %3319 = vmatprep.mubr.bf16.mxu0 %v1869
        %3320 = vmatmul.mubr.bf16.gmra.mrb[0].mxu0 %v1868
        %v3321 = vpop.f32.mrb[0].mxu0
        %v3322 = vadd.f32 %v2777, %v3321
        %v3323 = vpop.f32.mrb[0].mxu0
        %v3324 = vpop.f32.mrb[0].mxu0
        %v3325 = vadd.f32 %v2780, %v3324
        %v3326 = vpop.f32.mrb[0].mxu0
        %3327 = vmatprep.mubr.bf16.mxu0 %v1873
        %3328 = vmatmul.mubr.bf16.gmra.mrb[0].mxu0 %v1872
        %v3329 = vpop.f32.mrb[0].mxu0
        %v3330 = vadd.f32 %v2785, %v3329
        %v3331 = vpop.f32.mrb[0].mxu0
        %v3332 = vpop.f32.mrb[0].mxu0
        %v3333 = vadd.f32 %v2788, %v3332
        %v3334 = vpop.f32.mrb[0].mxu0
        %3335 = vmatprep.mubr.bf16.mxu0 %v1877
        %3336 = vmatmul.mubr.bf16.gmra.mrb[0].mxu0 %v1876
        %v3337 = vpop.f32.mrb[0].mxu0
        %v3338 = vadd.f32 %v2793, %v3337
        %v3339 = vpop.f32.mrb[0].mxu0
        %v3340 = vpop.f32.mrb[0].mxu0
        %v3341 = vadd.f32 %v2796, %v3340
        %v3342 = vpop.f32.mrb[0].mxu0
        %3343 = vmatprep.mubr.bf16.mxu0 %v1881
        %3344 = vmatmul.mubr.bf16.gmra.mrb[0].mxu0 %v1880
        %v3345 = vpop.f32.mrb[0].mxu0
        %v3346 = vadd.f32 %v2801, %v3345
        %v3347 = vpop.f32.mrb[0].mxu0
        %v3348 = vpop.f32.mrb[0].mxu0
        %v3349 = vadd.f32 %v2804, %v3348
        %v3350 = vpop.f32.mrb[0].mxu0
        %3351 = vmatprep.mubr.bf16.mxu0 %v1885
        %3352 = vmatmul.mubr.bf16.gmra.mrb[0].mxu0 %v1884
        %v3353 = vpop.f32.mrb[0].mxu0
        %v3354 = vadd.f32 %v2809, %v3353
        %v3355 = vpop.f32.mrb[0].mxu0
        %v3356 = vpop.f32.mrb[0].mxu0
        %v3357 = vadd.f32 %v2812, %v3356
        %v3358 = vpop.f32.mrb[0].mxu0
        %3359 = vmatprep.mubr.bf16.mxu0 %v1889
        %3360 = vmatmul.mubr.bf16.gmra.mrb[0].mxu0 %v1888
        %v3361 = vpop.f32.mrb[0].mxu0
        %v3362 = vadd.f32 %v2817, %v3361
        %v3363 = vpop.f32.mrb[0].mxu0
        %v3364 = vpop.f32.mrb[0].mxu0
        %v3365 = vadd.f32 %v2820, %v3364
        %v3366 = vpop.f32.mrb[0].mxu0
        %3367 = vmatprep.mubr.bf16.mxu0 %v1893
        %3368 = vmatmul.mubr.bf16.gmra.mrb[0].mxu0 %v1892
        %v3369 = vpop.f32.mrb[0].mxu0
        %v3370 = vadd.f32 %v2825, %v3369
        %v3371 = vpop.f32.mrb[0].mxu0
        %v3372 = vpop.f32.mrb[0].mxu0
        %v3373 = vadd.f32 %v2828, %v3372
        %v3374 = vpop.f32.mrb[0].mxu0
        %3375 = vmatprep.mubr.bf16.mxu0 %v1897
        %3376 = vmatmul.mubr.bf16.gmra.mrb[0].mxu0 %v1896
        %v3377 = vpop.f32.mrb[0].mxu0
        %v3378 = vadd.f32 %v2833, %v3377
        %v3379 = vpop.f32.mrb[0].mxu0
        %v3380 = vpop.f32.mrb[0].mxu0
        %v3381 = vadd.f32 %v2836, %v3380
        %v3382 = vpop.f32.mrb[0].mxu0
        %3383 = vmatprep.mubr.bf16.mxu0 %v1901
        %3384 = vmatmul.mubr.bf16.gmra.mrb[0].mxu0 %v1900
        %v3385 = vpop.f32.mrb[0].mxu0
        %v3386 = vadd.f32 %v2841, %v3385
        %v3387 = vpop.f32.mrb[0].mxu0
        %v3388 = vpop.f32.mrb[0].mxu0
        %v3389 = vadd.f32 %v2844, %v3388
        %v3390 = vpop.f32.mrb[0].mxu0
        %3391 = vmatprep.mubr.bf16.mxu0 %v1905
        %3392 = vmatmul.mubr.bf16.gmra.mrb[0].mxu0 %v1904
        %v3393 = vpop.f32.mrb[0].mxu0
        %v3394 = vadd.f32 %v2849, %v3393
        %v3395 = vpop.f32.mrb[0].mxu0
        %v3396 = vpop.f32.mrb[0].mxu0
        %v3397 = vadd.f32 %v2852, %v3396
        %v3398 = vpop.f32.mrb[0].mxu0
        %3399 = vmatprep.mubr.bf16.mxu0 %v1909
        %3400 = vmatmul.mubr.bf16.gmra.mrb[0].mxu0 %v1908
        %v3401 = vpop.f32.mrb[0].mxu0
        %v3402 = vadd.f32 %v2857, %v3401
        %v3403 = vpop.f32.mrb[0].mxu0
        %v3404 = vpop.f32.mrb[0].mxu0
        %v3405 = vadd.f32 %v2860, %v3404
        %v3406 = vpop.f32.mrb[0].mxu0
        %3407 = vmatprep.mubr.bf16.mxu0 %v1913
        %3408 = vmatmul.mubr.bf16.gmra.mrb[0].mxu0 %v1912
        %v3409 = vpop.f32.mrb[0].mxu0
        %v3410 = vadd.f32 %v2865, %v3409
        %v3411 = vpop.f32.mrb[0].mxu0
        %v3412 = vpop.f32.mrb[0].mxu0
        %v3413 = vadd.f32 %v2868, %v3412
        %v3414 = vpop.f32.mrb[0].mxu0
        %3415 = vmatprep.mubr.bf16.mxu0 %v1917
        %3416 = vmatmul.mubr.bf16.gmra.mrb[0].mxu0 %v1916
        %v3417 = vpop.f32.mrb[0].mxu0
        %v3418 = vadd.f32 %v2873, %v3417
        %v3419 = vpop.f32.mrb[0].mxu0
        %v3420 = vpop.f32.mrb[0].mxu0
        %v3421 = vadd.f32 %v2876, %v3420
        %v3422 = vpop.f32.mrb[0].mxu0
        %3423 = vmatprep.mubr.bf16.mxu0 %v1921
        %3424 = vmatmul.mubr.bf16.gmra.mrb[0].mxu0 %v1920
        %v3425 = vpop.f32.mrb[0].mxu0
        %v3426 = vadd.f32 %v2881, %v3425
        %v3427 = vpop.f32.mrb[0].mxu0
        %v3428 = vpop.f32.mrb[0].mxu0
        %v3429 = vadd.f32 %v2884, %v3428
        %v3430 = vpop.f32.mrb[0].mxu0
        %3431 = vmatprep.mubr.bf16.mxu0 %v1925
        %3432 = vmatmul.mubr.bf16.gmra.mrb[0].mxu0 %v1924
        %v3433 = vpop.f32.mrb[0].mxu0
        %v3434 = vadd.f32 %v2889, %v3433
        %v3435 = vpop.f32.mrb[0].mxu0
        %v3436 = vpop.f32.mrb[0].mxu0
        %v3437 = vadd.f32 %v2892, %v3436
        %v3438 = vpop.f32.mrb[0].mxu0
        %3439 = vmatprep.mubr.bf16.mxu0 %v1929
        %3440 = vmatmul.mubr.bf16.gmra.mrb[0].mxu0 %v1928
        %v3441 = vpop.f32.mrb[0].mxu0
        %v3442 = vadd.f32 %v2897, %v3441
        %v3443 = vpop.f32.mrb[0].mxu0
        %v3444 = vpop.f32.mrb[0].mxu0
        %v3445 = vadd.f32 %v2900, %v3444
        %v3446 = vpop.f32.mrb[0].mxu0
        %3447 = vmatprep.mubr.bf16.mxu0 %v1933
        %3448 = vmatmul.mubr.bf16.gmra.mrb[0].mxu0 %v1932
        %v3449 = vpop.f32.mrb[0].mxu0
        %v3450 = vadd.f32 %v2905, %v3449
        %v3451 = vpop.f32.mrb[0].mxu0
        %v3452 = vpop.f32.mrb[0].mxu0
        %v3453 = vadd.f32 %v2908, %v3452
        %v3454 = vpop.f32.mrb[0].mxu0
        %3455 = vmatprep.mubr.bf16.mxu0 %v1937
        %3456 = vmatmul.mubr.bf16.gmra.mrb[0].mxu0 %v1936
        %v3457 = vpop.f32.mrb[0].mxu0
        %v3458 = vadd.f32 %v2913, %v3457
        %v3459 = vpop.f32.mrb[0].mxu0
        %v3460 = vpop.f32.mrb[0].mxu0
        %v3461 = vadd.f32 %v2916, %v3460
        %v3462 = vpop.f32.mrb[0].mxu0
        %3463 = vmatprep.mubr.bf16.mxu0 %v1941
        %3464 = vmatmul.mubr.bf16.gmra.mrb[0].mxu0 %v1940
        %v3465 = vpop.f32.mrb[0].mxu0
        %v3466 = vadd.f32 %v2921, %v3465
        %v3467 = vpop.f32.mrb[0].mxu0
        %v3468 = vpop.f32.mrb[0].mxu0
        %v3469 = vadd.f32 %v2924, %v3468
        %v3470 = vpop.f32.mrb[0].mxu0
        %3471 = vmatprep.mubr.bf16.mxu0 %v1945
        %3472 = vmatmul.mubr.bf16.gmra.mrb[0].mxu0 %v1944
        %v3473 = vpop.f32.mrb[0].mxu0
        %v3474 = vadd.f32 %v2929, %v3473
        %v3475 = vpop.f32.mrb[0].mxu0
        %v3476 = vpop.f32.mrb[0].mxu0
        %v3477 = vadd.f32 %v2932, %v3476
        %v3478 = vpop.f32.mrb[0].mxu0
        %3479 = vmatprep.mubr.bf16.mxu0 %v1949
        %3480 = vmatmul.mubr.bf16.gmra.mrb[0].mxu0 %v1948
        %v3481 = vpop.f32.mrb[0].mxu0
        %v3482 = vadd.f32 %v2937, %v3481
        %v3483 = vpop.f32.mrb[0].mxu0
        %v3484 = vpop.f32.mrb[0].mxu0
        %v3485 = vadd.f32 %v2940, %v3484
        %v3486 = vpop.f32.mrb[0].mxu0
        %3487 = vdwg.mxu0
        %v3488 = vadd.f32 %v542, %v2978
        %v3489 = vadd.f32 %v543, %v2981
        %v3490 = vadd.f32 %v544, %v2986
        %v3491 = vadd.f32 %v545, %v2989
        %v3492 = vadd.f32 %v546, %v2994
        %v3493 = vadd.f32 %v547, %v2997
        %v3494 = vadd.f32 %v548, %v3002
        %v3495 = vadd.f32 %v549, %v3005
        %v3496 = vadd.f32 %v550, %v3010
        %v3497 = vadd.f32 %v551, %v3013
        %v3498 = vadd.f32 %v552, %v3018
        %v3499 = vadd.f32 %v553, %v3021
        %v3500 = vadd.f32 %v554, %v3026
        %v3501 = vadd.f32 %v555, %v3029
        %v3502 = vadd.f32 %v556, %v3034
        %v3503 = vadd.f32 %v557, %v3037
        %v3504 = vadd.f32 %v558, %v3042
        %v3505 = vadd.f32 %v559, %v3045
        %v3506 = vadd.f32 %v560, %v3050
        %v3507 = vadd.f32 %v561, %v3053
        %v3508 = vadd.f32 %v562, %v3058
        %v3509 = vadd.f32 %v563, %v3061
        %v3510 = vadd.f32 %v564, %v3066
        %v3511 = vadd.f32 %v565, %v3069
        %v3512 = vadd.f32 %v566, %v3074
        %v3513 = vadd.f32 %v567, %v3077
        %v3514 = vadd.f32 %v568, %v3082
        %v3515 = vadd.f32 %v569, %v3085
        %v3516 = vadd.f32 %v570, %v3090
        %v3517 = vadd.f32 %v571, %v3093
        %v3518 = vadd.f32 %v572, %v3098
        %v3519 = vadd.f32 %v573, %v3101
        %v3520 = vadd.f32 %v574, %v3106
        %v3521 = vadd.f32 %v575, %v3109
        %v3522 = vadd.f32 %v576, %v3114
        %v3523 = vadd.f32 %v577, %v3117
        %v3524 = vadd.f32 %v578, %v3122
        %v3525 = vadd.f32 %v579, %v3125
        %v3526 = vadd.f32 %v580, %v3130
        %v3527 = vadd.f32 %v581, %v3133
        %v3528 = vadd.f32 %v582, %v3138
        %v3529 = vadd.f32 %v583, %v3141
        %v3530 = vadd.f32 %v584, %v3146
        %v3531 = vadd.f32 %v585, %v3149
        %v3532 = vadd.f32 %v586, %v3154
        %v3533 = vadd.f32 %v587, %v3157
        %v3534 = vadd.f32 %v588, %v3162
        %v3535 = vadd.f32 %v589, %v3165
        %v3536 = vadd.f32 %v590, %v3170
        %v3537 = vadd.f32 %v591, %v3173
        %v3538 = vadd.f32 %v592, %v3178
        %v3539 = vadd.f32 %v593, %v3181
        %v3540 = vadd.f32 %v594, %v3186
        %v3541 = vadd.f32 %v595, %v3189
        %v3542 = vadd.f32 %v596, %v3194
        %v3543 = vadd.f32 %v597, %v3197
        %v3544 = vadd.f32 %v598, %v3202
        %v3545 = vadd.f32 %v599, %v3205
        %v3546 = vadd.f32 %v600, %v3210
        %v3547 = vadd.f32 %v601, %v3213
        %v3548 = vadd.f32 %v602, %v3218
        %v3549 = vadd.f32 %v603, %v3221
        %v3550 = vadd.f32 %v604, %v3226
        %v3551 = vadd.f32 %v605, %v3229
        %v3552 = vadd.f32 %v606, %v3234
        %v3553 = vadd.f32 %v607, %v3237
        %v3554 = vadd.f32 %v608, %v3242
        %v3555 = vadd.f32 %v609, %v3245
        %v3556 = vadd.f32 %v610, %v3250
        %v3557 = vadd.f32 %v611, %v3253
        %v3558 = vadd.f32 %v612, %v3258
        %v3559 = vadd.f32 %v613, %v3261
        %v3560 = vadd.f32 %v614, %v3266
        %v3561 = vadd.f32 %v615, %v3269
        %v3562 = vadd.f32 %v616, %v3274
        %v3563 = vadd.f32 %v617, %v3277
        %v3564 = vadd.f32 %v618, %v3282
        %v3565 = vadd.f32 %v619, %v3285
        %v3566 = vadd.f32 %v620, %v3290
        %v3567 = vadd.f32 %v621, %v3293
        %v3568 = vadd.f32 %v622, %v3298
        %v3569 = vadd.f32 %v623, %v3301
        %v3570 = vadd.f32 %v624, %v3306
        %v3571 = vadd.f32 %v625, %v3309
        %v3572 = vadd.f32 %v626, %v3314
        %v3573 = vadd.f32 %v627, %v3317
        %v3574 = vadd.f32 %v628, %v3322
        %v3575 = vadd.f32 %v629, %v3325
        %v3576 = vadd.f32 %v630, %v3330
        %v3577 = vadd.f32 %v631, %v3333
        %v3578 = vadd.f32 %v632, %v3338
        %v3579 = vadd.f32 %v633, %v3341
        %v3580 = vadd.f32 %v634, %v3346
        %v3581 = vadd.f32 %v635, %v3349
        %v3582 = vadd.f32 %v636, %v3354
        %v3583 = vadd.f32 %v637, %v3357
        %v3584 = vadd.f32 %v638, %v3362
        %v3585 = vadd.f32 %v639, %v3365
        %v3586 = vadd.f32 %v640, %v3370
        %v3587 = vadd.f32 %v641, %v3373
        %v3588 = vadd.f32 %v642, %v3378
        %v3589 = vadd.f32 %v643, %v3381
        %v3590 = vadd.f32 %v644, %v3386
        %v3591 = vadd.f32 %v645, %v3389
        %v3592 = vadd.f32 %v646, %v3394
        %v3593 = vadd.f32 %v647, %v3397
        %v3594 = vadd.f32 %v648, %v3402
        %v3595 = vadd.f32 %v649, %v3405
        %v3596 = vadd.f32 %v650, %v3410
        %v3597 = vadd.f32 %v651, %v3413
        %v3598 = vadd.f32 %v652, %v3418
        %v3599 = vadd.f32 %v653, %v3421
        %v3600 = vadd.f32 %v654, %v3426
        %v3601 = vadd.f32 %v655, %v3429
        %v3602 = vadd.f32 %v656, %v3434
        %v3603 = vadd.f32 %v657, %v3437
        %v3604 = vadd.f32 %v658, %v3442
        %v3605 = vadd.f32 %v659, %v3445
        %v3606 = vadd.f32 %v660, %v3450
        %v3607 = vadd.f32 %v661, %v3453
        %v3608 = vadd.f32 %v662, %v3458
        %v3609 = vadd.f32 %v663, %v3461
        %v3610 = vadd.f32 %v664, %v3466
        %v3611 = vadd.f32 %v665, %v3469
        %v3612 = vadd.f32 %v666, %v3474
        %v3613 = vadd.f32 %v667, %v3477
        %v3614 = vadd.f32 %v668, %v3482
        %v3615 = vadd.f32 %v669, %v3485
        %vm3616 = vcmask 261120
        %3617 = vst.msk [vmem:[#allocation2] sm:$0xff] %vm3616, %v3488
        %3618 = vst.msk [vmem:[#allocation2 + $0x8] sm:$0xff] %vm3616, %v3489
        %3619 = vst.msk [vmem:[#allocation2 + $0x10] sm:$0xff] %vm3616, %v3490
        %3620 = vst.msk [vmem:[#allocation2 + $0x18] sm:$0xff] %vm3616, %v3491
        %3621 = vst.msk [vmem:[#allocation2 + $0x20] sm:$0xff] %vm3616, %v3492
        %3622 = vst.msk [vmem:[#allocation2 + $0x28] sm:$0xff] %vm3616, %v3493
        %3623 = vst.msk [vmem:[#allocation2 + $0x30] sm:$0xff] %vm3616, %v3494
        %3624 = vst.msk [vmem:[#allocation2 + $0x38] sm:$0xff] %vm3616, %v3495
        %3625 = vst.msk [vmem:[#allocation2 + $0x40] sm:$0xff] %vm3616, %v3496
        %3626 = vst.msk [vmem:[#allocation2 + $0x48] sm:$0xff] %vm3616, %v3497
        %3627 = vst.msk [vmem:[#allocation2 + $0x50] sm:$0xff] %vm3616, %v3498
        %3628 = vst.msk [vmem:[#allocation2 + $0x58] sm:$0xff] %vm3616, %v3499
        %3629 = vst.msk [vmem:[#allocation2 + $0x60] sm:$0xff] %vm3616, %v3500
        %3630 = vst.msk [vmem:[#allocation2 + $0x68] sm:$0xff] %vm3616, %v3501
        %3631 = vst.msk [vmem:[#allocation2 + $0x70] sm:$0xff] %vm3616, %v3502
        %3632 = vst.msk [vmem:[#allocation2 + $0x78] sm:$0xff] %vm3616, %v3503
        %3633 = vst.msk [vmem:[#allocation2 + $0x80] sm:$0xff] %vm3616, %v3504
        %3634 = vst.msk [vmem:[#allocation2 + $0x88] sm:$0xff] %vm3616, %v3505
        %3635 = vst.msk [vmem:[#allocation2 + $0x90] sm:$0xff] %vm3616, %v3506
        %3636 = vst.msk [vmem:[#allocation2 + $0x98] sm:$0xff] %vm3616, %v3507
        %3637 = vst.msk [vmem:[#allocation2 + $0xa0] sm:$0xff] %vm3616, %v3508
        %3638 = vst.msk [vmem:[#allocation2 + $0xa8] sm:$0xff] %vm3616, %v3509
        %3639 = vst.msk [vmem:[#allocation2 + $0xb0] sm:$0xff] %vm3616, %v3510
        %3640 = vst.msk [vmem:[#allocation2 + $0xb8] sm:$0xff] %vm3616, %v3511
        %3641 = vst.msk [vmem:[#allocation2 + $0xc0] sm:$0xff] %vm3616, %v3512
        %3642 = vst.msk [vmem:[#allocation2 + $0xc8] sm:$0xff] %vm3616, %v3513
        %3643 = vst.msk [vmem:[#allocation2 + $0xd0] sm:$0xff] %vm3616, %v3514
        %3644 = vst.msk [vmem:[#allocation2 + $0xd8] sm:$0xff] %vm3616, %v3515
        %3645 = vst.msk [vmem:[#allocation2 + $0xe0] sm:$0xff] %vm3616, %v3516
        %3646 = vst.msk [vmem:[#allocation2 + $0xe8] sm:$0xff] %vm3616, %v3517
        %3647 = vst.msk [vmem:[#allocation2 + $0xf0] sm:$0xff] %vm3616, %v3518
        %3648 = vst.msk [vmem:[#allocation2 + $0xf8] sm:$0xff] %vm3616, %v3519
        %3649 = vst.msk [vmem:[#allocation2 + $0x100] sm:$0xff] %vm3616, %v3520
        %3650 = vst.msk [vmem:[#allocation2 + $0x108] sm:$0xff] %vm3616, %v3521
        %3651 = vst.msk [vmem:[#allocation2 + $0x110] sm:$0xff] %vm3616, %v3522
        %3652 = vst.msk [vmem:[#allocation2 + $0x118] sm:$0xff] %vm3616, %v3523
        %3653 = vst.msk [vmem:[#allocation2 + $0x120] sm:$0xff] %vm3616, %v3524
        %3654 = vst.msk [vmem:[#allocation2 + $0x128] sm:$0xff] %vm3616, %v3525
        %3655 = vst.msk [vmem:[#allocation2 + $0x130] sm:$0xff] %vm3616, %v3526
        %3656 = vst.msk [vmem:[#allocation2 + $0x138] sm:$0xff] %vm3616, %v3527
        %3657 = vst.msk [vmem:[#allocation2 + $0x140] sm:$0xff] %vm3616, %v3528
        %3658 = vst.msk [vmem:[#allocation2 + $0x148] sm:$0xff] %vm3616, %v3529
        %3659 = vst.msk [vmem:[#allocation2 + $0x150] sm:$0xff] %vm3616, %v3530
        %3660 = vst.msk [vmem:[#allocation2 + $0x158] sm:$0xff] %vm3616, %v3531
        %3661 = vst.msk [vmem:[#allocation2 + $0x160] sm:$0xff] %vm3616, %v3532
        %3662 = vst.msk [vmem:[#allocation2 + $0x168] sm:$0xff] %vm3616, %v3533
        %3663 = vst.msk [vmem:[#allocation2 + $0x170] sm:$0xff] %vm3616, %v3534
        %3664 = vst.msk [vmem:[#allocation2 + $0x178] sm:$0xff] %vm3616, %v3535
        %3665 = vst.msk [vmem:[#allocation2 + $0x180] sm:$0xff] %vm3616, %v3536
        %3666 = vst.msk [vmem:[#allocation2 + $0x188] sm:$0xff] %vm3616, %v3537
        %3667 = vst.msk [vmem:[#allocation2 + $0x190] sm:$0xff] %vm3616, %v3538
        %3668 = vst.msk [vmem:[#allocation2 + $0x198] sm:$0xff] %vm3616, %v3539
        %3669 = vst.msk [vmem:[#allocation2 + $0x1a0] sm:$0xff] %vm3616, %v3540
        %3670 = vst.msk [vmem:[#allocation2 + $0x1a8] sm:$0xff] %vm3616, %v3541
        %3671 = vst.msk [vmem:[#allocation2 + $0x1b0] sm:$0xff] %vm3616, %v3542
        %3672 = vst.msk [vmem:[#allocation2 + $0x1b8] sm:$0xff] %vm3616, %v3543
        %3673 = vst.msk [vmem:[#allocation2 + $0x1c0] sm:$0xff] %vm3616, %v3544
        %3674 = vst.msk [vmem:[#allocation2 + $0x1c8] sm:$0xff] %vm3616, %v3545
        %3675 = vst.msk [vmem:[#allocation2 + $0x1d0] sm:$0xff] %vm3616, %v3546
        %3676 = vst.msk [vmem:[#allocation2 + $0x1d8] sm:$0xff] %vm3616, %v3547
        %3677 = vst.msk [vmem:[#allocation2 + $0x1e0] sm:$0xff] %vm3616, %v3548
        %3678 = vst.msk [vmem:[#allocation2 + $0x1e8] sm:$0xff] %vm3616, %v3549
        %3679 = vst.msk [vmem:[#allocation2 + $0x1f0] sm:$0xff] %vm3616, %v3550
        %3680 = vst.msk [vmem:[#allocation2 + $0x1f8] sm:$0xff] %vm3616, %v3551
        %3681 = vst.msk [vmem:[#allocation2 + $0x200] sm:$0xff] %vm3616, %v3552
        %3682 = vst.msk [vmem:[#allocation2 + $0x208] sm:$0xff] %vm3616, %v3553
        %3683 = vst.msk [vmem:[#allocation2 + $0x210] sm:$0xff] %vm3616, %v3554
        %3684 = vst.msk [vmem:[#allocation2 + $0x218] sm:$0xff] %vm3616, %v3555
        %3685 = vst.msk [vmem:[#allocation2 + $0x220] sm:$0xff] %vm3616, %v3556
        %3686 = vst.msk [vmem:[#allocation2 + $0x228] sm:$0xff] %vm3616, %v3557
        %3687 = vst.msk [vmem:[#allocation2 + $0x230] sm:$0xff] %vm3616, %v3558
        %3688 = vst.msk [vmem:[#allocation2 + $0x238] sm:$0xff] %vm3616, %v3559
        %3689 = vst.msk [vmem:[#allocation2 + $0x240] sm:$0xff] %vm3616, %v3560
        %3690 = vst.msk [vmem:[#allocation2 + $0x248] sm:$0xff] %vm3616, %v3561
        %3691 = vst.msk [vmem:[#allocation2 + $0x250] sm:$0xff] %vm3616, %v3562
        %3692 = vst.msk [vmem:[#allocation2 + $0x258] sm:$0xff] %vm3616, %v3563
        %3693 = vst.msk [vmem:[#allocation2 + $0x260] sm:$0xff] %vm3616, %v3564
        %3694 = vst.msk [vmem:[#allocation2 + $0x268] sm:$0xff] %vm3616, %v3565
        %3695 = vst.msk [vmem:[#allocation2 + $0x270] sm:$0xff] %vm3616, %v3566
        %3696 = vst.msk [vmem:[#allocation2 + $0x278] sm:$0xff] %vm3616, %v3567
        %3697 = vst.msk [vmem:[#allocation2 + $0x280] sm:$0xff] %vm3616, %v3568
        %3698 = vst.msk [vmem:[#allocation2 + $0x288] sm:$0xff] %vm3616, %v3569
        %3699 = vst.msk [vmem:[#allocation2 + $0x290] sm:$0xff] %vm3616, %v3570
        %3700 = vst.msk [vmem:[#allocation2 + $0x298] sm:$0xff] %vm3616, %v3571
        %3701 = vst.msk [vmem:[#allocation2 + $0x2a0] sm:$0xff] %vm3616, %v3572
        %3702 = vst.msk [vmem:[#allocation2 + $0x2a8] sm:$0xff] %vm3616, %v3573
        %3703 = vst.msk [vmem:[#allocation2 + $0x2b0] sm:$0xff] %vm3616, %v3574
        %3704 = vst.msk [vmem:[#allocation2 + $0x2b8] sm:$0xff] %vm3616, %v3575
        %3705 = vst.msk [vmem:[#allocation2 + $0x2c0] sm:$0xff] %vm3616, %v3576
        %3706 = vst.msk [vmem:[#allocation2 + $0x2c8] sm:$0xff] %vm3616, %v3577
        %3707 = vst.msk [vmem:[#allocation2 + $0x2d0] sm:$0xff] %vm3616, %v3578
        %3708 = vst.msk [vmem:[#allocation2 + $0x2d8] sm:$0xff] %vm3616, %v3579
        %3709 = vst.msk [vmem:[#allocation2 + $0x2e0] sm:$0xff] %vm3616, %v3580
        %3710 = vst.msk [vmem:[#allocation2 + $0x2e8] sm:$0xff] %vm3616, %v3581
        %3711 = vst.msk [vmem:[#allocation2 + $0x2f0] sm:$0xff] %vm3616, %v3582
        %3712 = vst.msk [vmem:[#allocation2 + $0x2f8] sm:$0xff] %vm3616, %v3583
        %3713 = vst.msk [vmem:[#allocation2 + $0x300] sm:$0xff] %vm3616, %v3584
        %3714 = vst.msk [vmem:[#allocation2 + $0x308] sm:$0xff] %vm3616, %v3585
        %3715 = vst.msk [vmem:[#allocation2 + $0x310] sm:$0xff] %vm3616, %v3586
        %3716 = vst.msk [vmem:[#allocation2 + $0x318] sm:$0xff] %vm3616, %v3587
        %3717 = vst.msk [vmem:[#allocation2 + $0x320] sm:$0xff] %vm3616, %v3588
        %3718 = vst.msk [vmem:[#allocation2 + $0x328] sm:$0xff] %vm3616, %v3589
        %3719 = vst.msk [vmem:[#allocation2 + $0x330] sm:$0xff] %vm3616, %v3590
        %3720 = vst.msk [vmem:[#allocation2 + $0x338] sm:$0xff] %vm3616, %v3591
        %3721 = vst.msk [vmem:[#allocation2 + $0x340] sm:$0xff] %vm3616, %v3592
        %3722 = vst.msk [vmem:[#allocation2 + $0x348] sm:$0xff] %vm3616, %v3593
        %3723 = vst.msk [vmem:[#allocation2 + $0x350] sm:$0xff] %vm3616, %v3594
        %3724 = vst.msk [vmem:[#allocation2 + $0x358] sm:$0xff] %vm3616, %v3595
        %3725 = vst.msk [vmem:[#allocation2 + $0x360] sm:$0xff] %vm3616, %v3596
        %3726 = vst.msk [vmem:[#allocation2 + $0x368] sm:$0xff] %vm3616, %v3597
        %3727 = vst.msk [vmem:[#allocation2 + $0x370] sm:$0xff] %vm3616, %v3598
        %3728 = vst.msk [vmem:[#allocation2 + $0x378] sm:$0xff] %vm3616, %v3599
        %3729 = vst.msk [vmem:[#allocation2 + $0x380] sm:$0xff] %vm3616, %v3600
        %3730 = vst.msk [vmem:[#allocation2 + $0x388] sm:$0xff] %vm3616, %v3601
        %3731 = vst.msk [vmem:[#allocation2 + $0x390] sm:$0xff] %vm3616, %v3602
        %3732 = vst.msk [vmem:[#allocation2 + $0x398] sm:$0xff] %vm3616, %v3603
        %3733 = vst.msk [vmem:[#allocation2 + $0x3a0] sm:$0xff] %vm3616, %v3604
        %3734 = vst.msk [vmem:[#allocation2 + $0x3a8] sm:$0xff] %vm3616, %v3605
        %3735 = vst.msk [vmem:[#allocation2 + $0x3b0] sm:$0xff] %vm3616, %v3606
        %3736 = vst.msk [vmem:[#allocation2 + $0x3b8] sm:$0xff] %vm3616, %v3607
        %3737 = vst.msk [vmem:[#allocation2 + $0x3c0] sm:$0xff] %vm3616, %v3608
        %3738 = vst.msk [vmem:[#allocation2 + $0x3c8] sm:$0xff] %vm3616, %v3609
        %3739 = vst.msk [vmem:[#allocation2 + $0x3d0] sm:$0xff] %vm3616, %v3610
        %3740 = vst.msk [vmem:[#allocation2 + $0x3d8] sm:$0xff] %vm3616, %v3611
        %3741 = vst.msk [vmem:[#allocation2 + $0x3e0] sm:$0xff] %vm3616, %v3612
        %3742 = vst.msk [vmem:[#allocation2 + $0x3e8] sm:$0xff] %vm3616, %v3613
        %3743 = vst.msk [vmem:[#allocation2 + $0x3f0] sm:$0xff] %vm3616, %v3614
        %3744 = vst.msk [vmem:[#allocation2 + $0x3f8] sm:$0xff] %vm3616, %v3615
        %p3745 = scmp.eq.s32.totalorder %s26, 1
        // Predicated region
        $region41: #{gcn_propagate.2} parent=31 // pred_check
          %p3746 = pneg %p3745
        $region42: #{gcn_propagate.2} parent=31 // pred_check_branch
          %3748 = sbr.rel (%p3746) target = $region44
        $region43: #{gcn_propagate.2} parent=31 // pred_region
          %v3749 = vld [vmem:[#allocation2] sm:$0xff]
          %v3750 = vld [vmem:[#allocation2 + $0x8] sm:$0xff]
          %v3751 = vld [vmem:[#allocation2 + $0x10] sm:$0xff]
          %v3752 = vld [vmem:[#allocation2 + $0x18] sm:$0xff]
          %v3753 = vld [vmem:[#allocation2 + $0x20] sm:$0xff]
          %v3754 = vld [vmem:[#allocation2 + $0x28] sm:$0xff]
          %v3755 = vld [vmem:[#allocation2 + $0x30] sm:$0xff]
          %v3756 = vld [vmem:[#allocation2 + $0x38] sm:$0xff]
          %v3757 = vld [vmem:[#allocation2 + $0x40] sm:$0xff]
          %v3758 = vld [vmem:[#allocation2 + $0x48] sm:$0xff]
          %v3759 = vld [vmem:[#allocation2 + $0x50] sm:$0xff]
          %v3760 = vld [vmem:[#allocation2 + $0x58] sm:$0xff]
          %v3761 = vld [vmem:[#allocation2 + $0x60] sm:$0xff]
          %v3762 = vld [vmem:[#allocation2 + $0x68] sm:$0xff]
          %v3763 = vld [vmem:[#allocation2 + $0x70] sm:$0xff]
          %v3764 = vld [vmem:[#allocation2 + $0x78] sm:$0xff]
          %v3765 = vld [vmem:[#allocation2 + $0x80] sm:$0xff]
          %v3766 = vld [vmem:[#allocation2 + $0x88] sm:$0xff]
          %v3767 = vld [vmem:[#allocation2 + $0x90] sm:$0xff]
          %v3768 = vld [vmem:[#allocation2 + $0x98] sm:$0xff]
          %v3769 = vld [vmem:[#allocation2 + $0xa0] sm:$0xff]
          %v3770 = vld [vmem:[#allocation2 + $0xa8] sm:$0xff]
          %v3771 = vld [vmem:[#allocation2 + $0xb0] sm:$0xff]
          %v3772 = vld [vmem:[#allocation2 + $0xb8] sm:$0xff]
          %v3773 = vld [vmem:[#allocation2 + $0xc0] sm:$0xff]
          %v3774 = vld [vmem:[#allocation2 + $0xc8] sm:$0xff]
          %v3775 = vld [vmem:[#allocation2 + $0xd0] sm:$0xff]
          %v3776 = vld [vmem:[#allocation2 + $0xd8] sm:$0xff]
          %v3777 = vld [vmem:[#allocation2 + $0xe0] sm:$0xff]
          %v3778 = vld [vmem:[#allocation2 + $0xe8] sm:$0xff]
          %v3779 = vld [vmem:[#allocation2 + $0xf0] sm:$0xff]
          %v3780 = vld [vmem:[#allocation2 + $0xf8] sm:$0xff]
          %v3781 = vld [vmem:[#allocation2 + $0x100] sm:$0xff]
          %v3782 = vld [vmem:[#allocation2 + $0x108] sm:$0xff]
          %v3783 = vld [vmem:[#allocation2 + $0x110] sm:$0xff]
          %v3784 = vld [vmem:[#allocation2 + $0x118] sm:$0xff]
          %v3785 = vld [vmem:[#allocation2 + $0x120] sm:$0xff]
          %v3786 = vld [vmem:[#allocation2 + $0x128] sm:$0xff]
          %v3787 = vld [vmem:[#allocation2 + $0x130] sm:$0xff]
          %v3788 = vld [vmem:[#allocation2 + $0x138] sm:$0xff]
          %v3789 = vld [vmem:[#allocation2 + $0x140] sm:$0xff]
          %v3790 = vld [vmem:[#allocation2 + $0x148] sm:$0xff]
          %v3791 = vld [vmem:[#allocation2 + $0x150] sm:$0xff]
          %v3792 = vld [vmem:[#allocation2 + $0x158] sm:$0xff]
          %v3793 = vld [vmem:[#allocation2 + $0x160] sm:$0xff]
          %v3794 = vld [vmem:[#allocation2 + $0x168] sm:$0xff]
          %v3795 = vld [vmem:[#allocation2 + $0x170] sm:$0xff]
          %v3796 = vld [vmem:[#allocation2 + $0x178] sm:$0xff]
          %v3797 = vld [vmem:[#allocation2 + $0x180] sm:$0xff]
          %v3798 = vld [vmem:[#allocation2 + $0x188] sm:$0xff]
          %v3799 = vld [vmem:[#allocation2 + $0x190] sm:$0xff]
          %v3800 = vld [vmem:[#allocation2 + $0x198] sm:$0xff]
          %v3801 = vld [vmem:[#allocation2 + $0x1a0] sm:$0xff]
          %v3802 = vld [vmem:[#allocation2 + $0x1a8] sm:$0xff]
          %v3803 = vld [vmem:[#allocation2 + $0x1b0] sm:$0xff]
          %v3804 = vld [vmem:[#allocation2 + $0x1b8] sm:$0xff]
          %v3805 = vld [vmem:[#allocation2 + $0x1c0] sm:$0xff]
          %v3806 = vld [vmem:[#allocation2 + $0x1c8] sm:$0xff]
          %v3807 = vld [vmem:[#allocation2 + $0x1d0] sm:$0xff]
          %v3808 = vld [vmem:[#allocation2 + $0x1d8] sm:$0xff]
          %v3809 = vld [vmem:[#allocation2 + $0x1e0] sm:$0xff]
          %v3810 = vld [vmem:[#allocation2 + $0x1e8] sm:$0xff]
          %v3811 = vld [vmem:[#allocation2 + $0x1f0] sm:$0xff]
          %v3812 = vld [vmem:[#allocation2 + $0x1f8] sm:$0xff]
          %v3813 = vld [vmem:[#allocation2 + $0x200] sm:$0xff]
          %v3814 = vld [vmem:[#allocation2 + $0x208] sm:$0xff]
          %v3815 = vld [vmem:[#allocation2 + $0x210] sm:$0xff]
          %v3816 = vld [vmem:[#allocation2 + $0x218] sm:$0xff]
          %v3817 = vld [vmem:[#allocation2 + $0x220] sm:$0xff]
          %v3818 = vld [vmem:[#allocation2 + $0x228] sm:$0xff]
          %v3819 = vld [vmem:[#allocation2 + $0x230] sm:$0xff]
          %v3820 = vld [vmem:[#allocation2 + $0x238] sm:$0xff]
          %v3821 = vld [vmem:[#allocation2 + $0x240] sm:$0xff]
          %v3822 = vld [vmem:[#allocation2 + $0x248] sm:$0xff]
          %v3823 = vld [vmem:[#allocation2 + $0x250] sm:$0xff]
          %v3824 = vld [vmem:[#allocation2 + $0x258] sm:$0xff]
          %v3825 = vld [vmem:[#allocation2 + $0x260] sm:$0xff]
          %v3826 = vld [vmem:[#allocation2 + $0x268] sm:$0xff]
          %v3827 = vld [vmem:[#allocation2 + $0x270] sm:$0xff]
          %v3828 = vld [vmem:[#allocation2 + $0x278] sm:$0xff]
          %v3829 = vld [vmem:[#allocation2 + $0x280] sm:$0xff]
          %v3830 = vld [vmem:[#allocation2 + $0x288] sm:$0xff]
          %v3831 = vld [vmem:[#allocation2 + $0x290] sm:$0xff]
          %v3832 = vld [vmem:[#allocation2 + $0x298] sm:$0xff]
          %v3833 = vld [vmem:[#allocation2 + $0x2a0] sm:$0xff]
          %v3834 = vld [vmem:[#allocation2 + $0x2a8] sm:$0xff]
          %v3835 = vld [vmem:[#allocation2 + $0x2b0] sm:$0xff]
          %v3836 = vld [vmem:[#allocation2 + $0x2b8] sm:$0xff]
          %v3837 = vld [vmem:[#allocation2 + $0x2c0] sm:$0xff]
          %v3838 = vld [vmem:[#allocation2 + $0x2c8] sm:$0xff]
          %v3839 = vld [vmem:[#allocation2 + $0x2d0] sm:$0xff]
          %v3840 = vld [vmem:[#allocation2 + $0x2d8] sm:$0xff]
          %v3841 = vld [vmem:[#allocation2 + $0x2e0] sm:$0xff]
          %v3842 = vld [vmem:[#allocation2 + $0x2e8] sm:$0xff]
          %v3843 = vld [vmem:[#allocation2 + $0x2f0] sm:$0xff]
          %v3844 = vld [vmem:[#allocation2 + $0x2f8] sm:$0xff]
          %v3845 = vld [vmem:[#allocation2 + $0x300] sm:$0xff]
          %v3846 = vld [vmem:[#allocation2 + $0x308] sm:$0xff]
          %v3847 = vld [vmem:[#allocation2 + $0x310] sm:$0xff]
          %v3848 = vld [vmem:[#allocation2 + $0x318] sm:$0xff]
          %v3849 = vld [vmem:[#allocation2 + $0x320] sm:$0xff]
          %v3850 = vld [vmem:[#allocation2 + $0x328] sm:$0xff]
          %v3851 = vld [vmem:[#allocation2 + $0x330] sm:$0xff]
          %v3852 = vld [vmem:[#allocation2 + $0x338] sm:$0xff]
          %v3853 = vld [vmem:[#allocation2 + $0x340] sm:$0xff]
          %v3854 = vld [vmem:[#allocation2 + $0x348] sm:$0xff]
          %v3855 = vld [vmem:[#allocation2 + $0x350] sm:$0xff]
          %v3856 = vld [vmem:[#allocation2 + $0x358] sm:$0xff]
          %v3857 = vld [vmem:[#allocation2 + $0x360] sm:$0xff]
          %v3858 = vld [vmem:[#allocation2 + $0x368] sm:$0xff]
          %v3859 = vld [vmem:[#allocation2 + $0x370] sm:$0xff]
          %v3860 = vld [vmem:[#allocation2 + $0x378] sm:$0xff]
          %v3861 = vld [vmem:[#allocation2 + $0x380] sm:$0xff]
          %v3862 = vld [vmem:[#allocation2 + $0x388] sm:$0xff]
          %v3863 = vld [vmem:[#allocation2 + $0x390] sm:$0xff]
          %v3864 = vld [vmem:[#allocation2 + $0x398] sm:$0xff]
          %v3865 = vld [vmem:[#allocation2 + $0x3a0] sm:$0xff]
          %v3866 = vld [vmem:[#allocation2 + $0x3a8] sm:$0xff]
          %v3867 = vld [vmem:[#allocation2 + $0x3b0] sm:$0xff]
          %v3868 = vld [vmem:[#allocation2 + $0x3b8] sm:$0xff]
          %v3869 = vld [vmem:[#allocation2 + $0x3c0] sm:$0xff]
          %v3870 = vld [vmem:[#allocation2 + $0x3c8] sm:$0xff]
          %v3871 = vld [vmem:[#allocation2 + $0x3d0] sm:$0xff]
          %v3872 = vld [vmem:[#allocation2 + $0x3d8] sm:$0xff]
          %v3873 = vld [vmem:[#allocation2 + $0x3e0] sm:$0xff]
          %v3874 = vld [vmem:[#allocation2 + $0x3e8] sm:$0xff]
          %v3875 = vld [vmem:[#allocation2 + $0x3f0] sm:$0xff]
          %v3876 = vld [vmem:[#allocation2 + $0x3f8] sm:$0xff]
          %v3877 = vld [vmem:[%s317] sm:$0xff]
          %v3878 = vld [vmem:[%s317 + $0x8] sm:$0xff]
          %v3879 = vld [vmem:[%s317 + $0x10] sm:$0xff]
          %v3880 = vld [vmem:[%s317 + $0x18] sm:$0xff]
          %v3881 = vld [vmem:[%s317 + $0x20] sm:$0xff]
          %v3882 = vld [vmem:[%s317 + $0x28] sm:$0xff]
          %v3883 = vld [vmem:[%s317 + $0x30] sm:$0xff]
          %v3884 = vld [vmem:[%s317 + $0x38] sm:$0xff]
          %v3885 = vld [vmem:[%s317 + $0x40] sm:$0xff]
          %v3886 = vld [vmem:[%s317 + $0x48] sm:$0xff]
          %v3887 = vld [vmem:[%s317 + $0x50] sm:$0xff]
          %v3888 = vld [vmem:[%s317 + $0x58] sm:$0xff]
          %v3889 = vld [vmem:[%s317 + $0x60] sm:$0xff]
          %v3890 = vld [vmem:[%s317 + $0x68] sm:$0xff]
          %v3891 = vld [vmem:[%s317 + $0x70] sm:$0xff]
          %v3892 = vld [vmem:[%s317 + $0x78] sm:$0xff]
          %v3893 = vld [vmem:[%s317 + $0x80] sm:$0xff]
          %v3894 = vld [vmem:[%s317 + $0x88] sm:$0xff]
          %v3895 = vld [vmem:[%s317 + $0x90] sm:$0xff]
          %v3896 = vld [vmem:[%s317 + $0x98] sm:$0xff]
          %v3897 = vld [vmem:[%s317 + $0xa0] sm:$0xff]
          %v3898 = vld [vmem:[%s317 + $0xa8] sm:$0xff]
          %v3899 = vld [vmem:[%s317 + $0xb0] sm:$0xff]
          %v3900 = vld [vmem:[%s317 + $0xb8] sm:$0xff]
          %v3901 = vld [vmem:[%s317 + $0xc0] sm:$0xff]
          %v3902 = vld [vmem:[%s317 + $0xc8] sm:$0xff]
          %v3903 = vld [vmem:[%s317 + $0xd0] sm:$0xff]
          %v3904 = vld [vmem:[%s317 + $0xd8] sm:$0xff]
          %v3905 = vld [vmem:[%s317 + $0xe0] sm:$0xff]
          %v3906 = vld [vmem:[%s317 + $0xe8] sm:$0xff]
          %v3907 = vld [vmem:[%s317 + $0xf0] sm:$0xff]
          %v3908 = vld [vmem:[%s317 + $0xf8] sm:$0xff]
          %v3909 = vld [vmem:[%s317 + $0x100] sm:$0xff]
          %v3910 = vld [vmem:[%s317 + $0x108] sm:$0xff]
          %v3911 = vld [vmem:[%s317 + $0x110] sm:$0xff]
          %v3912 = vld [vmem:[%s317 + $0x118] sm:$0xff]
          %v3913 = vld [vmem:[%s317 + $0x120] sm:$0xff]
          %v3914 = vld [vmem:[%s317 + $0x128] sm:$0xff]
          %v3915 = vld [vmem:[%s317 + $0x130] sm:$0xff]
          %v3916 = vld [vmem:[%s317 + $0x138] sm:$0xff]
          %v3917 = vld [vmem:[%s317 + $0x140] sm:$0xff]
          %v3918 = vld [vmem:[%s317 + $0x148] sm:$0xff]
          %v3919 = vld [vmem:[%s317 + $0x150] sm:$0xff]
          %v3920 = vld [vmem:[%s317 + $0x158] sm:$0xff]
          %v3921 = vld [vmem:[%s317 + $0x160] sm:$0xff]
          %v3922 = vld [vmem:[%s317 + $0x168] sm:$0xff]
          %v3923 = vld [vmem:[%s317 + $0x170] sm:$0xff]
          %v3924 = vld [vmem:[%s317 + $0x178] sm:$0xff]
          %v3925 = vld [vmem:[%s317 + $0x180] sm:$0xff]
          %v3926 = vld [vmem:[%s317 + $0x188] sm:$0xff]
          %v3927 = vld [vmem:[%s317 + $0x190] sm:$0xff]
          %v3928 = vld [vmem:[%s317 + $0x198] sm:$0xff]
          %v3929 = vld [vmem:[%s317 + $0x1a0] sm:$0xff]
          %v3930 = vld [vmem:[%s317 + $0x1a8] sm:$0xff]
          %v3931 = vld [vmem:[%s317 + $0x1b0] sm:$0xff]
          %v3932 = vld [vmem:[%s317 + $0x1b8] sm:$0xff]
          %v3933 = vld [vmem:[%s317 + $0x1c0] sm:$0xff]
          %v3934 = vld [vmem:[%s317 + $0x1c8] sm:$0xff]
          %v3935 = vld [vmem:[%s317 + $0x1d0] sm:$0xff]
          %v3936 = vld [vmem:[%s317 + $0x1d8] sm:$0xff]
          %v3937 = vld [vmem:[%s317 + $0x1e0] sm:$0xff]
          %v3938 = vld [vmem:[%s317 + $0x1e8] sm:$0xff]
          %v3939 = vld [vmem:[%s317 + $0x1f0] sm:$0xff]
          %v3940 = vld [vmem:[%s317 + $0x1f8] sm:$0xff]
          %v3941 = vld [vmem:[%s317 + $0x200] sm:$0xff]
          %v3942 = vld [vmem:[%s317 + $0x208] sm:$0xff]
          %v3943 = vld [vmem:[%s317 + $0x210] sm:$0xff]
          %v3944 = vld [vmem:[%s317 + $0x218] sm:$0xff]
          %v3945 = vld [vmem:[%s317 + $0x220] sm:$0xff]
          %v3946 = vld [vmem:[%s317 + $0x228] sm:$0xff]
          %v3947 = vld [vmem:[%s317 + $0x230] sm:$0xff]
          %v3948 = vld [vmem:[%s317 + $0x238] sm:$0xff]
          %v3949 = vld [vmem:[%s317 + $0x240] sm:$0xff]
          %v3950 = vld [vmem:[%s317 + $0x248] sm:$0xff]
          %v3951 = vld [vmem:[%s317 + $0x250] sm:$0xff]
          %v3952 = vld [vmem:[%s317 + $0x258] sm:$0xff]
          %v3953 = vld [vmem:[%s317 + $0x260] sm:$0xff]
          %v3954 = vld [vmem:[%s317 + $0x268] sm:$0xff]
          %v3955 = vld [vmem:[%s317 + $0x270] sm:$0xff]
          %v3956 = vld [vmem:[%s317 + $0x278] sm:$0xff]
          %v3957 = vld [vmem:[%s317 + $0x280] sm:$0xff]
          %v3958 = vld [vmem:[%s317 + $0x288] sm:$0xff]
          %v3959 = vld [vmem:[%s317 + $0x290] sm:$0xff]
          %v3960 = vld [vmem:[%s317 + $0x298] sm:$0xff]
          %v3961 = vld [vmem:[%s317 + $0x2a0] sm:$0xff]
          %v3962 = vld [vmem:[%s317 + $0x2a8] sm:$0xff]
          %v3963 = vld [vmem:[%s317 + $0x2b0] sm:$0xff]
          %v3964 = vld [vmem:[%s317 + $0x2b8] sm:$0xff]
          %v3965 = vld [vmem:[%s317 + $0x2c0] sm:$0xff]
          %v3966 = vld [vmem:[%s317 + $0x2c8] sm:$0xff]
          %v3967 = vld [vmem:[%s317 + $0x2d0] sm:$0xff]
          %v3968 = vld [vmem:[%s317 + $0x2d8] sm:$0xff]
          %v3969 = vld [vmem:[%s317 + $0x2e0] sm:$0xff]
          %v3970 = vld [vmem:[%s317 + $0x2e8] sm:$0xff]
          %v3971 = vld [vmem:[%s317 + $0x2f0] sm:$0xff]
          %v3972 = vld [vmem:[%s317 + $0x2f8] sm:$0xff]
          %v3973 = vld [vmem:[%s317 + $0x300] sm:$0xff]
          %v3974 = vld [vmem:[%s317 + $0x308] sm:$0xff]
          %v3975 = vld [vmem:[%s317 + $0x310] sm:$0xff]
          %v3976 = vld [vmem:[%s317 + $0x318] sm:$0xff]
          %v3977 = vld [vmem:[%s317 + $0x320] sm:$0xff]
          %v3978 = vld [vmem:[%s317 + $0x328] sm:$0xff]
          %v3979 = vld [vmem:[%s317 + $0x330] sm:$0xff]
          %v3980 = vld [vmem:[%s317 + $0x338] sm:$0xff]
          %v3981 = vld [vmem:[%s317 + $0x340] sm:$0xff]
          %v3982 = vld [vmem:[%s317 + $0x348] sm:$0xff]
          %v3983 = vld [vmem:[%s317 + $0x350] sm:$0xff]
          %v3984 = vld [vmem:[%s317 + $0x358] sm:$0xff]
          %v3985 = vld [vmem:[%s317 + $0x360] sm:$0xff]
          %v3986 = vld [vmem:[%s317 + $0x368] sm:$0xff]
          %v3987 = vld [vmem:[%s317 + $0x370] sm:$0xff]
          %v3988 = vld [vmem:[%s317 + $0x378] sm:$0xff]
          %v3989 = vld [vmem:[%s317 + $0x380] sm:$0xff]
          %v3990 = vld [vmem:[%s317 + $0x388] sm:$0xff]
          %v3991 = vld [vmem:[%s317 + $0x390] sm:$0xff]
          %v3992 = vld [vmem:[%s317 + $0x398] sm:$0xff]
          %v3993 = vld [vmem:[%s317 + $0x3a0] sm:$0xff]
          %v3994 = vld [vmem:[%s317 + $0x3a8] sm:$0xff]
          %v3995 = vld [vmem:[%s317 + $0x3b0] sm:$0xff]
          %v3996 = vld [vmem:[%s317 + $0x3b8] sm:$0xff]
          %v3997 = vld [vmem:[%s317 + $0x3c0] sm:$0xff]
          %v3998 = vld [vmem:[%s317 + $0x3c8] sm:$0xff]
          %v3999 = vld [vmem:[%s317 + $0x3d0] sm:$0xff]
          %v4000 = vld [vmem:[%s317 + $0x3d8] sm:$0xff]
          %v4001 = vld [vmem:[%s317 + $0x3e0] sm:$0xff]
          %v4002 = vld [vmem:[%s317 + $0x3e8] sm:$0xff]
          %v4003 = vld [vmem:[%s317 + $0x3f0] sm:$0xff]
          %v4004 = vld [vmem:[%s317 + $0x3f8] sm:$0xff]
          %v4005 = vadd.f32 %v3877, %v3749
          %v4006 = vadd.f32 %v3878, %v3750
          %v4007 = vadd.f32 %v3879, %v3751
          %v4008 = vadd.f32 %v3880, %v3752
          %v4009 = vadd.f32 %v3881, %v3753
          %v4010 = vadd.f32 %v3882, %v3754
          %v4011 = vadd.f32 %v3883, %v3755
          %v4012 = vadd.f32 %v3884, %v3756
          %v4013 = vadd.f32 %v3885, %v3757
          %v4014 = vadd.f32 %v3886, %v3758
          %v4015 = vadd.f32 %v3887, %v3759
          %v4016 = vadd.f32 %v3888, %v3760
          %v4017 = vadd.f32 %v3889, %v3761
          %v4018 = vadd.f32 %v3890, %v3762
          %v4019 = vadd.f32 %v3891, %v3763
          %v4020 = vadd.f32 %v3892, %v3764
          %v4021 = vadd.f32 %v3893, %v3765
          %v4022 = vadd.f32 %v3894, %v3766
          %v4023 = vadd.f32 %v3895, %v3767
          %v4024 = vadd.f32 %v3896, %v3768
          %v4025 = vadd.f32 %v3897, %v3769
          %v4026 = vadd.f32 %v3898, %v3770
          %v4027 = vadd.f32 %v3899, %v3771
          %v4028 = vadd.f32 %v3900, %v3772
          %v4029 = vadd.f32 %v3901, %v3773
          %v4030 = vadd.f32 %v3902, %v3774
          %v4031 = vadd.f32 %v3903, %v3775
          %v4032 = vadd.f32 %v3904, %v3776
          %v4033 = vadd.f32 %v3905, %v3777
          %v4034 = vadd.f32 %v3906, %v3778
          %v4035 = vadd.f32 %v3907, %v3779
          %v4036 = vadd.f32 %v3908, %v3780
          %v4037 = vadd.f32 %v3909, %v3781
          %v4038 = vadd.f32 %v3910, %v3782
          %v4039 = vadd.f32 %v3911, %v3783
          %v4040 = vadd.f32 %v3912, %v3784
          %v4041 = vadd.f32 %v3913, %v3785
          %v4042 = vadd.f32 %v3914, %v3786
          %v4043 = vadd.f32 %v3915, %v3787
          %v4044 = vadd.f32 %v3916, %v3788
          %v4045 = vadd.f32 %v3917, %v3789
          %v4046 = vadd.f32 %v3918, %v3790
          %v4047 = vadd.f32 %v3919, %v3791
          %v4048 = vadd.f32 %v3920, %v3792
          %v4049 = vadd.f32 %v3921, %v3793
          %v4050 = vadd.f32 %v3922, %v3794
          %v4051 = vadd.f32 %v3923, %v3795
          %v4052 = vadd.f32 %v3924, %v3796
          %v4053 = vadd.f32 %v3925, %v3797
          %v4054 = vadd.f32 %v3926, %v3798
          %v4055 = vadd.f32 %v3927, %v3799
          %v4056 = vadd.f32 %v3928, %v3800
          %v4057 = vadd.f32 %v3929, %v3801
          %v4058 = vadd.f32 %v3930, %v3802
          %v4059 = vadd.f32 %v3931, %v3803
          %v4060 = vadd.f32 %v3932, %v3804
          %v4061 = vadd.f32 %v3933, %v3805
          %v4062 = vadd.f32 %v3934, %v3806
          %v4063 = vadd.f32 %v3935, %v3807
          %v4064 = vadd.f32 %v3936, %v3808
          %v4065 = vadd.f32 %v3937, %v3809
          %v4066 = vadd.f32 %v3938, %v3810
          %v4067 = vadd.f32 %v3939, %v3811
          %v4068 = vadd.f32 %v3940, %v3812
          %v4069 = vadd.f32 %v3941, %v3813
          %v4070 = vadd.f32 %v3942, %v3814
          %v4071 = vadd.f32 %v3943, %v3815
          %v4072 = vadd.f32 %v3944, %v3816
          %v4073 = vadd.f32 %v3945, %v3817
          %v4074 = vadd.f32 %v3946, %v3818
          %v4075 = vadd.f32 %v3947, %v3819
          %v4076 = vadd.f32 %v3948, %v3820
          %v4077 = vadd.f32 %v3949, %v3821
          %v4078 = vadd.f32 %v3950, %v3822
          %v4079 = vadd.f32 %v3951, %v3823
          %v4080 = vadd.f32 %v3952, %v3824
          %v4081 = vadd.f32 %v3953, %v3825
          %v4082 = vadd.f32 %v3954, %v3826
          %v4083 = vadd.f32 %v3955, %v3827
          %v4084 = vadd.f32 %v3956, %v3828
          %v4085 = vadd.f32 %v3957, %v3829
          %v4086 = vadd.f32 %v3958, %v3830
          %v4087 = vadd.f32 %v3959, %v3831
          %v4088 = vadd.f32 %v3960, %v3832
          %v4089 = vadd.f32 %v3961, %v3833
          %v4090 = vadd.f32 %v3962, %v3834
          %v4091 = vadd.f32 %v3963, %v3835
          %v4092 = vadd.f32 %v3964, %v3836
          %v4093 = vadd.f32 %v3965, %v3837
          %v4094 = vadd.f32 %v3966, %v3838
          %v4095 = vadd.f32 %v3967, %v3839
          %v4096 = vadd.f32 %v3968, %v3840
          %v4097 = vadd.f32 %v3969, %v3841
          %v4098 = vadd.f32 %v3970, %v3842
          %v4099 = vadd.f32 %v3971, %v3843
          %v4100 = vadd.f32 %v3972, %v3844
          %v4101 = vadd.f32 %v3973, %v3845
          %v4102 = vadd.f32 %v3974, %v3846
          %v4103 = vadd.f32 %v3975, %v3847
          %v4104 = vadd.f32 %v3976, %v3848
          %v4105 = vadd.f32 %v3977, %v3849
          %v4106 = vadd.f32 %v3978, %v3850
          %v4107 = vadd.f32 %v3979, %v3851
          %v4108 = vadd.f32 %v3980, %v3852
          %v4109 = vadd.f32 %v3981, %v3853
          %v4110 = vadd.f32 %v3982, %v3854
          %v4111 = vadd.f32 %v3983, %v3855
          %v4112 = vadd.f32 %v3984, %v3856
          %v4113 = vadd.f32 %v3985, %v3857
          %v4114 = vadd.f32 %v3986, %v3858
          %v4115 = vadd.f32 %v3987, %v3859
          %v4116 = vadd.f32 %v3988, %v3860
          %v4117 = vadd.f32 %v3989, %v3861
          %v4118 = vadd.f32 %v3990, %v3862
          %v4119 = vadd.f32 %v3991, %v3863
          %v4120 = vadd.f32 %v3992, %v3864
          %v4121 = vadd.f32 %v3993, %v3865
          %v4122 = vadd.f32 %v3994, %v3866
          %v4123 = vadd.f32 %v3995, %v3867
          %v4124 = vadd.f32 %v3996, %v3868
          %v4125 = vadd.f32 %v3997, %v3869
          %v4126 = vadd.f32 %v3998, %v3870
          %v4127 = vadd.f32 %v3999, %v3871
          %v4128 = vadd.f32 %v4000, %v3872
          %v4129 = vadd.f32 %v4001, %v3873
          %v4130 = vadd.f32 %v4002, %v3874
          %v4131 = vadd.f32 %v4003, %v3875
          %v4132 = vadd.f32 %v4004, %v3876
          %4133 = vst.msk [vmem:[%s327] sm:$0xff] %vm3616, %v4005
          %4134 = vst.msk [vmem:[%s327 + $0x8] sm:$0xff] %vm3616, %v4006
          %4135 = vst.msk [vmem:[%s327 + $0x10] sm:$0xff] %vm3616, %v4007
          %4136 = vst.msk [vmem:[%s327 + $0x18] sm:$0xff] %vm3616, %v4008
          %4137 = vst.msk [vmem:[%s327 + $0x20] sm:$0xff] %vm3616, %v4009
          %4138 = vst.msk [vmem:[%s327 + $0x28] sm:$0xff] %vm3616, %v4010
          %4139 = vst.msk [vmem:[%s327 + $0x30] sm:$0xff] %vm3616, %v4011
          %4140 = vst.msk [vmem:[%s327 + $0x38] sm:$0xff] %vm3616, %v4012
          %4141 = vst.msk [vmem:[%s327 + $0x40] sm:$0xff] %vm3616, %v4013
          %4142 = vst.msk [vmem:[%s327 + $0x48] sm:$0xff] %vm3616, %v4014
          %4143 = vst.msk [vmem:[%s327 + $0x50] sm:$0xff] %vm3616, %v4015
          %4144 = vst.msk [vmem:[%s327 + $0x58] sm:$0xff] %vm3616, %v4016
          %4145 = vst.msk [vmem:[%s327 + $0x60] sm:$0xff] %vm3616, %v4017
          %4146 = vst.msk [vmem:[%s327 + $0x68] sm:$0xff] %vm3616, %v4018
          %4147 = vst.msk [vmem:[%s327 + $0x70] sm:$0xff] %vm3616, %v4019
          %4148 = vst.msk [vmem:[%s327 + $0x78] sm:$0xff] %vm3616, %v4020
          %4149 = vst.msk [vmem:[%s327 + $0x80] sm:$0xff] %vm3616, %v4021
          %4150 = vst.msk [vmem:[%s327 + $0x88] sm:$0xff] %vm3616, %v4022
          %4151 = vst.msk [vmem:[%s327 + $0x90] sm:$0xff] %vm3616, %v4023
          %4152 = vst.msk [vmem:[%s327 + $0x98] sm:$0xff] %vm3616, %v4024
          %4153 = vst.msk [vmem:[%s327 + $0xa0] sm:$0xff] %vm3616, %v4025
          %4154 = vst.msk [vmem:[%s327 + $0xa8] sm:$0xff] %vm3616, %v4026
          %4155 = vst.msk [vmem:[%s327 + $0xb0] sm:$0xff] %vm3616, %v4027
          %4156 = vst.msk [vmem:[%s327 + $0xb8] sm:$0xff] %vm3616, %v4028
          %4157 = vst.msk [vmem:[%s327 + $0xc0] sm:$0xff] %vm3616, %v4029
          %4158 = vst.msk [vmem:[%s327 + $0xc8] sm:$0xff] %vm3616, %v4030
          %4159 = vst.msk [vmem:[%s327 + $0xd0] sm:$0xff] %vm3616, %v4031
          %4160 = vst.msk [vmem:[%s327 + $0xd8] sm:$0xff] %vm3616, %v4032
          %4161 = vst.msk [vmem:[%s327 + $0xe0] sm:$0xff] %vm3616, %v4033
          %4162 = vst.msk [vmem:[%s327 + $0xe8] sm:$0xff] %vm3616, %v4034
          %4163 = vst.msk [vmem:[%s327 + $0xf0] sm:$0xff] %vm3616, %v4035
          %4164 = vst.msk [vmem:[%s327 + $0xf8] sm:$0xff] %vm3616, %v4036
          %4165 = vst.msk [vmem:[%s327 + $0x100] sm:$0xff] %vm3616, %v4037
          %4166 = vst.msk [vmem:[%s327 + $0x108] sm:$0xff] %vm3616, %v4038
          %4167 = vst.msk [vmem:[%s327 + $0x110] sm:$0xff] %vm3616, %v4039
          %4168 = vst.msk [vmem:[%s327 + $0x118] sm:$0xff] %vm3616, %v4040
          %4169 = vst.msk [vmem:[%s327 + $0x120] sm:$0xff] %vm3616, %v4041
          %4170 = vst.msk [vmem:[%s327 + $0x128] sm:$0xff] %vm3616, %v4042
          %4171 = vst.msk [vmem:[%s327 + $0x130] sm:$0xff] %vm3616, %v4043
          %4172 = vst.msk [vmem:[%s327 + $0x138] sm:$0xff] %vm3616, %v4044
          %4173 = vst.msk [vmem:[%s327 + $0x140] sm:$0xff] %vm3616, %v4045
          %4174 = vst.msk [vmem:[%s327 + $0x148] sm:$0xff] %vm3616, %v4046
          %4175 = vst.msk [vmem:[%s327 + $0x150] sm:$0xff] %vm3616, %v4047
          %4176 = vst.msk [vmem:[%s327 + $0x158] sm:$0xff] %vm3616, %v4048
          %4177 = vst.msk [vmem:[%s327 + $0x160] sm:$0xff] %vm3616, %v4049
          %4178 = vst.msk [vmem:[%s327 + $0x168] sm:$0xff] %vm3616, %v4050
          %4179 = vst.msk [vmem:[%s327 + $0x170] sm:$0xff] %vm3616, %v4051
          %4180 = vst.msk [vmem:[%s327 + $0x178] sm:$0xff] %vm3616, %v4052
          %4181 = vst.msk [vmem:[%s327 + $0x180] sm:$0xff] %vm3616, %v4053
          %4182 = vst.msk [vmem:[%s327 + $0x188] sm:$0xff] %vm3616, %v4054
          %4183 = vst.msk [vmem:[%s327 + $0x190] sm:$0xff] %vm3616, %v4055
          %4184 = vst.msk [vmem:[%s327 + $0x198] sm:$0xff] %vm3616, %v4056
          %4185 = vst.msk [vmem:[%s327 + $0x1a0] sm:$0xff] %vm3616, %v4057
          %4186 = vst.msk [vmem:[%s327 + $0x1a8] sm:$0xff] %vm3616, %v4058
          %4187 = vst.msk [vmem:[%s327 + $0x1b0] sm:$0xff] %vm3616, %v4059
          %4188 = vst.msk [vmem:[%s327 + $0x1b8] sm:$0xff] %vm3616, %v4060
          %4189 = vst.msk [vmem:[%s327 + $0x1c0] sm:$0xff] %vm3616, %v4061
          %4190 = vst.msk [vmem:[%s327 + $0x1c8] sm:$0xff] %vm3616, %v4062
          %4191 = vst.msk [vmem:[%s327 + $0x1d0] sm:$0xff] %vm3616, %v4063
          %4192 = vst.msk [vmem:[%s327 + $0x1d8] sm:$0xff] %vm3616, %v4064
          %4193 = vst.msk [vmem:[%s327 + $0x1e0] sm:$0xff] %vm3616, %v4065
          %4194 = vst.msk [vmem:[%s327 + $0x1e8] sm:$0xff] %vm3616, %v4066
          %4195 = vst.msk [vmem:[%s327 + $0x1f0] sm:$0xff] %vm3616, %v4067
          %4196 = vst.msk [vmem:[%s327 + $0x1f8] sm:$0xff] %vm3616, %v4068
          %4197 = vst.msk [vmem:[%s327 + $0x200] sm:$0xff] %vm3616, %v4069
          %4198 = vst.msk [vmem:[%s327 + $0x208] sm:$0xff] %vm3616, %v4070
          %4199 = vst.msk [vmem:[%s327 + $0x210] sm:$0xff] %vm3616, %v4071
          %4200 = vst.msk [vmem:[%s327 + $0x218] sm:$0xff] %vm3616, %v4072
          %4201 = vst.msk [vmem:[%s327 + $0x220] sm:$0xff] %vm3616, %v4073
          %4202 = vst.msk [vmem:[%s327 + $0x228] sm:$0xff] %vm3616, %v4074
          %4203 = vst.msk [vmem:[%s327 + $0x230] sm:$0xff] %vm3616, %v4075
          %4204 = vst.msk [vmem:[%s327 + $0x238] sm:$0xff] %vm3616, %v4076
          %4205 = vst.msk [vmem:[%s327 + $0x240] sm:$0xff] %vm3616, %v4077
          %4206 = vst.msk [vmem:[%s327 + $0x248] sm:$0xff] %vm3616, %v4078
          %4207 = vst.msk [vmem:[%s327 + $0x250] sm:$0xff] %vm3616, %v4079
          %4208 = vst.msk [vmem:[%s327 + $0x258] sm:$0xff] %vm3616, %v4080
          %4209 = vst.msk [vmem:[%s327 + $0x260] sm:$0xff] %vm3616, %v4081
          %4210 = vst.msk [vmem:[%s327 + $0x268] sm:$0xff] %vm3616, %v4082
          %4211 = vst.msk [vmem:[%s327 + $0x270] sm:$0xff] %vm3616, %v4083
          %4212 = vst.msk [vmem:[%s327 + $0x278] sm:$0xff] %vm3616, %v4084
          %4213 = vst.msk [vmem:[%s327 + $0x280] sm:$0xff] %vm3616, %v4085
          %4214 = vst.msk [vmem:[%s327 + $0x288] sm:$0xff] %vm3616, %v4086
          %4215 = vst.msk [vmem:[%s327 + $0x290] sm:$0xff] %vm3616, %v4087
          %4216 = vst.msk [vmem:[%s327 + $0x298] sm:$0xff] %vm3616, %v4088
          %4217 = vst.msk [vmem:[%s327 + $0x2a0] sm:$0xff] %vm3616, %v4089
          %4218 = vst.msk [vmem:[%s327 + $0x2a8] sm:$0xff] %vm3616, %v4090
          %4219 = vst.msk [vmem:[%s327 + $0x2b0] sm:$0xff] %vm3616, %v4091
          %4220 = vst.msk [vmem:[%s327 + $0x2b8] sm:$0xff] %vm3616, %v4092
          %4221 = vst.msk [vmem:[%s327 + $0x2c0] sm:$0xff] %vm3616, %v4093
          %4222 = vst.msk [vmem:[%s327 + $0x2c8] sm:$0xff] %vm3616, %v4094
          %4223 = vst.msk [vmem:[%s327 + $0x2d0] sm:$0xff] %vm3616, %v4095
          %4224 = vst.msk [vmem:[%s327 + $0x2d8] sm:$0xff] %vm3616, %v4096
          %4225 = vst.msk [vmem:[%s327 + $0x2e0] sm:$0xff] %vm3616, %v4097
          %4226 = vst.msk [vmem:[%s327 + $0x2e8] sm:$0xff] %vm3616, %v4098
          %4227 = vst.msk [vmem:[%s327 + $0x2f0] sm:$0xff] %vm3616, %v4099
          %4228 = vst.msk [vmem:[%s327 + $0x2f8] sm:$0xff] %vm3616, %v4100
          %4229 = vst.msk [vmem:[%s327 + $0x300] sm:$0xff] %vm3616, %v4101
          %4230 = vst.msk [vmem:[%s327 + $0x308] sm:$0xff] %vm3616, %v4102
          %4231 = vst.msk [vmem:[%s327 + $0x310] sm:$0xff] %vm3616, %v4103
          %4232 = vst.msk [vmem:[%s327 + $0x318] sm:$0xff] %vm3616, %v4104
          %4233 = vst.msk [vmem:[%s327 + $0x320] sm:$0xff] %vm3616, %v4105
          %4234 = vst.msk [vmem:[%s327 + $0x328] sm:$0xff] %vm3616, %v4106
          %4235 = vst.msk [vmem:[%s327 + $0x330] sm:$0xff] %vm3616, %v4107
          %4236 = vst.msk [vmem:[%s327 + $0x338] sm:$0xff] %vm3616, %v4108
          %4237 = vst.msk [vmem:[%s327 + $0x340] sm:$0xff] %vm3616, %v4109
          %4238 = vst.msk [vmem:[%s327 + $0x348] sm:$0xff] %vm3616, %v4110
          %4239 = vst.msk [vmem:[%s327 + $0x350] sm:$0xff] %vm3616, %v4111
          %4240 = vst.msk [vmem:[%s327 + $0x358] sm:$0xff] %vm3616, %v4112
          %4241 = vst.msk [vmem:[%s327 + $0x360] sm:$0xff] %vm3616, %v4113
          %4242 = vst.msk [vmem:[%s327 + $0x368] sm:$0xff] %vm3616, %v4114
          %4243 = vst.msk [vmem:[%s327 + $0x370] sm:$0xff] %vm3616, %v4115
          %4244 = vst.msk [vmem:[%s327 + $0x378] sm:$0xff] %vm3616, %v4116
          %4245 = vst.msk [vmem:[%s327 + $0x380] sm:$0xff] %vm3616, %v4117
          %4246 = vst.msk [vmem:[%s327 + $0x388] sm:$0xff] %vm3616, %v4118
          %4247 = vst.msk [vmem:[%s327 + $0x390] sm:$0xff] %vm3616, %v4119
          %4248 = vst.msk [vmem:[%s327 + $0x398] sm:$0xff] %vm3616, %v4120
          %4249 = vst.msk [vmem:[%s327 + $0x3a0] sm:$0xff] %vm3616, %v4121
          %4250 = vst.msk [vmem:[%s327 + $0x3a8] sm:$0xff] %vm3616, %v4122
          %4251 = vst.msk [vmem:[%s327 + $0x3b0] sm:$0xff] %vm3616, %v4123
          %4252 = vst.msk [vmem:[%s327 + $0x3b8] sm:$0xff] %vm3616, %v4124
          %4253 = vst.msk [vmem:[%s327 + $0x3c0] sm:$0xff] %vm3616, %v4125
          %4254 = vst.msk [vmem:[%s327 + $0x3c8] sm:$0xff] %vm3616, %v4126
          %4255 = vst.msk [vmem:[%s327 + $0x3d0] sm:$0xff] %vm3616, %v4127
          %4256 = vst.msk [vmem:[%s327 + $0x3d8] sm:$0xff] %vm3616, %v4128
          %4257 = vst.msk [vmem:[%s327 + $0x3e0] sm:$0xff] %vm3616, %v4129
          %4258 = vst.msk [vmem:[%s327 + $0x3e8] sm:$0xff] %vm3616, %v4130
          %4259 = vst.msk [vmem:[%s327 + $0x3f0] sm:$0xff] %vm3616, %v4131
          %4260 = vst.msk [vmem:[%s327 + $0x3f8] sm:$0xff] %vm3616, %v4132
          %v4261 = vpack.c.bf16 %v3750, %v3749
          %v4262 = vpack.c.bf16 %v3752, %v3751
          %v4263 = vpack.c.bf16 %v3754, %v3753
          %v4264 = vpack.c.bf16 %v3756, %v3755
          %v4265 = vpack.c.bf16 %v3758, %v3757
          %v4266 = vpack.c.bf16 %v3760, %v3759
          %v4267 = vpack.c.bf16 %v3762, %v3761
          %v4268 = vpack.c.bf16 %v3764, %v3763
          %v4269 = vpack.c.bf16 %v3766, %v3765
          %v4270 = vpack.c.bf16 %v3768, %v3767
          %v4271 = vpack.c.bf16 %v3770, %v3769
          %v4272 = vpack.c.bf16 %v3772, %v3771
          %v4273 = vpack.c.bf16 %v3774, %v3773
          %v4274 = vpack.c.bf16 %v3776, %v3775
          %v4275 = vpack.c.bf16 %v3778, %v3777
          %v4276 = vpack.c.bf16 %v3780, %v3779
          %v4277 = vpack.c.bf16 %v3782, %v3781
          %v4278 = vpack.c.bf16 %v3784, %v3783
          %v4279 = vpack.c.bf16 %v3786, %v3785
          %v4280 = vpack.c.bf16 %v3788, %v3787
          %v4281 = vpack.c.bf16 %v3790, %v3789
          %v4282 = vpack.c.bf16 %v3792, %v3791
          %v4283 = vpack.c.bf16 %v3794, %v3793
          %v4284 = vpack.c.bf16 %v3796, %v3795
          %v4285 = vpack.c.bf16 %v3798, %v3797
          %v4286 = vpack.c.bf16 %v3800, %v3799
          %v4287 = vpack.c.bf16 %v3802, %v3801
          %v4288 = vpack.c.bf16 %v3804, %v3803
          %v4289 = vpack.c.bf16 %v3806, %v3805
          %v4290 = vpack.c.bf16 %v3808, %v3807
          %v4291 = vpack.c.bf16 %v3810, %v3809
          %v4292 = vpack.c.bf16 %v3812, %v3811
          %v4293 = vpack.c.bf16 %v3814, %v3813
          %v4294 = vpack.c.bf16 %v3816, %v3815
          %v4295 = vpack.c.bf16 %v3818, %v3817
          %v4296 = vpack.c.bf16 %v3820, %v3819
          %v4297 = vpack.c.bf16 %v3822, %v3821
          %v4298 = vpack.c.bf16 %v3824, %v3823
          %v4299 = vpack.c.bf16 %v3826, %v3825
          %v4300 = vpack.c.bf16 %v3828, %v3827
          %v4301 = vpack.c.bf16 %v3830, %v3829
          %v4302 = vpack.c.bf16 %v3832, %v3831
          %v4303 = vpack.c.bf16 %v3834, %v3833
          %v4304 = vpack.c.bf16 %v3836, %v3835
          %v4305 = vpack.c.bf16 %v3838, %v3837
          %v4306 = vpack.c.bf16 %v3840, %v3839
          %v4307 = vpack.c.bf16 %v3842, %v3841
          %v4308 = vpack.c.bf16 %v3844, %v3843
          %v4309 = vpack.c.bf16 %v3846, %v3845
          %v4310 = vpack.c.bf16 %v3848, %v3847
          %v4311 = vpack.c.bf16 %v3850, %v3849
          %v4312 = vpack.c.bf16 %v3852, %v3851
          %v4313 = vpack.c.bf16 %v3854, %v3853
          %v4314 = vpack.c.bf16 %v3856, %v3855
          %v4315 = vpack.c.bf16 %v3858, %v3857
          %v4316 = vpack.c.bf16 %v3860, %v3859
          %v4317 = vpack.c.bf16 %v3862, %v3861
          %v4318 = vpack.c.bf16 %v3864, %v3863
          %v4319 = vpack.c.bf16 %v3866, %v3865
          %v4320 = vpack.c.bf16 %v3868, %v3867
          %v4321 = vpack.c.bf16 %v3870, %v3869
          %v4322 = vpack.c.bf16 %v3872, %v3871
          %v4323 = vpack.c.bf16 %v3874, %v3873
          %v4324 = vpack.c.bf16 %v3876, %v3875
          %v4389 = vunpack.c.l.b16 %v4261
          %v4390 = vunpack.c.h.b16 %v4261
          %v4391 = vunpack.c.l.b16 %v4262
          %v4392 = vunpack.c.h.b16 %v4262
          %v4393 = vunpack.c.l.b16 %v4263
          %v4394 = vunpack.c.h.b16 %v4263
          %v4395 = vunpack.c.l.b16 %v4264
          %v4396 = vunpack.c.h.b16 %v4264
          %v4397 = vunpack.c.l.b16 %v4265
          %v4398 = vunpack.c.h.b16 %v4265
          %v4399 = vunpack.c.l.b16 %v4266
          %v4400 = vunpack.c.h.b16 %v4266
          %v4401 = vunpack.c.l.b16 %v4267
          %v4402 = vunpack.c.h.b16 %v4267
          %v4403 = vunpack.c.l.b16 %v4268
          %v4404 = vunpack.c.h.b16 %v4268
          %v4405 = vunpack.c.l.b16 %v4269
          %v4406 = vunpack.c.h.b16 %v4269
          %v4407 = vunpack.c.l.b16 %v4270
          %v4408 = vunpack.c.h.b16 %v4270
          %v4409 = vunpack.c.l.b16 %v4271
          %v4410 = vunpack.c.h.b16 %v4271
          %v4411 = vunpack.c.l.b16 %v4272
          %v4412 = vunpack.c.h.b16 %v4272
          %v4413 = vunpack.c.l.b16 %v4273
          %v4414 = vunpack.c.h.b16 %v4273
          %v4415 = vunpack.c.l.b16 %v4274
          %v4416 = vunpack.c.h.b16 %v4274
          %v4417 = vunpack.c.l.b16 %v4275
          %v4418 = vunpack.c.h.b16 %v4275
          %v4419 = vunpack.c.l.b16 %v4276
          %v4420 = vunpack.c.h.b16 %v4276
          %v4421 = vunpack.c.l.b16 %v4277
          %v4422 = vunpack.c.h.b16 %v4277
          %v4423 = vunpack.c.l.b16 %v4278
          %v4424 = vunpack.c.h.b16 %v4278
          %v4425 = vunpack.c.l.b16 %v4279
          %v4426 = vunpack.c.h.b16 %v4279
          %v4427 = vunpack.c.l.b16 %v4280
          %v4428 = vunpack.c.h.b16 %v4280
          %v4429 = vunpack.c.l.b16 %v4281
          %v4430 = vunpack.c.h.b16 %v4281
          %v4431 = vunpack.c.l.b16 %v4282
          %v4432 = vunpack.c.h.b16 %v4282
          %v4433 = vunpack.c.l.b16 %v4283
          %v4434 = vunpack.c.h.b16 %v4283
          %v4435 = vunpack.c.l.b16 %v4284
          %v4436 = vunpack.c.h.b16 %v4284
          %v4437 = vunpack.c.l.b16 %v4285
          %v4438 = vunpack.c.h.b16 %v4285
          %v4439 = vunpack.c.l.b16 %v4286
          %v4440 = vunpack.c.h.b16 %v4286
          %v4441 = vunpack.c.l.b16 %v4287
          %v4442 = vunpack.c.h.b16 %v4287
          %v4443 = vunpack.c.l.b16 %v4288
          %v4444 = vunpack.c.h.b16 %v4288
          %v4445 = vunpack.c.l.b16 %v4289
          %v4446 = vunpack.c.h.b16 %v4289
          %v4447 = vunpack.c.l.b16 %v4290
          %v4448 = vunpack.c.h.b16 %v4290
          %v4449 = vunpack.c.l.b16 %v4291
          %v4450 = vunpack.c.h.b16 %v4291
          %v4451 = vunpack.c.l.b16 %v4292
          %v4452 = vunpack.c.h.b16 %v4292
          %v4453 = vunpack.c.l.b16 %v4293
          %v4454 = vunpack.c.h.b16 %v4293
          %v4455 = vunpack.c.l.b16 %v4294
          %v4456 = vunpack.c.h.b16 %v4294
          %v4457 = vunpack.c.l.b16 %v4295
          %v4458 = vunpack.c.h.b16 %v4295
          %v4459 = vunpack.c.l.b16 %v4296
          %v4460 = vunpack.c.h.b16 %v4296
          %v4461 = vunpack.c.l.b16 %v4297
          %v4462 = vunpack.c.h.b16 %v4297
          %v4463 = vunpack.c.l.b16 %v4298
          %v4464 = vunpack.c.h.b16 %v4298
          %v4465 = vunpack.c.l.b16 %v4299
          %v4466 = vunpack.c.h.b16 %v4299
          %v4467 = vunpack.c.l.b16 %v4300
          %v4468 = vunpack.c.h.b16 %v4300
          %v4469 = vunpack.c.l.b16 %v4301
          %v4470 = vunpack.c.h.b16 %v4301
          %v4471 = vunpack.c.l.b16 %v4302
          %v4472 = vunpack.c.h.b16 %v4302
          %v4473 = vunpack.c.l.b16 %v4303
          %v4474 = vunpack.c.h.b16 %v4303
          %v4475 = vunpack.c.l.b16 %v4304
          %v4476 = vunpack.c.h.b16 %v4304
          %v4477 = vunpack.c.l.b16 %v4305
          %v4478 = vunpack.c.h.b16 %v4305
          %v4479 = vunpack.c.l.b16 %v4306
          %v4480 = vunpack.c.h.b16 %v4306
          %v4481 = vunpack.c.l.b16 %v4307
          %v4482 = vunpack.c.h.b16 %v4307
          %v4483 = vunpack.c.l.b16 %v4308
          %v4484 = vunpack.c.h.b16 %v4308
          %v4485 = vunpack.c.l.b16 %v4309
          %v4486 = vunpack.c.h.b16 %v4309
          %v4487 = vunpack.c.l.b16 %v4310
          %v4488 = vunpack.c.h.b16 %v4310
          %v4489 = vunpack.c.l.b16 %v4311
          %v4490 = vunpack.c.h.b16 %v4311
          %v4491 = vunpack.c.l.b16 %v4312
          %v4492 = vunpack.c.h.b16 %v4312
          %v4493 = vunpack.c.l.b16 %v4313
          %v4494 = vunpack.c.h.b16 %v4313
          %v4495 = vunpack.c.l.b16 %v4314
          %v4496 = vunpack.c.h.b16 %v4314
          %v4497 = vunpack.c.l.b16 %v4315
          %v4498 = vunpack.c.h.b16 %v4315
          %v4499 = vunpack.c.l.b16 %v4316
          %v4500 = vunpack.c.h.b16 %v4316
          %v4501 = vunpack.c.l.b16 %v4317
          %v4502 = vunpack.c.h.b16 %v4317
          %v4503 = vunpack.c.l.b16 %v4318
          %v4504 = vunpack.c.h.b16 %v4318
          %v4505 = vunpack.c.l.b16 %v4319
          %v4506 = vunpack.c.h.b16 %v4319
          %v4507 = vunpack.c.l.b16 %v4320
          %v4508 = vunpack.c.h.b16 %v4320
          %v4509 = vunpack.c.l.b16 %v4321
          %v4510 = vunpack.c.h.b16 %v4321
          %v4511 = vunpack.c.l.b16 %v4322
          %v4512 = vunpack.c.h.b16 %v4322
          %v4513 = vunpack.c.l.b16 %v4323
          %v4514 = vunpack.c.h.b16 %v4323
          %v4515 = vunpack.c.l.b16 %v4324
          %v4516 = vunpack.c.h.b16 %v4324
          %v4517 = vpack.c.b16 %v4389, %v4389
          %v4518 = vpack.c.b16 %v4390, %v4390
          %v4519 = vpack.c.b16 %v4391, %v4391
          %v4520 = vpack.c.b16 %v4392, %v4392
          %v4521 = vpack.c.b16 %v4393, %v4393
          %v4522 = vpack.c.b16 %v4394, %v4394
          %v4523 = vpack.c.b16 %v4395, %v4395
          %v4524 = vpack.c.b16 %v4396, %v4396
          %v4525 = vpack.c.b16 %v4397, %v4397
          %v4526 = vpack.c.b16 %v4398, %v4398
          %v4527 = vpack.c.b16 %v4399, %v4399
          %v4528 = vpack.c.b16 %v4400, %v4400
          %v4529 = vpack.c.b16 %v4401, %v4401
          %v4530 = vpack.c.b16 %v4402, %v4402
          %v4531 = vpack.c.b16 %v4403, %v4403
          %v4532 = vpack.c.b16 %v4404, %v4404
          %v4533 = vpack.c.b16 %v4405, %v4405
          %v4534 = vpack.c.b16 %v4406, %v4406
          %v4535 = vpack.c.b16 %v4407, %v4407
          %v4536 = vpack.c.b16 %v4408, %v4408
          %v4537 = vpack.c.b16 %v4409, %v4409
          %v4538 = vpack.c.b16 %v4410, %v4410
          %v4539 = vpack.c.b16 %v4411, %v4411
          %v4540 = vpack.c.b16 %v4412, %v4412
          %v4541 = vpack.c.b16 %v4413, %v4413
          %v4542 = vpack.c.b16 %v4414, %v4414
          %v4543 = vpack.c.b16 %v4415, %v4415
          %v4544 = vpack.c.b16 %v4416, %v4416
          %v4545 = vpack.c.b16 %v4417, %v4417
          %v4546 = vpack.c.b16 %v4418, %v4418
          %v4547 = vpack.c.b16 %v4419, %v4419
          %v4548 = vpack.c.b16 %v4420, %v4420
          %v4549 = vpack.c.b16 %v4421, %v4421
          %v4550 = vpack.c.b16 %v4422, %v4422
          %v4551 = vpack.c.b16 %v4423, %v4423
          %v4552 = vpack.c.b16 %v4424, %v4424
          %v4553 = vpack.c.b16 %v4425, %v4425
          %v4554 = vpack.c.b16 %v4426, %v4426
          %v4555 = vpack.c.b16 %v4427, %v4427
          %v4556 = vpack.c.b16 %v4428, %v4428
          %v4557 = vpack.c.b16 %v4429, %v4429
          %v4558 = vpack.c.b16 %v4430, %v4430
          %v4559 = vpack.c.b16 %v4431, %v4431
          %v4560 = vpack.c.b16 %v4432, %v4432
          %v4561 = vpack.c.b16 %v4433, %v4433
          %v4562 = vpack.c.b16 %v4434, %v4434
          %v4563 = vpack.c.b16 %v4435, %v4435
          %v4564 = vpack.c.b16 %v4436, %v4436
          %v4565 = vpack.c.b16 %v4437, %v4437
          %v4566 = vpack.c.b16 %v4438, %v4438
          %v4567 = vpack.c.b16 %v4439, %v4439
          %v4568 = vpack.c.b16 %v4440, %v4440
          %v4569 = vpack.c.b16 %v4441, %v4441
          %v4570 = vpack.c.b16 %v4442, %v4442
          %v4571 = vpack.c.b16 %v4443, %v4443
          %v4572 = vpack.c.b16 %v4444, %v4444
          %v4573 = vpack.c.b16 %v4445, %v4445
          %v4574 = vpack.c.b16 %v4446, %v4446
          %v4575 = vpack.c.b16 %v4447, %v4447
          %v4576 = vpack.c.b16 %v4448, %v4448
          %v4577 = vpack.c.b16 %v4449, %v4449
          %v4578 = vpack.c.b16 %v4450, %v4450
          %v4579 = vpack.c.b16 %v4451, %v4451
          %v4580 = vpack.c.b16 %v4452, %v4452
          %v4581 = vpack.c.b16 %v4453, %v4453
          %v4582 = vpack.c.b16 %v4454, %v4454
          %v4583 = vpack.c.b16 %v4455, %v4455
          %v4584 = vpack.c.b16 %v4456, %v4456
          %v4585 = vpack.c.b16 %v4457, %v4457
          %v4586 = vpack.c.b16 %v4458, %v4458
          %v4587 = vpack.c.b16 %v4459, %v4459
          %v4588 = vpack.c.b16 %v4460, %v4460
          %v4589 = vpack.c.b16 %v4461, %v4461
          %v4590 = vpack.c.b16 %v4462, %v4462
          %v4591 = vpack.c.b16 %v4463, %v4463
          %v4592 = vpack.c.b16 %v4464, %v4464
          %v4593 = vpack.c.b16 %v4465, %v4465
          %v4594 = vpack.c.b16 %v4466, %v4466
          %v4595 = vpack.c.b16 %v4467, %v4467
          %v4596 = vpack.c.b16 %v4468, %v4468
          %v4597 = vpack.c.b16 %v4469, %v4469
          %v4598 = vpack.c.b16 %v4470, %v4470
          %v4599 = vpack.c.b16 %v4471, %v4471
          %v4600 = vpack.c.b16 %v4472, %v4472
          %v4601 = vpack.c.b16 %v4473, %v4473
          %v4602 = vpack.c.b16 %v4474, %v4474
          %v4603 = vpack.c.b16 %v4475, %v4475
          %v4604 = vpack.c.b16 %v4476, %v4476
          %v4605 = vpack.c.b16 %v4477, %v4477
          %v4606 = vpack.c.b16 %v4478, %v4478
          %v4607 = vpack.c.b16 %v4479, %v4479
          %v4608 = vpack.c.b16 %v4480, %v4480
          %v4609 = vpack.c.b16 %v4481, %v4481
          %v4610 = vpack.c.b16 %v4482, %v4482
          %v4611 = vpack.c.b16 %v4483, %v4483
          %v4612 = vpack.c.b16 %v4484, %v4484
          %v4613 = vpack.c.b16 %v4485, %v4485
          %v4614 = vpack.c.b16 %v4486, %v4486
          %v4615 = vpack.c.b16 %v4487, %v4487
          %v4616 = vpack.c.b16 %v4488, %v4488
          %v4617 = vpack.c.b16 %v4489, %v4489
          %v4618 = vpack.c.b16 %v4490, %v4490
          %v4619 = vpack.c.b16 %v4491, %v4491
          %v4620 = vpack.c.b16 %v4492, %v4492
          %v4621 = vpack.c.b16 %v4493, %v4493
          %v4622 = vpack.c.b16 %v4494, %v4494
          %v4623 = vpack.c.b16 %v4495, %v4495
          %v4624 = vpack.c.b16 %v4496, %v4496
          %v4625 = vpack.c.b16 %v4497, %v4497
          %v4626 = vpack.c.b16 %v4498, %v4498
          %v4627 = vpack.c.b16 %v4499, %v4499
          %v4628 = vpack.c.b16 %v4500, %v4500
          %v4629 = vpack.c.b16 %v4501, %v4501
          %v4630 = vpack.c.b16 %v4502, %v4502
          %v4631 = vpack.c.b16 %v4503, %v4503
          %v4632 = vpack.c.b16 %v4504, %v4504
          %v4633 = vpack.c.b16 %v4505, %v4505
          %v4634 = vpack.c.b16 %v4506, %v4506
          %v4635 = vpack.c.b16 %v4507, %v4507
          %v4636 = vpack.c.b16 %v4508, %v4508
          %v4637 = vpack.c.b16 %v4509, %v4509
          %v4638 = vpack.c.b16 %v4510, %v4510
          %v4639 = vpack.c.b16 %v4511, %v4511
          %v4640 = vpack.c.b16 %v4512, %v4512
          %v4641 = vpack.c.b16 %v4513, %v4513
          %v4642 = vpack.c.b16 %v4514, %v4514
          %v4643 = vpack.c.b16 %v4515, %v4515
          %v4644 = vpack.c.b16 %v4516, %v4516
          %vm4773 = vcmask 257024
          %4774 = vst.msk [vmem:[%s337] sm:$0xf] %vm4773, %v4517
          %4775 = vst.msk [vmem:[%s337 + $0x4] sm:$0xf] %vm4773, %v4518
          %4776 = vst.msk [vmem:[%s337 + $0x8] sm:$0xf] %vm4773, %v4519
          %4777 = vst.msk [vmem:[%s337 + $0xc] sm:$0xf] %vm4773, %v4520
          %4778 = vst.msk [vmem:[%s337 + $0x10] sm:$0xf] %vm4773, %v4521
          %4779 = vst.msk [vmem:[%s337 + $0x14] sm:$0xf] %vm4773, %v4522
          %4780 = vst.msk [vmem:[%s337 + $0x18] sm:$0xf] %vm4773, %v4523
          %4781 = vst.msk [vmem:[%s337 + $0x1c] sm:$0xf] %vm4773, %v4524
          %4782 = vst.msk [vmem:[%s337 + $0x20] sm:$0xf] %vm4773, %v4525
          %4783 = vst.msk [vmem:[%s337 + $0x24] sm:$0xf] %vm4773, %v4526
          %4784 = vst.msk [vmem:[%s337 + $0x28] sm:$0xf] %vm4773, %v4527
          %4785 = vst.msk [vmem:[%s337 + $0x2c] sm:$0xf] %vm4773, %v4528
          %4786 = vst.msk [vmem:[%s337 + $0x30] sm:$0xf] %vm4773, %v4529
          %4787 = vst.msk [vmem:[%s337 + $0x34] sm:$0xf] %vm4773, %v4530
          %4788 = vst.msk [vmem:[%s337 + $0x38] sm:$0xf] %vm4773, %v4531
          %4789 = vst.msk [vmem:[%s337 + $0x3c] sm:$0xf] %vm4773, %v4532
          %4790 = vst.msk [vmem:[%s337 + $0x40] sm:$0xf] %vm4773, %v4533
          %4791 = vst.msk [vmem:[%s337 + $0x44] sm:$0xf] %vm4773, %v4534
          %4792 = vst.msk [vmem:[%s337 + $0x48] sm:$0xf] %vm4773, %v4535
          %4793 = vst.msk [vmem:[%s337 + $0x4c] sm:$0xf] %vm4773, %v4536
          %4794 = vst.msk [vmem:[%s337 + $0x50] sm:$0xf] %vm4773, %v4537
          %4795 = vst.msk [vmem:[%s337 + $0x54] sm:$0xf] %vm4773, %v4538
          %4796 = vst.msk [vmem:[%s337 + $0x58] sm:$0xf] %vm4773, %v4539
          %4797 = vst.msk [vmem:[%s337 + $0x5c] sm:$0xf] %vm4773, %v4540
          %4798 = vst.msk [vmem:[%s337 + $0x60] sm:$0xf] %vm4773, %v4541
          %4799 = vst.msk [vmem:[%s337 + $0x64] sm:$0xf] %vm4773, %v4542
          %4800 = vst.msk [vmem:[%s337 + $0x68] sm:$0xf] %vm4773, %v4543
          %4801 = vst.msk [vmem:[%s337 + $0x6c] sm:$0xf] %vm4773, %v4544
          %4802 = vst.msk [vmem:[%s337 + $0x70] sm:$0xf] %vm4773, %v4545
          %4803 = vst.msk [vmem:[%s337 + $0x74] sm:$0xf] %vm4773, %v4546
          %4804 = vst.msk [vmem:[%s337 + $0x78] sm:$0xf] %vm4773, %v4547
          %4805 = vst.msk [vmem:[%s337 + $0x7c] sm:$0xf] %vm4773, %v4548
          %4806 = vst.msk [vmem:[%s337 + $0x80] sm:$0xf] %vm4773, %v4549
          %4807 = vst.msk [vmem:[%s337 + $0x84] sm:$0xf] %vm4773, %v4550
          %4808 = vst.msk [vmem:[%s337 + $0x88] sm:$0xf] %vm4773, %v4551
          %4809 = vst.msk [vmem:[%s337 + $0x8c] sm:$0xf] %vm4773, %v4552
          %4810 = vst.msk [vmem:[%s337 + $0x90] sm:$0xf] %vm4773, %v4553
          %4811 = vst.msk [vmem:[%s337 + $0x94] sm:$0xf] %vm4773, %v4554
          %4812 = vst.msk [vmem:[%s337 + $0x98] sm:$0xf] %vm4773, %v4555
          %4813 = vst.msk [vmem:[%s337 + $0x9c] sm:$0xf] %vm4773, %v4556
          %4814 = vst.msk [vmem:[%s337 + $0xa0] sm:$0xf] %vm4773, %v4557
          %4815 = vst.msk [vmem:[%s337 + $0xa4] sm:$0xf] %vm4773, %v4558
          %4816 = vst.msk [vmem:[%s337 + $0xa8] sm:$0xf] %vm4773, %v4559
          %4817 = vst.msk [vmem:[%s337 + $0xac] sm:$0xf] %vm4773, %v4560
          %4818 = vst.msk [vmem:[%s337 + $0xb0] sm:$0xf] %vm4773, %v4561
          %4819 = vst.msk [vmem:[%s337 + $0xb4] sm:$0xf] %vm4773, %v4562
          %4820 = vst.msk [vmem:[%s337 + $0xb8] sm:$0xf] %vm4773, %v4563
          %4821 = vst.msk [vmem:[%s337 + $0xbc] sm:$0xf] %vm4773, %v4564
          %4822 = vst.msk [vmem:[%s337 + $0xc0] sm:$0xf] %vm4773, %v4565
          %4823 = vst.msk [vmem:[%s337 + $0xc4] sm:$0xf] %vm4773, %v4566
          %4824 = vst.msk [vmem:[%s337 + $0xc8] sm:$0xf] %vm4773, %v4567
          %4825 = vst.msk [vmem:[%s337 + $0xcc] sm:$0xf] %vm4773, %v4568
          %4826 = vst.msk [vmem:[%s337 + $0xd0] sm:$0xf] %vm4773, %v4569
          %4827 = vst.msk [vmem:[%s337 + $0xd4] sm:$0xf] %vm4773, %v4570
          %4828 = vst.msk [vmem:[%s337 + $0xd8] sm:$0xf] %vm4773, %v4571
          %4829 = vst.msk [vmem:[%s337 + $0xdc] sm:$0xf] %vm4773, %v4572
          %4830 = vst.msk [vmem:[%s337 + $0xe0] sm:$0xf] %vm4773, %v4573
          %4831 = vst.msk [vmem:[%s337 + $0xe4] sm:$0xf] %vm4773, %v4574
          %4832 = vst.msk [vmem:[%s337 + $0xe8] sm:$0xf] %vm4773, %v4575
          %4833 = vst.msk [vmem:[%s337 + $0xec] sm:$0xf] %vm4773, %v4576
          %4834 = vst.msk [vmem:[%s337 + $0xf0] sm:$0xf] %vm4773, %v4577
          %4835 = vst.msk [vmem:[%s337 + $0xf4] sm:$0xf] %vm4773, %v4578
          %4836 = vst.msk [vmem:[%s337 + $0xf8] sm:$0xf] %vm4773, %v4579
          %4837 = vst.msk [vmem:[%s337 + $0xfc] sm:$0xf] %vm4773, %v4580
          %4838 = vst.msk [vmem:[%s337 + $0x100] sm:$0xf] %vm4773, %v4581
          %4839 = vst.msk [vmem:[%s337 + $0x104] sm:$0xf] %vm4773, %v4582
          %4840 = vst.msk [vmem:[%s337 + $0x108] sm:$0xf] %vm4773, %v4583
          %4841 = vst.msk [vmem:[%s337 + $0x10c] sm:$0xf] %vm4773, %v4584
          %4842 = vst.msk [vmem:[%s337 + $0x110] sm:$0xf] %vm4773, %v4585
          %4843 = vst.msk [vmem:[%s337 + $0x114] sm:$0xf] %vm4773, %v4586
          %4844 = vst.msk [vmem:[%s337 + $0x118] sm:$0xf] %vm4773, %v4587
          %4845 = vst.msk [vmem:[%s337 + $0x11c] sm:$0xf] %vm4773, %v4588
          %4846 = vst.msk [vmem:[%s337 + $0x120] sm:$0xf] %vm4773, %v4589
          %4847 = vst.msk [vmem:[%s337 + $0x124] sm:$0xf] %vm4773, %v4590
          %4848 = vst.msk [vmem:[%s337 + $0x128] sm:$0xf] %vm4773, %v4591
          %4849 = vst.msk [vmem:[%s337 + $0x12c] sm:$0xf] %vm4773, %v4592
          %4850 = vst.msk [vmem:[%s337 + $0x130] sm:$0xf] %vm4773, %v4593
          %4851 = vst.msk [vmem:[%s337 + $0x134] sm:$0xf] %vm4773, %v4594
          %4852 = vst.msk [vmem:[%s337 + $0x138] sm:$0xf] %vm4773, %v4595
          %4853 = vst.msk [vmem:[%s337 + $0x13c] sm:$0xf] %vm4773, %v4596
          %4854 = vst.msk [vmem:[%s337 + $0x140] sm:$0xf] %vm4773, %v4597
          %4855 = vst.msk [vmem:[%s337 + $0x144] sm:$0xf] %vm4773, %v4598
          %4856 = vst.msk [vmem:[%s337 + $0x148] sm:$0xf] %vm4773, %v4599
          %4857 = vst.msk [vmem:[%s337 + $0x14c] sm:$0xf] %vm4773, %v4600
          %4858 = vst.msk [vmem:[%s337 + $0x150] sm:$0xf] %vm4773, %v4601
          %4859 = vst.msk [vmem:[%s337 + $0x154] sm:$0xf] %vm4773, %v4602
          %4860 = vst.msk [vmem:[%s337 + $0x158] sm:$0xf] %vm4773, %v4603
          %4861 = vst.msk [vmem:[%s337 + $0x15c] sm:$0xf] %vm4773, %v4604
          %4862 = vst.msk [vmem:[%s337 + $0x160] sm:$0xf] %vm4773, %v4605
          %4863 = vst.msk [vmem:[%s337 + $0x164] sm:$0xf] %vm4773, %v4606
          %4864 = vst.msk [vmem:[%s337 + $0x168] sm:$0xf] %vm4773, %v4607
          %4865 = vst.msk [vmem:[%s337 + $0x16c] sm:$0xf] %vm4773, %v4608
          %4866 = vst.msk [vmem:[%s337 + $0x170] sm:$0xf] %vm4773, %v4609
          %4867 = vst.msk [vmem:[%s337 + $0x174] sm:$0xf] %vm4773, %v4610
          %4868 = vst.msk [vmem:[%s337 + $0x178] sm:$0xf] %vm4773, %v4611
          %4869 = vst.msk [vmem:[%s337 + $0x17c] sm:$0xf] %vm4773, %v4612
          %4870 = vst.msk [vmem:[%s337 + $0x180] sm:$0xf] %vm4773, %v4613
          %4871 = vst.msk [vmem:[%s337 + $0x184] sm:$0xf] %vm4773, %v4614
          %4872 = vst.msk [vmem:[%s337 + $0x188] sm:$0xf] %vm4773, %v4615
          %4873 = vst.msk [vmem:[%s337 + $0x18c] sm:$0xf] %vm4773, %v4616
          %4874 = vst.msk [vmem:[%s337 + $0x190] sm:$0xf] %vm4773, %v4617
          %4875 = vst.msk [vmem:[%s337 + $0x194] sm:$0xf] %vm4773, %v4618
          %4876 = vst.msk [vmem:[%s337 + $0x198] sm:$0xf] %vm4773, %v4619
          %4877 = vst.msk [vmem:[%s337 + $0x19c] sm:$0xf] %vm4773, %v4620
          %4878 = vst.msk [vmem:[%s337 + $0x1a0] sm:$0xf] %vm4773, %v4621
          %4879 = vst.msk [vmem:[%s337 + $0x1a4] sm:$0xf] %vm4773, %v4622
          %4880 = vst.msk [vmem:[%s337 + $0x1a8] sm:$0xf] %vm4773, %v4623
          %4881 = vst.msk [vmem:[%s337 + $0x1ac] sm:$0xf] %vm4773, %v4624
          %4882 = vst.msk [vmem:[%s337 + $0x1b0] sm:$0xf] %vm4773, %v4625
          %4883 = vst.msk [vmem:[%s337 + $0x1b4] sm:$0xf] %vm4773, %v4626
          %4884 = vst.msk [vmem:[%s337 + $0x1b8] sm:$0xf] %vm4773, %v4627
          %4885 = vst.msk [vmem:[%s337 + $0x1bc] sm:$0xf] %vm4773, %v4628
          %4886 = vst.msk [vmem:[%s337 + $0x1c0] sm:$0xf] %vm4773, %v4629
          %4887 = vst.msk [vmem:[%s337 + $0x1c4] sm:$0xf] %vm4773, %v4630
          %4888 = vst.msk [vmem:[%s337 + $0x1c8] sm:$0xf] %vm4773, %v4631
          %4889 = vst.msk [vmem:[%s337 + $0x1cc] sm:$0xf] %vm4773, %v4632
          %4890 = vst.msk [vmem:[%s337 + $0x1d0] sm:$0xf] %vm4773, %v4633
          %4891 = vst.msk [vmem:[%s337 + $0x1d4] sm:$0xf] %vm4773, %v4634
          %4892 = vst.msk [vmem:[%s337 + $0x1d8] sm:$0xf] %vm4773, %v4635
          %4893 = vst.msk [vmem:[%s337 + $0x1dc] sm:$0xf] %vm4773, %v4636
          %4894 = vst.msk [vmem:[%s337 + $0x1e0] sm:$0xf] %vm4773, %v4637
          %4895 = vst.msk [vmem:[%s337 + $0x1e4] sm:$0xf] %vm4773, %v4638
          %4896 = vst.msk [vmem:[%s337 + $0x1e8] sm:$0xf] %vm4773, %v4639
          %4897 = vst.msk [vmem:[%s337 + $0x1ec] sm:$0xf] %vm4773, %v4640
          %4898 = vst.msk [vmem:[%s337 + $0x1f0] sm:$0xf] %vm4773, %v4641
          %4899 = vst.msk [vmem:[%s337 + $0x1f4] sm:$0xf] %vm4773, %v4642
          %4900 = vst.msk [vmem:[%s337 + $0x1f8] sm:$0xf] %vm4773, %v4643
          %4901 = vst.msk [vmem:[%s337 + $0x1fc] sm:$0xf] %vm4773, %v4644
        $region44: #{gcn_propagate.2} parent=31 // pred_fallthru
          _
        %s4902 = smul.u32 128, %s25
        %p4903 = scmp.lt.s32.totalorder %s24, 0
        %s4904 = scalar_select %p4903, %s24, 0
        %p4905 = scmp.lt.s32.totalorder %s4902, 127
        %s4906 = scalar_select %p4905, %s4902, 127
        %s4907 = smul.addr %s4904, 128
        %s4908 = sadd.s32 %s4906, %s4907
        %s4909 = smul.addr %s4908, 8
        %s4910 = scalar_lea.vmem %s3, %s4909
        %s4911 = smul.u32 128, %s25
        %p4912 = scmp.lt.s32.totalorder %s24, 0
        %s4913 = scalar_select %p4912, %s24, 0
        %p4914 = scmp.lt.s32.totalorder %s4911, 127
        %s4915 = scalar_select %p4914, %s4911, 127
        %s4916 = smul.addr %s4913, 128
        %s4917 = sadd.s32 %s4915, %s4916
        %s4918 = smul.addr %s4917, 4
        %s4919 = scalar_lea.vmem %s4, %s4918
        // Predicated region
        $region45: #{gcn_propagate.2} parent=31 // pred_check
          %p4920 = pneg %p142
        $region46: #{gcn_propagate.2} parent=31 // pred_check_branch
          %4922 = sbr.rel (%p4920) target = $region48
        $region47: #{gcn_propagate.2} parent=31 // pred_region
          %s4923 = smul.u32 128, %s25
        $region48: #{gcn_propagate.2} parent=31 // pred_fallthru
          _
        // Predicated region
        $region49: #{gcn_propagate.2} parent=31 // pred_check
          %p4924 = pneg %p170
        $region50: #{gcn_propagate.2} parent=31 // pred_check_branch
          %4926 = sbr.rel (%p4924) target = $region52
        $region51: #{gcn_propagate.2} parent=31 // pred_region
          %s4927 = smul.u32 128, %s25
        $region52: #{gcn_propagate.2} parent=31 // pred_fallthru
          _
        // Predicated region
        $region53: #{gcn_propagate.2} parent=31 // pred_check
          %p4928 = pneg %p142
        $region54: #{gcn_propagate.2} parent=31 // pred_check_branch
          %4930 = sbr.rel (%p4928) target = $region56
        $region55: #{gcn_propagate.2} parent=31 // pred_region
          %s4931 = smul.u32 128, %s25
          %p4932 = scmp.lt.s32.totalorder %s24, 0
          %s4933 = scalar_select %p4932, %s24, 0
          %p4934 = scmp.lt.s32.totalorder %s4931, 127
          %s4935 = scalar_select %p4934, %s4931, 127
          %s4936 = smul.addr %s4933, 128
          %s4937 = sadd.s32 %s4935, %s4936
          %s4938 = smul.addr %s4937, 8
          %s4939 = scalar_lea.vmem %s3, %s4938
        $region56: #{gcn_propagate.2} parent=31 // pred_fallthru
          _
        // Predicated region
        $region57: #{gcn_propagate.2} parent=31 // pred_check
          %p4940 = pneg %p170
        $region58: #{gcn_propagate.2} parent=31 // pred_check_branch
          %4942 = sbr.rel (%p4940) target = $region60
        $region59: #{gcn_propagate.2} parent=31 // pred_region
          %s4943 = smul.u32 128, %s25
          %p4944 = scmp.lt.s32.totalorder %s24, 0
          %s4945 = scalar_select %p4944, %s24, 0
          %p4946 = scmp.lt.s32.totalorder %s4943, 127
          %s4947 = scalar_select %p4946, %s4943, 127
          %s4948 = smul.addr %s4945, 128
          %s4949 = sadd.s32 %s4947, %s4948
          %s4950 = smul.addr %s4949, 4
          %s4951 = scalar_lea.vmem %s4, %s4950
        $region60: #{gcn_propagate.2} parent=31 // pred_fallthru
          _
      $region32: #{gcn_propagate.2} parent=5 // pred_fallthru
        _
      %p4952 = scmp.le.s32.totalorder 2, %s14
      // Predicated region
      $region61: #{gcn_propagate.2} parent=5 // pred_check
        %p4953 = pneg %p4952
      $region62: #{gcn_propagate.2} parent=5 // pred_check_branch
        %4955 = sbr.rel (%p4953) target = $region64
      $region63: #{gcn_propagate.2} parent=5 // pred_region
        %s4956 = ssub.s32 %s14, 2
      $region64: #{gcn_propagate.2} parent=5 // pred_fallthru
        _
    $region6: #{gcn_propagate.2} parent=1 // loop_footer
      %s18 = sadd.s32 1, %s14
    $region7: #{gcn_propagate.2} parent=1 // loop_footer_branch
      %13 = sbr.rel target = $region3
    $region8: #{gcn_propagate.2} parent=1 // loop_exit
      _
    %4957 = vsyncpa [#allocation4], 1
    %s4958 = scalar_lea.sflag [#allocation4], 1
    %4959 = vsyncpa %s4958, 1

// kernel: gcn_propagate.3
$region0: #{gcn_propagate.3}
  #allocation0 [shape = 'u32[]', space=smem, size = 0x4, offset = 0x4, fixed_abs, tag = 'smem constant byte address 0x4 - core index']
  #allocation1 [shape = 'u32[144,128]{1,0:T(1,128)}', space=vmem, size = 0x12000, scoped, tag = 'internal scratch']
  #allocation2 [shape = 'f32[1024,32]{1,0:T(8,128)}', space=vmem, size = 0x80000, scoped, tag = 'scratch operand']
  %s0 = inlined_call_operand.vmem [shape: bf16[1,1024,1024], index: 0, kind: input, shape index: {}]
  %s1 = inlined_call_operand.vmem [shape: bf16[1,1024,32], index: 1, kind: input, shape index: {}]
  %s2 = inlined_call_operand.vmem [shape: f32[1,1024,32], index: 2, kind: input, shape index: {}, may-alias: {2,3}]
  %s3 = inlined_call_operand.vmem [shape: f32[1,1024,32], index: 3, kind: output, shape index: {0}, may-alias: {2,3}]
  %s4 = inlined_call_operand.hbm [shape: bf16[1,1024,32], index: 4, kind: output, shape index: {1}]
  %5 = xla_tuple %s3, %s4
  %s6 = sld [smem:[#allocation0]]
  $region84: #{gcn_propagate.3} parent=0
    _
  %s8 = ssub.s32 1, %s6
  %s9 = scalar_select 0, %s8, %s6
  $region1: #{gcn_propagate.3} parent=0
    #allocation3 [shape = 'u8[2097152]{0}', space=vmem, size = 0x200000, scoped, tag = 'input window, operand 0']
    #allocation4 [shape = 'u8[262144]{0}', space=vmem, size = 0x40000, scoped, tag = 'output window, operand 1, single buffered']
    #allocation5 [shape = 's32[2]{0}', space=sflag, size = 0x8, scoped, tag = 'scoped memory for gcn_propagate.3']
    %10 = vsyncpa [#allocation5], 0
    loop: start=0, step=1, limit=4
    $region2: #{gcn_propagate.3} parent=1 // loop_pre_header
      _
    $region3: #{gcn_propagate.3} parent=1 // loop_header
      %s12 = sphi 0, %s16
      %p13 = scmp.ge.s32.totalorder %s12, 4
      %s19 = sphi 0, %s38
      %s20 = sphi 0, %s34
      %s21 = sphi 0, %s30
      %s22 = sphi 0, %s19
      %s23 = sphi 0, %s20
      %s24 = sphi 0, %s21
      %s25 = sphi 0, %s22
      %s26 = sphi 0, %s23
      %s27 = sphi 0, %s24
      %s45 = sphi 0, %s47
      %s48 = sphi 0, %s45
      %s49 = sphi 0, %s48
      %s65 = sphi 0, %s49
      %s71 = sphi 0, %s73
      %s74 = sphi 0, %s71
      %s75 = sphi 0, %s74
      %s91 = sphi 0, %s75
      %s99 = sphi 0, %s101
      %s102 = sphi 0, %s99
      %s103 = sphi 0, %s102
      %s119 = sphi 0, %s103
      %s127 = sphi 0, %s129
      %s130 = sphi 0, %s127
      %s131 = sphi 0, %s130
      %s147 = sphi 0, %s131
      %s155 = sphi 0, %s157
      %s158 = sphi 0, %s155
      %s159 = sphi 0, %s158
      %s175 = sphi 0, %s159
    $region4: #{gcn_propagate.3} parent=1 // loop_header_branch
      %15 = sbr.rel (%p13) target = $region8
    $region5: #{gcn_propagate.3} parent=1 // loop_body
      %s17 = ssub.s32 %s12, 1
      %s18 = ssub.s32 %s12, 2
      %s28 = sadd.s32 1, %s21
      %p29 = scmp.ge.s32.totalorder %s28, 2
      %s30 = scalar_select %p29, 0, %s28
      %s31 = sadd.s32 1, %s20
      %s32 = scalar_select %p29, %s31, %s20
      %p33 = scmp.ge.s32.totalorder %s32, 1
      %s34 = scalar_select %p33, 0, %s32
      %s35 = sadd.s32 1, %s19
      %s36 = scalar_select %p33, %s35, %s19
      %p37 = scmp.ge.s32.totalorder %s36, 1
      %s38 = scalar_select %p37, 0, %s36
      %s39 = ssub.s32 %s19, %s38
      %s40 = ssub.s32 %s20, %s34
      %s41 = sor.u32 %s39, %s40
      %s42 = ssub.s32 %s21, %s30
      %s43 = sor.u32 %s41, %s42
      %p44 = scmp.eq.s32.totalorder %s43, 0
      %s46 = sadd.s32 %s45, 1
      %s47 = scalar_select %p44, %s45, %s46
      %p50 = pneg %p44
      %p51 = scmp.eq.s32.totalorder %s12, 1
      %p52 = por %p50, %p51
      %p53 = scmp.ne.s32.totalorder %s45, %s48
      %p54 = scmp.eq.s32.totalorder %s12, 0
      %p55 = por %p53, %p54
      %p56 = scmp.ne.s32.totalorder %s45, %s48
      %p57 = scmp.eq.s32.totalorder %s17, 1
      %p58 = por %p56, %p57
      %p59 = scmp.ne.s32.totalorder %s48, %s49
      %p60 = scmp.eq.s32.totalorder %s17, 0
      %p61 = por %p59, %p60
      %p62 = scmp.ne.s32.totalorder %s48, %s49
      %p63 = scmp.eq.s32.totalorder %s18, 1
      %p64 = por %p62, %p63
      %p66 = scmp.ne.s32.totalorder %s49, %s65
      %p67 = scmp.eq.s32.totalorder %s18, 0
      %p68 = por %p66, %p67
      %s69 = ssub.s32 %s19, %s38
      %p70 = scmp.eq.s32.totalorder %s69, 0
      %s72 = sadd.s32 %s71, 1
      %s73 = scalar_select %p70, %s71, %s72
      %p76 = pneg %p70
      %p77 = scmp.eq.s32.totalorder %s12, 1
      %p78 = por %p76, %p77
      %p79 = scmp.ne.s32.totalorder %s71, %s74
      %p80 = scmp.eq.s32.totalorder %s12, 0
      %p81 = por %p79, %p80
      %p82 = scmp.ne.s32.totalorder %s71, %s74
      %p83 = scmp.eq.s32.totalorder %s17, 1
      %p84 = por %p82, %p83
      %p85 = scmp.ne.s32.totalorder %s74, %s75
      %p86 = scmp.eq.s32.totalorder %s17, 0
      %p87 = por %p85, %p86
      %p88 = scmp.ne.s32.totalorder %s74, %s75
      %p89 = scmp.eq.s32.totalorder %s18, 1
      %p90 = por %p88, %p89
      %p92 = scmp.ne.s32.totalorder %s75, %s91
      %p93 = scmp.eq.s32.totalorder %s18, 0
      %p94 = por %p92, %p93
      %s95 = ssub.s32 %s19, %s38
      %s96 = ssub.s32 %s20, %s34
      %s97 = sor.u32 %s95, %s96
      %p98 = scmp.eq.s32.totalorder %s97, 0
      %s100 = sadd.s32 %s99, 1
      %s101 = scalar_select %p98, %s99, %s100
      %p104 = pneg %p98
      %p105 = scmp.eq.s32.totalorder %s12, 1
      %p106 = por %p104, %p105
      %p107 = scmp.ne.s32.totalorder %s99, %s102
      %p108 = scmp.eq.s32.totalorder %s12, 0
      %p109 = por %p107, %p108
      %p110 = scmp.ne.s32.totalorder %s99, %s102
      %p111 = scmp.eq.s32.totalorder %s17, 1
      %p112 = por %p110, %p111
      %p113 = scmp.ne.s32.totalorder %s102, %s103
      %p114 = scmp.eq.s32.totalorder %s17, 0
      %p115 = por %p113, %p114
      %p116 = scmp.ne.s32.totalorder %s102, %s103
      %p117 = scmp.eq.s32.totalorder %s18, 1
      %p118 = por %p116, %p117
      %p120 = scmp.ne.s32.totalorder %s103, %s119
      %p121 = scmp.eq.s32.totalorder %s18, 0
      %p122 = por %p120, %p121
      %s123 = ssub.s32 %s19, %s38
      %s124 = ssub.s32 %s20, %s34
      %s125 = sor.u32 %s123, %s124
      %p126 = scmp.eq.s32.totalorder %s125, 0
      %s128 = sadd.s32 %s127, 1
      %s129 = scalar_select %p126, %s127, %s128
      %p132 = pneg %p126
      %p133 = scmp.eq.s32.totalorder %s12, 1
      %p134 = por %p132, %p133
      %p135 = scmp.ne.s32.totalorder %s127, %s130
      %p136 = scmp.eq.s32.totalorder %s12, 0
      %p137 = por %p135, %p136
      %p138 = scmp.ne.s32.totalorder %s127, %s130
      %p139 = scmp.eq.s32.totalorder %s17, 1
      %p140 = por %p138, %p139
      %p141 = scmp.ne.s32.totalorder %s130, %s131
      %p142 = scmp.eq.s32.totalorder %s17, 0
      %p143 = por %p141, %p142
      %p144 = scmp.ne.s32.totalorder %s130, %s131
      %p145 = scmp.eq.s32.totalorder %s18, 1
      %p146 = por %p144, %p145
      %p148 = scmp.ne.s32.totalorder %s131, %s147
      %p149 = scmp.eq.s32.totalorder %s18, 0
      %p150 = por %p148, %p149
      %s151 = ssub.s32 %s19, %s38
      %s152 = ssub.s32 %s20, %s34
      %s153 = sor.u32 %s151, %s152
      %p154 = scmp.eq.s32.totalorder %s153, 0
      %s156 = sadd.s32 %s155, 1
      %s157 = scalar_select %p154, %s155, %s156
      %p160 = pneg %p154
      %p161 = scmp.eq.s32.totalorder %s12, 1
      %p162 = por %p160, %p161
      %p163 = scmp.ne.s32.totalorder %s155, %s158
      %p164 = scmp.eq.s32.totalorder %s12, 0
      %p165 = por %p163, %p164
      %p166 = scmp.ne.s32.totalorder %s155, %s158
      %p167 = scmp.eq.s32.totalorder %s17, 1
      %p168 = por %p166, %p167
      %p169 = scmp.ne.s32.totalorder %s158, %s159
      %p170 = scmp.eq.s32.totalorder %s17, 0
      %p171 = por %p169, %p170
      %p172 = scmp.ne.s32.totalorder %s158, %s159
      %p173 = scmp.eq.s32.totalorder %s18, 1
      %p174 = por %p172, %p173
      %p176 = scmp.ne.s32.totalorder %s159, %s175
      %p177 = scmp.eq.s32.totalorder %s18, 0
      %p178 = por %p176, %p177
      %p179 = scmp.le.s32.totalorder 1, %s12
      %p180 = scmp.lt.s32.totalorder %s12, 3
      %p181 = pnand %p179, %p180
      %p182 = pneg %p181
      // Predicated region
      $region9: #{gcn_propagate.3} parent=5 // pred_check
        _
      $region10: #{gcn_propagate.3} parent=5 // pred_check_branch
        %184 = sbr.rel (%p181) target = $region12
      $region11: #{gcn_propagate.3} parent=5 // pred_region
        %s185 = ssub.s32 %s12, 1
        // Predicated region
        $region13: #{gcn_propagate.3} parent=11 // pred_check
          %p186 = pneg %p87
        $region14: #{gcn_propagate.3} parent=11 // pred_check_branch
          %188 = sbr.rel (%p186) target = $region16
        $region15: #{gcn_propagate.3} parent=11 // pred_region
          %p189 = scmp.lt.s32.totalorder %s22, 0
          %s190 = scalar_select %p189, %s22, 0
          %s191 = smul.addr %s190, 128
          %s192 = smul.addr %s191, 4
          %s193 = scalar_lea.vmem %s1, %s192
        $region16: #{gcn_propagate.3} parent=11 // pred_fallthru
          _
        // Predicated region
        $region17: #{gcn_propagate.3} parent=11 // pred_check
          %p194 = pneg %p115
        $region18: #{gcn_propagate.3} parent=11 // pred_check_branch
          %196 = sbr.rel (%p194) target = $region20
        $region19: #{gcn_propagate.3} parent=11 // pred_region
          %s197 = smul.u32 128, %s23
          %p198 = scmp.lt.s32.totalorder %s22, 0
          %s199 = scalar_select %p198, %s22, 0
          %p200 = scmp.lt.s32.totalorder %s197, 127
          %s201 = scalar_select %p200, %s197, 127
          %s202 = smul.addr %s199, 128
          %s203 = sadd.s32 %s201, %s202
          %s204 = smul.addr %s203, 8
          %s205 = scalar_lea.vmem %s2, %s204
          %s206 = smul.u32 128, %s23
        $region20: #{gcn_propagate.3} parent=11 // pred_fallthru
          _
      $region12: #{gcn_propagate.3} parent=5 // pred_fallthru
        _
      %p207 = scmp.lt.s32.totalorder %s12, 2
      // Predicated region
      $region21: #{gcn_propagate.3} parent=5 // pred_check
        %p208 = pneg %p207
      $region22: #{gcn_propagate.3} parent=5 // pred_check_branch
        %210 = sbr.rel (%p208) target = $region24
      $region23: #{gcn_propagate.3} parent=5 // pred_region
        // Predicated region
        $region25: #{gcn_propagate.3} parent=23 // pred_check
          %p211 = pneg %p55
        $region26: #{gcn_propagate.3} parent=23 // pred_check_branch
          %213 = sbr.rel (%p211) target = $region28
        $region27: #{gcn_propagate.3} parent=23 // pred_region
          %s214 = sand.u32 %s45, 1
          %s215 = sand.u32 %s45, 1
          %s216 = smul.addr %s215, 2048
          %s217 = scalar_lea.vmem [#allocation3], %s216
          %s218 = smul.u32 128, %s20
          %s219 = smul.u32 4, %s21
          %s220 = smul.addr %s218, 8
          %s221 = sadd.s32 %s219, %s220
          %s222 = smul.addr %s19, 1024
          %s223 = sadd.s32 %s221, %s222
          %s224 = smul.addr %s223, 4
          %s225 = scalar_lea.vmem %s0, %s224
          // Predicated region
          $region29: #{gcn_propagate.3} parent=27 // pred_check
            _
          $region30: #{gcn_propagate.3} parent=27 // pred_check_branch
            %227 = sbr.rel (0) target = $region32
          $region31: #{gcn_propagate.3} parent=27 // pred_region
            // Predicated region
            $region33: #{gcn_propagate.3} parent=31 // pred_check
              _
            $region34: #{gcn_propagate.3} parent=31 // pred_check_branch
              %229 = sbr.rel (0) target = $region36
            $region35: #{gcn_propagate.3} parent=31 // pred_region
              loop: start=0, step=1, limit=1
              $region37: #{gcn_propagate.3} parent=35 // loop_pre_header
                _
              $region38: #{gcn_propagate.3} parent=35 // loop_header
                %s231 = sphi 0, %s235
                %p232 = scmp.ge.s32.totalorder %s231, 1
                %s236 = sphi %s225, %s225
                %s237 = sphi %s217, %s217
              $region39: #{gcn_propagate.3} parent=35 // loop_header_branch
                %234 = sbr.rel (%p232) target = $region43
              $region40: #{gcn_propagate.3} parent=35 // loop_body
                %v238 = vld [vmem:[%s236] sm:$0xff]
                %239 = vst [vmem:[%s237] sm:$0xff] %v238
                %v240 = vld [vmem:[%s236 + $0x8] sm:$0xff]
                %241 = vst [vmem:[%s237 + $0x8] sm:$0xff] %v240
                %v242 = vld [vmem:[%s236 + $0x20] sm:$0xff]
                %243 = vst [vmem:[%s237 + $0x10] sm:$0xff] %v242
                %v244 = vld [vmem:[%s236 + $0x28] sm:$0xff]
                %245 = vst [vmem:[%s237 + $0x18] sm:$0xff] %v244
                %v246 = vld [vmem:[%s236 + $0x40] sm:$0xff]
                %247 = vst [vmem:[%s237 + $0x20] sm:$0xff] %v246
                %v248 = vld [vmem:[%s236 + $0x48] sm:$0xff]
                %249 = vst [vmem:[%s237 + $0x28] sm:$0xff] %v248
                %v250 = vld [vmem:[%s236 + $0x60] sm:$0xff]
                %251 = vst [vmem:[%s237 + $0x30] sm:$0xff] %v250
                %v252 = vld [vmem:[%s236 + $0x68] sm:$0xff]
                %253 = vst [vmem:[%s237 + $0x38] sm:$0xff] %v252
                %v254 = vld [vmem:[%s236 + $0x80] sm:$0xff]
                %255 = vst [vmem:[%s237 + $0x40] sm:$0xff] %v254
                %v256 = vld [vmem:[%s236 + $0x88] sm:$0xff]
                %257 = vst [vmem:[%s237 + $0x48] sm:$0xff] %v256
                %v258 = vld [vmem:[%s236 + $0xa0] sm:$0xff]
                %259 = vst [vmem:[%s237 + $0x50] sm:$0xff] %v258
                %v260 = vld [vmem:[%s236 + $0xa8] sm:$0xff]
                %261 = vst [vmem:[%s237 + $0x58] sm:$0xff] %v260
                %v262 = vld [vmem:[%s236 + $0xc0] sm:$0xff]
                %263 = vst [vmem:[%s237 + $0x60] sm:$0xff] %v262
                %v264 = vld [vmem:[%s236 + $0xc8] sm:$0xff]
                %265 = vst [vmem:[%s237 + $0x68] sm:$0xff] %v264
                %v266 = vld [vmem:[%s236 + $0xe0] sm:$0xff]
                %267 = vst [vmem:[%s237 + $0x70] sm:$0xff] %v266
                %v268 = vld [vmem:[%s236 + $0xe8] sm:$0xff]
                %269 = vst [vmem:[%s237 + $0x78] sm:$0xff] %v268
                %v270 = vld [vmem:[%s236 + $0x100] sm:$0xff]
                %271 = vst [vmem:[%s237 + $0x80] sm:$0xff] %v270
                %v272 = vld [vmem:[%s236 + $0x108] sm:$0xff]
                %273 = vst [vmem:[%s237 + $0x88] sm:$0xff] %v272
                %v274 = vld [vmem:[%s236 + $0x120] sm:$0xff]
                %275 = vst [vmem:[%s237 + $0x90] sm:$0xff] %v274
                %v276 = vld [vmem:[%s236 + $0x128] sm:$0xff]
                %277 = vst [vmem:[%s237 + $0x98] sm:$0xff] %v276
                %v278 = vld [vmem:[%s236 + $0x140] sm:$0xff]
                %279 = vst [vmem:[%s237 + $0xa0] sm:$0xff] %v278
                %v280 = vld [vmem:[%s236 + $0x148] sm:$0xff]
                %281 = vst [vmem:[%s237 + $0xa8] sm:$0xff] %v280
                %v282 = vld [vmem:[%s236 + $0x160] sm:$0xff]
                %283 = vst [vmem:[%s237 + $0xb0] sm:$0xff] %v282
                %v284 = vld [vmem:[%s236 + $0x168] sm:$0xff]
                %285 = vst [vmem:[%s237 + $0xb8] sm:$0xff] %v284
                %v286 = vld [vmem:[%s236 + $0x180] sm:$0xff]
                %287 = vst [vmem:[%s237 + $0xc0] sm:$0xff] %v286
                %v288 = vld [vmem:[%s236 + $0x188] sm:$0xff]
                %289 = vst [vmem:[%s237 + $0xc8] sm:$0xff] %v288
                %v290 = vld [vmem:[%s236 + $0x1a0] sm:$0xff]
                %291 = vst [vmem:[%s237 + $0xd0] sm:$0xff] %v290
                %v292 = vld [vmem:[%s236 + $0x1a8] sm:$0xff]
                %293 = vst [vmem:[%s237 + $0xd8] sm:$0xff] %v292
                %v294 = vld [vmem:[%s236 + $0x1c0] sm:$0xff]
                %295 = vst [vmem:[%s237 + $0xe0] sm:$0xff] %v294
                %v296 = vld [vmem:[%s236 + $0x1c8] sm:$0xff]
                %297 = vst [vmem:[%s237 + $0xe8] sm:$0xff] %v296
                %v298 = vld [vmem:[%s236 + $0x1e0] sm:$0xff]
                %299 = vst [vmem:[%s237 + $0xf0] sm:$0xff] %v298
                %v300 = vld [vmem:[%s236 + $0x1e8] sm:$0xff]
                %301 = vst [vmem:[%s237 + $0xf8] sm:$0xff] %v300
                %v302 = vld [vmem:[%s236 + $0x200] sm:$0xff]
                %303 = vst [vmem:[%s237 + $0x100] sm:$0xff] %v302
                %v304 = vld [vmem:[%s236 + $0x208] sm:$0xff]
                %305 = vst [vmem:[%s237 + $0x108] sm:$0xff] %v304
                %v306 = vld [vmem:[%s236 + $0x220] sm:$0xff]
                %307 = vst [vmem:[%s237 + $0x110] sm:$0xff] %v306
                %v308 = vld [vmem:[%s236 + $0x228] sm:$0xff]
                %309 = vst [vmem:[%s237 + $0x118] sm:$0xff] %v308
                %v310 = vld [vmem:[%s236 + $0x240] sm:$0xff]
                %311 = vst [vmem:[%s237 + $0x120] sm:$0xff] %v310
                %v312 = vld [vmem:[%s236 + $0x248] sm:$0xff]
                %313 = vst [vmem:[%s237 + $0x128] sm:$0xff] %v312
                %v314 = vld [vmem:[%s236 + $0x260] sm:$0xff]
                %315 = vst [vmem:[%s237 + $0x130] sm:$0xff] %v314
                %v316 = vld [vmem:[%s236 + $0x268] sm:$0xff]
                %317 = vst [vmem:[%s237 + $0x138] sm:$0xff] %v316
                %v318 = vld [vmem:[%s236 + $0x280] sm:$0xff]
                %319 = vst [vmem:[%s237 + $0x140] sm:$0xff] %v318
                %v320 = vld [vmem:[%s236 + $0x288] sm:$0xff]
                %321 = vst [vmem:[%s237 + $0x148] sm:$0xff] %v320
                %v322 = vld [vmem:[%s236 + $0x2a0] sm:$0xff]
                %323 = vst [vmem:[%s237 + $0x150] sm:$0xff] %v322
                %v324 = vld [vmem:[%s236 + $0x2a8] sm:$0xff]
                %325 = vst [vmem:[%s237 + $0x158] sm:$0xff] %v324
                %v326 = vld [vmem:[%s236 + $0x2c0] sm:$0xff]
                %327 = vst [vmem:[%s237 + $0x160] sm:$0xff] %v326
                %v328 = vld [vmem:[%s236 + $0x2c8] sm:$0xff]
                %329 = vst [vmem:[%s237 + $0x168] sm:$0xff] %v328
                %v330 = vld [vmem:[%s236 + $0x2e0] sm:$0xff]
                %331 = vst [vmem:[%s237 + $0x170] sm:$0xff] %v330
                %v332 = vld [vmem:[%s236 + $0x2e8] sm:$0xff]
                %333 = vst [vmem:[%s237 + $0x178] sm:$0xff] %v332
                %v334 = vld [vmem:[%s236 + $0x300] sm:$0xff]
                %335 = vst [vmem:[%s237 + $0x180] sm:$0xff] %v334
                %v336 = vld [vmem:[%s236 + $0x308] sm:$0xff]
                %337 = vst [vmem:[%s237 + $0x188] sm:$0xff] %v336
                %v338 = vld [vmem:[%s236 + $0x320] sm:$0xff]
                %339 = vst [vmem:[%s237 + $0x190] sm:$0xff] %v338
                %v340 = vld [vmem:[%s236 + $0x328] sm:$0xff]
                %341 = vst [vmem:[%s237 + $0x198] sm:$0xff] %v340
                %v342 = vld [vmem:[%s236 + $0x340] sm:$0xff]
                %343 = vst [vmem:[%s237 + $0x1a0] sm:$0xff] %v342
                %v344 = vld [vmem:[%s236 + $0x348] sm:$0xff]
                %345 = vst [vmem:[%s237 + $0x1a8] sm:$0xff] %v344
                %v346 = vld [vmem:[%s236 + $0x360] sm:$0xff]
                %347 = vst [vmem:[%s237 + $0x1b0] sm:$0xff] %v346
                %v348 = vld [vmem:[%s236 + $0x368] sm:$0xff]
                %349 = vst [vmem:[%s237 + $0x1b8] sm:$0xff] %v348
                %v350 = vld [vmem:[%s236 + $0x380] sm:$0xff]
                %351 = vst [vmem:[%s237 + $0x1c0] sm:$0xff] %v350
                %v352 = vld [vmem:[%s236 + $0x388] sm:$0xff]
                %353 = vst [vmem:[%s237 + $0x1c8] sm:$0xff] %v352
                %v354 = vld [vmem:[%s236 + $0x3a0] sm:$0xff]
                %355 = vst [vmem:[%s237 + $0x1d0] sm:$0xff] %v354
                %v356 = vld [vmem:[%s236 + $0x3a8] sm:$0xff]
                %357 = vst [vmem:[%s237 + $0x1d8] sm:$0xff] %v356
                %v358 = vld [vmem:[%s236 + $0x3c0] sm:$0xff]
                %359 = vst [vmem:[%s237 + $0x1e0] sm:$0xff] %v358
                %v360 = vld [vmem:[%s236 + $0x3c8] sm:$0xff]
                %361 = vst [vmem:[%s237 + $0x1e8] sm:$0xff] %v360
                %v362 = vld [vmem:[%s236 + $0x3e0] sm:$0xff]
                %363 = vst [vmem:[%s237 + $0x1f0] sm:$0xff] %v362
                %v364 = vld [vmem:[%s236 + $0x3e8] sm:$0xff]
                %365 = vst [vmem:[%s237 + $0x1f8] sm:$0xff] %v364
                %v366 = vld [vmem:[%s236 + $0x400] sm:$0xff]
                %367 = vst [vmem:[%s237 + $0x200] sm:$0xff] %v366
                %v368 = vld [vmem:[%s236 + $0x408] sm:$0xff]
                %369 = vst [vmem:[%s237 + $0x208] sm:$0xff] %v368
                %v370 = vld [vmem:[%s236 + $0x420] sm:$0xff]
                %371 = vst [vmem:[%s237 + $0x210] sm:$0xff] %v370
                %v372 = vld [vmem:[%s236 + $0x428] sm:$0xff]
                %373 = vst [vmem:[%s237 + $0x218] sm:$0xff] %v372
                %v374 = vld [vmem:[%s236 + $0x440] sm:$0xff]
                %375 = vst [vmem:[%s237 + $0x220] sm:$0xff] %v374
                %v376 = vld [vmem:[%s236 + $0x448] sm:$0xff]
                %377 = vst [vmem:[%s237 + $0x228] sm:$0xff] %v376
                %v378 = vld [vmem:[%s236 + $0x460] sm:$0xff]
                %379 = vst [vmem:[%s237 + $0x230] sm:$0xff] %v378
                %v380 = vld [vmem:[%s236 + $0x468] sm:$0xff]
                %381 = vst [vmem:[%s237 + $0x238] sm:$0xff] %v380
                %v382 = vld [vmem:[%s236 + $0x480] sm:$0xff]
                %383 = vst [vmem:[%s237 + $0x240] sm:$0xff] %v382
                %v384 = vld [vmem:[%s236 + $0x488] sm:$0xff]
                %385 = vst [vmem:[%s237 + $0x248] sm:$0xff] %v384
                %v386 = vld [vmem:[%s236 + $0x4a0] sm:$0xff]
                %387 = vst [vmem:[%s237 + $0x250] sm:$0xff] %v386
                %v388 = vld [vmem:[%s236 + $0x4a8] sm:$0xff]
                %389 = vst [vmem:[%s237 + $0x258] sm:$0xff] %v388
                %v390 = vld [vmem:[%s236 + $0x4c0] sm:$0xff]
                %391 = vst [vmem:[%s237 + $0x260] sm:$0xff] %v390
                %v392 = vld [vmem:[%s236 + $0x4c8] sm:$0xff]
                %393 = vst [vmem:[%s237 + $0x268] sm:$0xff] %v392
                %v394 = vld [vmem:[%s236 + $0x4e0] sm:$0xff]
                %395 = vst [vmem:[%s237 + $0x270] sm:$0xff] %v394
                %v396 = vld [vmem:[%s236 + $0x4e8] sm:$0xff]
                %397 = vst [vmem:[%s237 + $0x278] sm:$0xff] %v396
                %v398 = vld [vmem:[%s236 + $0x500] sm:$0xff]
                %399 = vst [vmem:[%s237 + $0x280] sm:$0xff] %v398
                %v400 = vld [vmem:[%s236 + $0x508] sm:$0xff]
                %401 = vst [vmem:[%s237 + $0x288] sm:$0xff] %v400
                %v402 = vld [vmem:[%s236 + $0x520] sm:$0xff]
                %403 = vst [vmem:[%s237 + $0x290] sm:$0xff] %v402
                %v404 = vld [vmem:[%s236 + $0x528] sm:$0xff]
                %405 = vst [vmem:[%s237 + $0x298] sm:$0xff] %v404
                %v406 = vld [vmem:[%s236 + $0x540] sm:$0xff]
                %407 = vst [vmem:[%s237 + $0x2a0] sm:$0xff] %v406
                %v408 = vld [vmem:[%s236 + $0x548] sm:$0xff]
                %409 = vst [vmem:[%s237 + $0x2a8] sm:$0xff] %v408
                %v410 = vld [vmem:[%s236 + $0x560] sm:$0xff]
                %411 = vst [vmem:[%s237 + $0x2b0] sm:$0xff] %v410
                %v412 = vld [vmem:[%s236 + $0x568] sm:$0xff]
                %413 = vst [vmem:[%s237 + $0x2b8] sm:$0xff] %v412
                %v414 = vld [vmem:[%s236 + $0x580] sm:$0xff]
                %415 = vst [vmem:[%s237 + $0x2c0] sm:$0xff] %v414
                %v416 = vld [vmem:[%s236 + $0x588] sm:$0xff]
                %417 = vst [vmem:[%s237 + $0x2c8] sm:$0xff] %v416
                %v418 = vld [vmem:[%s236 + $0x5a0] sm:$0xff]
                %419 = vst [vmem:[%s237 + $0x2d0] sm:$0xff] %v418
                %v420 = vld [vmem:[%s236 + $0x5a8] sm:$0xff]
                %421 = vst [vmem:[%s237 + $0x2d8] sm:$0xff] %v420
                %v422 = vld [vmem:[%s236 + $0x5c0] sm:$0xff]
                %423 = vst [vmem:[%s237 + $0x2e0] sm:$0xff] %v422
                %v424 = vld [vmem:[%s236 + $0x5c8] sm:$0xff]
                %425 = vst [vmem:[%s237 + $0x2e8] sm:$0xff] %v424
                %v426 = vld [vmem:[%s236 + $0x5e0] sm:$0xff]
                %427 = vst [vmem:[%s237 + $0x2f0] sm:$0xff] %v426
                %v428 = vld [vmem:[%s236 + $0x5e8] sm:$0xff]
                %429 = vst [vmem:[%s237 + $0x2f8] sm:$0xff] %v428
                %v430 = vld [vmem:[%s236 + $0x600] sm:$0xff]
                %431 = vst [vmem:[%s237 + $0x300] sm:$0xff] %v430
                %v432 = vld [vmem:[%s236 + $0x608] sm:$0xff]
                %433 = vst [vmem:[%s237 + $0x308] sm:$0xff] %v432
                %v434 = vld [vmem:[%s236 + $0x620] sm:$0xff]
                %435 = vst [vmem:[%s237 + $0x310] sm:$0xff] %v434
                %v436 = vld [vmem:[%s236 + $0x628] sm:$0xff]
                %437 = vst [vmem:[%s237 + $0x318] sm:$0xff] %v436
                %v438 = vld [vmem:[%s236 + $0x640] sm:$0xff]
                %439 = vst [vmem:[%s237 + $0x320] sm:$0xff] %v438
                %v440 = vld [vmem:[%s236 + $0x648] sm:$0xff]
                %441 = vst [vmem:[%s237 + $0x328] sm:$0xff] %v440
                %v442 = vld [vmem:[%s236 + $0x660] sm:$0xff]
                %443 = vst [vmem:[%s237 + $0x330] sm:$0xff] %v442
                %v444 = vld [vmem:[%s236 + $0x668] sm:$0xff]
                %445 = vst [vmem:[%s237 + $0x338] sm:$0xff] %v444
                %v446 = vld [vmem:[%s236 + $0x680] sm:$0xff]
                %447 = vst [vmem:[%s237 + $0x340] sm:$0xff] %v446
                %v448 = vld [vmem:[%s236 + $0x688] sm:$0xff]
                %449 = vst [vmem:[%s237 + $0x348] sm:$0xff] %v448
                %v450 = vld [vmem:[%s236 + $0x6a0] sm:$0xff]
                %451 = vst [vmem:[%s237 + $0x350] sm:$0xff] %v450
                %v452 = vld [vmem:[%s236 + $0x6a8] sm:$0xff]
                %453 = vst [vmem:[%s237 + $0x358] sm:$0xff] %v452
                %v454 = vld [vmem:[%s236 + $0x6c0] sm:$0xff]
                %455 = vst [vmem:[%s237 + $0x360] sm:$0xff] %v454
                %v456 = vld [vmem:[%s236 + $0x6c8] sm:$0xff]
                %457 = vst [vmem:[%s237 + $0x368] sm:$0xff] %v456
                %v458 = vld [vmem:[%s236 + $0x6e0] sm:$0xff]
                %459 = vst [vmem:[%s237 + $0x370] sm:$0xff] %v458
                %v460 = vld [vmem:[%s236 + $0x6e8] sm:$0xff]
                %461 = vst [vmem:[%s237 + $0x378] sm:$0xff] %v460
                %v462 = vld [vmem:[%s236 + $0x700] sm:$0xff]
                %463 = vst [vmem:[%s237 + $0x380] sm:$0xff] %v462
                %v464 = vld [vmem:[%s236 + $0x708] sm:$0xff]
                %465 = vst [vmem:[%s237 + $0x388] sm:$0xff] %v464
                %v466 = vld [vmem:[%s236 + $0x720] sm:$0xff]
                %467 = vst [vmem:[%s237 + $0x390] sm:$0xff] %v466
                %v468 = vld [vmem:[%s236 + $0x728] sm:$0xff]
                %469 = vst [vmem:[%s237 + $0x398] sm:$0xff] %v468
                %v470 = vld [vmem:[%s236 + $0x740] sm:$0xff]
                %471 = vst [vmem:[%s237 + $0x3a0] sm:$0xff] %v470
                %v472 = vld [vmem:[%s236 + $0x748] sm:$0xff]
                %473 = vst [vmem:[%s237 + $0x3a8] sm:$0xff] %v472
                %v474 = vld [vmem:[%s236 + $0x760] sm:$0xff]
                %475 = vst [vmem:[%s237 + $0x3b0] sm:$0xff] %v474
                %v476 = vld [vmem:[%s236 + $0x768] sm:$0xff]
                %477 = vst [vmem:[%s237 + $0x3b8] sm:$0xff] %v476
                %v478 = vld [vmem:[%s236 + $0x780] sm:$0xff]
                %479 = vst [vmem:[%s237 + $0x3c0] sm:$0xff] %v478
                %v480 = vld [vmem:[%s236 + $0x788] sm:$0xff]
                %481 = vst [vmem:[%s237 + $0x3c8] sm:$0xff] %v480
                %v482 = vld [vmem:[%s236 + $0x7a0] sm:$0xff]
                %483 = vst [vmem:[%s237 + $0x3d0] sm:$0xff] %v482
                %v484 = vld [vmem:[%s236 + $0x7a8] sm:$0xff]
                %485 = vst [vmem:[%s237 + $0x3d8] sm:$0xff] %v484
                %v486 = vld [vmem:[%s236 + $0x7c0] sm:$0xff]
                %487 = vst [vmem:[%s237 + $0x3e0] sm:$0xff] %v486
                %v488 = vld [vmem:[%s236 + $0x7c8] sm:$0xff]
                %489 = vst [vmem:[%s237 + $0x3e8] sm:$0xff] %v488
                %v490 = vld [vmem:[%s236 + $0x7e0] sm:$0xff]
                %491 = vst [vmem:[%s237 + $0x3f0] sm:$0xff] %v490
                %v492 = vld [vmem:[%s236 + $0x7e8] sm:$0xff]
                %493 = vst [vmem:[%s237 + $0x3f8] sm:$0xff] %v492
                %v494 = vld [vmem:[%s236 + $0x800] sm:$0xff]
                %495 = vst [vmem:[%s237 + $0x400] sm:$0xff] %v494
                %v496 = vld [vmem:[%s236 + $0x808] sm:$0xff]
                %497 = vst [vmem:[%s237 + $0x408] sm:$0xff] %v496
                %v498 = vld [vmem:[%s236 + $0x820] sm:$0xff]
                %499 = vst [vmem:[%s237 + $0x410] sm:$0xff] %v498
                %v500 = vld [vmem:[%s236 + $0x828] sm:$0xff]
                %501 = vst [vmem:[%s237 + $0x418] sm:$0xff] %v500
                %v502 = vld [vmem:[%s236 + $0x840] sm:$0xff]
                %503 = vst [vmem:[%s237 + $0x420] sm:$0xff] %v502
                %v504 = vld [vmem:[%s236 + $0x848] sm:$0xff]
                %505 = vst [vmem:[%s237 + $0x428] sm:$0xff] %v504
                %v506 = vld [vmem:[%s236 + $0x860] sm:$0xff]
                %507 = vst [vmem:[%s237 + $0x430] sm:$0xff] %v506
                %v508 = vld [vmem:[%s236 + $0x868] sm:$0xff]
                %509 = vst [vmem:[%s237 + $0x438] sm:$0xff] %v508
                %v510 = vld [vmem:[%s236 + $0x880] sm:$0xff]
                %511 = vst [vmem:[%s237 + $0x440] sm:$0xff] %v510
                %v512 = vld [vmem:[%s236 + $0x888] sm:$0xff]
                %513 = vst [vmem:[%s237 + $0x448] sm:$0xff] %v512
                %v514 = vld [vmem:[%s236 + $0x8a0] sm:$0xff]
                %515 = vst [vmem:[%s237 + $0x450] sm:$0xff] %v514
                %v516 = vld [vmem:[%s236 + $0x8a8] sm:$0xff]
                %517 = vst [vmem:[%s237 + $0x458] sm:$0xff] %v516
                %v518 = vld [vmem:[%s236 + $0x8c0] sm:$0xff]
                %519 = vst [vmem:[%s237 + $0x460] sm:$0xff] %v518
                %v520 = vld [vmem:[%s236 + $0x8c8] sm:$0xff]
                %521 = vst [vmem:[%s237 + $0x468] sm:$0xff] %v520
                %v522 = vld [vmem:[%s236 + $0x8e0] sm:$0xff]
                %523 = vst [vmem:[%s237 + $0x470] sm:$0xff] %v522
                %v524 = vld [vmem:[%s236 + $0x8e8] sm:$0xff]
                %525 = vst [vmem:[%s237 + $0x478] sm:$0xff] %v524
                %v526 = vld [vmem:[%s236 + $0x900] sm:$0xff]
                %527 = vst [vmem:[%s237 + $0x480] sm:$0xff] %v526
                %v528 = vld [vmem:[%s236 + $0x908] sm:$0xff]
                %529 = vst [vmem:[%s237 + $0x488] sm:$0xff] %v528
                %v530 = vld [vmem:[%s236 + $0x920] sm:$0xff]
                %531 = vst [vmem:[%s237 + $0x490] sm:$0xff] %v530
                %v532 = vld [vmem:[%s236 + $0x928] sm:$0xff]
                %533 = vst [vmem:[%s237 + $0x498] sm:$0xff] %v532
                %v534 = vld [vmem:[%s236 + $0x940] sm:$0xff]
                %535 = vst [vmem:[%s237 + $0x4a0] sm:$0xff] %v534
                %v536 = vld [vmem:[%s236 + $0x948] sm:$0xff]
                %537 = vst [vmem:[%s237 + $0x4a8] sm:$0xff] %v536
                %v538 = vld [vmem:[%s236 + $0x960] sm:$0xff]
                %539 = vst [vmem:[%s237 + $0x4b0] sm:$0xff] %v538
                %v540 = vld [vmem:[%s236 + $0x968] sm:$0xff]
                %541 = vst [vmem:[%s237 + $0x4b8] sm:$0xff] %v540
                %v542 = vld [vmem:[%s236 + $0x980] sm:$0xff]
                %543 = vst [vmem:[%s237 + $0x4c0] sm:$0xff] %v542
                %v544 = vld [vmem:[%s236 + $0x988] sm:$0xff]
                %545 = vst [vmem:[%s237 + $0x4c8] sm:$0xff] %v544
                %v546 = vld [vmem:[%s236 + $0x9a0] sm:$0xff]
                %547 = vst [vmem:[%s237 + $0x4d0] sm:$0xff] %v546
                %v548 = vld [vmem:[%s236 + $0x9a8] sm:$0xff]
                %549 = vst [vmem:[%s237 + $0x4d8] sm:$0xff] %v548
                %v550 = vld [vmem:[%s236 + $0x9c0] sm:$0xff]
                %551 = vst [vmem:[%s237 + $0x4e0] sm:$0xff] %v550
                %v552 = vld [vmem:[%s236 + $0x9c8] sm:$0xff]
                %553 = vst [vmem:[%s237 + $0x4e8] sm:$0xff] %v552
                %v554 = vld [vmem:[%s236 + $0x9e0] sm:$0xff]
                %555 = vst [vmem:[%s237 + $0x4f0] sm:$0xff] %v554
                %v556 = vld [vmem:[%s236 + $0x9e8] sm:$0xff]
                %557 = vst [vmem:[%s237 + $0x4f8] sm:$0xff] %v556
                %v558 = vld [vmem:[%s236 + $0xa00] sm:$0xff]
                %559 = vst [vmem:[%s237 + $0x500] sm:$0xff] %v558
                %v560 = vld [vmem:[%s236 + $0xa08] sm:$0xff]
                %561 = vst [vmem:[%s237 + $0x508] sm:$0xff] %v560
                %v562 = vld [vmem:[%s236 + $0xa20] sm:$0xff]
                %563 = vst [vmem:[%s237 + $0x510] sm:$0xff] %v562
                %v564 = vld [vmem:[%s236 + $0xa28] sm:$0xff]
                %565 = vst [vmem:[%s237 + $0x518] sm:$0xff] %v564
                %v566 = vld [vmem:[%s236 + $0xa40] sm:$0xff]
                %567 = vst [vmem:[%s237 + $0x520] sm:$0xff] %v566
                %v568 = vld [vmem:[%s236 + $0xa48] sm:$0xff]
                %569 = vst [vmem:[%s237 + $0x528] sm:$0xff] %v568
                %v570 = vld [vmem:[%s236 + $0xa60] sm:$0xff]
                %571 = vst [vmem:[%s237 + $0x530] sm:$0xff] %v570
                %v572 = vld [vmem:[%s236 + $0xa68] sm:$0xff]
                %573 = vst [vmem:[%s237 + $0x538] sm:$0xff] %v572
                %v574 = vld [vmem:[%s236 + $0xa80] sm:$0xff]
                %575 = vst [vmem:[%s237 + $0x540] sm:$0xff] %v574
                %v576 = vld [vmem:[%s236 + $0xa88] sm:$0xff]
                %577 = vst [vmem:[%s237 + $0x548] sm:$0xff] %v576
                %v578 = vld [vmem:[%s236 + $0xaa0] sm:$0xff]
                %579 = vst [vmem:[%s237 + $0x550] sm:$0xff] %v578
                %v580 = vld [vmem:[%s236 + $0xaa8] sm:$0xff]
                %581 = vst [vmem:[%s237 + $0x558] sm:$0xff] %v580
                %v582 = vld [vmem:[%s236 + $0xac0] sm:$0xff]
                %583 = vst [vmem:[%s237 + $0x560] sm:$0xff] %v582
                %v584 = vld [vmem:[%s236 + $0xac8] sm:$0xff]
                %585 = vst [vmem:[%s237 + $0x568] sm:$0xff] %v584
                %v586 = vld [vmem:[%s236 + $0xae0] sm:$0xff]
                %587 = vst [vmem:[%s237 + $0x570] sm:$0xff] %v586
                %v588 = vld [vmem:[%s236 + $0xae8] sm:$0xff]
                %589 = vst [vmem:[%s237 + $0x578] sm:$0xff] %v588
                %v590 = vld [vmem:[%s236 + $0xb00] sm:$0xff]
                %591 = vst [vmem:[%s237 + $0x580] sm:$0xff] %v590
                %v592 = vld [vmem:[%s236 + $0xb08] sm:$0xff]
                %593 = vst [vmem:[%s237 + $0x588] sm:$0xff] %v592
                %v594 = vld [vmem:[%s236 + $0xb20] sm:$0xff]
                %595 = vst [vmem:[%s237 + $0x590] sm:$0xff] %v594
                %v596 = vld [vmem:[%s236 + $0xb28] sm:$0xff]
                %597 = vst [vmem:[%s237 + $0x598] sm:$0xff] %v596
                %v598 = vld [vmem:[%s236 + $0xb40] sm:$0xff]
                %599 = vst [vmem:[%s237 + $0x5a0] sm:$0xff] %v598
                %v600 = vld [vmem:[%s236 + $0xb48] sm:$0xff]
                %601 = vst [vmem:[%s237 + $0x5a8] sm:$0xff] %v600
                %v602 = vld [vmem:[%s236 + $0xb60] sm:$0xff]
                %603 = vst [vmem:[%s237 + $0x5b0] sm:$0xff] %v602
                %v604 = vld [vmem:[%s236 + $0xb68] sm:$0xff]
                %605 = vst [vmem:[%s237 + $0x5b8] sm:$0xff] %v604
                %v606 = vld [vmem:[%s236 + $0xb80] sm:$0xff]
                %607 = vst [vmem:[%s237 + $0x5c0] sm:$0xff] %v606
                %v608 = vld [vmem:[%s236 + $0xb88] sm:$0xff]
                %609 = vst [vmem:[%s237 + $0x5c8] sm:$0xff] %v608
                %v610 = vld [vmem:[%s236 + $0xba0] sm:$0xff]
                %611 = vst [vmem:[%s237 + $0x5d0] sm:$0xff] %v610
                %v612 = vld [vmem:[%s236 + $0xba8] sm:$0xff]
                %613 = vst [vmem:[%s237 + $0x5d8] sm:$0xff] %v612
                %v614 = vld [vmem:[%s236 + $0xbc0] sm:$0xff]
                %615 = vst [vmem:[%s237 + $0x5e0] sm:$0xff] %v614
                %v616 = vld [vmem:[%s236 + $0xbc8] sm:$0xff]
                %617 = vst [vmem:[%s237 + $0x5e8] sm:$0xff] %v616
                %v618 = vld [vmem:[%s236 + $0xbe0] sm:$0xff]
                %619 = vst [vmem:[%s237 + $0x5f0] sm:$0xff] %v618
                %v620 = vld [vmem:[%s236 + $0xbe8] sm:$0xff]
                %621 = vst [vmem:[%s237 + $0x5f8] sm:$0xff] %v620
                %v622 = vld [vmem:[%s236 + $0xc00] sm:$0xff]
                %623 = vst [vmem:[%s237 + $0x600] sm:$0xff] %v622
                %v624 = vld [vmem:[%s236 + $0xc08] sm:$0xff]
                %625 = vst [vmem:[%s237 + $0x608] sm:$0xff] %v624
                %v626 = vld [vmem:[%s236 + $0xc20] sm:$0xff]
                %627 = vst [vmem:[%s237 + $0x610] sm:$0xff] %v626
                %v628 = vld [vmem:[%s236 + $0xc28] sm:$0xff]
                %629 = vst [vmem:[%s237 + $0x618] sm:$0xff] %v628
                %v630 = vld [vmem:[%s236 + $0xc40] sm:$0xff]
                %631 = vst [vmem:[%s237 + $0x620] sm:$0xff] %v630
                %v632 = vld [vmem:[%s236 + $0xc48] sm:$0xff]
                %633 = vst [vmem:[%s237 + $0x628] sm:$0xff] %v632
                %v634 = vld [vmem:[%s236 + $0xc60] sm:$0xff]
                %635 = vst [vmem:[%s237 + $0x630] sm:$0xff] %v634
                %v636 = vld [vmem:[%s236 + $0xc68] sm:$0xff]
                %637 = vst [vmem:[%s237 + $0x638] sm:$0xff] %v636
                %v638 = vld [vmem:[%s236 + $0xc80] sm:$0xff]
                %639 = vst [vmem:[%s237 + $0x640] sm:$0xff] %v638
                %v640 = vld [vmem:[%s236 + $0xc88] sm:$0xff]
                %641 = vst [vmem:[%s237 + $0x648] sm:$0xff] %v640
                %v642 = vld [vmem:[%s236 + $0xca0] sm:$0xff]
                %643 = vst [vmem:[%s237 + $0x650] sm:$0xff] %v642
                %v644 = vld [vmem:[%s236 + $0xca8] sm:$0xff]
                %645 = vst [vmem:[%s237 + $0x658] sm:$0xff] %v644
                %v646 = vld [vmem:[%s236 + $0xcc0] sm:$0xff]
                %647 = vst [vmem:[%s237 + $0x660] sm:$0xff] %v646
                %v648 = vld [vmem:[%s236 + $0xcc8] sm:$0xff]
                %649 = vst [vmem:[%s237 + $0x668] sm:$0xff] %v648
                %v650 = vld [vmem:[%s236 + $0xce0] sm:$0xff]
                %651 = vst [vmem:[%s237 + $0x670] sm:$0xff] %v650
                %v652 = vld [vmem:[%s236 + $0xce8] sm:$0xff]
                %653 = vst [vmem:[%s237 + $0x678] sm:$0xff] %v652
                %v654 = vld [vmem:[%s236 + $0xd00] sm:$0xff]
                %655 = vst [vmem:[%s237 + $0x680] sm:$0xff] %v654
                %v656 = vld [vmem:[%s236 + $0xd08] sm:$0xff]
                %657 = vst [vmem:[%s237 + $0x688] sm:$0xff] %v656
                %v658 = vld [vmem:[%s236 + $0xd20] sm:$0xff]
                %659 = vst [vmem:[%s237 + $0x690] sm:$0xff] %v658
                %v660 = vld [vmem:[%s236 + $0xd28] sm:$0xff]
                %661 = vst [vmem:[%s237 + $0x698] sm:$0xff] %v660
                %v662 = vld [vmem:[%s236 + $0xd40] sm:$0xff]
                %663 = vst [vmem:[%s237 + $0x6a0] sm:$0xff] %v662
                %v664 = vld [vmem:[%s236 + $0xd48] sm:$0xff]
                %665 = vst [vmem:[%s237 + $0x6a8] sm:$0xff] %v664
                %v666 = vld [vmem:[%s236 + $0xd60] sm:$0xff]
                %667 = vst [vmem:[%s237 + $0x6b0] sm:$0xff] %v666
                %v668 = vld [vmem:[%s236 + $0xd68] sm:$0xff]
                %669 = vst [vmem:[%s237 + $0x6b8] sm:$0xff] %v668
                %v670 = vld [vmem:[%s236 + $0xd80] sm:$0xff]
                %671 = vst [vmem:[%s237 + $0x6c0] sm:$0xff] %v670
                %v672 = vld [vmem:[%s236 + $0xd88] sm:$0xff]
                %673 = vst [vmem:[%s237 + $0x6c8] sm:$0xff] %v672
                %v674 = vld [vmem:[%s236 + $0xda0] sm:$0xff]
                %675 = vst [vmem:[%s237 + $0x6d0] sm:$0xff] %v674
                %v676 = vld [vmem:[%s236 + $0xda8] sm:$0xff]
                %677 = vst [vmem:[%s237 + $0x6d8] sm:$0xff] %v676
                %v678 = vld [vmem:[%s236 + $0xdc0] sm:$0xff]
                %679 = vst [vmem:[%s237 + $0x6e0] sm:$0xff] %v678
                %v680 = vld [vmem:[%s236 + $0xdc8] sm:$0xff]
                %681 = vst [vmem:[%s237 + $0x6e8] sm:$0xff] %v680
                %v682 = vld [vmem:[%s236 + $0xde0] sm:$0xff]
                %683 = vst [vmem:[%s237 + $0x6f0] sm:$0xff] %v682
                %v684 = vld [vmem:[%s236 + $0xde8] sm:$0xff]
                %685 = vst [vmem:[%s237 + $0x6f8] sm:$0xff] %v684
                %v686 = vld [vmem:[%s236 + $0xe00] sm:$0xff]
                %687 = vst [vmem:[%s237 + $0x700] sm:$0xff] %v686
                %v688 = vld [vmem:[%s236 + $0xe08] sm:$0xff]
                %689 = vst [vmem:[%s237 + $0x708] sm:$0xff] %v688
                %v690 = vld [vmem:[%s236 + $0xe20] sm:$0xff]
                %691 = vst [vmem:[%s237 + $0x710] sm:$0xff] %v690
                %v692 = vld [vmem:[%s236 + $0xe28] sm:$0xff]
                %693 = vst [vmem:[%s237 + $0x718] sm:$0xff] %v692
                %v694 = vld [vmem:[%s236 + $0xe40] sm:$0xff]
                %695 = vst [vmem:[%s237 + $0x720] sm:$0xff] %v694
                %v696 = vld [vmem:[%s236 + $0xe48] sm:$0xff]
                %697 = vst [vmem:[%s237 + $0x728] sm:$0xff] %v696
                %v698 = vld [vmem:[%s236 + $0xe60] sm:$0xff]
                %699 = vst [vmem:[%s237 + $0x730] sm:$0xff] %v698
                %v700 = vld [vmem:[%s236 + $0xe68] sm:$0xff]
                %701 = vst [vmem:[%s237 + $0x738] sm:$0xff] %v700
                %v702 = vld [vmem:[%s236 + $0xe80] sm:$0xff]
                %703 = vst [vmem:[%s237 + $0x740] sm:$0xff] %v702
                %v704 = vld [vmem:[%s236 + $0xe88] sm:$0xff]
                %705 = vst [vmem:[%s237 + $0x748] sm:$0xff] %v704
                %v706 = vld [vmem:[%s236 + $0xea0] sm:$0xff]
                %707 = vst [vmem:[%s237 + $0x750] sm:$0xff] %v706
                %v708 = vld [vmem:[%s236 + $0xea8] sm:$0xff]
                %709 = vst [vmem:[%s237 + $0x758] sm:$0xff] %v708
                %v710 = vld [vmem:[%s236 + $0xec0] sm:$0xff]
                %711 = vst [vmem:[%s237 + $0x760] sm:$0xff] %v710
                %v712 = vld [vmem:[%s236 + $0xec8] sm:$0xff]
                %713 = vst [vmem:[%s237 + $0x768] sm:$0xff] %v712
                %v714 = vld [vmem:[%s236 + $0xee0] sm:$0xff]
                %715 = vst [vmem:[%s237 + $0x770] sm:$0xff] %v714
                %v716 = vld [vmem:[%s236 + $0xee8] sm:$0xff]
                %717 = vst [vmem:[%s237 + $0x778] sm:$0xff] %v716
                %v718 = vld [vmem:[%s236 + $0xf00] sm:$0xff]
                %719 = vst [vmem:[%s237 + $0x780] sm:$0xff] %v718
                %v720 = vld [vmem:[%s236 + $0xf08] sm:$0xff]
                %721 = vst [vmem:[%s237 + $0x788] sm:$0xff] %v720
                %v722 = vld [vmem:[%s236 + $0xf20] sm:$0xff]
                %723 = vst [vmem:[%s237 + $0x790] sm:$0xff] %v722
                %v724 = vld [vmem:[%s236 + $0xf28] sm:$0xff]
                %725 = vst [vmem:[%s237 + $0x798] sm:$0xff] %v724
                %v726 = vld [vmem:[%s236 + $0xf40] sm:$0xff]
                %727 = vst [vmem:[%s237 + $0x7a0] sm:$0xff] %v726
                %v728 = vld [vmem:[%s236 + $0xf48] sm:$0xff]
                %729 = vst [vmem:[%s237 + $0x7a8] sm:$0xff] %v728
                %v730 = vld [vmem:[%s236 + $0xf60] sm:$0xff]
                %731 = vst [vmem:[%s237 + $0x7b0] sm:$0xff] %v730
                %v732 = vld [vmem:[%s236 + $0xf68] sm:$0xff]
                %733 = vst [vmem:[%s237 + $0x7b8] sm:$0xff] %v732
                %v734 = vld [vmem:[%s236 + $0xf80] sm:$0xff]
                %735 = vst [vmem:[%s237 + $0x7c0] sm:$0xff] %v734
                %v736 = vld [vmem:[%s236 + $0xf88] sm:$0xff]
                %737 = vst [vmem:[%s237 + $0x7c8] sm:$0xff] %v736
                %v738 = vld [vmem:[%s236 + $0xfa0] sm:$0xff]
                %739 = vst [vmem:[%s237 + $0x7d0] sm:$0xff] %v738
                %v740 = vld [vmem:[%s236 + $0xfa8] sm:$0xff]
                %741 = vst [vmem:[%s237 + $0x7d8] sm:$0xff] %v740
                %v742 = vld [vmem:[%s236 + $0xfc0] sm:$0xff]
                %743 = vst [vmem:[%s237 + $0x7e0] sm:$0xff] %v742
                %v744 = vld [vmem:[%s236 + $0xfc8] sm:$0xff]
                %745 = vst [vmem:[%s237 + $0x7e8] sm:$0xff] %v744
                %v746 = vld [vmem:[%s236 + $0xfe0] sm:$0xff]
                %747 = vst [vmem:[%s237 + $0x7f0] sm:$0xff] %v746
                %v748 = vld [vmem:[%s236 + $0xfe8] sm:$0xff]
                %749 = vst [vmem:[%s237 + $0x7f8] sm:$0xff] %v748
              $region41: #{gcn_propagate.3} parent=35 // loop_footer
                %s235 = sadd.s32 1, %s231
              $region42: #{gcn_propagate.3} parent=35 // loop_footer_branch
                %230 = sbr.rel target = $region38
              $region43: #{gcn_propagate.3} parent=35 // loop_exit
                _
            $region36: #{gcn_propagate.3} parent=31 // pred_fallthru
              _
            // Predicated region
            $region44: #{gcn_propagate.3} parent=31 // pred_check
              _
            $region45: #{gcn_propagate.3} parent=31 // pred_check_branch
              %751 = sbr.rel target = $region47
            $region46: #{gcn_propagate.3} parent=31 // pred_region
              _
            $region47: #{gcn_propagate.3} parent=31 // pred_fallthru
              _
          $region32: #{gcn_propagate.3} parent=27 // pred_fallthru
            _
          %752 = vnop
        $region28: #{gcn_propagate.3} parent=23 // pred_fallthru
          _
      $region24: #{gcn_propagate.3} parent=5 // pred_fallthru
        _
      %p753 = scmp.le.s32.totalorder 1, %s12
      %p754 = scmp.lt.s32.totalorder %s12, 3
      %p755 = pnand %p753, %p754
      %p756 = pneg %p755
      // Predicated region
      $region48: #{gcn_propagate.3} parent=5 // pred_check
        _
      $region49: #{gcn_propagate.3} parent=5 // pred_check_branch
        %758 = sbr.rel (%p755) target = $region51
      $region50: #{gcn_propagate.3} parent=5 // pred_region
        %s759 = ssub.s32 %s12, 1
        %s760 = sand.u32 %s48, 1
        %s761 = sand.u32 %s48, 1
        %s762 = smul.addr %s761, 2048
        %s763 = scalar_lea.vmem [#allocation3], %s762
        // Predicated region
        $region52: #{gcn_propagate.3} parent=50 // pred_check
          %p764 = pneg %p61
        $region53: #{gcn_propagate.3} parent=50 // pred_check_branch
          %766 = sbr.rel (%p764) target = $region55
        $region54: #{gcn_propagate.3} parent=50 // pred_region
          _
        $region55: #{gcn_propagate.3} parent=50 // pred_fallthru
          _
        %s767 = sand.u32 %s48, 1
        %s768 = sand.u32 %s48, 1
        %s769 = smul.addr %s768, 2048
        %s770 = scalar_lea.vmem [#allocation3], %s769
        %p771 = pneg %p61
        %p772 = pneg %p58
        %p773 = scmp.lt.s32.totalorder %s22, 0
        %s774 = scalar_select %p773, %s22, 0
        %s775 = smul.addr %s774, 128
        %s776 = smul.addr %s775, 4
        %s777 = scalar_lea.vmem %s1, %s776
        %p778 = pneg %p87
        %p779 = pneg %p84
        %s780 = smul.u32 128, %s23
        %p781 = scmp.lt.s32.totalorder %s22, 0
        %s782 = scalar_select %p781, %s22, 0
        %p783 = scmp.lt.s32.totalorder %s780, 127
        %s784 = scalar_select %p783, %s780, 127
        %s785 = smul.addr %s782, 128
        %s786 = sadd.s32 %s784, %s785
        %s787 = smul.addr %s786, 8
        %s788 = scalar_lea.vmem %s2, %s787
        %p789 = pneg %p115
        %p790 = pneg %p112
        %p791 = pneg %p143
        %p792 = pneg %p140
        %s793 = smul.u32 128, %s23
        %p794 = scmp.lt.s32.totalorder %s22, 0
        %s795 = scalar_select %p794, %s22, 0
        %p796 = scmp.lt.s32.totalorder %s793, 127
        %s797 = scalar_select %p796, %s793, 127
        %s798 = smul.addr %s795, 128
        %s799 = sadd.s32 %s797, %s798
        %s800 = smul.addr %s799, 8
        %s801 = scalar_lea.vmem %s3, %s800
        %p802 = pneg %p171
        %p803 = pneg %p168
        %s804 = smul.u32 128, %s23
        %s805 = smul.u32 4, %s24
        %p806 = scmp.lt.s32.totalorder %s22, 0
        %s807 = scalar_select %p806, %s22, 0
        %s808 = smul.addr %s807, 128
        %s809 = smul.addr %s808, 4
        %s810 = scalar_lea.vmem %s1, %s809
        %s811 = smul.u32 128, %s23
        %p812 = scmp.lt.s32.totalorder %s22, 0
        %s813 = scalar_select %p812, %s22, 0
        %p814 = scmp.lt.s32.totalorder %s811, 127
        %s815 = scalar_select %p814, %s811, 127
        %s816 = smul.addr %s813, 128
        %s817 = sadd.s32 %s815, %s816
        %s818 = smul.addr %s817, 8
        %s819 = scalar_lea.vmem %s2, %s818
        %s820 = smul.u32 128, %s23
        %s821 = smul.u32 128, %s23
        %p822 = scmp.lt.s32.totalorder %s22, 0
        %s823 = scalar_select %p822, %s22, 0
        %p824 = scmp.lt.s32.totalorder %s821, 127
        %s825 = scalar_select %p824, %s821, 127
        %s826 = smul.addr %s823, 128
        %s827 = sadd.s32 %s825, %s826
        %s828 = smul.addr %s827, 8
        %s829 = scalar_lea.vmem %s3, %s828
        %s830 = smul.u32 128, %s23
        %s831 = smul.u32 128, %s23
        %p833 = scmp.eq.s32.totalorder %s24, 0
        // Predicated region
        $region56: #{gcn_propagate.3} parent=50 // pred_check
          %p834 = pneg %p833
        $region57: #{gcn_propagate.3} parent=50 // pred_check_branch
          %836 = sbr.rel (%p834) target = $region59
        $region58: #{gcn_propagate.3} parent=50 // pred_region
          %vm837 = vcmask 261120
          %838 = vst.msk [vmem:[#allocation2] sm:$0xff] %vm837, 0.0
          %839 = vst.msk [vmem:[#allocation2 + $0x8] sm:$0xff] %vm837, 0.0
          %840 = vst.msk [vmem:[#allocation2 + $0x10] sm:$0xff] %vm837, 0.0
          %841 = vst.msk [vmem:[#allocation2 + $0x18] sm:$0xff] %vm837, 0.0
          %842 = vst.msk [vmem:[#allocation2 + $0x20] sm:$0xff] %vm837, 0.0
          %843 = vst.msk [vmem:[#allocation2 + $0x28] sm:$0xff] %vm837, 0.0
          %844 = vst.msk [vmem:[#allocation2 + $0x30] sm:$0xff] %vm837, 0.0
          %845 = vst.msk [vmem:[#allocation2 + $0x38] sm:$0xff] %vm837, 0.0
          %846 = vst.msk [vmem:[#allocation2 + $0x40] sm:$0xff] %vm837, 0.0
          %847 = vst.msk [vmem:[#allocation2 + $0x48] sm:$0xff] %vm837, 0.0
          %848 = vst.msk [vmem:[#allocation2 + $0x50] sm:$0xff] %vm837, 0.0
          %849 = vst.msk [vmem:[#allocation2 + $0x58] sm:$0xff] %vm837, 0.0
          %850 = vst.msk [vmem:[#allocation2 + $0x60] sm:$0xff] %vm837, 0.0
          %851 = vst.msk [vmem:[#allocation2 + $0x68] sm:$0xff] %vm837, 0.0
          %852 = vst.msk [vmem:[#allocation2 + $0x70] sm:$0xff] %vm837, 0.0
          %853 = vst.msk [vmem:[#allocation2 + $0x78] sm:$0xff] %vm837, 0.0
          %854 = vst.msk [vmem:[#allocation2 + $0x80] sm:$0xff] %vm837, 0.0
          %855 = vst.msk [vmem:[#allocation2 + $0x88] sm:$0xff] %vm837, 0.0
          %856 = vst.msk [vmem:[#allocation2 + $0x90] sm:$0xff] %vm837, 0.0
          %857 = vst.msk [vmem:[#allocation2 + $0x98] sm:$0xff] %vm837, 0.0
          %858 = vst.msk [vmem:[#allocation2 + $0xa0] sm:$0xff] %vm837, 0.0
          %859 = vst.msk [vmem:[#allocation2 + $0xa8] sm:$0xff] %vm837, 0.0
          %860 = vst.msk [vmem:[#allocation2 + $0xb0] sm:$0xff] %vm837, 0.0
          %861 = vst.msk [vmem:[#allocation2 + $0xb8] sm:$0xff] %vm837, 0.0
          %862 = vst.msk [vmem:[#allocation2 + $0xc0] sm:$0xff] %vm837, 0.0
          %863 = vst.msk [vmem:[#allocation2 + $0xc8] sm:$0xff] %vm837, 0.0
          %864 = vst.msk [vmem:[#allocation2 + $0xd0] sm:$0xff] %vm837, 0.0
          %865 = vst.msk [vmem:[#allocation2 + $0xd8] sm:$0xff] %vm837, 0.0
          %866 = vst.msk [vmem:[#allocation2 + $0xe0] sm:$0xff] %vm837, 0.0
          %867 = vst.msk [vmem:[#allocation2 + $0xe8] sm:$0xff] %vm837, 0.0
          %868 = vst.msk [vmem:[#allocation2 + $0xf0] sm:$0xff] %vm837, 0.0
          %869 = vst.msk [vmem:[#allocation2 + $0xf8] sm:$0xff] %vm837, 0.0
          %870 = vst.msk [vmem:[#allocation2 + $0x100] sm:$0xff] %vm837, 0.0
          %871 = vst.msk [vmem:[#allocation2 + $0x108] sm:$0xff] %vm837, 0.0
          %872 = vst.msk [vmem:[#allocation2 + $0x110] sm:$0xff] %vm837, 0.0
          %873 = vst.msk [vmem:[#allocation2 + $0x118] sm:$0xff] %vm837, 0.0
          %874 = vst.msk [vmem:[#allocation2 + $0x120] sm:$0xff] %vm837, 0.0
          %875 = vst.msk [vmem:[#allocation2 + $0x128] sm:$0xff] %vm837, 0.0
          %876 = vst.msk [vmem:[#allocation2 + $0x130] sm:$0xff] %vm837, 0.0
          %877 = vst.msk [vmem:[#allocation2 + $0x138] sm:$0xff] %vm837, 0.0
          %878 = vst.msk [vmem:[#allocation2 + $0x140] sm:$0xff] %vm837, 0.0
          %879 = vst.msk [vmem:[#allocation2 + $0x148] sm:$0xff] %vm837, 0.0
          %880 = vst.msk [vmem:[#allocation2 + $0x150] sm:$0xff] %vm837, 0.0
          %881 = vst.msk [vmem:[#allocation2 + $0x158] sm:$0xff] %vm837, 0.0
          %882 = vst.msk [vmem:[#allocation2 + $0x160] sm:$0xff] %vm837, 0.0
          %883 = vst.msk [vmem:[#allocation2 + $0x168] sm:$0xff] %vm837, 0.0
          %884 = vst.msk [vmem:[#allocation2 + $0x170] sm:$0xff] %vm837, 0.0
          %885 = vst.msk [vmem:[#allocation2 + $0x178] sm:$0xff] %vm837, 0.0
          %886 = vst.msk [vmem:[#allocation2 + $0x180] sm:$0xff] %vm837, 0.0
          %887 = vst.msk [vmem:[#allocation2 + $0x188] sm:$0xff] %vm837, 0.0
          %888 = vst.msk [vmem:[#allocation2 + $0x190] sm:$0xff] %vm837, 0.0
          %889 = vst.msk [vmem:[#allocation2 + $0x198] sm:$0xff] %vm837, 0.0
          %890 = vst.msk [vmem:[#allocation2 + $0x1a0] sm:$0xff] %vm837, 0.0
          %891 = vst.msk [vmem:[#allocation2 + $0x1a8] sm:$0xff] %vm837, 0.0
          %892 = vst.msk [vmem:[#allocation2 + $0x1b0] sm:$0xff] %vm837, 0.0
          %893 = vst.msk [vmem:[#allocation2 + $0x1b8] sm:$0xff] %vm837, 0.0
          %894 = vst.msk [vmem:[#allocation2 + $0x1c0] sm:$0xff] %vm837, 0.0
          %895 = vst.msk [vmem:[#allocation2 + $0x1c8] sm:$0xff] %vm837, 0.0
          %896 = vst.msk [vmem:[#allocation2 + $0x1d0] sm:$0xff] %vm837, 0.0
          %897 = vst.msk [vmem:[#allocation2 + $0x1d8] sm:$0xff] %vm837, 0.0
          %898 = vst.msk [vmem:[#allocation2 + $0x1e0] sm:$0xff] %vm837, 0.0
          %899 = vst.msk [vmem:[#allocation2 + $0x1e8] sm:$0xff] %vm837, 0.0
          %900 = vst.msk [vmem:[#allocation2 + $0x1f0] sm:$0xff] %vm837, 0.0
          %901 = vst.msk [vmem:[#allocation2 + $0x1f8] sm:$0xff] %vm837, 0.0
          %902 = vst.msk [vmem:[#allocation2 + $0x200] sm:$0xff] %vm837, 0.0
          %903 = vst.msk [vmem:[#allocation2 + $0x208] sm:$0xff] %vm837, 0.0
          %904 = vst.msk [vmem:[#allocation2 + $0x210] sm:$0xff] %vm837, 0.0
          %905 = vst.msk [vmem:[#allocation2 + $0x218] sm:$0xff] %vm837, 0.0
          %906 = vst.msk [vmem:[#allocation2 + $0x220] sm:$0xff] %vm837, 0.0
          %907 = vst.msk [vmem:[#allocation2 + $0x228] sm:$0xff] %vm837, 0.0
          %908 = vst.msk [vmem:[#allocation2 + $0x230] sm:$0xff] %vm837, 0.0
          %909 = vst.msk [vmem:[#allocation2 + $0x238] sm:$0xff] %vm837, 0.0
          %910 = vst.msk [vmem:[#allocation2 + $0x240] sm:$0xff] %vm837, 0.0
          %911 = vst.msk [vmem:[#allocation2 + $0x248] sm:$0xff] %vm837, 0.0
          %912 = vst.msk [vmem:[#allocation2 + $0x250] sm:$0xff] %vm837, 0.0
          %913 = vst.msk [vmem:[#allocation2 + $0x258] sm:$0xff] %vm837, 0.0
          %914 = vst.msk [vmem:[#allocation2 + $0x260] sm:$0xff] %vm837, 0.0
          %915 = vst.msk [vmem:[#allocation2 + $0x268] sm:$0xff] %vm837, 0.0
          %916 = vst.msk [vmem:[#allocation2 + $0x270] sm:$0xff] %vm837, 0.0
          %917 = vst.msk [vmem:[#allocation2 + $0x278] sm:$0xff] %vm837, 0.0
          %918 = vst.msk [vmem:[#allocation2 + $0x280] sm:$0xff] %vm837, 0.0
          %919 = vst.msk [vmem:[#allocation2 + $0x288] sm:$0xff] %vm837, 0.0
          %920 = vst.msk [vmem:[#allocation2 + $0x290] sm:$0xff] %vm837, 0.0
          %921 = vst.msk [vmem:[#allocation2 + $0x298] sm:$0xff] %vm837, 0.0
          %922 = vst.msk [vmem:[#allocation2 + $0x2a0] sm:$0xff] %vm837, 0.0
          %923 = vst.msk [vmem:[#allocation2 + $0x2a8] sm:$0xff] %vm837, 0.0
          %924 = vst.msk [vmem:[#allocation2 + $0x2b0] sm:$0xff] %vm837, 0.0
          %925 = vst.msk [vmem:[#allocation2 + $0x2b8] sm:$0xff] %vm837, 0.0
          %926 = vst.msk [vmem:[#allocation2 + $0x2c0] sm:$0xff] %vm837, 0.0
          %927 = vst.msk [vmem:[#allocation2 + $0x2c8] sm:$0xff] %vm837, 0.0
          %928 = vst.msk [vmem:[#allocation2 + $0x2d0] sm:$0xff] %vm837, 0.0
          %929 = vst.msk [vmem:[#allocation2 + $0x2d8] sm:$0xff] %vm837, 0.0
          %930 = vst.msk [vmem:[#allocation2 + $0x2e0] sm:$0xff] %vm837, 0.0
          %931 = vst.msk [vmem:[#allocation2 + $0x2e8] sm:$0xff] %vm837, 0.0
          %932 = vst.msk [vmem:[#allocation2 + $0x2f0] sm:$0xff] %vm837, 0.0
          %933 = vst.msk [vmem:[#allocation2 + $0x2f8] sm:$0xff] %vm837, 0.0
          %934 = vst.msk [vmem:[#allocation2 + $0x300] sm:$0xff] %vm837, 0.0
          %935 = vst.msk [vmem:[#allocation2 + $0x308] sm:$0xff] %vm837, 0.0
          %936 = vst.msk [vmem:[#allocation2 + $0x310] sm:$0xff] %vm837, 0.0
          %937 = vst.msk [vmem:[#allocation2 + $0x318] sm:$0xff] %vm837, 0.0
          %938 = vst.msk [vmem:[#allocation2 + $0x320] sm:$0xff] %vm837, 0.0
          %939 = vst.msk [vmem:[#allocation2 + $0x328] sm:$0xff] %vm837, 0.0
          %940 = vst.msk [vmem:[#allocation2 + $0x330] sm:$0xff] %vm837, 0.0
          %941 = vst.msk [vmem:[#allocation2 + $0x338] sm:$0xff] %vm837, 0.0
          %942 = vst.msk [vmem:[#allocation2 + $0x340] sm:$0xff] %vm837, 0.0
          %943 = vst.msk [vmem:[#allocation2 + $0x348] sm:$0xff] %vm837, 0.0
          %944 = vst.msk [vmem:[#allocation2 + $0x350] sm:$0xff] %vm837, 0.0
          %945 = vst.msk [vmem:[#allocation2 + $0x358] sm:$0xff] %vm837, 0.0
          %946 = vst.msk [vmem:[#allocation2 + $0x360] sm:$0xff] %vm837, 0.0
          %947 = vst.msk [vmem:[#allocation2 + $0x368] sm:$0xff] %vm837, 0.0
          %948 = vst.msk [vmem:[#allocation2 + $0x370] sm:$0xff] %vm837, 0.0
          %949 = vst.msk [vmem:[#allocation2 + $0x378] sm:$0xff] %vm837, 0.0
          %950 = vst.msk [vmem:[#allocation2 + $0x380] sm:$0xff] %vm837, 0.0
          %951 = vst.msk [vmem:[#allocation2 + $0x388] sm:$0xff] %vm837, 0.0
          %952 = vst.msk [vmem:[#allocation2 + $0x390] sm:$0xff] %vm837, 0.0
          %953 = vst.msk [vmem:[#allocation2 + $0x398] sm:$0xff] %vm837, 0.0
          %954 = vst.msk [vmem:[#allocation2 + $0x3a0] sm:$0xff] %vm837, 0.0
          %955 = vst.msk [vmem:[#allocation2 + $0x3a8] sm:$0xff] %vm837, 0.0
          %956 = vst.msk [vmem:[#allocation2 + $0x3b0] sm:$0xff] %vm837, 0.0
          %957 = vst.msk [vmem:[#allocation2 + $0x3b8] sm:$0xff] %vm837, 0.0
          %958 = vst.msk [vmem:[#allocation2 + $0x3c0] sm:$0xff] %vm837, 0.0
          %959 = vst.msk [vmem:[#allocation2 + $0x3c8] sm:$0xff] %vm837, 0.0
          %960 = vst.msk [vmem:[#allocation2 + $0x3d0] sm:$0xff] %vm837, 0.0
          %961 = vst.msk [vmem:[#allocation2 + $0x3d8] sm:$0xff] %vm837, 0.0
          %962 = vst.msk [vmem:[#allocation2 + $0x3e0] sm:$0xff] %vm837, 0.0
          %963 = vst.msk [vmem:[#allocation2 + $0x3e8] sm:$0xff] %vm837, 0.0
          %964 = vst.msk [vmem:[#allocation2 + $0x3f0] sm:$0xff] %vm837, 0.0
          %965 = vst.msk [vmem:[#allocation2 + $0x3f8] sm:$0xff] %vm837, 0.0
        $region59: #{gcn_propagate.3} parent=50 // pred_fallthru
          _
        %s966 = smul.u32 %s24, 512
        %s967 = sshra.s32 %s966, 3
        %s968 = sand.u32 %s966, 7
        %s969 = smul.addr %s967, 4
        %s970 = scalar_lea.vmem %s810, %s969
        %v971 = vld [vmem:[%s970] sm:$0xf]
        %v972 = vld [vmem:[%s970 + $0x4] sm:$0xf]
        %v973 = vld [vmem:[%s970 + $0x8] sm:$0xf]
        %v974 = vld [vmem:[%s970 + $0xc] sm:$0xf]
        %v975 = vld [vmem:[%s970 + $0x10] sm:$0xf]
        %v976 = vld [vmem:[%s970 + $0x14] sm:$0xf]
        %v977 = vld [vmem:[%s970 + $0x18] sm:$0xf]
        %v978 = vld [vmem:[%s970 + $0x1c] sm:$0xf]
        %v979 = vld [vmem:[%s970 + $0x20] sm:$0xf]
        %v980 = vld [vmem:[%s970 + $0x24] sm:$0xf]
        %v981 = vld [vmem:[%s970 + $0x28] sm:$0xf]
        %v982 = vld [vmem:[%s970 + $0x2c] sm:$0xf]
        %v983 = vld [vmem:[%s970 + $0x30] sm:$0xf]
        %v984 = vld [vmem:[%s970 + $0x34] sm:$0xf]
        %v985 = vld [vmem:[%s970 + $0x38] sm:$0xf]
        %v986 = vld [vmem:[%s970 + $0x3c] sm:$0xf]
        %v987 = vld [vmem:[%s970 + $0x40] sm:$0xf]
        %v988 = vld [vmem:[%s970 + $0x44] sm:$0xf]
        %v989 = vld [vmem:[%s970 + $0x48] sm:$0xf]
        %v990 = vld [vmem:[%s970 + $0x4c] sm:$0xf]
        %v991 = vld [vmem:[%s970 + $0x50] sm:$0xf]
        %v992 = vld [vmem:[%s970 + $0x54] sm:$0xf]
        %v993 = vld [vmem:[%s970 + $0x58] sm:$0xf]
        %v994 = vld [vmem:[%s970 + $0x5c] sm:$0xf]
        %v995 = vld [vmem:[%s970 + $0x60] sm:$0xf]
        %v996 = vld [vmem:[%s970 + $0x64] sm:$0xf]
        %v997 = vld [vmem:[%s970 + $0x68] sm:$0xf]
        %v998 = vld [vmem:[%s970 + $0x6c] sm:$0xf]
        %v999 = vld [vmem:[%s970 + $0x70] sm:$0xf]
        %v1000 = vld [vmem:[%s970 + $0x74] sm:$0xf]
        %v1001 = vld [vmem:[%s970 + $0x78] sm:$0xf]
        %v1002 = vld [vmem:[%s970 + $0x7c] sm:$0xf]
        %v1003 = vld [vmem:[%s970 + $0x80] sm:$0xf]
        %v1004 = vld [vmem:[%s970 + $0x84] sm:$0xf]
        %v1005 = vld [vmem:[%s970 + $0x88] sm:$0xf]
        %v1006 = vld [vmem:[%s970 + $0x8c] sm:$0xf]
        %v1007 = vld [vmem:[%s970 + $0x90] sm:$0xf]
        %v1008 = vld [vmem:[%s970 + $0x94] sm:$0xf]
        %v1009 = vld [vmem:[%s970 + $0x98] sm:$0xf]
        %v1010 = vld [vmem:[%s970 + $0x9c] sm:$0xf]
        %v1011 = vld [vmem:[%s970 + $0xa0] sm:$0xf]
        %v1012 = vld [vmem:[%s970 + $0xa4] sm:$0xf]
        %v1013 = vld [vmem:[%s970 + $0xa8] sm:$0xf]
        %v1014 = vld [vmem:[%s970 + $0xac] sm:$0xf]
        %v1015 = vld [vmem:[%s970 + $0xb0] sm:$0xf]
        %v1016 = vld [vmem:[%s970 + $0xb4] sm:$0xf]
        %v1017 = vld [vmem:[%s970 + $0xb8] sm:$0xf]
        %v1018 = vld [vmem:[%s970 + $0xbc] sm:$0xf]
        %v1019 = vld [vmem:[%s970 + $0xc0] sm:$0xf]
        %v1020 = vld [vmem:[%s970 + $0xc4] sm:$0xf]
        %v1021 = vld [vmem:[%s970 + $0xc8] sm:$0xf]
        %v1022 = vld [vmem:[%s970 + $0xcc] sm:$0xf]
        %v1023 = vld [vmem:[%s970 + $0xd0] sm:$0xf]
        %v1024 = vld [vmem:[%s970 + $0xd4] sm:$0xf]
        %v1025 = vld [vmem:[%s970 + $0xd8] sm:$0xf]
        %v1026 = vld [vmem:[%s970 + $0xdc] sm:$0xf]
        %v1027 = vld [vmem:[%s970 + $0xe0] sm:$0xf]
        %v1028 = vld [vmem:[%s970 + $0xe4] sm:$0xf]
        %v1029 = vld [vmem:[%s970 + $0xe8] sm:$0xf]
        %v1030 = vld [vmem:[%s970 + $0xec] sm:$0xf]
        %v1031 = vld [vmem:[%s970 + $0xf0] sm:$0xf]
        %v1032 = vld [vmem:[%s970 + $0xf4] sm:$0xf]
        %v1033 = vld [vmem:[%s970 + $0xf8] sm:$0xf]
        %v1034 = vld [vmem:[%s970 + $0xfc] sm:$0xf]
        %v1035 = vld [vmem:[#allocation2] sm:$0xff]
        %v1036 = vld [vmem:[#allocation2 + $0x8] sm:$0xff]
        %v1037 = vld [vmem:[#allocation2 + $0x10] sm:$0xff]
        %v1038 = vld [vmem:[#allocation2 + $0x18] sm:$0xff]
        %v1039 = vld [vmem:[#allocation2 + $0x20] sm:$0xff]
        %v1040 = vld [vmem:[#allocation2 + $0x28] sm:$0xff]
        %v1041 = vld [vmem:[#allocation2 + $0x30] sm:$0xff]
        %v1042 = vld [vmem:[#allocation2 + $0x38] sm:$0xff]
        %v1043 = vld [vmem:[#allocation2 + $0x40] sm:$0xff]
        %v1044 = vld [vmem:[#allocation2 + $0x48] sm:$0xff]
        %v1045 = vld [vmem:[#allocation2 + $0x50] sm:$0xff]
        %v1046 = vld [vmem:[#allocation2 + $0x58] sm:$0xff]
        %v1047 = vld [vmem:[#allocation2 + $0x60] sm:$0xff]
        %v1048 = vld [vmem:[#allocation2 + $0x68] sm:$0xff]
        %v1049 = vld [vmem:[#allocation2 + $0x70] sm:$0xff]
        %v1050 = vld [vmem:[#allocation2 + $0x78] sm:$0xff]
        %v1051 = vld [vmem:[#allocation2 + $0x80] sm:$0xff]
        %v1052 = vld [vmem:[#allocation2 + $0x88] sm:$0xff]
        %v1053 = vld [vmem:[#allocation2 + $0x90] sm:$0xff]
        %v1054 = vld [vmem:[#allocation2 + $0x98] sm:$0xff]
        %v1055 = vld [vmem:[#allocation2 + $0xa0] sm:$0xff]
        %v1056 = vld [vmem:[#allocation2 + $0xa8] sm:$0xff]
        %v1057 = vld [vmem:[#allocation2 + $0xb0] sm:$0xff]
        %v1058 = vld [vmem:[#allocation2 + $0xb8] sm:$0xff]
        %v1059 = vld [vmem:[#allocation2 + $0xc0] sm:$0xff]
        %v1060 = vld [vmem:[#allocation2 + $0xc8] sm:$0xff]
        %v1061 = vld [vmem:[#allocation2 + $0xd0] sm:$0xff]
        %v1062 = vld [vmem:[#allocation2 + $0xd8] sm:$0xff]
        %v1063 = vld [vmem:[#allocation2 + $0xe0] sm:$0xff]
        %v1064 = vld [vmem:[#allocation2 + $0xe8] sm:$0xff]
        %v1065 = vld [vmem:[#allocation2 + $0xf0] sm:$0xff]
        %v1066 = vld [vmem:[#allocation2 + $0xf8] sm:$0xff]
        %v1067 = vld [vmem:[#allocation2 + $0x100] sm:$0xff]
        %v1068 = vld [vmem:[#allocation2 + $0x108] sm:$0xff]
        %v1069 = vld [vmem:[#allocation2 + $0x110] sm:$0xff]
        %v1070 = vld [vmem:[#allocation2 + $0x118] sm:$0xff]
        %v1071 = vld [vmem:[#allocation2 + $0x120] sm:$0xff]
        %v1072 = vld [vmem:[#allocation2 + $0x128] sm:$0xff]
        %v1073 = vld [vmem:[#allocation2 + $0x130] sm:$0xff]
        %v1074 = vld [vmem:[#allocation2 + $0x138] sm:$0xff]
        %v1075 = vld [vmem:[#allocation2 + $0x140] sm:$0xff]
        %v1076 = vld [vmem:[#allocation2 + $0x148] sm:$0xff]
        %v1077 = vld [vmem:[#allocation2 + $0x150] sm:$0xff]
        %v1078 = vld [vmem:[#allocation2 + $0x158] sm:$0xff]
        %v1079 = vld [vmem:[#allocation2 + $0x160] sm:$0xff]
        %v1080 = vld [vmem:[#allocation2 + $0x168] sm:$0xff]
        %v1081 = vld [vmem:[#allocation2 + $0x170] sm:$0xff]
        %v1082 = vld [vmem:[#allocation2 + $0x178] sm:$0xff]
        %v1083 = vld [vmem:[#allocation2 + $0x180] sm:$0xff]
        %v1084 = vld [vmem:[#allocation2 + $0x188] sm:$0xff]
        %v1085 = vld [vmem:[#allocation2 + $0x190] sm:$0xff]
        %v1086 = vld [vmem:[#allocation2 + $0x198] sm:$0xff]
        %v1087 = vld [vmem:[#allocation2 + $0x1a0] sm:$0xff]
        %v1088 = vld [vmem:[#allocation2 + $0x1a8] sm:$0xff]
        %v1089 = vld [vmem:[#allocation2 + $0x1b0] sm:$0xff]
        %v1090 = vld [vmem:[#allocation2 + $0x1b8] sm:$0xff]
        %v1091 = vld [vmem:[#allocation2 + $0x1c0] sm:$0xff]
        %v1092 = vld [vmem:[#allocation2 + $0x1c8] sm:$0xff]
        %v1093 = vld [vmem:[#allocation2 + $0x1d0] sm:$0xff]
        %v1094 = vld [vmem:[#allocation2 + $0x1d8] sm:$0xff]
        %v1095 = vld [vmem:[#allocation2 + $0x1e0] sm:$0xff]
        %v1096 = vld [vmem:[#allocation2 + $0x1e8] sm:$0xff]
        %v1097 = vld [vmem:[#allocation2 + $0x1f0] sm:$0xff]
        %v1098 = vld [vmem:[#allocation2 + $0x1f8] sm:$0xff]
        %v1099 = vld [vmem:[#allocation2 + $0x200] sm:$0xff]
        %v1100 = vld [vmem:[#allocation2 + $0x208] sm:$0xff]
        %v1101 = vld [vmem:[#allocation2 + $0x210] sm:$0xff]
        %v1102 = vld [vmem:[#allocation2 + $0x218] sm:$0xff]
        %v1103 = vld [vmem:[#allocation2 + $0x220] sm:$0xff]
        %v1104 = vld [vmem:[#allocation2 + $0x228] sm:$0xff]
        %v1105 = vld [vmem:[#allocation2 + $0x230] sm:$0xff]
        %v1106 = vld [vmem:[#allocation2 + $0x238] sm:$0xff]
        %v1107 = vld [vmem:[#allocation2 + $0x240] sm:$0xff]
        %v1108 = vld [vmem:[#allocation2 + $0x248] sm:$0xff]
        %v1109 = vld [vmem:[#allocation2 + $0x250] sm:$0xff]
        %v1110 = vld [vmem:[#allocation2 + $0x258] sm:$0xff]
        %v1111 = vld [vmem:[#allocation2 + $0x260] sm:$0xff]
        %v1112 = vld [vmem:[#allocation2 + $0x268] sm:$0xff]
        %v1113 = vld [vmem:[#allocation2 + $0x270] sm:$0xff]
        %v1114 = vld [vmem:[#allocation2 + $0x278] sm:$0xff]
        %v1115 = vld [vmem:[#allocation2 + $0x280] sm:$0xff]
        %v1116 = vld [vmem:[#allocation2 + $0x288] sm:$0xff]
        %v1117 = vld [vmem:[#allocation2 + $0x290] sm:$0xff]
        %v1118 = vld [vmem:[#allocation2 + $0x298] sm:$0xff]
        %v1119 = vld [vmem:[#allocation2 + $0x2a0] sm:$0xff]
        %v1120 = vld [vmem:[#allocation2 + $0x2a8] sm:$0xff]
        %v1121 = vld [vmem:[#allocation2 + $0x2b0] sm:$0xff]
        %v1122 = vld [vmem:[#allocation2 + $0x2b8] sm:$0xff]
        %v1123 = vld [vmem:[#allocation2 + $0x2c0] sm:$0xff]
        %v1124 = vld [vmem:[#allocation2 + $0x2c8] sm:$0xff]
        %v1125 = vld [vmem:[#allocation2 + $0x2d0] sm:$0xff]
        %v1126 = vld [vmem:[#allocation2 + $0x2d8] sm:$0xff]
        %v1127 = vld [vmem:[#allocation2 + $0x2e0] sm:$0xff]
        %v1128 = vld [vmem:[#allocation2 + $0x2e8] sm:$0xff]
        %v1129 = vld [vmem:[#allocation2 + $0x2f0] sm:$0xff]
        %v1130 = vld [vmem:[#allocation2 + $0x2f8] sm:$0xff]
        %v1131 = vld [vmem:[#allocation2 + $0x300] sm:$0xff]
        %v1132 = vld [vmem:[#allocation2 + $0x308] sm:$0xff]
        %v1133 = vld [vmem:[#allocation2 + $0x310] sm:$0xff]
        %v1134 = vld [vmem:[#allocation2 + $0x318] sm:$0xff]
        %v1135 = vld [vmem:[#allocation2 + $0x320] sm:$0xff]
        %v1136 = vld [vmem:[#allocation2 + $0x328] sm:$0xff]
        %v1137 = vld [vmem:[#allocation2 + $0x330] sm:$0xff]
        %v1138 = vld [vmem:[#allocation2 + $0x338] sm:$0xff]
        %v1139 = vld [vmem:[#allocation2 + $0x340] sm:$0xff]
        %v1140 = vld [vmem:[#allocation2 + $0x348] sm:$0xff]
        %v1141 = vld [vmem:[#allocation2 + $0x350] sm:$0xff]
        %v1142 = vld [vmem:[#allocation2 + $0x358] sm:$0xff]
        %v1143 = vld [vmem:[#allocation2 + $0x360] sm:$0xff]
        %v1144 = vld [vmem:[#allocation2 + $0x368] sm:$0xff]
        %v1145 = vld [vmem:[#allocation2 + $0x370] sm:$0xff]
        %v1146 = vld [vmem:[#allocation2 + $0x378] sm:$0xff]
        %v1147 = vld [vmem:[#allocation2 + $0x380] sm:$0xff]
        %v1148 = vld [vmem:[#allocation2 + $0x388] sm:$0xff]
        %v1149 = vld [vmem:[#allocation2 + $0x390] sm:$0xff]
        %v1150 = vld [vmem:[#allocation2 + $0x398] sm:$0xff]
        %v1151 = vld [vmem:[#allocation2 + $0x3a0] sm:$0xff]
        %v1152 = vld [vmem:[#allocation2 + $0x3a8] sm:$0xff]
        %v1153 = vld [vmem:[#allocation2 + $0x3b0] sm:$0xff]
        %v1154 = vld [vmem:[#allocation2 + $0x3b8] sm:$0xff]
        %v1155 = vld [vmem:[#allocation2 + $0x3c0] sm:$0xff]
        %v1156 = vld [vmem:[#allocation2 + $0x3c8] sm:$0xff]
        %v1157 = vld [vmem:[#allocation2 + $0x3d0] sm:$0xff]
        %v1158 = vld [vmem:[#allocation2 + $0x3d8] sm:$0xff]
        %v1159 = vld [vmem:[#allocation2 + $0x3e0] sm:$0xff]
        %v1160 = vld [vmem:[#allocation2 + $0x3e8] sm:$0xff]
        %v1161 = vld [vmem:[#allocation2 + $0x3f0] sm:$0xff]
        %v1162 = vld [vmem:[#allocation2 + $0x3f8] sm:$0xff]
        %v1163 = vld [vmem:[%s763] sm:$0xff]
        %v1164 = vld [vmem:[%s763 + $0x8] sm:$0xff]
        %v1165 = vld [vmem:[%s763 + $0x10] sm:$0xff]
        %v1166 = vld [vmem:[%s763 + $0x18] sm:$0xff]
        %v1167 = vld [vmem:[%s763 + $0x20] sm:$0xff]
        %v1168 = vld [vmem:[%s763 + $0x28] sm:$0xff]
        %v1169 = vld [vmem:[%s763 + $0x30] sm:$0xff]
        %v1170 = vld [vmem:[%s763 + $0x38] sm:$0xff]
        %v1171 = vld [vmem:[%s763 + $0x40] sm:$0xff]
        %v1172 = vld [vmem:[%s763 + $0x48] sm:$0xff]
        %v1173 = vld [vmem:[%s763 + $0x50] sm:$0xff]
        %v1174 = vld [vmem:[%s763 + $0x58] sm:$0xff]
        %v1175 = vld [vmem:[%s763 + $0x60] sm:$0xff]
        %v1176 = vld [vmem:[%s763 + $0x68] sm:$0xff]
        %v1177 = vld [vmem:[%s763 + $0x70] sm:$0xff]
        %v1178 = vld [vmem:[%s763 + $0x78] sm:$0xff]
        %v1179 = vld [vmem:[%s763 + $0x80] sm:$0xff]
        %v1180 = vld [vmem:[%s763 + $0x88] sm:$0xff]
        %v1181 = vld [vmem:[%s763 + $0x90] sm:$0xff]
        %v1182 = vld [vmem:[%s763 + $0x98] sm:$0xff]
        %v1183 = vld [vmem:[%s763 + $0xa0] sm:$0xff]
        %v1184 = vld [vmem:[%s763 + $0xa8] sm:$0xff]
        %v1185 = vld [vmem:[%s763 + $0xb0] sm:$0xff]
        %v1186 = vld [vmem:[%s763 + $0xb8] sm:$0xff]
        %v1187 = vld [vmem:[%s763 + $0xc0] sm:$0xff]
        %v1188 = vld [vmem:[%s763 + $0xc8] sm:$0xff]
        %v1189 = vld [vmem:[%s763 + $0xd0] sm:$0xff]
        %v1190 = vld [vmem:[%s763 + $0xd8] sm:$0xff]
        %v1191 = vld [vmem:[%s763 + $0xe0] sm:$0xff]
        %v1192 = vld [vmem:[%s763 + $0xe8] sm:$0xff]
        %v1193 = vld [vmem:[%s763 + $0xf0] sm:$0xff]
        %v1194 = vld [vmem:[%s763 + $0xf8] sm:$0xff]
        %v1195 = vld [vmem:[%s763 + $0x100] sm:$0xff]
        %v1196 = vld [vmem:[%s763 + $0x108] sm:$0xff]
        %v1197 = vld [vmem:[%s763 + $0x110] sm:$0xff]
        %v1198 = vld [vmem:[%s763 + $0x118] sm:$0xff]
        %v1199 = vld [vmem:[%s763 + $0x120] sm:$0xff]
        %v1200 = vld [vmem:[%s763 + $0x128] sm:$0xff]
        %v1201 = vld [vmem:[%s763 + $0x130] sm:$0xff]
        %v1202 = vld [vmem:[%s763 + $0x138] sm:$0xff]
        %v1203 = vld [vmem:[%s763 + $0x140] sm:$0xff]
        %v1204 = vld [vmem:[%s763 + $0x148] sm:$0xff]
        %v1205 = vld [vmem:[%s763 + $0x150] sm:$0xff]
        %v1206 = vld [vmem:[%s763 + $0x158] sm:$0xff]
        %v1207 = vld [vmem:[%s763 + $0x160] sm:$0xff]
        %v1208 = vld [vmem:[%s763 + $0x168] sm:$0xff]
        %v1209 = vld [vmem:[%s763 + $0x170] sm:$0xff]
        %v1210 = vld [vmem:[%s763 + $0x178] sm:$0xff]
        %v1211 = vld [vmem:[%s763 + $0x180] sm:$0xff]
        %v1212 = vld [vmem:[%s763 + $0x188] sm:$0xff]
        %v1213 = vld [vmem:[%s763 + $0x190] sm:$0xff]
        %v1214 = vld [vmem:[%s763 + $0x198] sm:$0xff]
        %v1215 = vld [vmem:[%s763 + $0x1a0] sm:$0xff]
        %v1216 = vld [vmem:[%s763 + $0x1a8] sm:$0xff]
        %v1217 = vld [vmem:[%s763 + $0x1b0] sm:$0xff]
        %v1218 = vld [vmem:[%s763 + $0x1b8] sm:$0xff]
        %v1219 = vld [vmem:[%s763 + $0x1c0] sm:$0xff]
        %v1220 = vld [vmem:[%s763 + $0x1c8] sm:$0xff]
        %v1221 = vld [vmem:[%s763 + $0x1d0] sm:$0xff]
        %v1222 = vld [vmem:[%s763 + $0x1d8] sm:$0xff]
        %v1223 = vld [vmem:[%s763 + $0x1e0] sm:$0xff]
        %v1224 = vld [vmem:[%s763 + $0x1e8] sm:$0xff]
        %v1225 = vld [vmem:[%s763 + $0x1f0] sm:$0xff]
        %v1226 = vld [vmem:[%s763 + $0x1f8] sm:$0xff]
        %v1227 = vld [vmem:[%s763 + $0x200] sm:$0xff]
        %v1228 = vld [vmem:[%s763 + $0x208] sm:$0xff]
        %v1229 = vld [vmem:[%s763 + $0x210] sm:$0xff]
        %v1230 = vld [vmem:[%s763 + $0x218] sm:$0xff]
        %v1231 = vld [vmem:[%s763 + $0x220] sm:$0xff]
        %v1232 = vld [vmem:[%s763 + $0x228] sm:$0xff]
        %v1233 = vld [vmem:[%s763 + $0x230] sm:$0xff]
        %v1234 = vld [vmem:[%s763 + $0x238] sm:$0xff]
        %v1235 = vld [vmem:[%s763 + $0x240] sm:$0xff]
        %v1236 = vld [vmem:[%s763 + $0x248] sm:$0xff]
        %v1237 = vld [vmem:[%s763 + $0x250] sm:$0xff]
        %v1238 = vld [vmem:[%s763 + $0x258] sm:$0xff]
        %v1239 = vld [vmem:[%s763 + $0x260] sm:$0xff]
        %v1240 = vld [vmem:[%s763 + $0x268] sm:$0xff]
        %v1241 = vld [vmem:[%s763 + $0x270] sm:$0xff]
        %v1242 = vld [vmem:[%s763 + $0x278] sm:$0xff]
        %v1243 = vld [vmem:[%s763 + $0x280] sm:$0xff]
        %v1244 = vld [vmem:[%s763 + $0x288] sm:$0xff]
        %v1245 = vld [vmem:[%s763 + $0x290] sm:$0xff]
        %v1246 = vld [vmem:[%s763 + $0x298] sm:$0xff]
        %v1247 = vld [vmem:[%s763 + $0x2a0] sm:$0xff]
        %v1248 = vld [vmem:[%s763 + $0x2a8] sm:$0xff]
        %v1249 = vld [vmem:[%s763 + $0x2b0] sm:$0xff]
        %v1250 = vld [vmem:[%s763 + $0x2b8] sm:$0xff]
        %v1251 = vld [vmem:[%s763 + $0x2c0] sm:$0xff]
        %v1252 = vld [vmem:[%s763 + $0x2c8] sm:$0xff]
        %v1253 = vld [vmem:[%s763 + $0x2d0] sm:$0xff]
        %v1254 = vld [vmem:[%s763 + $0x2d8] sm:$0xff]
        %v1255 = vld [vmem:[%s763 + $0x2e0] sm:$0xff]
        %v1256 = vld [vmem:[%s763 + $0x2e8] sm:$0xff]
        %v1257 = vld [vmem:[%s763 + $0x2f0] sm:$0xff]
        %v1258 = vld [vmem:[%s763 + $0x2f8] sm:$0xff]
        %v1259 = vld [vmem:[%s763 + $0x300] sm:$0xff]
        %v1260 = vld [vmem:[%s763 + $0x308] sm:$0xff]
        %v1261 = vld [vmem:[%s763 + $0x310] sm:$0xff]
        %v1262 = vld [vmem:[%s763 + $0x318] sm:$0xff]
        %v1263 = vld [vmem:[%s763 + $0x320] sm:$0xff]
        %v1264 = vld [vmem:[%s763 + $0x328] sm:$0xff]
        %v1265 = vld [vmem:[%s763 + $0x330] sm:$0xff]
        %v1266 = vld [vmem:[%s763 + $0x338] sm:$0xff]
        %v1267 = vld [vmem:[%s763 + $0x340] sm:$0xff]
        %v1268 = vld [vmem:[%s763 + $0x348] sm:$0xff]
        %v1269 = vld [vmem:[%s763 + $0x350] sm:$0xff]
        %v1270 = vld [vmem:[%s763 + $0x358] sm:$0xff]
        %v1271 = vld [vmem:[%s763 + $0x360] sm:$0xff]
        %v1272 = vld [vmem:[%s763 + $0x368] sm:$0xff]
        %v1273 = vld [vmem:[%s763 + $0x370] sm:$0xff]
        %v1274 = vld [vmem:[%s763 + $0x378] sm:$0xff]
        %v1275 = vld [vmem:[%s763 + $0x380] sm:$0xff]
        %v1276 = vld [vmem:[%s763 + $0x388] sm:$0xff]
        %v1277 = vld [vmem:[%s763 + $0x390] sm:$0xff]
        %v1278 = vld [vmem:[%s763 + $0x398] sm:$0xff]
        %v1279 = vld [vmem:[%s763 + $0x3a0] sm:$0xff]
        %v1280 = vld [vmem:[%s763 + $0x3a8] sm:$0xff]
        %v1281 = vld [vmem:[%s763 + $0x3b0] sm:$0xff]
        %v1282 = vld [vmem:[%s763 + $0x3b8] sm:$0xff]
        %v1283 = vld [vmem:[%s763 + $0x3c0] sm:$0xff]
        %v1284 = vld [vmem:[%s763 + $0x3c8] sm:$0xff]
        %v1285 = vld [vmem:[%s763 + $0x3d0] sm:$0xff]
        %v1286 = vld [vmem:[%s763 + $0x3d8] sm:$0xff]
        %v1287 = vld [vmem:[%s763 + $0x3e0] sm:$0xff]
        %v1288 = vld [vmem:[%s763 + $0x3e8] sm:$0xff]
        %v1289 = vld [vmem:[%s763 + $0x3f0] sm:$0xff]
        %v1290 = vld [vmem:[%s763 + $0x3f8] sm:$0xff]
        %v1291 = vld [vmem:[%s763 + $0x400] sm:$0xff]
        %v1292 = vld [vmem:[%s763 + $0x408] sm:$0xff]
        %v1293 = vld [vmem:[%s763 + $0x410] sm:$0xff]
        %v1294 = vld [vmem:[%s763 + $0x418] sm:$0xff]
        %v1295 = vld [vmem:[%s763 + $0x420] sm:$0xff]
        %v1296 = vld [vmem:[%s763 + $0x428] sm:$0xff]
        %v1297 = vld [vmem:[%s763 + $0x430] sm:$0xff]
        %v1298 = vld [vmem:[%s763 + $0x438] sm:$0xff]
        %v1299 = vld [vmem:[%s763 + $0x440] sm:$0xff]
        %v1300 = vld [vmem:[%s763 + $0x448] sm:$0xff]
        %v1301 = vld [vmem:[%s763 + $0x450] sm:$0xff]
        %v1302 = vld [vmem:[%s763 + $0x458] sm:$0xff]
        %v1303 = vld [vmem:[%s763 + $0x460] sm:$0xff]
        %v1304 = vld [vmem:[%s763 + $0x468] sm:$0xff]
        %v1305 = vld [vmem:[%s763 + $0x470] sm:$0xff]
        %v1306 = vld [vmem:[%s763 + $0x478] sm:$0xff]
        %v1307 = vld [vmem:[%s763 + $0x480] sm:$0xff]
        %v1308 = vld [vmem:[%s763 + $0x488] sm:$0xff]
        %v1309 = vld [vmem:[%s763 + $0x490] sm:$0xff]
        %v1310 = vld [vmem:[%s763 + $0x498] sm:$0xff]
        %v1311 = vld [vmem:[%s763 + $0x4a0] sm:$0xff]
        %v1312 = vld [vmem:[%s763 + $0x4a8] sm:$0xff]
        %v1313 = vld [vmem:[%s763 + $0x4b0] sm:$0xff]
        %v1314 = vld [vmem:[%s763 + $0x4b8] sm:$0xff]
        %v1315 = vld [vmem:[%s763 + $0x4c0] sm:$0xff]
        %v1316 = vld [vmem:[%s763 + $0x4c8] sm:$0xff]
        %v1317 = vld [vmem:[%s763 + $0x4d0] sm:$0xff]
        %v1318 = vld [vmem:[%s763 + $0x4d8] sm:$0xff]
        %v1319 = vld [vmem:[%s763 + $0x4e0] sm:$0xff]
        %v1320 = vld [vmem:[%s763 + $0x4e8] sm:$0xff]
        %v1321 = vld [vmem:[%s763 + $0x4f0] sm:$0xff]
        %v1322 = vld [vmem:[%s763 + $0x4f8] sm:$0xff]
        %v1323 = vld [vmem:[%s763 + $0x500] sm:$0xff]
        %v1324 = vld [vmem:[%s763 + $0x508] sm:$0xff]
        %v1325 = vld [vmem:[%s763 + $0x510] sm:$0xff]
        %v1326 = vld [vmem:[%s763 + $0x518] sm:$0xff]
        %v1327 = vld [vmem:[%s763 + $0x520] sm:$0xff]
        %v1328 = vld [vmem:[%s763 + $0x528] sm:$0xff]
        %v1329 = vld [vmem:[%s763 + $0x530] sm:$0xff]
        %v1330 = vld [vmem:[%s763 + $0x538] sm:$0xff]
        %v1331 = vld [vmem:[%s763 + $0x540] sm:$0xff]
        %v1332 = vld [vmem:[%s763 + $0x548] sm:$0xff]
        %v1333 = vld [vmem:[%s763 + $0x550] sm:$0xff]
        %v1334 = vld [vmem:[%s763 + $0x558] sm:$0xff]
        %v1335 = vld [vmem:[%s763 + $0x560] sm:$0xff]
        %v1336 = vld [vmem:[%s763 + $0x568] sm:$0xff]
        %v1337 = vld [vmem:[%s763 + $0x570] sm:$0xff]
        %v1338 = vld [vmem:[%s763 + $0x578] sm:$0xff]
        %v1339 = vld [vmem:[%s763 + $0x580] sm:$0xff]
        %v1340 = vld [vmem:[%s763 + $0x588] sm:$0xff]
        %v1341 = vld [vmem:[%s763 + $0x590] sm:$0xff]
        %v1342 = vld [vmem:[%s763 + $0x598] sm:$0xff]
        %v1343 = vld [vmem:[%s763 + $0x5a0] sm:$0xff]
        %v1344 = vld [vmem:[%s763 + $0x5a8] sm:$0xff]
        %v1345 = vld [vmem:[%s763 + $0x5b0] sm:$0xff]
        %v1346 = vld [vmem:[%s763 + $0x5b8] sm:$0xff]
        %v1347 = vld [vmem:[%s763 + $0x5c0] sm:$0xff]
        %v1348 = vld [vmem:[%s763 + $0x5c8] sm:$0xff]
        %v1349 = vld [vmem:[%s763 + $0x5d0] sm:$0xff]
        %v1350 = vld [vmem:[%s763 + $0x5d8] sm:$0xff]
        %v1351 = vld [vmem:[%s763 + $0x5e0] sm:$0xff]
        %v1352 = vld [vmem:[%s763 + $0x5e8] sm:$0xff]
        %v1353 = vld [vmem:[%s763 + $0x5f0] sm:$0xff]
        %v1354 = vld [vmem:[%s763 + $0x5f8] sm:$0xff]
        %v1355 = vld [vmem:[%s763 + $0x600] sm:$0xff]
        %v1356 = vld [vmem:[%s763 + $0x608] sm:$0xff]
        %v1357 = vld [vmem:[%s763 + $0x610] sm:$0xff]
        %v1358 = vld [vmem:[%s763 + $0x618] sm:$0xff]
        %v1359 = vld [vmem:[%s763 + $0x620] sm:$0xff]
        %v1360 = vld [vmem:[%s763 + $0x628] sm:$0xff]
        %v1361 = vld [vmem:[%s763 + $0x630] sm:$0xff]
        %v1362 = vld [vmem:[%s763 + $0x638] sm:$0xff]
        %v1363 = vld [vmem:[%s763 + $0x640] sm:$0xff]
        %v1364 = vld [vmem:[%s763 + $0x648] sm:$0xff]
        %v1365 = vld [vmem:[%s763 + $0x650] sm:$0xff]
        %v1366 = vld [vmem:[%s763 + $0x658] sm:$0xff]
        %v1367 = vld [vmem:[%s763 + $0x660] sm:$0xff]
        %v1368 = vld [vmem:[%s763 + $0x668] sm:$0xff]
        %v1369 = vld [vmem:[%s763 + $0x670] sm:$0xff]
        %v1370 = vld [vmem:[%s763 + $0x678] sm:$0xff]
        %v1371 = vld [vmem:[%s763 + $0x680] sm:$0xff]
        %v1372 = vld [vmem:[%s763 + $0x688] sm:$0xff]
        %v1373 = vld [vmem:[%s763 + $0x690] sm:$0xff]
        %v1374 = vld [vmem:[%s763 + $0x698] sm:$0xff]
        %v1375 = vld [vmem:[%s763 + $0x6a0] sm:$0xff]
        %v1376 = vld [vmem:[%s763 + $0x6a8] sm:$0xff]
        %v1377 = vld [vmem:[%s763 + $0x6b0] sm:$0xff]
        %v1378 = vld [vmem:[%s763 + $0x6b8] sm:$0xff]
        %v1379 = vld [vmem:[%s763 + $0x6c0] sm:$0xff]
        %v1380 = vld [vmem:[%s763 + $0x6c8] sm:$0xff]
        %v1381 = vld [vmem:[%s763 + $0x6d0] sm:$0xff]
        %v1382 = vld [vmem:[%s763 + $0x6d8] sm:$0xff]
        %v1383 = vld [vmem:[%s763 + $0x6e0] sm:$0xff]
        %v1384 = vld [vmem:[%s763 + $0x6e8] sm:$0xff]
        %v1385 = vld [vmem:[%s763 + $0x6f0] sm:$0xff]
        %v1386 = vld [vmem:[%s763 + $0x6f8] sm:$0xff]
        %v1387 = vld [vmem:[%s763 + $0x700] sm:$0xff]
        %v1388 = vld [vmem:[%s763 + $0x708] sm:$0xff]
        %v1389 = vld [vmem:[%s763 + $0x710] sm:$0xff]
        %v1390 = vld [vmem:[%s763 + $0x718] sm:$0xff]
        %v1391 = vld [vmem:[%s763 + $0x720] sm:$0xff]
        %v1392 = vld [vmem:[%s763 + $0x728] sm:$0xff]
        %v1393 = vld [vmem:[%s763 + $0x730] sm:$0xff]
        %v1394 = vld [vmem:[%s763 + $0x738] sm:$0xff]
        %v1395 = vld [vmem:[%s763 + $0x740] sm:$0xff]
        %v1396 = vld [vmem:[%s763 + $0x748] sm:$0xff]
        %v1397 = vld [vmem:[%s763 + $0x750] sm:$0xff]
        %v1398 = vld [vmem:[%s763 + $0x758] sm:$0xff]
        %v1399 = vld [vmem:[%s763 + $0x760] sm:$0xff]
        %v1400 = vld [vmem:[%s763 + $0x768] sm:$0xff]
        %v1401 = vld [vmem:[%s763 + $0x770] sm:$0xff]
        %v1402 = vld [vmem:[%s763 + $0x778] sm:$0xff]
        %v1403 = vld [vmem:[%s763 + $0x780] sm:$0xff]
        %v1404 = vld [vmem:[%s763 + $0x788] sm:$0xff]
        %v1405 = vld [vmem:[%s763 + $0x790] sm:$0xff]
        %v1406 = vld [vmem:[%s763 + $0x798] sm:$0xff]
        %v1407 = vld [vmem:[%s763 + $0x7a0] sm:$0xff]
        %v1408 = vld [vmem:[%s763 + $0x7a8] sm:$0xff]
        %v1409 = vld [vmem:[%s763 + $0x7b0] sm:$0xff]
        %v1410 = vld [vmem:[%s763 + $0x7b8] sm:$0xff]
        %v1411 = vld [vmem:[%s763 + $0x7c0] sm:$0xff]
        %v1412 = vld [vmem:[%s763 + $0x7c8] sm:$0xff]
        %v1413 = vld [vmem:[%s763 + $0x7d0] sm:$0xff]
        %v1414 = vld [vmem:[%s763 + $0x7d8] sm:$0xff]
        %v1415 = vld [vmem:[%s763 + $0x7e0] sm:$0xff]
        %v1416 = vld [vmem:[%s763 + $0x7e8] sm:$0xff]
        %v1417 = vld [vmem:[%s763 + $0x7f0] sm:$0xff]
        %v1418 = vld [vmem:[%s763 + $0x7f8] sm:$0xff]
        %v1675 = vunpack.c.l.b16 %v1163
        %v1676 = vunpack.c.h.b16 %v1163
        %v1677 = vunpack.c.l.b16 %v1164
        %v1678 = vunpack.c.h.b16 %v1164
        %v1679 = vunpack.c.l.b16 %v1165
        %v1680 = vunpack.c.h.b16 %v1165
        %v1681 = vunpack.c.l.b16 %v1166
        %v1682 = vunpack.c.h.b16 %v1166
        %v1683 = vunpack.c.l.b16 %v1167
        %v1684 = vunpack.c.h.b16 %v1167
        %v1685 = vunpack.c.l.b16 %v1168
        %v1686 = vunpack.c.h.b16 %v1168
        %v1687 = vunpack.c.l.b16 %v1169
        %v1688 = vunpack.c.h.b16 %v1169
        %v1689 = vunpack.c.l.b16 %v1170
        %v1690 = vunpack.c.h.b16 %v1170
        %v1691 = vunpack.c.l.b16 %v1171
        %v1692 = vunpack.c.h.b16 %v1171
        %v1693 = vunpack.c.l.b16 %v1172
        %v1694 = vunpack.c.h.b16 %v1172
        %v1695 = vunpack.c.l.b16 %v1173
        %v1696 = vunpack.c.h.b16 %v1173
        %v1697 = vunpack.c.l.b16 %v1174
        %v1698 = vunpack.c.h.b16 %v1174
        %v1699 = vunpack.c.l.b16 %v1175
        %v1700 = vunpack.c.h.b16 %v1175
        %v1701 = vunpack.c.l.b16 %v1176
        %v1702 = vunpack.c.h.b16 %v1176
        %v1703 = vunpack.c.l.b16 %v1177
        %v1704 = vunpack.c.h.b16 %v1177
        %v1705 = vunpack.c.l.b16 %v1178
        %v1706 = vunpack.c.h.b16 %v1178
        %v1707 = vunpack.c.l.b16 %v1179
        %v1708 = vunpack.c.h.b16 %v1179
        %v1709 = vunpack.c.l.b16 %v1180
        %v1710 = vunpack.c.h.b16 %v1180
        %v1711 = vunpack.c.l.b16 %v1181
        %v1712 = vunpack.c.h.b16 %v1181
        %v1713 = vunpack.c.l.b16 %v1182
        %v1714 = vunpack.c.h.b16 %v1182
        %v1715 = vunpack.c.l.b16 %v1183
        %v1716 = vunpack.c.h.b16 %v1183
        %v1717 = vunpack.c.l.b16 %v1184
        %v1718 = vunpack.c.h.b16 %v1184
        %v1719 = vunpack.c.l.b16 %v1185
        %v1720 = vunpack.c.h.b16 %v1185
        %v1721 = vunpack.c.l.b16 %v1186
        %v1722 = vunpack.c.h.b16 %v1186
        %v1723 = vunpack.c.l.b16 %v1187
        %v1724 = vunpack.c.h.b16 %v1187
        %v1725 = vunpack.c.l.b16 %v1188
        %v1726 = vunpack.c.h.b16 %v1188
        %v1727 = vunpack.c.l.b16 %v1189
        %v1728 = vunpack.c.h.b16 %v1189
        %v1729 = vunpack.c.l.b16 %v1190
        %v1730 = vunpack.c.h.b16 %v1190
        %v1731 = vunpack.c.l.b16 %v1191
        %v1732 = vunpack.c.h.b16 %v1191
        %v1733 = vunpack.c.l.b16 %v1192
        %v1734 = vunpack.c.h.b16 %v1192
        %v1735 = vunpack.c.l.b16 %v1193
        %v1736 = vunpack.c.h.b16 %v1193
        %v1737 = vunpack.c.l.b16 %v1194
        %v1738 = vunpack.c.h.b16 %v1194
        %v1739 = vunpack.c.l.b16 %v1195
        %v1740 = vunpack.c.h.b16 %v1195
        %v1741 = vunpack.c.l.b16 %v1196
        %v1742 = vunpack.c.h.b16 %v1196
        %v1743 = vunpack.c.l.b16 %v1197
        %v1744 = vunpack.c.h.b16 %v1197
        %v1745 = vunpack.c.l.b16 %v1198
        %v1746 = vunpack.c.h.b16 %v1198
        %v1747 = vunpack.c.l.b16 %v1199
        %v1748 = vunpack.c.h.b16 %v1199
        %v1749 = vunpack.c.l.b16 %v1200
        %v1750 = vunpack.c.h.b16 %v1200
        %v1751 = vunpack.c.l.b16 %v1201
        %v1752 = vunpack.c.h.b16 %v1201
        %v1753 = vunpack.c.l.b16 %v1202
        %v1754 = vunpack.c.h.b16 %v1202
        %v1755 = vunpack.c.l.b16 %v1203
        %v1756 = vunpack.c.h.b16 %v1203
        %v1757 = vunpack.c.l.b16 %v1204
        %v1758 = vunpack.c.h.b16 %v1204
        %v1759 = vunpack.c.l.b16 %v1205
        %v1760 = vunpack.c.h.b16 %v1205
        %v1761 = vunpack.c.l.b16 %v1206
        %v1762 = vunpack.c.h.b16 %v1206
        %v1763 = vunpack.c.l.b16 %v1207
        %v1764 = vunpack.c.h.b16 %v1207
        %v1765 = vunpack.c.l.b16 %v1208
        %v1766 = vunpack.c.h.b16 %v1208
        %v1767 = vunpack.c.l.b16 %v1209
        %v1768 = vunpack.c.h.b16 %v1209
        %v1769 = vunpack.c.l.b16 %v1210
        %v1770 = vunpack.c.h.b16 %v1210
        %v1771 = vunpack.c.l.b16 %v1211
        %v1772 = vunpack.c.h.b16 %v1211
        %v1773 = vunpack.c.l.b16 %v1212
        %v1774 = vunpack.c.h.b16 %v1212
        %v1775 = vunpack.c.l.b16 %v1213
        %v1776 = vunpack.c.h.b16 %v1213
        %v1777 = vunpack.c.l.b16 %v1214
        %v1778 = vunpack.c.h.b16 %v1214
        %v1779 = vunpack.c.l.b16 %v1215
        %v1780 = vunpack.c.h.b16 %v1215
        %v1781 = vunpack.c.l.b16 %v1216
        %v1782 = vunpack.c.h.b16 %v1216
        %v1783 = vunpack.c.l.b16 %v1217
        %v1784 = vunpack.c.h.b16 %v1217
        %v1785 = vunpack.c.l.b16 %v1218
        %v1786 = vunpack.c.h.b16 %v1218
        %v1787 = vunpack.c.l.b16 %v1219
        %v1788 = vunpack.c.h.b16 %v1219
        %v1789 = vunpack.c.l.b16 %v1220
        %v1790 = vunpack.c.h.b16 %v1220
        %v1791 = vunpack.c.l.b16 %v1221
        %v1792 = vunpack.c.h.b16 %v1221
        %v1793 = vunpack.c.l.b16 %v1222
        %v1794 = vunpack.c.h.b16 %v1222
        %v1795 = vunpack.c.l.b16 %v1223
        %v1796 = vunpack.c.h.b16 %v1223
        %v1797 = vunpack.c.l.b16 %v1224
        %v1798 = vunpack.c.h.b16 %v1224
        %v1799 = vunpack.c.l.b16 %v1225
        %v1800 = vunpack.c.h.b16 %v1225
        %v1801 = vunpack.c.l.b16 %v1226
        %v1802 = vunpack.c.h.b16 %v1226
        %v1803 = vunpack.c.l.b16 %v1227
        %v1804 = vunpack.c.h.b16 %v1227
        %v1805 = vunpack.c.l.b16 %v1228
        %v1806 = vunpack.c.h.b16 %v1228
        %v1807 = vunpack.c.l.b16 %v1229
        %v1808 = vunpack.c.h.b16 %v1229
        %v1809 = vunpack.c.l.b16 %v1230
        %v1810 = vunpack.c.h.b16 %v1230
        %v1811 = vunpack.c.l.b16 %v1231
        %v1812 = vunpack.c.h.b16 %v1231
        %v1813 = vunpack.c.l.b16 %v1232
        %v1814 = vunpack.c.h.b16 %v1232
        %v1815 = vunpack.c.l.b16 %v1233
        %v1816 = vunpack.c.h.b16 %v1233
        %v1817 = vunpack.c.l.b16 %v1234
        %v1818 = vunpack.c.h.b16 %v1234
        %v1819 = vunpack.c.l.b16 %v1235
        %v1820 = vunpack.c.h.b16 %v1235
        %v1821 = vunpack.c.l.b16 %v1236
        %v1822 = vunpack.c.h.b16 %v1236
        %v1823 = vunpack.c.l.b16 %v1237
        %v1824 = vunpack.c.h.b16 %v1237
        %v1825 = vunpack.c.l.b16 %v1238
        %v1826 = vunpack.c.h.b16 %v1238
        %v1827 = vunpack.c.l.b16 %v1239
        %v1828 = vunpack.c.h.b16 %v1239
        %v1829 = vunpack.c.l.b16 %v1240
        %v1830 = vunpack.c.h.b16 %v1240
        %v1831 = vunpack.c.l.b16 %v1241
        %v1832 = vunpack.c.h.b16 %v1241
        %v1833 = vunpack.c.l.b16 %v1242
        %v1834 = vunpack.c.h.b16 %v1242
        %v1835 = vunpack.c.l.b16 %v1243
        %v1836 = vunpack.c.h.b16 %v1243
        %v1837 = vunpack.c.l.b16 %v1244
        %v1838 = vunpack.c.h.b16 %v1244
        %v1839 = vunpack.c.l.b16 %v1245
        %v1840 = vunpack.c.h.b16 %v1245
        %v1841 = vunpack.c.l.b16 %v1246
        %v1842 = vunpack.c.h.b16 %v1246
        %v1843 = vunpack.c.l.b16 %v1247
        %v1844 = vunpack.c.h.b16 %v1247
        %v1845 = vunpack.c.l.b16 %v1248
        %v1846 = vunpack.c.h.b16 %v1248
        %v1847 = vunpack.c.l.b16 %v1249
        %v1848 = vunpack.c.h.b16 %v1249
        %v1849 = vunpack.c.l.b16 %v1250
        %v1850 = vunpack.c.h.b16 %v1250
        %v1851 = vunpack.c.l.b16 %v1251
        %v1852 = vunpack.c.h.b16 %v1251
        %v1853 = vunpack.c.l.b16 %v1252
        %v1854 = vunpack.c.h.b16 %v1252
        %v1855 = vunpack.c.l.b16 %v1253
        %v1856 = vunpack.c.h.b16 %v1253
        %v1857 = vunpack.c.l.b16 %v1254
        %v1858 = vunpack.c.h.b16 %v1254
        %v1859 = vunpack.c.l.b16 %v1255
        %v1860 = vunpack.c.h.b16 %v1255
        %v1861 = vunpack.c.l.b16 %v1256
        %v1862 = vunpack.c.h.b16 %v1256
        %v1863 = vunpack.c.l.b16 %v1257
        %v1864 = vunpack.c.h.b16 %v1257
        %v1865 = vunpack.c.l.b16 %v1258
        %v1866 = vunpack.c.h.b16 %v1258
        %v1867 = vunpack.c.l.b16 %v1259
        %v1868 = vunpack.c.h.b16 %v1259
        %v1869 = vunpack.c.l.b16 %v1260
        %v1870 = vunpack.c.h.b16 %v1260
        %v1871 = vunpack.c.l.b16 %v1261
        %v1872 = vunpack.c.h.b16 %v1261
        %v1873 = vunpack.c.l.b16 %v1262
        %v1874 = vunpack.c.h.b16 %v1262
        %v1875 = vunpack.c.l.b16 %v1263
        %v1876 = vunpack.c.h.b16 %v1263
        %v1877 = vunpack.c.l.b16 %v1264
        %v1878 = vunpack.c.h.b16 %v1264
        %v1879 = vunpack.c.l.b16 %v1265
        %v1880 = vunpack.c.h.b16 %v1265
        %v1881 = vunpack.c.l.b16 %v1266
        %v1882 = vunpack.c.h.b16 %v1266
        %v1883 = vunpack.c.l.b16 %v1267
        %v1884 = vunpack.c.h.b16 %v1267
        %v1885 = vunpack.c.l.b16 %v1268
        %v1886 = vunpack.c.h.b16 %v1268
        %v1887 = vunpack.c.l.b16 %v1269
        %v1888 = vunpack.c.h.b16 %v1269
        %v1889 = vunpack.c.l.b16 %v1270
        %v1890 = vunpack.c.h.b16 %v1270
        %v1891 = vunpack.c.l.b16 %v1271
        %v1892 = vunpack.c.h.b16 %v1271
        %v1893 = vunpack.c.l.b16 %v1272
        %v1894 = vunpack.c.h.b16 %v1272
        %v1895 = vunpack.c.l.b16 %v1273
        %v1896 = vunpack.c.h.b16 %v1273
        %v1897 = vunpack.c.l.b16 %v1274
        %v1898 = vunpack.c.h.b16 %v1274
        %v1899 = vunpack.c.l.b16 %v1275
        %v1900 = vunpack.c.h.b16 %v1275
        %v1901 = vunpack.c.l.b16 %v1276
        %v1902 = vunpack.c.h.b16 %v1276
        %v1903 = vunpack.c.l.b16 %v1277
        %v1904 = vunpack.c.h.b16 %v1277
        %v1905 = vunpack.c.l.b16 %v1278
        %v1906 = vunpack.c.h.b16 %v1278
        %v1907 = vunpack.c.l.b16 %v1279
        %v1908 = vunpack.c.h.b16 %v1279
        %v1909 = vunpack.c.l.b16 %v1280
        %v1910 = vunpack.c.h.b16 %v1280
        %v1911 = vunpack.c.l.b16 %v1281
        %v1912 = vunpack.c.h.b16 %v1281
        %v1913 = vunpack.c.l.b16 %v1282
        %v1914 = vunpack.c.h.b16 %v1282
        %v1915 = vunpack.c.l.b16 %v1283
        %v1916 = vunpack.c.h.b16 %v1283
        %v1917 = vunpack.c.l.b16 %v1284
        %v1918 = vunpack.c.h.b16 %v1284
        %v1919 = vunpack.c.l.b16 %v1285
        %v1920 = vunpack.c.h.b16 %v1285
        %v1921 = vunpack.c.l.b16 %v1286
        %v1922 = vunpack.c.h.b16 %v1286
        %v1923 = vunpack.c.l.b16 %v1287
        %v1924 = vunpack.c.h.b16 %v1287
        %v1925 = vunpack.c.l.b16 %v1288
        %v1926 = vunpack.c.h.b16 %v1288
        %v1927 = vunpack.c.l.b16 %v1289
        %v1928 = vunpack.c.h.b16 %v1289
        %v1929 = vunpack.c.l.b16 %v1290
        %v1930 = vunpack.c.h.b16 %v1290
        %v1931 = vunpack.c.l.b16 %v1291
        %v1932 = vunpack.c.h.b16 %v1291
        %v1933 = vunpack.c.l.b16 %v1292
        %v1934 = vunpack.c.h.b16 %v1292
        %v1935 = vunpack.c.l.b16 %v1293
        %v1936 = vunpack.c.h.b16 %v1293
        %v1937 = vunpack.c.l.b16 %v1294
        %v1938 = vunpack.c.h.b16 %v1294
        %v1939 = vunpack.c.l.b16 %v1295
        %v1940 = vunpack.c.h.b16 %v1295
        %v1941 = vunpack.c.l.b16 %v1296
        %v1942 = vunpack.c.h.b16 %v1296
        %v1943 = vunpack.c.l.b16 %v1297
        %v1944 = vunpack.c.h.b16 %v1297
        %v1945 = vunpack.c.l.b16 %v1298
        %v1946 = vunpack.c.h.b16 %v1298
        %v1947 = vunpack.c.l.b16 %v1299
        %v1948 = vunpack.c.h.b16 %v1299
        %v1949 = vunpack.c.l.b16 %v1300
        %v1950 = vunpack.c.h.b16 %v1300
        %v1951 = vunpack.c.l.b16 %v1301
        %v1952 = vunpack.c.h.b16 %v1301
        %v1953 = vunpack.c.l.b16 %v1302
        %v1954 = vunpack.c.h.b16 %v1302
        %v1955 = vunpack.c.l.b16 %v1303
        %v1956 = vunpack.c.h.b16 %v1303
        %v1957 = vunpack.c.l.b16 %v1304
        %v1958 = vunpack.c.h.b16 %v1304
        %v1959 = vunpack.c.l.b16 %v1305
        %v1960 = vunpack.c.h.b16 %v1305
        %v1961 = vunpack.c.l.b16 %v1306
        %v1962 = vunpack.c.h.b16 %v1306
        %v1963 = vunpack.c.l.b16 %v1307
        %v1964 = vunpack.c.h.b16 %v1307
        %v1965 = vunpack.c.l.b16 %v1308
        %v1966 = vunpack.c.h.b16 %v1308
        %v1967 = vunpack.c.l.b16 %v1309
        %v1968 = vunpack.c.h.b16 %v1309
        %v1969 = vunpack.c.l.b16 %v1310
        %v1970 = vunpack.c.h.b16 %v1310
        %v1971 = vunpack.c.l.b16 %v1311
        %v1972 = vunpack.c.h.b16 %v1311
        %v1973 = vunpack.c.l.b16 %v1312
        %v1974 = vunpack.c.h.b16 %v1312
        %v1975 = vunpack.c.l.b16 %v1313
        %v1976 = vunpack.c.h.b16 %v1313
        %v1977 = vunpack.c.l.b16 %v1314
        %v1978 = vunpack.c.h.b16 %v1314
        %v1979 = vunpack.c.l.b16 %v1315
        %v1980 = vunpack.c.h.b16 %v1315
        %v1981 = vunpack.c.l.b16 %v1316
        %v1982 = vunpack.c.h.b16 %v1316
        %v1983 = vunpack.c.l.b16 %v1317
        %v1984 = vunpack.c.h.b16 %v1317
        %v1985 = vunpack.c.l.b16 %v1318
        %v1986 = vunpack.c.h.b16 %v1318
        %v1987 = vunpack.c.l.b16 %v1319
        %v1988 = vunpack.c.h.b16 %v1319
        %v1989 = vunpack.c.l.b16 %v1320
        %v1990 = vunpack.c.h.b16 %v1320
        %v1991 = vunpack.c.l.b16 %v1321
        %v1992 = vunpack.c.h.b16 %v1321
        %v1993 = vunpack.c.l.b16 %v1322
        %v1994 = vunpack.c.h.b16 %v1322
        %v1995 = vunpack.c.l.b16 %v1323
        %v1996 = vunpack.c.h.b16 %v1323
        %v1997 = vunpack.c.l.b16 %v1324
        %v1998 = vunpack.c.h.b16 %v1324
        %v1999 = vunpack.c.l.b16 %v1325
        %v2000 = vunpack.c.h.b16 %v1325
        %v2001 = vunpack.c.l.b16 %v1326
        %v2002 = vunpack.c.h.b16 %v1326
        %v2003 = vunpack.c.l.b16 %v1327
        %v2004 = vunpack.c.h.b16 %v1327
        %v2005 = vunpack.c.l.b16 %v1328
        %v2006 = vunpack.c.h.b16 %v1328
        %v2007 = vunpack.c.l.b16 %v1329
        %v2008 = vunpack.c.h.b16 %v1329
        %v2009 = vunpack.c.l.b16 %v1330
        %v2010 = vunpack.c.h.b16 %v1330
        %v2011 = vunpack.c.l.b16 %v1331
        %v2012 = vunpack.c.h.b16 %v1331
        %v2013 = vunpack.c.l.b16 %v1332
        %v2014 = vunpack.c.h.b16 %v1332
        %v2015 = vunpack.c.l.b16 %v1333
        %v2016 = vunpack.c.h.b16 %v1333
        %v2017 = vunpack.c.l.b16 %v1334
        %v2018 = vunpack.c.h.b16 %v1334
        %v2019 = vunpack.c.l.b16 %v1335
        %v2020 = vunpack.c.h.b16 %v1335
        %v2021 = vunpack.c.l.b16 %v1336
        %v2022 = vunpack.c.h.b16 %v1336
        %v2023 = vunpack.c.l.b16 %v1337
        %v2024 = vunpack.c.h.b16 %v1337
        %v2025 = vunpack.c.l.b16 %v1338
        %v2026 = vunpack.c.h.b16 %v1338
        %v2027 = vunpack.c.l.b16 %v1339
        %v2028 = vunpack.c.h.b16 %v1339
        %v2029 = vunpack.c.l.b16 %v1340
        %v2030 = vunpack.c.h.b16 %v1340
        %v2031 = vunpack.c.l.b16 %v1341
        %v2032 = vunpack.c.h.b16 %v1341
        %v2033 = vunpack.c.l.b16 %v1342
        %v2034 = vunpack.c.h.b16 %v1342
        %v2035 = vunpack.c.l.b16 %v1343
        %v2036 = vunpack.c.h.b16 %v1343
        %v2037 = vunpack.c.l.b16 %v1344
        %v2038 = vunpack.c.h.b16 %v1344
        %v2039 = vunpack.c.l.b16 %v1345
        %v2040 = vunpack.c.h.b16 %v1345
        %v2041 = vunpack.c.l.b16 %v1346
        %v2042 = vunpack.c.h.b16 %v1346
        %v2043 = vunpack.c.l.b16 %v1347
        %v2044 = vunpack.c.h.b16 %v1347
        %v2045 = vunpack.c.l.b16 %v1348
        %v2046 = vunpack.c.h.b16 %v1348
        %v2047 = vunpack.c.l.b16 %v1349
        %v2048 = vunpack.c.h.b16 %v1349
        %v2049 = vunpack.c.l.b16 %v1350
        %v2050 = vunpack.c.h.b16 %v1350
        %v2051 = vunpack.c.l.b16 %v1351
        %v2052 = vunpack.c.h.b16 %v1351
        %v2053 = vunpack.c.l.b16 %v1352
        %v2054 = vunpack.c.h.b16 %v1352
        %v2055 = vunpack.c.l.b16 %v1353
        %v2056 = vunpack.c.h.b16 %v1353
        %v2057 = vunpack.c.l.b16 %v1354
        %v2058 = vunpack.c.h.b16 %v1354
        %v2059 = vunpack.c.l.b16 %v1355
        %v2060 = vunpack.c.h.b16 %v1355
        %v2061 = vunpack.c.l.b16 %v1356
        %v2062 = vunpack.c.h.b16 %v1356
        %v2063 = vunpack.c.l.b16 %v1357
        %v2064 = vunpack.c.h.b16 %v1357
        %v2065 = vunpack.c.l.b16 %v1358
        %v2066 = vunpack.c.h.b16 %v1358
        %v2067 = vunpack.c.l.b16 %v1359
        %v2068 = vunpack.c.h.b16 %v1359
        %v2069 = vunpack.c.l.b16 %v1360
        %v2070 = vunpack.c.h.b16 %v1360
        %v2071 = vunpack.c.l.b16 %v1361
        %v2072 = vunpack.c.h.b16 %v1361
        %v2073 = vunpack.c.l.b16 %v1362
        %v2074 = vunpack.c.h.b16 %v1362
        %v2075 = vunpack.c.l.b16 %v1363
        %v2076 = vunpack.c.h.b16 %v1363
        %v2077 = vunpack.c.l.b16 %v1364
        %v2078 = vunpack.c.h.b16 %v1364
        %v2079 = vunpack.c.l.b16 %v1365
        %v2080 = vunpack.c.h.b16 %v1365
        %v2081 = vunpack.c.l.b16 %v1366
        %v2082 = vunpack.c.h.b16 %v1366
        %v2083 = vunpack.c.l.b16 %v1367
        %v2084 = vunpack.c.h.b16 %v1367
        %v2085 = vunpack.c.l.b16 %v1368
        %v2086 = vunpack.c.h.b16 %v1368
        %v2087 = vunpack.c.l.b16 %v1369
        %v2088 = vunpack.c.h.b16 %v1369
        %v2089 = vunpack.c.l.b16 %v1370
        %v2090 = vunpack.c.h.b16 %v1370
        %v2091 = vunpack.c.l.b16 %v1371
        %v2092 = vunpack.c.h.b16 %v1371
        %v2093 = vunpack.c.l.b16 %v1372
        %v2094 = vunpack.c.h.b16 %v1372
        %v2095 = vunpack.c.l.b16 %v1373
        %v2096 = vunpack.c.h.b16 %v1373
        %v2097 = vunpack.c.l.b16 %v1374
        %v2098 = vunpack.c.h.b16 %v1374
        %v2099 = vunpack.c.l.b16 %v1375
        %v2100 = vunpack.c.h.b16 %v1375
        %v2101 = vunpack.c.l.b16 %v1376
        %v2102 = vunpack.c.h.b16 %v1376
        %v2103 = vunpack.c.l.b16 %v1377
        %v2104 = vunpack.c.h.b16 %v1377
        %v2105 = vunpack.c.l.b16 %v1378
        %v2106 = vunpack.c.h.b16 %v1378
        %v2107 = vunpack.c.l.b16 %v1379
        %v2108 = vunpack.c.h.b16 %v1379
        %v2109 = vunpack.c.l.b16 %v1380
        %v2110 = vunpack.c.h.b16 %v1380
        %v2111 = vunpack.c.l.b16 %v1381
        %v2112 = vunpack.c.h.b16 %v1381
        %v2113 = vunpack.c.l.b16 %v1382
        %v2114 = vunpack.c.h.b16 %v1382
        %v2115 = vunpack.c.l.b16 %v1383
        %v2116 = vunpack.c.h.b16 %v1383
        %v2117 = vunpack.c.l.b16 %v1384
        %v2118 = vunpack.c.h.b16 %v1384
        %v2119 = vunpack.c.l.b16 %v1385
        %v2120 = vunpack.c.h.b16 %v1385
        %v2121 = vunpack.c.l.b16 %v1386
        %v2122 = vunpack.c.h.b16 %v1386
        %v2123 = vunpack.c.l.b16 %v1387
        %v2124 = vunpack.c.h.b16 %v1387
        %v2125 = vunpack.c.l.b16 %v1388
        %v2126 = vunpack.c.h.b16 %v1388
        %v2127 = vunpack.c.l.b16 %v1389
        %v2128 = vunpack.c.h.b16 %v1389
        %v2129 = vunpack.c.l.b16 %v1390
        %v2130 = vunpack.c.h.b16 %v1390
        %v2131 = vunpack.c.l.b16 %v1391
        %v2132 = vunpack.c.h.b16 %v1391
        %v2133 = vunpack.c.l.b16 %v1392
        %v2134 = vunpack.c.h.b16 %v1392
        %v2135 = vunpack.c.l.b16 %v1393
        %v2136 = vunpack.c.h.b16 %v1393
        %v2137 = vunpack.c.l.b16 %v1394
        %v2138 = vunpack.c.h.b16 %v1394
        %v2139 = vunpack.c.l.b16 %v1395
        %v2140 = vunpack.c.h.b16 %v1395
        %v2141 = vunpack.c.l.b16 %v1396
        %v2142 = vunpack.c.h.b16 %v1396
        %v2143 = vunpack.c.l.b16 %v1397
        %v2144 = vunpack.c.h.b16 %v1397
        %v2145 = vunpack.c.l.b16 %v1398
        %v2146 = vunpack.c.h.b16 %v1398
        %v2147 = vunpack.c.l.b16 %v1399
        %v2148 = vunpack.c.h.b16 %v1399
        %v2149 = vunpack.c.l.b16 %v1400
        %v2150 = vunpack.c.h.b16 %v1400
        %v2151 = vunpack.c.l.b16 %v1401
        %v2152 = vunpack.c.h.b16 %v1401
        %v2153 = vunpack.c.l.b16 %v1402
        %v2154 = vunpack.c.h.b16 %v1402
        %v2155 = vunpack.c.l.b16 %v1403
        %v2156 = vunpack.c.h.b16 %v1403
        %v2157 = vunpack.c.l.b16 %v1404
        %v2158 = vunpack.c.h.b16 %v1404
        %v2159 = vunpack.c.l.b16 %v1405
        %v2160 = vunpack.c.h.b16 %v1405
        %v2161 = vunpack.c.l.b16 %v1406
        %v2162 = vunpack.c.h.b16 %v1406
        %v2163 = vunpack.c.l.b16 %v1407
        %v2164 = vunpack.c.h.b16 %v1407
        %v2165 = vunpack.c.l.b16 %v1408
        %v2166 = vunpack.c.h.b16 %v1408
        %v2167 = vunpack.c.l.b16 %v1409
        %v2168 = vunpack.c.h.b16 %v1409
        %v2169 = vunpack.c.l.b16 %v1410
        %v2170 = vunpack.c.h.b16 %v1410
        %v2171 = vunpack.c.l.b16 %v1411
        %v2172 = vunpack.c.h.b16 %v1411
        %v2173 = vunpack.c.l.b16 %v1412
        %v2174 = vunpack.c.h.b16 %v1412
        %v2175 = vunpack.c.l.b16 %v1413
        %v2176 = vunpack.c.h.b16 %v1413
        %v2177 = vunpack.c.l.b16 %v1414
        %v2178 = vunpack.c.h.b16 %v1414
        %v2179 = vunpack.c.l.b16 %v1415
        %v2180 = vunpack.c.h.b16 %v1415
        %v2181 = vunpack.c.l.b16 %v1416
        %v2182 = vunpack.c.h.b16 %v1416
        %v2183 = vunpack.c.l.b16 %v1417
        %v2184 = vunpack.c.h.b16 %v1417
        %v2185 = vunpack.c.l.b16 %v1418
        %v2186 = vunpack.c.h.b16 %v1418
        %v2187 = vpack.c.b16 %v1679, %v1675
        %v2188 = vpack.c.b16 %v1680, %v1676
        %v2189 = vpack.c.b16 %v1681, %v1677
        %v2190 = vpack.c.b16 %v1682, %v1678
        %v2191 = vpack.c.b16 %v1687, %v1683
        %v2192 = vpack.c.b16 %v1688, %v1684
        %v2193 = vpack.c.b16 %v1689, %v1685
        %v2194 = vpack.c.b16 %v1690, %v1686
        %v2195 = vpack.c.b16 %v1695, %v1691
        %v2196 = vpack.c.b16 %v1696, %v1692
        %v2197 = vpack.c.b16 %v1697, %v1693
        %v2198 = vpack.c.b16 %v1698, %v1694
        %v2199 = vpack.c.b16 %v1703, %v1699
        %v2200 = vpack.c.b16 %v1704, %v1700
        %v2201 = vpack.c.b16 %v1705, %v1701
        %v2202 = vpack.c.b16 %v1706, %v1702
        %v2203 = vpack.c.b16 %v1711, %v1707
        %v2204 = vpack.c.b16 %v1712, %v1708
        %v2205 = vpack.c.b16 %v1713, %v1709
        %v2206 = vpack.c.b16 %v1714, %v1710
        %v2207 = vpack.c.b16 %v1719, %v1715
        %v2208 = vpack.c.b16 %v1720, %v1716
        %v2209 = vpack.c.b16 %v1721, %v1717
        %v2210 = vpack.c.b16 %v1722, %v1718
        %v2211 = vpack.c.b16 %v1727, %v1723
        %v2212 = vpack.c.b16 %v1728, %v1724
        %v2213 = vpack.c.b16 %v1729, %v1725
        %v2214 = vpack.c.b16 %v1730, %v1726
        %v2215 = vpack.c.b16 %v1735, %v1731
        %v2216 = vpack.c.b16 %v1736, %v1732
        %v2217 = vpack.c.b16 %v1737, %v1733
        %v2218 = vpack.c.b16 %v1738, %v1734
        %v2219 = vpack.c.b16 %v1743, %v1739
        %v2220 = vpack.c.b16 %v1744, %v1740
        %v2221 = vpack.c.b16 %v1745, %v1741
        %v2222 = vpack.c.b16 %v1746, %v1742
        %v2223 = vpack.c.b16 %v1751, %v1747
        %v2224 = vpack.c.b16 %v1752, %v1748
        %v2225 = vpack.c.b16 %v1753, %v1749
        %v2226 = vpack.c.b16 %v1754, %v1750
        %v2227 = vpack.c.b16 %v1759, %v1755
        %v2228 = vpack.c.b16 %v1760, %v1756
        %v2229 = vpack.c.b16 %v1761, %v1757
        %v2230 = vpack.c.b16 %v1762, %v1758
        %v2231 = vpack.c.b16 %v1767, %v1763
        %v2232 = vpack.c.b16 %v1768, %v1764
        %v2233 = vpack.c.b16 %v1769, %v1765
        %v2234 = vpack.c.b16 %v1770, %v1766
        %v2235 = vpack.c.b16 %v1775, %v1771
        %v2236 = vpack.c.b16 %v1776, %v1772
        %v2237 = vpack.c.b16 %v1777, %v1773
        %v2238 = vpack.c.b16 %v1778, %v1774
        %v2239 = vpack.c.b16 %v1783, %v1779
        %v2240 = vpack.c.b16 %v1784, %v1780
        %v2241 = vpack.c.b16 %v1785, %v1781
        %v2242 = vpack.c.b16 %v1786, %v1782
        %v2243 = vpack.c.b16 %v1791, %v1787
        %v2244 = vpack.c.b16 %v1792, %v1788
        %v2245 = vpack.c.b16 %v1793, %v1789
        %v2246 = vpack.c.b16 %v1794, %v1790
        %v2247 = vpack.c.b16 %v1799, %v1795
        %v2248 = vpack.c.b16 %v1800, %v1796
        %v2249 = vpack.c.b16 %v1801, %v1797
        %v2250 = vpack.c.b16 %v1802, %v1798
        %v2251 = vpack.c.b16 %v1807, %v1803
        %v2252 = vpack.c.b16 %v1808, %v1804
        %v2253 = vpack.c.b16 %v1809, %v1805
        %v2254 = vpack.c.b16 %v1810, %v1806
        %v2255 = vpack.c.b16 %v1815, %v1811
        %v2256 = vpack.c.b16 %v1816, %v1812
        %v2257 = vpack.c.b16 %v1817, %v1813
        %v2258 = vpack.c.b16 %v1818, %v1814
        %v2259 = vpack.c.b16 %v1823, %v1819
        %v2260 = vpack.c.b16 %v1824, %v1820
        %v2261 = vpack.c.b16 %v1825, %v1821
        %v2262 = vpack.c.b16 %v1826, %v1822
        %v2263 = vpack.c.b16 %v1831, %v1827
        %v2264 = vpack.c.b16 %v1832, %v1828
        %v2265 = vpack.c.b16 %v1833, %v1829
        %v2266 = vpack.c.b16 %v1834, %v1830
        %v2267 = vpack.c.b16 %v1839, %v1835
        %v2268 = vpack.c.b16 %v1840, %v1836
        %v2269 = vpack.c.b16 %v1841, %v1837
        %v2270 = vpack.c.b16 %v1842, %v1838
        %v2271 = vpack.c.b16 %v1847, %v1843
        %v2272 = vpack.c.b16 %v1848, %v1844
        %v2273 = vpack.c.b16 %v1849, %v1845
        %v2274 = vpack.c.b16 %v1850, %v1846
        %v2275 = vpack.c.b16 %v1855, %v1851
        %v2276 = vpack.c.b16 %v1856, %v1852
        %v2277 = vpack.c.b16 %v1857, %v1853
        %v2278 = vpack.c.b16 %v1858, %v1854
        %v2279 = vpack.c.b16 %v1863, %v1859
        %v2280 = vpack.c.b16 %v1864, %v1860
        %v2281 = vpack.c.b16 %v1865, %v1861
        %v2282 = vpack.c.b16 %v1866, %v1862
        %v2283 = vpack.c.b16 %v1871, %v1867
        %v2284 = vpack.c.b16 %v1872, %v1868
        %v2285 = vpack.c.b16 %v1873, %v1869
        %v2286 = vpack.c.b16 %v1874, %v1870
        %v2287 = vpack.c.b16 %v1879, %v1875
        %v2288 = vpack.c.b16 %v1880, %v1876
        %v2289 = vpack.c.b16 %v1881, %v1877
        %v2290 = vpack.c.b16 %v1882, %v1878
        %v2291 = vpack.c.b16 %v1887, %v1883
        %v2292 = vpack.c.b16 %v1888, %v1884
        %v2293 = vpack.c.b16 %v1889, %v1885
        %v2294 = vpack.c.b16 %v1890, %v1886
        %v2295 = vpack.c.b16 %v1895, %v1891
        %v2296 = vpack.c.b16 %v1896, %v1892
        %v2297 = vpack.c.b16 %v1897, %v1893
        %v2298 = vpack.c.b16 %v1898, %v1894
        %v2299 = vpack.c.b16 %v1903, %v1899
        %v2300 = vpack.c.b16 %v1904, %v1900
        %v2301 = vpack.c.b16 %v1905, %v1901
        %v2302 = vpack.c.b16 %v1906, %v1902
        %v2303 = vpack.c.b16 %v1911, %v1907
        %v2304 = vpack.c.b16 %v1912, %v1908
        %v2305 = vpack.c.b16 %v1913, %v1909
        %v2306 = vpack.c.b16 %v1914, %v1910
        %v2307 = vpack.c.b16 %v1919, %v1915
        %v2308 = vpack.c.b16 %v1920, %v1916
        %v2309 = vpack.c.b16 %v1921, %v1917
        %v2310 = vpack.c.b16 %v1922, %v1918
        %v2311 = vpack.c.b16 %v1927, %v1923
        %v2312 = vpack.c.b16 %v1928, %v1924
        %v2313 = vpack.c.b16 %v1929, %v1925
        %v2314 = vpack.c.b16 %v1930, %v1926
        %v2315 = vpack.c.b16 %v1935, %v1931
        %v2316 = vpack.c.b16 %v1936, %v1932
        %v2317 = vpack.c.b16 %v1937, %v1933
        %v2318 = vpack.c.b16 %v1938, %v1934
        %v2319 = vpack.c.b16 %v1943, %v1939
        %v2320 = vpack.c.b16 %v1944, %v1940
        %v2321 = vpack.c.b16 %v1945, %v1941
        %v2322 = vpack.c.b16 %v1946, %v1942
        %v2323 = vpack.c.b16 %v1951, %v1947
        %v2324 = vpack.c.b16 %v1952, %v1948
        %v2325 = vpack.c.b16 %v1953, %v1949
        %v2326 = vpack.c.b16 %v1954, %v1950
        %v2327 = vpack.c.b16 %v1959, %v1955
        %v2328 = vpack.c.b16 %v1960, %v1956
        %v2329 = vpack.c.b16 %v1961, %v1957
        %v2330 = vpack.c.b16 %v1962, %v1958
        %v2331 = vpack.c.b16 %v1967, %v1963
        %v2332 = vpack.c.b16 %v1968, %v1964
        %v2333 = vpack.c.b16 %v1969, %v1965
        %v2334 = vpack.c.b16 %v1970, %v1966
        %v2335 = vpack.c.b16 %v1975, %v1971
        %v2336 = vpack.c.b16 %v1976, %v1972
        %v2337 = vpack.c.b16 %v1977, %v1973
        %v2338 = vpack.c.b16 %v1978, %v1974
        %v2339 = vpack.c.b16 %v1983, %v1979
        %v2340 = vpack.c.b16 %v1984, %v1980
        %v2341 = vpack.c.b16 %v1985, %v1981
        %v2342 = vpack.c.b16 %v1986, %v1982
        %v2343 = vpack.c.b16 %v1991, %v1987
        %v2344 = vpack.c.b16 %v1992, %v1988
        %v2345 = vpack.c.b16 %v1993, %v1989
        %v2346 = vpack.c.b16 %v1994, %v1990
        %v2347 = vpack.c.b16 %v1999, %v1995
        %v2348 = vpack.c.b16 %v2000, %v1996
        %v2349 = vpack.c.b16 %v2001, %v1997
        %v2350 = vpack.c.b16 %v2002, %v1998
        %v2351 = vpack.c.b16 %v2007, %v2003
        %v2352 = vpack.c.b16 %v2008, %v2004
        %v2353 = vpack.c.b16 %v2009, %v2005
        %v2354 = vpack.c.b16 %v2010, %v2006
        %v2355 = vpack.c.b16 %v2015, %v2011
        %v2356 = vpack.c.b16 %v2016, %v2012
        %v2357 = vpack.c.b16 %v2017, %v2013
        %v2358 = vpack.c.b16 %v2018, %v2014
        %v2359 = vpack.c.b16 %v2023, %v2019
        %v2360 = vpack.c.b16 %v2024, %v2020
        %v2361 = vpack.c.b16 %v2025, %v2021
        %v2362 = vpack.c.b16 %v2026, %v2022
        %v2363 = vpack.c.b16 %v2031, %v2027
        %v2364 = vpack.c.b16 %v2032, %v2028
        %v2365 = vpack.c.b16 %v2033, %v2029
        %v2366 = vpack.c.b16 %v2034, %v2030
        %v2367 = vpack.c.b16 %v2039, %v2035
        %v2368 = vpack.c.b16 %v2040, %v2036
        %v2369 = vpack.c.b16 %v2041, %v2037
        %v2370 = vpack.c.b16 %v2042, %v2038
        %v2371 = vpack.c.b16 %v2047, %v2043
        %v2372 = vpack.c.b16 %v2048, %v2044
        %v2373 = vpack.c.b16 %v2049, %v2045
        %v2374 = vpack.c.b16 %v2050, %v2046
        %v2375 = vpack.c.b16 %v2055, %v2051
        %v2376 = vpack.c.b16 %v2056, %v2052
        %v2377 = vpack.c.b16 %v2057, %v2053
        %v2378 = vpack.c.b16 %v2058, %v2054
        %v2379 = vpack.c.b16 %v2063, %v2059
        %v2380 = vpack.c.b16 %v2064, %v2060
        %v2381 = vpack.c.b16 %v2065, %v2061
        %v2382 = vpack.c.b16 %v2066, %v2062
        %v2383 = vpack.c.b16 %v2071, %v2067
        %v2384 = vpack.c.b16 %v2072, %v2068
        %v2385 = vpack.c.b16 %v2073, %v2069
        %v2386 = vpack.c.b16 %v2074, %v2070
        %v2387 = vpack.c.b16 %v2079, %v2075
        %v2388 = vpack.c.b16 %v2080, %v2076
        %v2389 = vpack.c.b16 %v2081, %v2077
        %v2390 = vpack.c.b16 %v2082, %v2078
        %v2391 = vpack.c.b16 %v2087, %v2083
        %v2392 = vpack.c.b16 %v2088, %v2084
        %v2393 = vpack.c.b16 %v2089, %v2085
        %v2394 = vpack.c.b16 %v2090, %v2086
        %v2395 = vpack.c.b16 %v2095, %v2091
        %v2396 = vpack.c.b16 %v2096, %v2092
        %v2397 = vpack.c.b16 %v2097, %v2093
        %v2398 = vpack.c.b16 %v2098, %v2094
        %v2399 = vpack.c.b16 %v2103, %v2099
        %v2400 = vpack.c.b16 %v2104, %v2100
        %v2401 = vpack.c.b16 %v2105, %v2101
        %v2402 = vpack.c.b16 %v2106, %v2102
        %v2403 = vpack.c.b16 %v2111, %v2107
        %v2404 = vpack.c.b16 %v2112, %v2108
        %v2405 = vpack.c.b16 %v2113, %v2109
        %v2406 = vpack.c.b16 %v2114, %v2110
        %v2407 = vpack.c.b16 %v2119, %v2115
        %v2408 = vpack.c.b16 %v2120, %v2116
        %v2409 = vpack.c.b16 %v2121, %v2117
        %v2410 = vpack.c.b16 %v2122, %v2118
        %v2411 = vpack.c.b16 %v2127, %v2123
        %v2412 = vpack.c.b16 %v2128, %v2124
        %v2413 = vpack.c.b16 %v2129, %v2125
        %v2414 = vpack.c.b16 %v2130, %v2126
        %v2415 = vpack.c.b16 %v2135, %v2131
        %v2416 = vpack.c.b16 %v2136, %v2132
        %v2417 = vpack.c.b16 %v2137, %v2133
        %v2418 = vpack.c.b16 %v2138, %v2134
        %v2419 = vpack.c.b16 %v2143, %v2139
        %v2420 = vpack.c.b16 %v2144, %v2140
        %v2421 = vpack.c.b16 %v2145, %v2141
        %v2422 = vpack.c.b16 %v2146, %v2142
        %v2423 = vpack.c.b16 %v2151, %v2147
        %v2424 = vpack.c.b16 %v2152, %v2148
        %v2425 = vpack.c.b16 %v2153, %v2149
        %v2426 = vpack.c.b16 %v2154, %v2150
        %v2427 = vpack.c.b16 %v2159, %v2155
        %v2428 = vpack.c.b16 %v2160, %v2156
        %v2429 = vpack.c.b16 %v2161, %v2157
        %v2430 = vpack.c.b16 %v2162, %v2158
        %v2431 = vpack.c.b16 %v2167, %v2163
        %v2432 = vpack.c.b16 %v2168, %v2164
        %v2433 = vpack.c.b16 %v2169, %v2165
        %v2434 = vpack.c.b16 %v2170, %v2166
        %v2435 = vpack.c.b16 %v2175, %v2171
        %v2436 = vpack.c.b16 %v2176, %v2172
        %v2437 = vpack.c.b16 %v2177, %v2173
        %v2438 = vpack.c.b16 %v2178, %v2174
        %v2439 = vpack.c.b16 %v2183, %v2179
        %v2440 = vpack.c.b16 %v2184, %v2180
        %v2441 = vpack.c.b16 %v2185, %v2181
        %v2442 = vpack.c.b16 %v2186, %v2182
        %v2763 = vunpack.c.l.b16 %v971
        %v2764 = vunpack.c.l.b16 %v972
        %v2765 = vunpack.c.l.b16 %v973
        %v2766 = vunpack.c.l.b16 %v974
        %v2767 = vunpack.c.l.b16 %v975
        %v2768 = vunpack.c.l.b16 %v976
        %v2769 = vunpack.c.l.b16 %v977
        %v2770 = vunpack.c.l.b16 %v978
        %v2771 = vunpack.c.l.b16 %v979
        %v2772 = vunpack.c.l.b16 %v980
        %v2773 = vunpack.c.l.b16 %v981
        %v2774 = vunpack.c.l.b16 %v982
        %v2775 = vunpack.c.l.b16 %v983
        %v2776 = vunpack.c.l.b16 %v984
        %v2777 = vunpack.c.l.b16 %v985
        %v2778 = vunpack.c.l.b16 %v986
        %v2779 = vunpack.c.l.b16 %v987
        %v2780 = vunpack.c.l.b16 %v988
        %v2781 = vunpack.c.l.b16 %v989
        %v2782 = vunpack.c.l.b16 %v990
        %v2783 = vunpack.c.l.b16 %v991
        %v2784 = vunpack.c.l.b16 %v992
        %v2785 = vunpack.c.l.b16 %v993
        %v2786 = vunpack.c.l.b16 %v994
        %v2787 = vunpack.c.l.b16 %v995
        %v2788 = vunpack.c.l.b16 %v996
        %v2789 = vunpack.c.l.b16 %v997
        %v2790 = vunpack.c.l.b16 %v998
        %v2791 = vunpack.c.l.b16 %v999
        %v2792 = vunpack.c.l.b16 %v1000
        %v2793 = vunpack.c.l.b16 %v1001
        %v2794 = vunpack.c.l.b16 %v1002
        %v2795 = vunpack.c.l.b16 %v1003
        %v2796 = vunpack.c.l.b16 %v1004
        %v2797 = vunpack.c.l.b16 %v1005
        %v2798 = vunpack.c.l.b16 %v1006
        %v2799 = vunpack.c.l.b16 %v1007
        %v2800 = vunpack.c.l.b16 %v1008
        %v2801 = vunpack.c.l.b16 %v1009
        %v2802 = vunpack.c.l.b16 %v1010
        %v2803 = vunpack.c.l.b16 %v1011
        %v2804 = vunpack.c.l.b16 %v1012
        %v2805 = vunpack.c.l.b16 %v1013
        %v2806 = vunpack.c.l.b16 %v1014
        %v2807 = vunpack.c.l.b16 %v1015
        %v2808 = vunpack.c.l.b16 %v1016
        %v2809 = vunpack.c.l.b16 %v1017
        %v2810 = vunpack.c.l.b16 %v1018
        %v2811 = vunpack.c.l.b16 %v1019
        %v2812 = vunpack.c.l.b16 %v1020
        %v2813 = vunpack.c.l.b16 %v1021
        %v2814 = vunpack.c.l.b16 %v1022
        %v2815 = vunpack.c.l.b16 %v1023
        %v2816 = vunpack.c.l.b16 %v1024
        %v2817 = vunpack.c.l.b16 %v1025
        %v2818 = vunpack.c.l.b16 %v1026
        %v2819 = vunpack.c.l.b16 %v1027
        %v2820 = vunpack.c.l.b16 %v1028
        %v2821 = vunpack.c.l.b16 %v1029
        %v2822 = vunpack.c.l.b16 %v1030
        %v2823 = vunpack.c.l.b16 %v1031
        %v2824 = vunpack.c.l.b16 %v1032
        %v2825 = vunpack.c.l.b16 %v1033
        %v2826 = vunpack.c.l.b16 %v1034
        %v2827 = vpack.c.b16 %v2764, %v2763
        %v2828 = vpack.c.b16 %v2766, %v2765
        %v2829 = vpack.c.b16 %v2768, %v2767
        %v2830 = vpack.c.b16 %v2770, %v2769
        %v2831 = vpack.c.b16 %v2772, %v2771
        %v2832 = vpack.c.b16 %v2774, %v2773
        %v2833 = vpack.c.b16 %v2776, %v2775
        %v2834 = vpack.c.b16 %v2778, %v2777
        %v2835 = vpack.c.b16 %v2780, %v2779
        %v2836 = vpack.c.b16 %v2782, %v2781
        %v2837 = vpack.c.b16 %v2784, %v2783
        %v2838 = vpack.c.b16 %v2786, %v2785
        %v2839 = vpack.c.b16 %v2788, %v2787
        %v2840 = vpack.c.b16 %v2790, %v2789
        %v2841 = vpack.c.b16 %v2792, %v2791
        %v2842 = vpack.c.b16 %v2794, %v2793
        %v2843 = vpack.c.b16 %v2796, %v2795
        %v2844 = vpack.c.b16 %v2798, %v2797
        %v2845 = vpack.c.b16 %v2800, %v2799
        %v2846 = vpack.c.b16 %v2802, %v2801
        %v2847 = vpack.c.b16 %v2804, %v2803
        %v2848 = vpack.c.b16 %v2806, %v2805
        %v2849 = vpack.c.b16 %v2808, %v2807
        %v2850 = vpack.c.b16 %v2810, %v2809
        %v2851 = vpack.c.b16 %v2812, %v2811
        %v2852 = vpack.c.b16 %v2814, %v2813
        %v2853 = vpack.c.b16 %v2816, %v2815
        %v2854 = vpack.c.b16 %v2818, %v2817
        %v2855 = vpack.c.b16 %v2820, %v2819
        %v2856 = vpack.c.b16 %v2822, %v2821
        %v2857 = vpack.c.b16 %v2824, %v2823
        %v2858 = vpack.c.b16 %v2826, %v2825
        %2891 = vmatprep.subr.bf16.mxu0 0
        %2892 = vmatpush1.bf16.msra.mxu0 %v2827
        %2893 = vmatprep.subr.bf16.mxu0 0
        %2894 = vmatpush1.bf16.msra.mxu0 %v2828
        %2895 = vmatprep.subr.bf16.mxu0 0
        %2896 = vmatpush1.bf16.msra.mxu0 %v2829
        %2897 = vmatprep.subr.bf16.mxu0 0
        %2898 = vmatpush1.bf16.msra.mxu0 %v2830
        %2899 = vmatprep.subr.bf16.mxu0 0
        %2900 = vmatpush1.bf16.msra.mxu0 %v2831
        %2901 = vmatprep.subr.bf16.mxu0 0
        %2902 = vmatpush1.bf16.msra.mxu0 %v2832
        %2903 = vmatprep.subr.bf16.mxu0 0
        %2904 = vmatpush1.bf16.msra.mxu0 %v2833
        %2905 = vmatprep.subr.bf16.mxu0 0
        %2906 = vmatpush1.bf16.msra.mxu0 %v2834
        %2907 = vmatprep.subr.bf16.mxu0 0
        %2908 = vmatpush1.bf16.msra.mxu0 %v2835
        %2909 = vmatprep.subr.bf16.mxu0 0
        %2910 = vmatpush1.bf16.msra.mxu0 %v2836
        %2911 = vmatprep.subr.bf16.mxu0 0
        %2912 = vmatpush1.bf16.msra.mxu0 %v2837
        %2913 = vmatprep.subr.bf16.mxu0 0
        %2914 = vmatpush1.bf16.msra.mxu0 %v2838
        %2915 = vmatprep.subr.bf16.mxu0 0
        %2916 = vmatpush1.bf16.msra.mxu0 %v2839
        %2917 = vmatprep.subr.bf16.mxu0 0
        %2918 = vmatpush1.bf16.msra.mxu0 %v2840
        %2919 = vmatprep.subr.bf16.mxu0 0
        %2920 = vmatpush1.bf16.msra.mxu0 %v2841
        %2921 = vmatprep.subr.bf16.mxu0 0
        %2922 = vmatpush1.bf16.msra.mxu0 %v2842
        %2923 = vmatprep.mubr.bf16.mxu0 %v2188
        %2924 = vmatmul.mubr.bf16.gmra.mrb[0].mxu0 %v2187
        %v2925 = vpop.f32.mrb[0].mxu0
        %v2926 = vadd.f32 0.0, %v2925
        %v2927 = vpop.f32.mrb[0].mxu0
        %v2928 = vpop.f32.mrb[0].mxu0
        %v2929 = vadd.f32 0.0, %v2928
        %v2930 = vpop.f32.mrb[0].mxu0
        %2931 = vmatprep.mubr.bf16.mxu0 %v2192
        %2932 = vmatmul.mubr.bf16.gmra.mrb[0].mxu0 %v2191
        %v2933 = vpop.f32.mrb[0].mxu0
        %v2934 = vadd.f32 0.0, %v2933
        %v2935 = vpop.f32.mrb[0].mxu0
        %v2936 = vpop.f32.mrb[0].mxu0
        %v2937 = vadd.f32 0.0, %v2936
        %v2938 = vpop.f32.mrb[0].mxu0
        %2939 = vmatprep.mubr.bf16.mxu0 %v2196
        %2940 = vmatmul.mubr.bf16.gmra.mrb[0].mxu0 %v2195
        %v2941 = vpop.f32.mrb[0].mxu0
        %v2942 = vadd.f32 0.0, %v2941
        %v2943 = vpop.f32.mrb[0].mxu0
        %v2944 = vpop.f32.mrb[0].mxu0
        %v2945 = vadd.f32 0.0, %v2944
        %v2946 = vpop.f32.mrb[0].mxu0
        %2947 = vmatprep.mubr.bf16.mxu0 %v2200
        %2948 = vmatmul.mubr.bf16.gmra.mrb[0].mxu0 %v2199
        %v2949 = vpop.f32.mrb[0].mxu0
        %v2950 = vadd.f32 0.0, %v2949
        %v2951 = vpop.f32.mrb[0].mxu0
        %v2952 = vpop.f32.mrb[0].mxu0
        %v2953 = vadd.f32 0.0, %v2952
        %v2954 = vpop.f32.mrb[0].mxu0
        %2955 = vmatprep.mubr.bf16.mxu0 %v2204
        %2956 = vmatmul.mubr.bf16.gmra.mrb[0].mxu0 %v2203
        %v2957 = vpop.f32.mrb[0].mxu0
        %v2958 = vadd.f32 0.0, %v2957
        %v2959 = vpop.f32.mrb[0].mxu0
        %v2960 = vpop.f32.mrb[0].mxu0
        %v2961 = vadd.f32 0.0, %v2960
        %v2962 = vpop.f32.mrb[0].mxu0
        %2963 = vmatprep.mubr.bf16.mxu0 %v2208
        %2964 = vmatmul.mubr.bf16.gmra.mrb[0].mxu0 %v2207
        %v2965 = vpop.f32.mrb[0].mxu0
        %v2966 = vadd.f32 0.0, %v2965
        %v2967 = vpop.f32.mrb[0].mxu0
        %v2968 = vpop.f32.mrb[0].mxu0
        %v2969 = vadd.f32 0.0, %v2968
        %v2970 = vpop.f32.mrb[0].mxu0
        %2971 = vmatprep.mubr.bf16.mxu0 %v2212
        %2972 = vmatmul.mubr.bf16.gmra.mrb[0].mxu0 %v2211
        %v2973 = vpop.f32.mrb[0].mxu0
        %v2974 = vadd.f32 0.0, %v2973
        %v2975 = vpop.f32.mrb[0].mxu0
        %v2976 = vpop.f32.mrb[0].mxu0
        %v2977 = vadd.f32 0.0, %v2976
        %v2978 = vpop.f32.mrb[0].mxu0
        %2979 = vmatprep.mubr.bf16.mxu0 %v2216
        %2980 = vmatmul.mubr.bf16.gmra.mrb[0].mxu0 %v2215
        %v2981 = vpop.f32.mrb[0].mxu0
        %v2982 = vadd.f32 0.0, %v2981
        %v2983 = vpop.f32.mrb[0].mxu0
        %v2984 = vpop.f32.mrb[0].mxu0
        %v2985 = vadd.f32 0.0, %v2984
        %v2986 = vpop.f32.mrb[0].mxu0
        %2987 = vmatprep.mubr.bf16.mxu0 %v2220
        %2988 = vmatmul.mubr.bf16.gmra.mrb[0].mxu0 %v2219
        %v2989 = vpop.f32.mrb[0].mxu0
        %v2990 = vadd.f32 0.0, %v2989
        %v2991 = vpop.f32.mrb[0].mxu0
        %v2992 = vpop.f32.mrb[0].mxu0
        %v2993 = vadd.f32 0.0, %v2992
        %v2994 = vpop.f32.mrb[0].mxu0
        %2995 = vmatprep.mubr.bf16.mxu0 %v2224
        %2996 = vmatmul.mubr.bf16.gmra.mrb[0].mxu0 %v2223
        %v2997 = vpop.f32.mrb[0].mxu0
        %v2998 = vadd.f32 0.0, %v2997
        %v2999 = vpop.f32.mrb[0].mxu0
        %v3000 = vpop.f32.mrb[0].mxu0
        %v3001 = vadd.f32 0.0, %v3000
        %v3002 = vpop.f32.mrb[0].mxu0
        %3003 = vmatprep.mubr.bf16.mxu0 %v2228
        %3004 = vmatmul.mubr.bf16.gmra.mrb[0].mxu0 %v2227
        %v3005 = vpop.f32.mrb[0].mxu0
        %v3006 = vadd.f32 0.0, %v3005
        %v3007 = vpop.f32.mrb[0].mxu0
        %v3008 = vpop.f32.mrb[0].mxu0
        %v3009 = vadd.f32 0.0, %v3008
        %v3010 = vpop.f32.mrb[0].mxu0
        %3011 = vmatprep.mubr.bf16.mxu0 %v2232
        %3012 = vmatmul.mubr.bf16.gmra.mrb[0].mxu0 %v2231
        %v3013 = vpop.f32.mrb[0].mxu0
        %v3014 = vadd.f32 0.0, %v3013
        %v3015 = vpop.f32.mrb[0].mxu0
        %v3016 = vpop.f32.mrb[0].mxu0
        %v3017 = vadd.f32 0.0, %v3016
        %v3018 = vpop.f32.mrb[0].mxu0
        %3019 = vmatprep.mubr.bf16.mxu0 %v2236
        %3020 = vmatmul.mubr.bf16.gmra.mrb[0].mxu0 %v2235
        %v3021 = vpop.f32.mrb[0].mxu0
        %v3022 = vadd.f32 0.0, %v3021
        %v3023 = vpop.f32.mrb[0].mxu0
        %v3024 = vpop.f32.mrb[0].mxu0
        %v3025 = vadd.f32 0.0, %v3024
        %v3026 = vpop.f32.mrb[0].mxu0
        %3027 = vmatprep.mubr.bf16.mxu0 %v2240
        %3028 = vmatmul.mubr.bf16.gmra.mrb[0].mxu0 %v2239
        %v3029 = vpop.f32.mrb[0].mxu0
        %v3030 = vadd.f32 0.0, %v3029
        %v3031 = vpop.f32.mrb[0].mxu0
        %v3032 = vpop.f32.mrb[0].mxu0
        %v3033 = vadd.f32 0.0, %v3032
        %v3034 = vpop.f32.mrb[0].mxu0
        %3035 = vmatprep.mubr.bf16.mxu0 %v2244
        %3036 = vmatmul.mubr.bf16.gmra.mrb[0].mxu0 %v2243
        %v3037 = vpop.f32.mrb[0].mxu0
        %v3038 = vadd.f32 0.0, %v3037
        %v3039 = vpop.f32.mrb[0].mxu0
        %v3040 = vpop.f32.mrb[0].mxu0
        %v3041 = vadd.f32 0.0, %v3040
        %v3042 = vpop.f32.mrb[0].mxu0
        %3043 = vmatprep.mubr.bf16.mxu0 %v2248
        %3044 = vmatmul.mubr.bf16.gmra.mrb[0].mxu0 %v2247
        %v3045 = vpop.f32.mrb[0].mxu0
        %v3046 = vadd.f32 0.0, %v3045
        %v3047 = vpop.f32.mrb[0].mxu0
        %v3048 = vpop.f32.mrb[0].mxu0
        %v3049 = vadd.f32 0.0, %v3048
        %v3050 = vpop.f32.mrb[0].mxu0
        %3051 = vmatprep.mubr.bf16.mxu0 %v2252
        %3052 = vmatmul.mubr.bf16.gmra.mrb[0].mxu0 %v2251
        %v3053 = vpop.f32.mrb[0].mxu0
        %v3054 = vadd.f32 0.0, %v3053
        %v3055 = vpop.f32.mrb[0].mxu0
        %v3056 = vpop.f32.mrb[0].mxu0
        %v3057 = vadd.f32 0.0, %v3056
        %v3058 = vpop.f32.mrb[0].mxu0
        %3059 = vmatprep.mubr.bf16.mxu0 %v2256
        %3060 = vmatmul.mubr.bf16.gmra.mrb[0].mxu0 %v2255
        %v3061 = vpop.f32.mrb[0].mxu0
        %v3062 = vadd.f32 0.0, %v3061
        %v3063 = vpop.f32.mrb[0].mxu0
        %v3064 = vpop.f32.mrb[0].mxu0
        %v3065 = vadd.f32 0.0, %v3064
        %v3066 = vpop.f32.mrb[0].mxu0
        %3067 = vmatprep.mubr.bf16.mxu0 %v2260
        %3068 = vmatmul.mubr.bf16.gmra.mrb[0].mxu0 %v2259
        %v3069 = vpop.f32.mrb[0].mxu0
        %v3070 = vadd.f32 0.0, %v3069
        %v3071 = vpop.f32.mrb[0].mxu0
        %v3072 = vpop.f32.mrb[0].mxu0
        %v3073 = vadd.f32 0.0, %v3072
        %v3074 = vpop.f32.mrb[0].mxu0
        %3075 = vmatprep.mubr.bf16.mxu0 %v2264
        %3076 = vmatmul.mubr.bf16.gmra.mrb[0].mxu0 %v2263
        %v3077 = vpop.f32.mrb[0].mxu0
        %v3078 = vadd.f32 0.0, %v3077
        %v3079 = vpop.f32.mrb[0].mxu0
        %v3080 = vpop.f32.mrb[0].mxu0
        %v3081 = vadd.f32 0.0, %v3080
        %v3082 = vpop.f32.mrb[0].mxu0
        %3083 = vmatprep.mubr.bf16.mxu0 %v2268
        %3084 = vmatmul.mubr.bf16.gmra.mrb[0].mxu0 %v2267
        %v3085 = vpop.f32.mrb[0].mxu0
        %v3086 = vadd.f32 0.0, %v3085
        %v3087 = vpop.f32.mrb[0].mxu0
        %v3088 = vpop.f32.mrb[0].mxu0
        %v3089 = vadd.f32 0.0, %v3088
        %v3090 = vpop.f32.mrb[0].mxu0
        %3091 = vmatprep.mubr.bf16.mxu0 %v2272
        %3092 = vmatmul.mubr.bf16.gmra.mrb[0].mxu0 %v2271
        %v3093 = vpop.f32.mrb[0].mxu0
        %v3094 = vadd.f32 0.0, %v3093
        %v3095 = vpop.f32.mrb[0].mxu0
        %v3096 = vpop.f32.mrb[0].mxu0
        %v3097 = vadd.f32 0.0, %v3096
        %v3098 = vpop.f32.mrb[0].mxu0
        %3099 = vmatprep.mubr.bf16.mxu0 %v2276
        %3100 = vmatmul.mubr.bf16.gmra.mrb[0].mxu0 %v2275
        %v3101 = vpop.f32.mrb[0].mxu0
        %v3102 = vadd.f32 0.0, %v3101
        %v3103 = vpop.f32.mrb[0].mxu0
        %v3104 = vpop.f32.mrb[0].mxu0
        %v3105 = vadd.f32 0.0, %v3104
        %v3106 = vpop.f32.mrb[0].mxu0
        %3107 = vmatprep.mubr.bf16.mxu0 %v2280
        %3108 = vmatmul.mubr.bf16.gmra.mrb[0].mxu0 %v2279
        %v3109 = vpop.f32.mrb[0].mxu0
        %v3110 = vadd.f32 0.0, %v3109
        %v3111 = vpop.f32.mrb[0].mxu0
        %v3112 = vpop.f32.mrb[0].mxu0
        %v3113 = vadd.f32 0.0, %v3112
        %v3114 = vpop.f32.mrb[0].mxu0
        %3115 = vmatprep.mubr.bf16.mxu0 %v2284
        %3116 = vmatmul.mubr.bf16.gmra.mrb[0].mxu0 %v2283
        %v3117 = vpop.f32.mrb[0].mxu0
        %v3118 = vadd.f32 0.0, %v3117
        %v3119 = vpop.f32.mrb[0].mxu0
        %v3120 = vpop.f32.mrb[0].mxu0
        %v3121 = vadd.f32 0.0, %v3120
        %v3122 = vpop.f32.mrb[0].mxu0
        %3123 = vmatprep.mubr.bf16.mxu0 %v2288
        %3124 = vmatmul.mubr.bf16.gmra.mrb[0].mxu0 %v2287
        %v3125 = vpop.f32.mrb[0].mxu0
        %v3126 = vadd.f32 0.0, %v3125
        %v3127 = vpop.f32.mrb[0].mxu0
        %v3128 = vpop.f32.mrb[0].mxu0
        %v3129 = vadd.f32 0.0, %v3128
        %v3130 = vpop.f32.mrb[0].mxu0
        %3131 = vmatprep.mubr.bf16.mxu0 %v2292
        %3132 = vmatmul.mubr.bf16.gmra.mrb[0].mxu0 %v2291
        %v3133 = vpop.f32.mrb[0].mxu0
        %v3134 = vadd.f32 0.0, %v3133
        %v3135 = vpop.f32.mrb[0].mxu0
        %v3136 = vpop.f32.mrb[0].mxu0
        %v3137 = vadd.f32 0.0, %v3136
        %v3138 = vpop.f32.mrb[0].mxu0
        %3139 = vmatprep.mubr.bf16.mxu0 %v2296
        %3140 = vmatmul.mubr.bf16.gmra.mrb[0].mxu0 %v2295
        %v3141 = vpop.f32.mrb[0].mxu0
        %v3142 = vadd.f32 0.0, %v3141
        %v3143 = vpop.f32.mrb[0].mxu0
        %v3144 = vpop.f32.mrb[0].mxu0
        %v3145 = vadd.f32 0.0, %v3144
        %v3146 = vpop.f32.mrb[0].mxu0
        %3147 = vmatprep.mubr.bf16.mxu0 %v2300
        %3148 = vmatmul.mubr.bf16.gmra.mrb[0].mxu0 %v2299
        %v3149 = vpop.f32.mrb[0].mxu0
        %v3150 = vadd.f32 0.0, %v3149
        %v3151 = vpop.f32.mrb[0].mxu0
        %v3152 = vpop.f32.mrb[0].mxu0
        %v3153 = vadd.f32 0.0, %v3152
        %v3154 = vpop.f32.mrb[0].mxu0
        %3155 = vmatprep.mubr.bf16.mxu0 %v2304
        %3156 = vmatmul.mubr.bf16.gmra.mrb[0].mxu0 %v2303
        %v3157 = vpop.f32.mrb[0].mxu0
        %v3158 = vadd.f32 0.0, %v3157
        %v3159 = vpop.f32.mrb[0].mxu0
        %v3160 = vpop.f32.mrb[0].mxu0
        %v3161 = vadd.f32 0.0, %v3160
        %v3162 = vpop.f32.mrb[0].mxu0
        %3163 = vmatprep.mubr.bf16.mxu0 %v2308
        %3164 = vmatmul.mubr.bf16.gmra.mrb[0].mxu0 %v2307
        %v3165 = vpop.f32.mrb[0].mxu0
        %v3166 = vadd.f32 0.0, %v3165
        %v3167 = vpop.f32.mrb[0].mxu0
        %v3168 = vpop.f32.mrb[0].mxu0
        %v3169 = vadd.f32 0.0, %v3168
        %v3170 = vpop.f32.mrb[0].mxu0
        %3171 = vmatprep.mubr.bf16.mxu0 %v2312
        %3172 = vmatmul.mubr.bf16.gmra.mrb[0].mxu0 %v2311
        %v3173 = vpop.f32.mrb[0].mxu0
        %v3174 = vadd.f32 0.0, %v3173
        %v3175 = vpop.f32.mrb[0].mxu0
        %v3176 = vpop.f32.mrb[0].mxu0
        %v3177 = vadd.f32 0.0, %v3176
        %v3178 = vpop.f32.mrb[0].mxu0
        %3179 = vmatprep.mubr.bf16.mxu0 %v2316
        %3180 = vmatmul.mubr.bf16.gmra.mrb[0].mxu0 %v2315
        %v3181 = vpop.f32.mrb[0].mxu0
        %v3182 = vadd.f32 0.0, %v3181
        %v3183 = vpop.f32.mrb[0].mxu0
        %v3184 = vpop.f32.mrb[0].mxu0
        %v3185 = vadd.f32 0.0, %v3184
        %v3186 = vpop.f32.mrb[0].mxu0
        %3187 = vmatprep.mubr.bf16.mxu0 %v2320
        %3188 = vmatmul.mubr.bf16.gmra.mrb[0].mxu0 %v2319
        %v3189 = vpop.f32.mrb[0].mxu0
        %v3190 = vadd.f32 0.0, %v3189
        %v3191 = vpop.f32.mrb[0].mxu0
        %v3192 = vpop.f32.mrb[0].mxu0
        %v3193 = vadd.f32 0.0, %v3192
        %v3194 = vpop.f32.mrb[0].mxu0
        %3195 = vmatprep.mubr.bf16.mxu0 %v2324
        %3196 = vmatmul.mubr.bf16.gmra.mrb[0].mxu0 %v2323
        %v3197 = vpop.f32.mrb[0].mxu0
        %v3198 = vadd.f32 0.0, %v3197
        %v3199 = vpop.f32.mrb[0].mxu0
        %v3200 = vpop.f32.mrb[0].mxu0
        %v3201 = vadd.f32 0.0, %v3200
        %v3202 = vpop.f32.mrb[0].mxu0
        %3203 = vmatprep.mubr.bf16.mxu0 %v2328
        %3204 = vmatmul.mubr.bf16.gmra.mrb[0].mxu0 %v2327
        %v3205 = vpop.f32.mrb[0].mxu0
        %v3206 = vadd.f32 0.0, %v3205
        %v3207 = vpop.f32.mrb[0].mxu0
        %v3208 = vpop.f32.mrb[0].mxu0
        %v3209 = vadd.f32 0.0, %v3208
        %v3210 = vpop.f32.mrb[0].mxu0
        %3211 = vmatprep.mubr.bf16.mxu0 %v2332
        %3212 = vmatmul.mubr.bf16.gmra.mrb[0].mxu0 %v2331
        %v3213 = vpop.f32.mrb[0].mxu0
        %v3214 = vadd.f32 0.0, %v3213
        %v3215 = vpop.f32.mrb[0].mxu0
        %v3216 = vpop.f32.mrb[0].mxu0
        %v3217 = vadd.f32 0.0, %v3216
        %v3218 = vpop.f32.mrb[0].mxu0
        %3219 = vmatprep.mubr.bf16.mxu0 %v2336
        %3220 = vmatmul.mubr.bf16.gmra.mrb[0].mxu0 %v2335
        %v3221 = vpop.f32.mrb[0].mxu0
        %v3222 = vadd.f32 0.0, %v3221
        %v3223 = vpop.f32.mrb[0].mxu0
        %v3224 = vpop.f32.mrb[0].mxu0
        %v3225 = vadd.f32 0.0, %v3224
        %v3226 = vpop.f32.mrb[0].mxu0
        %3227 = vmatprep.mubr.bf16.mxu0 %v2340
        %3228 = vmatmul.mubr.bf16.gmra.mrb[0].mxu0 %v2339
        %v3229 = vpop.f32.mrb[0].mxu0
        %v3230 = vadd.f32 0.0, %v3229
        %v3231 = vpop.f32.mrb[0].mxu0
        %v3232 = vpop.f32.mrb[0].mxu0
        %v3233 = vadd.f32 0.0, %v3232
        %v3234 = vpop.f32.mrb[0].mxu0
        %3235 = vmatprep.mubr.bf16.mxu0 %v2344
        %3236 = vmatmul.mubr.bf16.gmra.mrb[0].mxu0 %v2343
        %v3237 = vpop.f32.mrb[0].mxu0
        %v3238 = vadd.f32 0.0, %v3237
        %v3239 = vpop.f32.mrb[0].mxu0
        %v3240 = vpop.f32.mrb[0].mxu0
        %v3241 = vadd.f32 0.0, %v3240
        %v3242 = vpop.f32.mrb[0].mxu0
        %3243 = vmatprep.mubr.bf16.mxu0 %v2348
        %3244 = vmatmul.mubr.bf16.gmra.mrb[0].mxu0 %v2347
        %v3245 = vpop.f32.mrb[0].mxu0
        %v3246 = vadd.f32 0.0, %v3245
        %v3247 = vpop.f32.mrb[0].mxu0
        %v3248 = vpop.f32.mrb[0].mxu0
        %v3249 = vadd.f32 0.0, %v3248
        %v3250 = vpop.f32.mrb[0].mxu0
        %3251 = vmatprep.mubr.bf16.mxu0 %v2352
        %3252 = vmatmul.mubr.bf16.gmra.mrb[0].mxu0 %v2351
        %v3253 = vpop.f32.mrb[0].mxu0
        %v3254 = vadd.f32 0.0, %v3253
        %v3255 = vpop.f32.mrb[0].mxu0
        %v3256 = vpop.f32.mrb[0].mxu0
        %v3257 = vadd.f32 0.0, %v3256
        %v3258 = vpop.f32.mrb[0].mxu0
        %3259 = vmatprep.mubr.bf16.mxu0 %v2356
        %3260 = vmatmul.mubr.bf16.gmra.mrb[0].mxu0 %v2355
        %v3261 = vpop.f32.mrb[0].mxu0
        %v3262 = vadd.f32 0.0, %v3261
        %v3263 = vpop.f32.mrb[0].mxu0
        %v3264 = vpop.f32.mrb[0].mxu0
        %v3265 = vadd.f32 0.0, %v3264
        %v3266 = vpop.f32.mrb[0].mxu0
        %3267 = vmatprep.mubr.bf16.mxu0 %v2360
        %3268 = vmatmul.mubr.bf16.gmra.mrb[0].mxu0 %v2359
        %v3269 = vpop.f32.mrb[0].mxu0
        %v3270 = vadd.f32 0.0, %v3269
        %v3271 = vpop.f32.mrb[0].mxu0
        %v3272 = vpop.f32.mrb[0].mxu0
        %v3273 = vadd.f32 0.0, %v3272
        %v3274 = vpop.f32.mrb[0].mxu0
        %3275 = vmatprep.mubr.bf16.mxu0 %v2364
        %3276 = vmatmul.mubr.bf16.gmra.mrb[0].mxu0 %v2363
        %v3277 = vpop.f32.mrb[0].mxu0
        %v3278 = vadd.f32 0.0, %v3277
        %v3279 = vpop.f32.mrb[0].mxu0
        %v3280 = vpop.f32.mrb[0].mxu0
        %v3281 = vadd.f32 0.0, %v3280
        %v3282 = vpop.f32.mrb[0].mxu0
        %3283 = vmatprep.mubr.bf16.mxu0 %v2368
        %3284 = vmatmul.mubr.bf16.gmra.mrb[0].mxu0 %v2367
        %v3285 = vpop.f32.mrb[0].mxu0
        %v3286 = vadd.f32 0.0, %v3285
        %v3287 = vpop.f32.mrb[0].mxu0
        %v3288 = vpop.f32.mrb[0].mxu0
        %v3289 = vadd.f32 0.0, %v3288
        %v3290 = vpop.f32.mrb[0].mxu0
        %3291 = vmatprep.mubr.bf16.mxu0 %v2372
        %3292 = vmatmul.mubr.bf16.gmra.mrb[0].mxu0 %v2371
        %v3293 = vpop.f32.mrb[0].mxu0
        %v3294 = vadd.f32 0.0, %v3293
        %v3295 = vpop.f32.mrb[0].mxu0
        %v3296 = vpop.f32.mrb[0].mxu0
        %v3297 = vadd.f32 0.0, %v3296
        %v3298 = vpop.f32.mrb[0].mxu0
        %3299 = vmatprep.mubr.bf16.mxu0 %v2376
        %3300 = vmatmul.mubr.bf16.gmra.mrb[0].mxu0 %v2375
        %v3301 = vpop.f32.mrb[0].mxu0
        %v3302 = vadd.f32 0.0, %v3301
        %v3303 = vpop.f32.mrb[0].mxu0
        %v3304 = vpop.f32.mrb[0].mxu0
        %v3305 = vadd.f32 0.0, %v3304
        %v3306 = vpop.f32.mrb[0].mxu0
        %3307 = vmatprep.mubr.bf16.mxu0 %v2380
        %3308 = vmatmul.mubr.bf16.gmra.mrb[0].mxu0 %v2379
        %v3309 = vpop.f32.mrb[0].mxu0
        %v3310 = vadd.f32 0.0, %v3309
        %v3311 = vpop.f32.mrb[0].mxu0
        %v3312 = vpop.f32.mrb[0].mxu0
        %v3313 = vadd.f32 0.0, %v3312
        %v3314 = vpop.f32.mrb[0].mxu0
        %3315 = vmatprep.mubr.bf16.mxu0 %v2384
        %3316 = vmatmul.mubr.bf16.gmra.mrb[0].mxu0 %v2383
        %v3317 = vpop.f32.mrb[0].mxu0
        %v3318 = vadd.f32 0.0, %v3317
        %v3319 = vpop.f32.mrb[0].mxu0
        %v3320 = vpop.f32.mrb[0].mxu0
        %v3321 = vadd.f32 0.0, %v3320
        %v3322 = vpop.f32.mrb[0].mxu0
        %3323 = vmatprep.mubr.bf16.mxu0 %v2388
        %3324 = vmatmul.mubr.bf16.gmra.mrb[0].mxu0 %v2387
        %v3325 = vpop.f32.mrb[0].mxu0
        %v3326 = vadd.f32 0.0, %v3325
        %v3327 = vpop.f32.mrb[0].mxu0
        %v3328 = vpop.f32.mrb[0].mxu0
        %v3329 = vadd.f32 0.0, %v3328
        %v3330 = vpop.f32.mrb[0].mxu0
        %3331 = vmatprep.mubr.bf16.mxu0 %v2392
        %3332 = vmatmul.mubr.bf16.gmra.mrb[0].mxu0 %v2391
        %v3333 = vpop.f32.mrb[0].mxu0
        %v3334 = vadd.f32 0.0, %v3333
        %v3335 = vpop.f32.mrb[0].mxu0
        %v3336 = vpop.f32.mrb[0].mxu0
        %v3337 = vadd.f32 0.0, %v3336
        %v3338 = vpop.f32.mrb[0].mxu0
        %3339 = vmatprep.mubr.bf16.mxu0 %v2396
        %3340 = vmatmul.mubr.bf16.gmra.mrb[0].mxu0 %v2395
        %v3341 = vpop.f32.mrb[0].mxu0
        %v3342 = vadd.f32 0.0, %v3341
        %v3343 = vpop.f32.mrb[0].mxu0
        %v3344 = vpop.f32.mrb[0].mxu0
        %v3345 = vadd.f32 0.0, %v3344
        %v3346 = vpop.f32.mrb[0].mxu0
        %3347 = vmatprep.mubr.bf16.mxu0 %v2400
        %3348 = vmatmul.mubr.bf16.gmra.mrb[0].mxu0 %v2399
        %v3349 = vpop.f32.mrb[0].mxu0
        %v3350 = vadd.f32 0.0, %v3349
        %v3351 = vpop.f32.mrb[0].mxu0
        %v3352 = vpop.f32.mrb[0].mxu0
        %v3353 = vadd.f32 0.0, %v3352
        %v3354 = vpop.f32.mrb[0].mxu0
        %3355 = vmatprep.mubr.bf16.mxu0 %v2404
        %3356 = vmatmul.mubr.bf16.gmra.mrb[0].mxu0 %v2403
        %v3357 = vpop.f32.mrb[0].mxu0
        %v3358 = vadd.f32 0.0, %v3357
        %v3359 = vpop.f32.mrb[0].mxu0
        %v3360 = vpop.f32.mrb[0].mxu0
        %v3361 = vadd.f32 0.0, %v3360
        %v3362 = vpop.f32.mrb[0].mxu0
        %3363 = vmatprep.mubr.bf16.mxu0 %v2408
        %3364 = vmatmul.mubr.bf16.gmra.mrb[0].mxu0 %v2407
        %v3365 = vpop.f32.mrb[0].mxu0
        %v3366 = vadd.f32 0.0, %v3365
        %v3367 = vpop.f32.mrb[0].mxu0
        %v3368 = vpop.f32.mrb[0].mxu0
        %v3369 = vadd.f32 0.0, %v3368
        %v3370 = vpop.f32.mrb[0].mxu0
        %3371 = vmatprep.mubr.bf16.mxu0 %v2412
        %3372 = vmatmul.mubr.bf16.gmra.mrb[0].mxu0 %v2411
        %v3373 = vpop.f32.mrb[0].mxu0
        %v3374 = vadd.f32 0.0, %v3373
        %v3375 = vpop.f32.mrb[0].mxu0
        %v3376 = vpop.f32.mrb[0].mxu0
        %v3377 = vadd.f32 0.0, %v3376
        %v3378 = vpop.f32.mrb[0].mxu0
        %3379 = vmatprep.mubr.bf16.mxu0 %v2416
        %3380 = vmatmul.mubr.bf16.gmra.mrb[0].mxu0 %v2415
        %v3381 = vpop.f32.mrb[0].mxu0
        %v3382 = vadd.f32 0.0, %v3381
        %v3383 = vpop.f32.mrb[0].mxu0
        %v3384 = vpop.f32.mrb[0].mxu0
        %v3385 = vadd.f32 0.0, %v3384
        %v3386 = vpop.f32.mrb[0].mxu0
        %3387 = vmatprep.mubr.bf16.mxu0 %v2420
        %3388 = vmatmul.mubr.bf16.gmra.mrb[0].mxu0 %v2419
        %v3389 = vpop.f32.mrb[0].mxu0
        %v3390 = vadd.f32 0.0, %v3389
        %v3391 = vpop.f32.mrb[0].mxu0
        %v3392 = vpop.f32.mrb[0].mxu0
        %v3393 = vadd.f32 0.0, %v3392
        %v3394 = vpop.f32.mrb[0].mxu0
        %3395 = vmatprep.mubr.bf16.mxu0 %v2424
        %3396 = vmatmul.mubr.bf16.gmra.mrb[0].mxu0 %v2423
        %v3397 = vpop.f32.mrb[0].mxu0
        %v3398 = vadd.f32 0.0, %v3397
        %v3399 = vpop.f32.mrb[0].mxu0
        %v3400 = vpop.f32.mrb[0].mxu0
        %v3401 = vadd.f32 0.0, %v3400
        %v3402 = vpop.f32.mrb[0].mxu0
        %3403 = vmatprep.mubr.bf16.mxu0 %v2428
        %3404 = vmatmul.mubr.bf16.gmra.mrb[0].mxu0 %v2427
        %v3405 = vpop.f32.mrb[0].mxu0
        %v3406 = vadd.f32 0.0, %v3405
        %v3407 = vpop.f32.mrb[0].mxu0
        %v3408 = vpop.f32.mrb[0].mxu0
        %v3409 = vadd.f32 0.0, %v3408
        %v3410 = vpop.f32.mrb[0].mxu0
        %3411 = vmatprep.mubr.bf16.mxu0 %v2432
        %3412 = vmatmul.mubr.bf16.gmra.mrb[0].mxu0 %v2431
        %v3413 = vpop.f32.mrb[0].mxu0
        %v3414 = vadd.f32 0.0, %v3413
        %v3415 = vpop.f32.mrb[0].mxu0
        %v3416 = vpop.f32.mrb[0].mxu0
        %v3417 = vadd.f32 0.0, %v3416
        %v3418 = vpop.f32.mrb[0].mxu0
        %3419 = vmatprep.mubr.bf16.mxu0 %v2436
        %3420 = vmatmul.mubr.bf16.gmra.mrb[0].mxu0 %v2435
        %v3421 = vpop.f32.mrb[0].mxu0
        %v3422 = vadd.f32 0.0, %v3421
        %v3423 = vpop.f32.mrb[0].mxu0
        %v3424 = vpop.f32.mrb[0].mxu0
        %v3425 = vadd.f32 0.0, %v3424
        %v3426 = vpop.f32.mrb[0].mxu0
        %3427 = vmatprep.mubr.bf16.mxu0 %v2440
        %3428 = vmatmul.mubr.bf16.gmra.mrb[0].mxu0 %v2439
        %v3429 = vpop.f32.mrb[0].mxu0
        %v3430 = vadd.f32 0.0, %v3429
        %v3431 = vpop.f32.mrb[0].mxu0
        %v3432 = vpop.f32.mrb[0].mxu0
        %v3433 = vadd.f32 0.0, %v3432
        %v3434 = vpop.f32.mrb[0].mxu0
        %3435 = vdwg.mxu0
        %3436 = vmatprep.subr.bf16.mxu0 0
        %3437 = vmatpush1.bf16.msra.mxu0 %v2843
        %3438 = vmatprep.subr.bf16.mxu0 0
        %3439 = vmatpush1.bf16.msra.mxu0 %v2844
        %3440 = vmatprep.subr.bf16.mxu0 0
        %3441 = vmatpush1.bf16.msra.mxu0 %v2845
        %3442 = vmatprep.subr.bf16.mxu0 0
        %3443 = vmatpush1.bf16.msra.mxu0 %v2846
        %3444 = vmatprep.subr.bf16.mxu0 0
        %3445 = vmatpush1.bf16.msra.mxu0 %v2847
        %3446 = vmatprep.subr.bf16.mxu0 0
        %3447 = vmatpush1.bf16.msra.mxu0 %v2848
        %3448 = vmatprep.subr.bf16.mxu0 0
        %3449 = vmatpush1.bf16.msra.mxu0 %v2849
        %3450 = vmatprep.subr.bf16.mxu0 0
        %3451 = vmatpush1.bf16.msra.mxu0 %v2850
        %3452 = vmatprep.subr.bf16.mxu0 0
        %3453 = vmatpush1.bf16.msra.mxu0 %v2851
        %3454 = vmatprep.subr.bf16.mxu0 0
        %3455 = vmatpush1.bf16.msra.mxu0 %v2852
        %3456 = vmatprep.subr.bf16.mxu0 0
        %3457 = vmatpush1.bf16.msra.mxu0 %v2853
        %3458 = vmatprep.subr.bf16.mxu0 0
        %3459 = vmatpush1.bf16.msra.mxu0 %v2854
        %3460 = vmatprep.subr.bf16.mxu0 0
        %3461 = vmatpush1.bf16.msra.mxu0 %v2855
        %3462 = vmatprep.subr.bf16.mxu0 0
        %3463 = vmatpush1.bf16.msra.mxu0 %v2856
        %3464 = vmatprep.subr.bf16.mxu0 0
        %3465 = vmatpush1.bf16.msra.mxu0 %v2857
        %3466 = vmatprep.subr.bf16.mxu0 0
        %3467 = vmatpush1.bf16.msra.mxu0 %v2858
        %3468 = vmatprep.mubr.bf16.mxu0 %v2190
        %3469 = vmatmul.mubr.bf16.gmra.mrb[0].mxu0 %v2189
        %v3470 = vpop.f32.mrb[0].mxu0
        %v3471 = vadd.f32 %v2926, %v3470
        %v3472 = vpop.f32.mrb[0].mxu0
        %v3473 = vpop.f32.mrb[0].mxu0
        %v3474 = vadd.f32 %v2929, %v3473
        %v3475 = vpop.f32.mrb[0].mxu0
        %3476 = vmatprep.mubr.bf16.mxu0 %v2194
        %3477 = vmatmul.mubr.bf16.gmra.mrb[0].mxu0 %v2193
        %v3478 = vpop.f32.mrb[0].mxu0
        %v3479 = vadd.f32 %v2934, %v3478
        %v3480 = vpop.f32.mrb[0].mxu0
        %v3481 = vpop.f32.mrb[0].mxu0
        %v3482 = vadd.f32 %v2937, %v3481
        %v3483 = vpop.f32.mrb[0].mxu0
        %3484 = vmatprep.mubr.bf16.mxu0 %v2198
        %3485 = vmatmul.mubr.bf16.gmra.mrb[0].mxu0 %v2197
        %v3486 = vpop.f32.mrb[0].mxu0
        %v3487 = vadd.f32 %v2942, %v3486
        %v3488 = vpop.f32.mrb[0].mxu0
        %v3489 = vpop.f32.mrb[0].mxu0
        %v3490 = vadd.f32 %v2945, %v3489
        %v3491 = vpop.f32.mrb[0].mxu0
        %3492 = vmatprep.mubr.bf16.mxu0 %v2202
        %3493 = vmatmul.mubr.bf16.gmra.mrb[0].mxu0 %v2201
        %v3494 = vpop.f32.mrb[0].mxu0
        %v3495 = vadd.f32 %v2950, %v3494
        %v3496 = vpop.f32.mrb[0].mxu0
        %v3497 = vpop.f32.mrb[0].mxu0
        %v3498 = vadd.f32 %v2953, %v3497
        %v3499 = vpop.f32.mrb[0].mxu0
        %3500 = vmatprep.mubr.bf16.mxu0 %v2206
        %3501 = vmatmul.mubr.bf16.gmra.mrb[0].mxu0 %v2205
        %v3502 = vpop.f32.mrb[0].mxu0
        %v3503 = vadd.f32 %v2958, %v3502
        %v3504 = vpop.f32.mrb[0].mxu0
        %v3505 = vpop.f32.mrb[0].mxu0
        %v3506 = vadd.f32 %v2961, %v3505
        %v3507 = vpop.f32.mrb[0].mxu0
        %3508 = vmatprep.mubr.bf16.mxu0 %v2210
        %3509 = vmatmul.mubr.bf16.gmra.mrb[0].mxu0 %v2209
        %v3510 = vpop.f32.mrb[0].mxu0
        %v3511 = vadd.f32 %v2966, %v3510
        %v3512 = vpop.f32.mrb[0].mxu0
        %v3513 = vpop.f32.mrb[0].mxu0
        %v3514 = vadd.f32 %v2969, %v3513
        %v3515 = vpop.f32.mrb[0].mxu0
        %3516 = vmatprep.mubr.bf16.mxu0 %v2214
        %3517 = vmatmul.mubr.bf16.gmra.mrb[0].mxu0 %v2213
        %v3518 = vpop.f32.mrb[0].mxu0
        %v3519 = vadd.f32 %v2974, %v3518
        %v3520 = vpop.f32.mrb[0].mxu0
        %v3521 = vpop.f32.mrb[0].mxu0
        %v3522 = vadd.f32 %v2977, %v3521
        %v3523 = vpop.f32.mrb[0].mxu0
        %3524 = vmatprep.mubr.bf16.mxu0 %v2218
        %3525 = vmatmul.mubr.bf16.gmra.mrb[0].mxu0 %v2217
        %v3526 = vpop.f32.mrb[0].mxu0
        %v3527 = vadd.f32 %v2982, %v3526
        %v3528 = vpop.f32.mrb[0].mxu0
        %v3529 = vpop.f32.mrb[0].mxu0
        %v3530 = vadd.f32 %v2985, %v3529
        %v3531 = vpop.f32.mrb[0].mxu0
        %3532 = vmatprep.mubr.bf16.mxu0 %v2222
        %3533 = vmatmul.mubr.bf16.gmra.mrb[0].mxu0 %v2221
        %v3534 = vpop.f32.mrb[0].mxu0
        %v3535 = vadd.f32 %v2990, %v3534
        %v3536 = vpop.f32.mrb[0].mxu0
        %v3537 = vpop.f32.mrb[0].mxu0
        %v3538 = vadd.f32 %v2993, %v3537
        %v3539 = vpop.f32.mrb[0].mxu0
        %3540 = vmatprep.mubr.bf16.mxu0 %v2226
        %3541 = vmatmul.mubr.bf16.gmra.mrb[0].mxu0 %v2225
        %v3542 = vpop.f32.mrb[0].mxu0
        %v3543 = vadd.f32 %v2998, %v3542
        %v3544 = vpop.f32.mrb[0].mxu0
        %v3545 = vpop.f32.mrb[0].mxu0
        %v3546 = vadd.f32 %v3001, %v3545
        %v3547 = vpop.f32.mrb[0].mxu0
        %3548 = vmatprep.mubr.bf16.mxu0 %v2230
        %3549 = vmatmul.mubr.bf16.gmra.mrb[0].mxu0 %v2229
        %v3550 = vpop.f32.mrb[0].mxu0
        %v3551 = vadd.f32 %v3006, %v3550
        %v3552 = vpop.f32.mrb[0].mxu0
        %v3553 = vpop.f32.mrb[0].mxu0
        %v3554 = vadd.f32 %v3009, %v3553
        %v3555 = vpop.f32.mrb[0].mxu0
        %3556 = vmatprep.mubr.bf16.mxu0 %v2234
        %3557 = vmatmul.mubr.bf16.gmra.mrb[0].mxu0 %v2233
        %v3558 = vpop.f32.mrb[0].mxu0
        %v3559 = vadd.f32 %v3014, %v3558
        %v3560 = vpop.f32.mrb[0].mxu0
        %v3561 = vpop.f32.mrb[0].mxu0
        %v3562 = vadd.f32 %v3017, %v3561
        %v3563 = vpop.f32.mrb[0].mxu0
        %3564 = vmatprep.mubr.bf16.mxu0 %v2238
        %3565 = vmatmul.mubr.bf16.gmra.mrb[0].mxu0 %v2237
        %v3566 = vpop.f32.mrb[0].mxu0
        %v3567 = vadd.f32 %v3022, %v3566
        %v3568 = vpop.f32.mrb[0].mxu0
        %v3569 = vpop.f32.mrb[0].mxu0
        %v3570 = vadd.f32 %v3025, %v3569
        %v3571 = vpop.f32.mrb[0].mxu0
        %3572 = vmatprep.mubr.bf16.mxu0 %v2242
        %3573 = vmatmul.mubr.bf16.gmra.mrb[0].mxu0 %v2241
        %v3574 = vpop.f32.mrb[0].mxu0
        %v3575 = vadd.f32 %v3030, %v3574
        %v3576 = vpop.f32.mrb[0].mxu0
        %v3577 = vpop.f32.mrb[0].mxu0
        %v3578 = vadd.f32 %v3033, %v3577
        %v3579 = vpop.f32.mrb[0].mxu0
        %3580 = vmatprep.mubr.bf16.mxu0 %v2246
        %3581 = vmatmul.mubr.bf16.gmra.mrb[0].mxu0 %v2245
        %v3582 = vpop.f32.mrb[0].mxu0
        %v3583 = vadd.f32 %v3038, %v3582
        %v3584 = vpop.f32.mrb[0].mxu0
        %v3585 = vpop.f32.mrb[0].mxu0
        %v3586 = vadd.f32 %v3041, %v3585
        %v3587 = vpop.f32.mrb[0].mxu0
        %3588 = vmatprep.mubr.bf16.mxu0 %v2250
        %3589 = vmatmul.mubr.bf16.gmra.mrb[0].mxu0 %v2249
        %v3590 = vpop.f32.mrb[0].mxu0
        %v3591 = vadd.f32 %v3046, %v3590
        %v3592 = vpop.f32.mrb[0].mxu0
        %v3593 = vpop.f32.mrb[0].mxu0
        %v3594 = vadd.f32 %v3049, %v3593
        %v3595 = vpop.f32.mrb[0].mxu0
        %3596 = vmatprep.mubr.bf16.mxu0 %v2254
        %3597 = vmatmul.mubr.bf16.gmra.mrb[0].mxu0 %v2253
        %v3598 = vpop.f32.mrb[0].mxu0
        %v3599 = vadd.f32 %v3054, %v3598
        %v3600 = vpop.f32.mrb[0].mxu0
        %v3601 = vpop.f32.mrb[0].mxu0
        %v3602 = vadd.f32 %v3057, %v3601
        %v3603 = vpop.f32.mrb[0].mxu0
        %3604 = vmatprep.mubr.bf16.mxu0 %v2258
        %3605 = vmatmul.mubr.bf16.gmra.mrb[0].mxu0 %v2257
        %v3606 = vpop.f32.mrb[0].mxu0
        %v3607 = vadd.f32 %v3062, %v3606
        %v3608 = vpop.f32.mrb[0].mxu0
        %v3609 = vpop.f32.mrb[0].mxu0
        %v3610 = vadd.f32 %v3065, %v3609
        %v3611 = vpop.f32.mrb[0].mxu0
        %3612 = vmatprep.mubr.bf16.mxu0 %v2262
        %3613 = vmatmul.mubr.bf16.gmra.mrb[0].mxu0 %v2261
        %v3614 = vpop.f32.mrb[0].mxu0
        %v3615 = vadd.f32 %v3070, %v3614
        %v3616 = vpop.f32.mrb[0].mxu0
        %v3617 = vpop.f32.mrb[0].mxu0
        %v3618 = vadd.f32 %v3073, %v3617
        %v3619 = vpop.f32.mrb[0].mxu0
        %3620 = vmatprep.mubr.bf16.mxu0 %v2266
        %3621 = vmatmul.mubr.bf16.gmra.mrb[0].mxu0 %v2265
        %v3622 = vpop.f32.mrb[0].mxu0
        %v3623 = vadd.f32 %v3078, %v3622
        %v3624 = vpop.f32.mrb[0].mxu0
        %v3625 = vpop.f32.mrb[0].mxu0
        %v3626 = vadd.f32 %v3081, %v3625
        %v3627 = vpop.f32.mrb[0].mxu0
        %3628 = vmatprep.mubr.bf16.mxu0 %v2270
        %3629 = vmatmul.mubr.bf16.gmra.mrb[0].mxu0 %v2269
        %v3630 = vpop.f32.mrb[0].mxu0
        %v3631 = vadd.f32 %v3086, %v3630
        %v3632 = vpop.f32.mrb[0].mxu0
        %v3633 = vpop.f32.mrb[0].mxu0
        %v3634 = vadd.f32 %v3089, %v3633
        %v3635 = vpop.f32.mrb[0].mxu0
        %3636 = vmatprep.mubr.bf16.mxu0 %v2274
        %3637 = vmatmul.mubr.bf16.gmra.mrb[0].mxu0 %v2273
        %v3638 = vpop.f32.mrb[0].mxu0
        %v3639 = vadd.f32 %v3094, %v3638
        %v3640 = vpop.f32.mrb[0].mxu0
        %v3641 = vpop.f32.mrb[0].mxu0
        %v3642 = vadd.f32 %v3097, %v3641
        %v3643 = vpop.f32.mrb[0].mxu0
        %3644 = vmatprep.mubr.bf16.mxu0 %v2278
        %3645 = vmatmul.mubr.bf16.gmra.mrb[0].mxu0 %v2277
        %v3646 = vpop.f32.mrb[0].mxu0
        %v3647 = vadd.f32 %v3102, %v3646
        %v3648 = vpop.f32.mrb[0].mxu0
        %v3649 = vpop.f32.mrb[0].mxu0
        %v3650 = vadd.f32 %v3105, %v3649
        %v3651 = vpop.f32.mrb[0].mxu0
        %3652 = vmatprep.mubr.bf16.mxu0 %v2282
        %3653 = vmatmul.mubr.bf16.gmra.mrb[0].mxu0 %v2281
        %v3654 = vpop.f32.mrb[0].mxu0
        %v3655 = vadd.f32 %v3110, %v3654
        %v3656 = vpop.f32.mrb[0].mxu0
        %v3657 = vpop.f32.mrb[0].mxu0
        %v3658 = vadd.f32 %v3113, %v3657
        %v3659 = vpop.f32.mrb[0].mxu0
        %3660 = vmatprep.mubr.bf16.mxu0 %v2286
        %3661 = vmatmul.mubr.bf16.gmra.mrb[0].mxu0 %v2285
        %v3662 = vpop.f32.mrb[0].mxu0
        %v3663 = vadd.f32 %v3118, %v3662
        %v3664 = vpop.f32.mrb[0].mxu0
        %v3665 = vpop.f32.mrb[0].mxu0
        %v3666 = vadd.f32 %v3121, %v3665
        %v3667 = vpop.f32.mrb[0].mxu0
        %3668 = vmatprep.mubr.bf16.mxu0 %v2290
        %3669 = vmatmul.mubr.bf16.gmra.mrb[0].mxu0 %v2289
        %v3670 = vpop.f32.mrb[0].mxu0
        %v3671 = vadd.f32 %v3126, %v3670
        %v3672 = vpop.f32.mrb[0].mxu0
        %v3673 = vpop.f32.mrb[0].mxu0
        %v3674 = vadd.f32 %v3129, %v3673
        %v3675 = vpop.f32.mrb[0].mxu0
        %3676 = vmatprep.mubr.bf16.mxu0 %v2294
        %3677 = vmatmul.mubr.bf16.gmra.mrb[0].mxu0 %v2293
        %v3678 = vpop.f32.mrb[0].mxu0
        %v3679 = vadd.f32 %v3134, %v3678
        %v3680 = vpop.f32.mrb[0].mxu0
        %v3681 = vpop.f32.mrb[0].mxu0
        %v3682 = vadd.f32 %v3137, %v3681
        %v3683 = vpop.f32.mrb[0].mxu0
        %3684 = vmatprep.mubr.bf16.mxu0 %v2298
        %3685 = vmatmul.mubr.bf16.gmra.mrb[0].mxu0 %v2297
        %v3686 = vpop.f32.mrb[0].mxu0
        %v3687 = vadd.f32 %v3142, %v3686
        %v3688 = vpop.f32.mrb[0].mxu0
        %v3689 = vpop.f32.mrb[0].mxu0
        %v3690 = vadd.f32 %v3145, %v3689
        %v3691 = vpop.f32.mrb[0].mxu0
        %3692 = vmatprep.mubr.bf16.mxu0 %v2302
        %3693 = vmatmul.mubr.bf16.gmra.mrb[0].mxu0 %v2301
        %v3694 = vpop.f32.mrb[0].mxu0
        %v3695 = vadd.f32 %v3150, %v3694
        %v3696 = vpop.f32.mrb[0].mxu0
        %v3697 = vpop.f32.mrb[0].mxu0
        %v3698 = vadd.f32 %v3153, %v3697
        %v3699 = vpop.f32.mrb[0].mxu0
        %3700 = vmatprep.mubr.bf16.mxu0 %v2306
        %3701 = vmatmul.mubr.bf16.gmra.mrb[0].mxu0 %v2305
        %v3702 = vpop.f32.mrb[0].mxu0
        %v3703 = vadd.f32 %v3158, %v3702
        %v3704 = vpop.f32.mrb[0].mxu0
        %v3705 = vpop.f32.mrb[0].mxu0
        %v3706 = vadd.f32 %v3161, %v3705
        %v3707 = vpop.f32.mrb[0].mxu0
        %3708 = vmatprep.mubr.bf16.mxu0 %v2310
        %3709 = vmatmul.mubr.bf16.gmra.mrb[0].mxu0 %v2309
        %v3710 = vpop.f32.mrb[0].mxu0
        %v3711 = vadd.f32 %v3166, %v3710
        %v3712 = vpop.f32.mrb[0].mxu0
        %v3713 = vpop.f32.mrb[0].mxu0
        %v3714 = vadd.f32 %v3169, %v3713
        %v3715 = vpop.f32.mrb[0].mxu0
        %3716 = vmatprep.mubr.bf16.mxu0 %v2314
        %3717 = vmatmul.mubr.bf16.gmra.mrb[0].mxu0 %v2313
        %v3718 = vpop.f32.mrb[0].mxu0
        %v3719 = vadd.f32 %v3174, %v3718
        %v3720 = vpop.f32.mrb[0].mxu0
        %v3721 = vpop.f32.mrb[0].mxu0
        %v3722 = vadd.f32 %v3177, %v3721
        %v3723 = vpop.f32.mrb[0].mxu0
        %3724 = vmatprep.mubr.bf16.mxu0 %v2318
        %3725 = vmatmul.mubr.bf16.gmra.mrb[0].mxu0 %v2317
        %v3726 = vpop.f32.mrb[0].mxu0
        %v3727 = vadd.f32 %v3182, %v3726
        %v3728 = vpop.f32.mrb[0].mxu0
        %v3729 = vpop.f32.mrb[0].mxu0
        %v3730 = vadd.f32 %v3185, %v3729
        %v3731 = vpop.f32.mrb[0].mxu0
        %3732 = vmatprep.mubr.bf16.mxu0 %v2322
        %3733 = vmatmul.mubr.bf16.gmra.mrb[0].mxu0 %v2321
        %v3734 = vpop.f32.mrb[0].mxu0
        %v3735 = vadd.f32 %v3190, %v3734
        %v3736 = vpop.f32.mrb[0].mxu0
        %v3737 = vpop.f32.mrb[0].mxu0
        %v3738 = vadd.f32 %v3193, %v3737
        %v3739 = vpop.f32.mrb[0].mxu0
        %3740 = vmatprep.mubr.bf16.mxu0 %v2326
        %3741 = vmatmul.mubr.bf16.gmra.mrb[0].mxu0 %v2325
        %v3742 = vpop.f32.mrb[0].mxu0
        %v3743 = vadd.f32 %v3198, %v3742
        %v3744 = vpop.f32.mrb[0].mxu0
        %v3745 = vpop.f32.mrb[0].mxu0
        %v3746 = vadd.f32 %v3201, %v3745
        %v3747 = vpop.f32.mrb[0].mxu0
        %3748 = vmatprep.mubr.bf16.mxu0 %v2330
        %3749 = vmatmul.mubr.bf16.gmra.mrb[0].mxu0 %v2329
        %v3750 = vpop.f32.mrb[0].mxu0
        %v3751 = vadd.f32 %v3206, %v3750
        %v3752 = vpop.f32.mrb[0].mxu0
        %v3753 = vpop.f32.mrb[0].mxu0
        %v3754 = vadd.f32 %v3209, %v3753
        %v3755 = vpop.f32.mrb[0].mxu0
        %3756 = vmatprep.mubr.bf16.mxu0 %v2334
        %3757 = vmatmul.mubr.bf16.gmra.mrb[0].mxu0 %v2333
        %v3758 = vpop.f32.mrb[0].mxu0
        %v3759 = vadd.f32 %v3214, %v3758
        %v3760 = vpop.f32.mrb[0].mxu0
        %v3761 = vpop.f32.mrb[0].mxu0
        %v3762 = vadd.f32 %v3217, %v3761
        %v3763 = vpop.f32.mrb[0].mxu0
        %3764 = vmatprep.mubr.bf16.mxu0 %v2338
        %3765 = vmatmul.mubr.bf16.gmra.mrb[0].mxu0 %v2337
        %v3766 = vpop.f32.mrb[0].mxu0
        %v3767 = vadd.f32 %v3222, %v3766
        %v3768 = vpop.f32.mrb[0].mxu0
        %v3769 = vpop.f32.mrb[0].mxu0
        %v3770 = vadd.f32 %v3225, %v3769
        %v3771 = vpop.f32.mrb[0].mxu0
        %3772 = vmatprep.mubr.bf16.mxu0 %v2342
        %3773 = vmatmul.mubr.bf16.gmra.mrb[0].mxu0 %v2341
        %v3774 = vpop.f32.mrb[0].mxu0
        %v3775 = vadd.f32 %v3230, %v3774
        %v3776 = vpop.f32.mrb[0].mxu0
        %v3777 = vpop.f32.mrb[0].mxu0
        %v3778 = vadd.f32 %v3233, %v3777
        %v3779 = vpop.f32.mrb[0].mxu0
        %3780 = vmatprep.mubr.bf16.mxu0 %v2346
        %3781 = vmatmul.mubr.bf16.gmra.mrb[0].mxu0 %v2345
        %v3782 = vpop.f32.mrb[0].mxu0
        %v3783 = vadd.f32 %v3238, %v3782
        %v3784 = vpop.f32.mrb[0].mxu0
        %v3785 = vpop.f32.mrb[0].mxu0
        %v3786 = vadd.f32 %v3241, %v3785
        %v3787 = vpop.f32.mrb[0].mxu0
        %3788 = vmatprep.mubr.bf16.mxu0 %v2350
        %3789 = vmatmul.mubr.bf16.gmra.mrb[0].mxu0 %v2349
        %v3790 = vpop.f32.mrb[0].mxu0
        %v3791 = vadd.f32 %v3246, %v3790
        %v3792 = vpop.f32.mrb[0].mxu0
        %v3793 = vpop.f32.mrb[0].mxu0
        %v3794 = vadd.f32 %v3249, %v3793
        %v3795 = vpop.f32.mrb[0].mxu0
        %3796 = vmatprep.mubr.bf16.mxu0 %v2354
        %3797 = vmatmul.mubr.bf16.gmra.mrb[0].mxu0 %v2353
        %v3798 = vpop.f32.mrb[0].mxu0
        %v3799 = vadd.f32 %v3254, %v3798
        %v3800 = vpop.f32.mrb[0].mxu0
        %v3801 = vpop.f32.mrb[0].mxu0
        %v3802 = vadd.f32 %v3257, %v3801
        %v3803 = vpop.f32.mrb[0].mxu0
        %3804 = vmatprep.mubr.bf16.mxu0 %v2358
        %3805 = vmatmul.mubr.bf16.gmra.mrb[0].mxu0 %v2357
        %v3806 = vpop.f32.mrb[0].mxu0
        %v3807 = vadd.f32 %v3262, %v3806
        %v3808 = vpop.f32.mrb[0].mxu0
        %v3809 = vpop.f32.mrb[0].mxu0
        %v3810 = vadd.f32 %v3265, %v3809
        %v3811 = vpop.f32.mrb[0].mxu0
        %3812 = vmatprep.mubr.bf16.mxu0 %v2362
        %3813 = vmatmul.mubr.bf16.gmra.mrb[0].mxu0 %v2361
        %v3814 = vpop.f32.mrb[0].mxu0
        %v3815 = vadd.f32 %v3270, %v3814
        %v3816 = vpop.f32.mrb[0].mxu0
        %v3817 = vpop.f32.mrb[0].mxu0
        %v3818 = vadd.f32 %v3273, %v3817
        %v3819 = vpop.f32.mrb[0].mxu0
        %3820 = vmatprep.mubr.bf16.mxu0 %v2366
        %3821 = vmatmul.mubr.bf16.gmra.mrb[0].mxu0 %v2365
        %v3822 = vpop.f32.mrb[0].mxu0
        %v3823 = vadd.f32 %v3278, %v3822
        %v3824 = vpop.f32.mrb[0].mxu0
        %v3825 = vpop.f32.mrb[0].mxu0
        %v3826 = vadd.f32 %v3281, %v3825
        %v3827 = vpop.f32.mrb[0].mxu0
        %3828 = vmatprep.mubr.bf16.mxu0 %v2370
        %3829 = vmatmul.mubr.bf16.gmra.mrb[0].mxu0 %v2369
        %v3830 = vpop.f32.mrb[0].mxu0
        %v3831 = vadd.f32 %v3286, %v3830
        %v3832 = vpop.f32.mrb[0].mxu0
        %v3833 = vpop.f32.mrb[0].mxu0
        %v3834 = vadd.f32 %v3289, %v3833
        %v3835 = vpop.f32.mrb[0].mxu0
        %3836 = vmatprep.mubr.bf16.mxu0 %v2374
        %3837 = vmatmul.mubr.bf16.gmra.mrb[0].mxu0 %v2373
        %v3838 = vpop.f32.mrb[0].mxu0
        %v3839 = vadd.f32 %v3294, %v3838
        %v3840 = vpop.f32.mrb[0].mxu0
        %v3841 = vpop.f32.mrb[0].mxu0
        %v3842 = vadd.f32 %v3297, %v3841
        %v3843 = vpop.f32.mrb[0].mxu0
        %3844 = vmatprep.mubr.bf16.mxu0 %v2378
        %3845 = vmatmul.mubr.bf16.gmra.mrb[0].mxu0 %v2377
        %v3846 = vpop.f32.mrb[0].mxu0
        %v3847 = vadd.f32 %v3302, %v3846
        %v3848 = vpop.f32.mrb[0].mxu0
        %v3849 = vpop.f32.mrb[0].mxu0
        %v3850 = vadd.f32 %v3305, %v3849
        %v3851 = vpop.f32.mrb[0].mxu0
        %3852 = vmatprep.mubr.bf16.mxu0 %v2382
        %3853 = vmatmul.mubr.bf16.gmra.mrb[0].mxu0 %v2381
        %v3854 = vpop.f32.mrb[0].mxu0
        %v3855 = vadd.f32 %v3310, %v3854
        %v3856 = vpop.f32.mrb[0].mxu0
        %v3857 = vpop.f32.mrb[0].mxu0
        %v3858 = vadd.f32 %v3313, %v3857
        %v3859 = vpop.f32.mrb[0].mxu0
        %3860 = vmatprep.mubr.bf16.mxu0 %v2386
        %3861 = vmatmul.mubr.bf16.gmra.mrb[0].mxu0 %v2385
        %v3862 = vpop.f32.mrb[0].mxu0
        %v3863 = vadd.f32 %v3318, %v3862
        %v3864 = vpop.f32.mrb[0].mxu0
        %v3865 = vpop.f32.mrb[0].mxu0
        %v3866 = vadd.f32 %v3321, %v3865
        %v3867 = vpop.f32.mrb[0].mxu0
        %3868 = vmatprep.mubr.bf16.mxu0 %v2390
        %3869 = vmatmul.mubr.bf16.gmra.mrb[0].mxu0 %v2389
        %v3870 = vpop.f32.mrb[0].mxu0
        %v3871 = vadd.f32 %v3326, %v3870
        %v3872 = vpop.f32.mrb[0].mxu0
        %v3873 = vpop.f32.mrb[0].mxu0
        %v3874 = vadd.f32 %v3329, %v3873
        %v3875 = vpop.f32.mrb[0].mxu0
        %3876 = vmatprep.mubr.bf16.mxu0 %v2394
        %3877 = vmatmul.mubr.bf16.gmra.mrb[0].mxu0 %v2393
        %v3878 = vpop.f32.mrb[0].mxu0
        %v3879 = vadd.f32 %v3334, %v3878
        %v3880 = vpop.f32.mrb[0].mxu0
        %v3881 = vpop.f32.mrb[0].mxu0
        %v3882 = vadd.f32 %v3337, %v3881
        %v3883 = vpop.f32.mrb[0].mxu0
        %3884 = vmatprep.mubr.bf16.mxu0 %v2398
        %3885 = vmatmul.mubr.bf16.gmra.mrb[0].mxu0 %v2397
        %v3886 = vpop.f32.mrb[0].mxu0
        %v3887 = vadd.f32 %v3342, %v3886
        %v3888 = vpop.f32.mrb[0].mxu0
        %v3889 = vpop.f32.mrb[0].mxu0
        %v3890 = vadd.f32 %v3345, %v3889
        %v3891 = vpop.f32.mrb[0].mxu0
        %3892 = vmatprep.mubr.bf16.mxu0 %v2402
        %3893 = vmatmul.mubr.bf16.gmra.mrb[0].mxu0 %v2401
        %v3894 = vpop.f32.mrb[0].mxu0
        %v3895 = vadd.f32 %v3350, %v3894
        %v3896 = vpop.f32.mrb[0].mxu0
        %v3897 = vpop.f32.mrb[0].mxu0
        %v3898 = vadd.f32 %v3353, %v3897
        %v3899 = vpop.f32.mrb[0].mxu0
        %3900 = vmatprep.mubr.bf16.mxu0 %v2406
        %3901 = vmatmul.mubr.bf16.gmra.mrb[0].mxu0 %v2405
        %v3902 = vpop.f32.mrb[0].mxu0
        %v3903 = vadd.f32 %v3358, %v3902
        %v3904 = vpop.f32.mrb[0].mxu0
        %v3905 = vpop.f32.mrb[0].mxu0
        %v3906 = vadd.f32 %v3361, %v3905
        %v3907 = vpop.f32.mrb[0].mxu0
        %3908 = vmatprep.mubr.bf16.mxu0 %v2410
        %3909 = vmatmul.mubr.bf16.gmra.mrb[0].mxu0 %v2409
        %v3910 = vpop.f32.mrb[0].mxu0
        %v3911 = vadd.f32 %v3366, %v3910
        %v3912 = vpop.f32.mrb[0].mxu0
        %v3913 = vpop.f32.mrb[0].mxu0
        %v3914 = vadd.f32 %v3369, %v3913
        %v3915 = vpop.f32.mrb[0].mxu0
        %3916 = vmatprep.mubr.bf16.mxu0 %v2414
        %3917 = vmatmul.mubr.bf16.gmra.mrb[0].mxu0 %v2413
        %v3918 = vpop.f32.mrb[0].mxu0
        %v3919 = vadd.f32 %v3374, %v3918
        %v3920 = vpop.f32.mrb[0].mxu0
        %v3921 = vpop.f32.mrb[0].mxu0
        %v3922 = vadd.f32 %v3377, %v3921
        %v3923 = vpop.f32.mrb[0].mxu0
        %3924 = vmatprep.mubr.bf16.mxu0 %v2418
        %3925 = vmatmul.mubr.bf16.gmra.mrb[0].mxu0 %v2417
        %v3926 = vpop.f32.mrb[0].mxu0
        %v3927 = vadd.f32 %v3382, %v3926
        %v3928 = vpop.f32.mrb[0].mxu0
        %v3929 = vpop.f32.mrb[0].mxu0
        %v3930 = vadd.f32 %v3385, %v3929
        %v3931 = vpop.f32.mrb[0].mxu0
        %3932 = vmatprep.mubr.bf16.mxu0 %v2422
        %3933 = vmatmul.mubr.bf16.gmra.mrb[0].mxu0 %v2421
        %v3934 = vpop.f32.mrb[0].mxu0
        %v3935 = vadd.f32 %v3390, %v3934
        %v3936 = vpop.f32.mrb[0].mxu0
        %v3937 = vpop.f32.mrb[0].mxu0
        %v3938 = vadd.f32 %v3393, %v3937
        %v3939 = vpop.f32.mrb[0].mxu0
        %3940 = vmatprep.mubr.bf16.mxu0 %v2426
        %3941 = vmatmul.mubr.bf16.gmra.mrb[0].mxu0 %v2425
        %v3942 = vpop.f32.mrb[0].mxu0
        %v3943 = vadd.f32 %v3398, %v3942
        %v3944 = vpop.f32.mrb[0].mxu0
        %v3945 = vpop.f32.mrb[0].mxu0
        %v3946 = vadd.f32 %v3401, %v3945
        %v3947 = vpop.f32.mrb[0].mxu0
        %3948 = vmatprep.mubr.bf16.mxu0 %v2430
        %3949 = vmatmul.mubr.bf16.gmra.mrb[0].mxu0 %v2429
        %v3950 = vpop.f32.mrb[0].mxu0
        %v3951 = vadd.f32 %v3406, %v3950
        %v3952 = vpop.f32.mrb[0].mxu0
        %v3953 = vpop.f32.mrb[0].mxu0
        %v3954 = vadd.f32 %v3409, %v3953
        %v3955 = vpop.f32.mrb[0].mxu0
        %3956 = vmatprep.mubr.bf16.mxu0 %v2434
        %3957 = vmatmul.mubr.bf16.gmra.mrb[0].mxu0 %v2433
        %v3958 = vpop.f32.mrb[0].mxu0
        %v3959 = vadd.f32 %v3414, %v3958
        %v3960 = vpop.f32.mrb[0].mxu0
        %v3961 = vpop.f32.mrb[0].mxu0
        %v3962 = vadd.f32 %v3417, %v3961
        %v3963 = vpop.f32.mrb[0].mxu0
        %3964 = vmatprep.mubr.bf16.mxu0 %v2438
        %3965 = vmatmul.mubr.bf16.gmra.mrb[0].mxu0 %v2437
        %v3966 = vpop.f32.mrb[0].mxu0
        %v3967 = vadd.f32 %v3422, %v3966
        %v3968 = vpop.f32.mrb[0].mxu0
        %v3969 = vpop.f32.mrb[0].mxu0
        %v3970 = vadd.f32 %v3425, %v3969
        %v3971 = vpop.f32.mrb[0].mxu0
        %3972 = vmatprep.mubr.bf16.mxu0 %v2442
        %3973 = vmatmul.mubr.bf16.gmra.mrb[0].mxu0 %v2441
        %v3974 = vpop.f32.mrb[0].mxu0
        %v3975 = vadd.f32 %v3430, %v3974
        %v3976 = vpop.f32.mrb[0].mxu0
        %v3977 = vpop.f32.mrb[0].mxu0
        %v3978 = vadd.f32 %v3433, %v3977
        %v3979 = vpop.f32.mrb[0].mxu0
        %3980 = vdwg.mxu0
        %v3981 = vadd.f32 %v1035, %v3471
        %v3982 = vadd.f32 %v1036, %v3474
        %v3983 = vadd.f32 %v1037, %v3479
        %v3984 = vadd.f32 %v1038, %v3482
        %v3985 = vadd.f32 %v1039, %v3487
        %v3986 = vadd.f32 %v1040, %v3490
        %v3987 = vadd.f32 %v1041, %v3495
        %v3988 = vadd.f32 %v1042, %v3498
        %v3989 = vadd.f32 %v1043, %v3503
        %v3990 = vadd.f32 %v1044, %v3506
        %v3991 = vadd.f32 %v1045, %v3511
        %v3992 = vadd.f32 %v1046, %v3514
        %v3993 = vadd.f32 %v1047, %v3519
        %v3994 = vadd.f32 %v1048, %v3522
        %v3995 = vadd.f32 %v1049, %v3527
        %v3996 = vadd.f32 %v1050, %v3530
        %v3997 = vadd.f32 %v1051, %v3535
        %v3998 = vadd.f32 %v1052, %v3538
        %v3999 = vadd.f32 %v1053, %v3543
        %v4000 = vadd.f32 %v1054, %v3546
        %v4001 = vadd.f32 %v1055, %v3551
        %v4002 = vadd.f32 %v1056, %v3554
        %v4003 = vadd.f32 %v1057, %v3559
        %v4004 = vadd.f32 %v1058, %v3562
        %v4005 = vadd.f32 %v1059, %v3567
        %v4006 = vadd.f32 %v1060, %v3570
        %v4007 = vadd.f32 %v1061, %v3575
        %v4008 = vadd.f32 %v1062, %v3578
        %v4009 = vadd.f32 %v1063, %v3583
        %v4010 = vadd.f32 %v1064, %v3586
        %v4011 = vadd.f32 %v1065, %v3591
        %v4012 = vadd.f32 %v1066, %v3594
        %v4013 = vadd.f32 %v1067, %v3599
        %v4014 = vadd.f32 %v1068, %v3602
        %v4015 = vadd.f32 %v1069, %v3607
        %v4016 = vadd.f32 %v1070, %v3610
        %v4017 = vadd.f32 %v1071, %v3615
        %v4018 = vadd.f32 %v1072, %v3618
        %v4019 = vadd.f32 %v1073, %v3623
        %v4020 = vadd.f32 %v1074, %v3626
        %v4021 = vadd.f32 %v1075, %v3631
        %v4022 = vadd.f32 %v1076, %v3634
        %v4023 = vadd.f32 %v1077, %v3639
        %v4024 = vadd.f32 %v1078, %v3642
        %v4025 = vadd.f32 %v1079, %v3647
        %v4026 = vadd.f32 %v1080, %v3650
        %v4027 = vadd.f32 %v1081, %v3655
        %v4028 = vadd.f32 %v1082, %v3658
        %v4029 = vadd.f32 %v1083, %v3663
        %v4030 = vadd.f32 %v1084, %v3666
        %v4031 = vadd.f32 %v1085, %v3671
        %v4032 = vadd.f32 %v1086, %v3674
        %v4033 = vadd.f32 %v1087, %v3679
        %v4034 = vadd.f32 %v1088, %v3682
        %v4035 = vadd.f32 %v1089, %v3687
        %v4036 = vadd.f32 %v1090, %v3690
        %v4037 = vadd.f32 %v1091, %v3695
        %v4038 = vadd.f32 %v1092, %v3698
        %v4039 = vadd.f32 %v1093, %v3703
        %v4040 = vadd.f32 %v1094, %v3706
        %v4041 = vadd.f32 %v1095, %v3711
        %v4042 = vadd.f32 %v1096, %v3714
        %v4043 = vadd.f32 %v1097, %v3719
        %v4044 = vadd.f32 %v1098, %v3722
        %v4045 = vadd.f32 %v1099, %v3727
        %v4046 = vadd.f32 %v1100, %v3730
        %v4047 = vadd.f32 %v1101, %v3735
        %v4048 = vadd.f32 %v1102, %v3738
        %v4049 = vadd.f32 %v1103, %v3743
        %v4050 = vadd.f32 %v1104, %v3746
        %v4051 = vadd.f32 %v1105, %v3751
        %v4052 = vadd.f32 %v1106, %v3754
        %v4053 = vadd.f32 %v1107, %v3759
        %v4054 = vadd.f32 %v1108, %v3762
        %v4055 = vadd.f32 %v1109, %v3767
        %v4056 = vadd.f32 %v1110, %v3770
        %v4057 = vadd.f32 %v1111, %v3775
        %v4058 = vadd.f32 %v1112, %v3778
        %v4059 = vadd.f32 %v1113, %v3783
        %v4060 = vadd.f32 %v1114, %v3786
        %v4061 = vadd.f32 %v1115, %v3791
        %v4062 = vadd.f32 %v1116, %v3794
        %v4063 = vadd.f32 %v1117, %v3799
        %v4064 = vadd.f32 %v1118, %v3802
        %v4065 = vadd.f32 %v1119, %v3807
        %v4066 = vadd.f32 %v1120, %v3810
        %v4067 = vadd.f32 %v1121, %v3815
        %v4068 = vadd.f32 %v1122, %v3818
        %v4069 = vadd.f32 %v1123, %v3823
        %v4070 = vadd.f32 %v1124, %v3826
        %v4071 = vadd.f32 %v1125, %v3831
        %v4072 = vadd.f32 %v1126, %v3834
        %v4073 = vadd.f32 %v1127, %v3839
        %v4074 = vadd.f32 %v1128, %v3842
        %v4075 = vadd.f32 %v1129, %v3847
        %v4076 = vadd.f32 %v1130, %v3850
        %v4077 = vadd.f32 %v1131, %v3855
        %v4078 = vadd.f32 %v1132, %v3858
        %v4079 = vadd.f32 %v1133, %v3863
        %v4080 = vadd.f32 %v1134, %v3866
        %v4081 = vadd.f32 %v1135, %v3871
        %v4082 = vadd.f32 %v1136, %v3874
        %v4083 = vadd.f32 %v1137, %v3879
        %v4084 = vadd.f32 %v1138, %v3882
        %v4085 = vadd.f32 %v1139, %v3887
        %v4086 = vadd.f32 %v1140, %v3890
        %v4087 = vadd.f32 %v1141, %v3895
        %v4088 = vadd.f32 %v1142, %v3898
        %v4089 = vadd.f32 %v1143, %v3903
        %v4090 = vadd.f32 %v1144, %v3906
        %v4091 = vadd.f32 %v1145, %v3911
        %v4092 = vadd.f32 %v1146, %v3914
        %v4093 = vadd.f32 %v1147, %v3919
        %v4094 = vadd.f32 %v1148, %v3922
        %v4095 = vadd.f32 %v1149, %v3927
        %v4096 = vadd.f32 %v1150, %v3930
        %v4097 = vadd.f32 %v1151, %v3935
        %v4098 = vadd.f32 %v1152, %v3938
        %v4099 = vadd.f32 %v1153, %v3943
        %v4100 = vadd.f32 %v1154, %v3946
        %v4101 = vadd.f32 %v1155, %v3951
        %v4102 = vadd.f32 %v1156, %v3954
        %v4103 = vadd.f32 %v1157, %v3959
        %v4104 = vadd.f32 %v1158, %v3962
        %v4105 = vadd.f32 %v1159, %v3967
        %v4106 = vadd.f32 %v1160, %v3970
        %v4107 = vadd.f32 %v1161, %v3975
        %v4108 = vadd.f32 %v1162, %v3978
        %vm4109 = vcmask 261120
        %4110 = vst.msk [vmem:[#allocation2] sm:$0xff] %vm4109, %v3981
        %4111 = vst.msk [vmem:[#allocation2 + $0x8] sm:$0xff] %vm4109, %v3982
        %4112 = vst.msk [vmem:[#allocation2 + $0x10] sm:$0xff] %vm4109, %v3983
        %4113 = vst.msk [vmem:[#allocation2 + $0x18] sm:$0xff] %vm4109, %v3984
        %4114 = vst.msk [vmem:[#allocation2 + $0x20] sm:$0xff] %vm4109, %v3985
        %4115 = vst.msk [vmem:[#allocation2 + $0x28] sm:$0xff] %vm4109, %v3986
        %4116 = vst.msk [vmem:[#allocation2 + $0x30] sm:$0xff] %vm4109, %v3987
        %4117 = vst.msk [vmem:[#allocation2 + $0x38] sm:$0xff] %vm4109, %v3988
        %4118 = vst.msk [vmem:[#allocation2 + $0x40] sm:$0xff] %vm4109, %v3989
        %4119 = vst.msk [vmem:[#allocation2 + $0x48] sm:$0xff] %vm4109, %v3990
        %4120 = vst.msk [vmem:[#allocation2 + $0x50] sm:$0xff] %vm4109, %v3991
        %4121 = vst.msk [vmem:[#allocation2 + $0x58] sm:$0xff] %vm4109, %v3992
        %4122 = vst.msk [vmem:[#allocation2 + $0x60] sm:$0xff] %vm4109, %v3993
        %4123 = vst.msk [vmem:[#allocation2 + $0x68] sm:$0xff] %vm4109, %v3994
        %4124 = vst.msk [vmem:[#allocation2 + $0x70] sm:$0xff] %vm4109, %v3995
        %4125 = vst.msk [vmem:[#allocation2 + $0x78] sm:$0xff] %vm4109, %v3996
        %4126 = vst.msk [vmem:[#allocation2 + $0x80] sm:$0xff] %vm4109, %v3997
        %4127 = vst.msk [vmem:[#allocation2 + $0x88] sm:$0xff] %vm4109, %v3998
        %4128 = vst.msk [vmem:[#allocation2 + $0x90] sm:$0xff] %vm4109, %v3999
        %4129 = vst.msk [vmem:[#allocation2 + $0x98] sm:$0xff] %vm4109, %v4000
        %4130 = vst.msk [vmem:[#allocation2 + $0xa0] sm:$0xff] %vm4109, %v4001
        %4131 = vst.msk [vmem:[#allocation2 + $0xa8] sm:$0xff] %vm4109, %v4002
        %4132 = vst.msk [vmem:[#allocation2 + $0xb0] sm:$0xff] %vm4109, %v4003
        %4133 = vst.msk [vmem:[#allocation2 + $0xb8] sm:$0xff] %vm4109, %v4004
        %4134 = vst.msk [vmem:[#allocation2 + $0xc0] sm:$0xff] %vm4109, %v4005
        %4135 = vst.msk [vmem:[#allocation2 + $0xc8] sm:$0xff] %vm4109, %v4006
        %4136 = vst.msk [vmem:[#allocation2 + $0xd0] sm:$0xff] %vm4109, %v4007
        %4137 = vst.msk [vmem:[#allocation2 + $0xd8] sm:$0xff] %vm4109, %v4008
        %4138 = vst.msk [vmem:[#allocation2 + $0xe0] sm:$0xff] %vm4109, %v4009
        %4139 = vst.msk [vmem:[#allocation2 + $0xe8] sm:$0xff] %vm4109, %v4010
        %4140 = vst.msk [vmem:[#allocation2 + $0xf0] sm:$0xff] %vm4109, %v4011
        %4141 = vst.msk [vmem:[#allocation2 + $0xf8] sm:$0xff] %vm4109, %v4012
        %4142 = vst.msk [vmem:[#allocation2 + $0x100] sm:$0xff] %vm4109, %v4013
        %4143 = vst.msk [vmem:[#allocation2 + $0x108] sm:$0xff] %vm4109, %v4014
        %4144 = vst.msk [vmem:[#allocation2 + $0x110] sm:$0xff] %vm4109, %v4015
        %4145 = vst.msk [vmem:[#allocation2 + $0x118] sm:$0xff] %vm4109, %v4016
        %4146 = vst.msk [vmem:[#allocation2 + $0x120] sm:$0xff] %vm4109, %v4017
        %4147 = vst.msk [vmem:[#allocation2 + $0x128] sm:$0xff] %vm4109, %v4018
        %4148 = vst.msk [vmem:[#allocation2 + $0x130] sm:$0xff] %vm4109, %v4019
        %4149 = vst.msk [vmem:[#allocation2 + $0x138] sm:$0xff] %vm4109, %v4020
        %4150 = vst.msk [vmem:[#allocation2 + $0x140] sm:$0xff] %vm4109, %v4021
        %4151 = vst.msk [vmem:[#allocation2 + $0x148] sm:$0xff] %vm4109, %v4022
        %4152 = vst.msk [vmem:[#allocation2 + $0x150] sm:$0xff] %vm4109, %v4023
        %4153 = vst.msk [vmem:[#allocation2 + $0x158] sm:$0xff] %vm4109, %v4024
        %4154 = vst.msk [vmem:[#allocation2 + $0x160] sm:$0xff] %vm4109, %v4025
        %4155 = vst.msk [vmem:[#allocation2 + $0x168] sm:$0xff] %vm4109, %v4026
        %4156 = vst.msk [vmem:[#allocation2 + $0x170] sm:$0xff] %vm4109, %v4027
        %4157 = vst.msk [vmem:[#allocation2 + $0x178] sm:$0xff] %vm4109, %v4028
        %4158 = vst.msk [vmem:[#allocation2 + $0x180] sm:$0xff] %vm4109, %v4029
        %4159 = vst.msk [vmem:[#allocation2 + $0x188] sm:$0xff] %vm4109, %v4030
        %4160 = vst.msk [vmem:[#allocation2 + $0x190] sm:$0xff] %vm4109, %v4031
        %4161 = vst.msk [vmem:[#allocation2 + $0x198] sm:$0xff] %vm4109, %v4032
        %4162 = vst.msk [vmem:[#allocation2 + $0x1a0] sm:$0xff] %vm4109, %v4033
        %4163 = vst.msk [vmem:[#allocation2 + $0x1a8] sm:$0xff] %vm4109, %v4034
        %4164 = vst.msk [vmem:[#allocation2 + $0x1b0] sm:$0xff] %vm4109, %v4035
        %4165 = vst.msk [vmem:[#allocation2 + $0x1b8] sm:$0xff] %vm4109, %v4036
        %4166 = vst.msk [vmem:[#allocation2 + $0x1c0] sm:$0xff] %vm4109, %v4037
        %4167 = vst.msk [vmem:[#allocation2 + $0x1c8] sm:$0xff] %vm4109, %v4038
        %4168 = vst.msk [vmem:[#allocation2 + $0x1d0] sm:$0xff] %vm4109, %v4039
        %4169 = vst.msk [vmem:[#allocation2 + $0x1d8] sm:$0xff] %vm4109, %v4040
        %4170 = vst.msk [vmem:[#allocation2 + $0x1e0] sm:$0xff] %vm4109, %v4041
        %4171 = vst.msk [vmem:[#allocation2 + $0x1e8] sm:$0xff] %vm4109, %v4042
        %4172 = vst.msk [vmem:[#allocation2 + $0x1f0] sm:$0xff] %vm4109, %v4043
        %4173 = vst.msk [vmem:[#allocation2 + $0x1f8] sm:$0xff] %vm4109, %v4044
        %4174 = vst.msk [vmem:[#allocation2 + $0x200] sm:$0xff] %vm4109, %v4045
        %4175 = vst.msk [vmem:[#allocation2 + $0x208] sm:$0xff] %vm4109, %v4046
        %4176 = vst.msk [vmem:[#allocation2 + $0x210] sm:$0xff] %vm4109, %v4047
        %4177 = vst.msk [vmem:[#allocation2 + $0x218] sm:$0xff] %vm4109, %v4048
        %4178 = vst.msk [vmem:[#allocation2 + $0x220] sm:$0xff] %vm4109, %v4049
        %4179 = vst.msk [vmem:[#allocation2 + $0x228] sm:$0xff] %vm4109, %v4050
        %4180 = vst.msk [vmem:[#allocation2 + $0x230] sm:$0xff] %vm4109, %v4051
        %4181 = vst.msk [vmem:[#allocation2 + $0x238] sm:$0xff] %vm4109, %v4052
        %4182 = vst.msk [vmem:[#allocation2 + $0x240] sm:$0xff] %vm4109, %v4053
        %4183 = vst.msk [vmem:[#allocation2 + $0x248] sm:$0xff] %vm4109, %v4054
        %4184 = vst.msk [vmem:[#allocation2 + $0x250] sm:$0xff] %vm4109, %v4055
        %4185 = vst.msk [vmem:[#allocation2 + $0x258] sm:$0xff] %vm4109, %v4056
        %4186 = vst.msk [vmem:[#allocation2 + $0x260] sm:$0xff] %vm4109, %v4057
        %4187 = vst.msk [vmem:[#allocation2 + $0x268] sm:$0xff] %vm4109, %v4058
        %4188 = vst.msk [vmem:[#allocation2 + $0x270] sm:$0xff] %vm4109, %v4059
        %4189 = vst.msk [vmem:[#allocation2 + $0x278] sm:$0xff] %vm4109, %v4060
        %4190 = vst.msk [vmem:[#allocation2 + $0x280] sm:$0xff] %vm4109, %v4061
        %4191 = vst.msk [vmem:[#allocation2 + $0x288] sm:$0xff] %vm4109, %v4062
        %4192 = vst.msk [vmem:[#allocation2 + $0x290] sm:$0xff] %vm4109, %v4063
        %4193 = vst.msk [vmem:[#allocation2 + $0x298] sm:$0xff] %vm4109, %v4064
        %4194 = vst.msk [vmem:[#allocation2 + $0x2a0] sm:$0xff] %vm4109, %v4065
        %4195 = vst.msk [vmem:[#allocation2 + $0x2a8] sm:$0xff] %vm4109, %v4066
        %4196 = vst.msk [vmem:[#allocation2 + $0x2b0] sm:$0xff] %vm4109, %v4067
        %4197 = vst.msk [vmem:[#allocation2 + $0x2b8] sm:$0xff] %vm4109, %v4068
        %4198 = vst.msk [vmem:[#allocation2 + $0x2c0] sm:$0xff] %vm4109, %v4069
        %4199 = vst.msk [vmem:[#allocation2 + $0x2c8] sm:$0xff] %vm4109, %v4070
        %4200 = vst.msk [vmem:[#allocation2 + $0x2d0] sm:$0xff] %vm4109, %v4071
        %4201 = vst.msk [vmem:[#allocation2 + $0x2d8] sm:$0xff] %vm4109, %v4072
        %4202 = vst.msk [vmem:[#allocation2 + $0x2e0] sm:$0xff] %vm4109, %v4073
        %4203 = vst.msk [vmem:[#allocation2 + $0x2e8] sm:$0xff] %vm4109, %v4074
        %4204 = vst.msk [vmem:[#allocation2 + $0x2f0] sm:$0xff] %vm4109, %v4075
        %4205 = vst.msk [vmem:[#allocation2 + $0x2f8] sm:$0xff] %vm4109, %v4076
        %4206 = vst.msk [vmem:[#allocation2 + $0x300] sm:$0xff] %vm4109, %v4077
        %4207 = vst.msk [vmem:[#allocation2 + $0x308] sm:$0xff] %vm4109, %v4078
        %4208 = vst.msk [vmem:[#allocation2 + $0x310] sm:$0xff] %vm4109, %v4079
        %4209 = vst.msk [vmem:[#allocation2 + $0x318] sm:$0xff] %vm4109, %v4080
        %4210 = vst.msk [vmem:[#allocation2 + $0x320] sm:$0xff] %vm4109, %v4081
        %4211 = vst.msk [vmem:[#allocation2 + $0x328] sm:$0xff] %vm4109, %v4082
        %4212 = vst.msk [vmem:[#allocation2 + $0x330] sm:$0xff] %vm4109, %v4083
        %4213 = vst.msk [vmem:[#allocation2 + $0x338] sm:$0xff] %vm4109, %v4084
        %4214 = vst.msk [vmem:[#allocation2 + $0x340] sm:$0xff] %vm4109, %v4085
        %4215 = vst.msk [vmem:[#allocation2 + $0x348] sm:$0xff] %vm4109, %v4086
        %4216 = vst.msk [vmem:[#allocation2 + $0x350] sm:$0xff] %vm4109, %v4087
        %4217 = vst.msk [vmem:[#allocation2 + $0x358] sm:$0xff] %vm4109, %v4088
        %4218 = vst.msk [vmem:[#allocation2 + $0x360] sm:$0xff] %vm4109, %v4089
        %4219 = vst.msk [vmem:[#allocation2 + $0x368] sm:$0xff] %vm4109, %v4090
        %4220 = vst.msk [vmem:[#allocation2 + $0x370] sm:$0xff] %vm4109, %v4091
        %4221 = vst.msk [vmem:[#allocation2 + $0x378] sm:$0xff] %vm4109, %v4092
        %4222 = vst.msk [vmem:[#allocation2 + $0x380] sm:$0xff] %vm4109, %v4093
        %4223 = vst.msk [vmem:[#allocation2 + $0x388] sm:$0xff] %vm4109, %v4094
        %4224 = vst.msk [vmem:[#allocation2 + $0x390] sm:$0xff] %vm4109, %v4095
        %4225 = vst.msk [vmem:[#allocation2 + $0x398] sm:$0xff] %vm4109, %v4096
        %4226 = vst.msk [vmem:[#allocation2 + $0x3a0] sm:$0xff] %vm4109, %v4097
        %4227 = vst.msk [vmem:[#allocation2 + $0x3a8] sm:$0xff] %vm4109, %v4098
        %4228 = vst.msk [vmem:[#allocation2 + $0x3b0] sm:$0xff] %vm4109, %v4099
        %4229 = vst.msk [vmem:[#allocation2 + $0x3b8] sm:$0xff] %vm4109, %v4100
        %4230 = vst.msk [vmem:[#allocation2 + $0x3c0] sm:$0xff] %vm4109, %v4101
        %4231 = vst.msk [vmem:[#allocation2 + $0x3c8] sm:$0xff] %vm4109, %v4102
        %4232 = vst.msk [vmem:[#allocation2 + $0x3d0] sm:$0xff] %vm4109, %v4103
        %4233 = vst.msk [vmem:[#allocation2 + $0x3d8] sm:$0xff] %vm4109, %v4104
        %4234 = vst.msk [vmem:[#allocation2 + $0x3e0] sm:$0xff] %vm4109, %v4105
        %4235 = vst.msk [vmem:[#allocation2 + $0x3e8] sm:$0xff] %vm4109, %v4106
        %4236 = vst.msk [vmem:[#allocation2 + $0x3f0] sm:$0xff] %vm4109, %v4107
        %4237 = vst.msk [vmem:[#allocation2 + $0x3f8] sm:$0xff] %vm4109, %v4108
        %p4238 = scmp.eq.s32.totalorder %s24, 1
        // Predicated region
        $region60: #{gcn_propagate.3} parent=50 // pred_check
          %p4239 = pneg %p4238
        $region61: #{gcn_propagate.3} parent=50 // pred_check_branch
          %4241 = sbr.rel (%p4239) target = $region63
        $region62: #{gcn_propagate.3} parent=50 // pred_region
          %v4242 = vld [vmem:[#allocation2] sm:$0xff]
          %v4243 = vld [vmem:[#allocation2 + $0x8] sm:$0xff]
          %v4244 = vld [vmem:[#allocation2 + $0x10] sm:$0xff]
          %v4245 = vld [vmem:[#allocation2 + $0x18] sm:$0xff]
          %v4246 = vld [vmem:[#allocation2 + $0x20] sm:$0xff]
          %v4247 = vld [vmem:[#allocation2 + $0x28] sm:$0xff]
          %v4248 = vld [vmem:[#allocation2 + $0x30] sm:$0xff]
          %v4249 = vld [vmem:[#allocation2 + $0x38] sm:$0xff]
          %v4250 = vld [vmem:[#allocation2 + $0x40] sm:$0xff]
          %v4251 = vld [vmem:[#allocation2 + $0x48] sm:$0xff]
          %v4252 = vld [vmem:[#allocation2 + $0x50] sm:$0xff]
          %v4253 = vld [vmem:[#allocation2 + $0x58] sm:$0xff]
          %v4254 = vld [vmem:[#allocation2 + $0x60] sm:$0xff]
          %v4255 = vld [vmem:[#allocation2 + $0x68] sm:$0xff]
          %v4256 = vld [vmem:[#allocation2 + $0x70] sm:$0xff]
          %v4257 = vld [vmem:[#allocation2 + $0x78] sm:$0xff]
          %v4258 = vld [vmem:[#allocation2 + $0x80] sm:$0xff]
          %v4259 = vld [vmem:[#allocation2 + $0x88] sm:$0xff]
          %v4260 = vld [vmem:[#allocation2 + $0x90] sm:$0xff]
          %v4261 = vld [vmem:[#allocation2 + $0x98] sm:$0xff]
          %v4262 = vld [vmem:[#allocation2 + $0xa0] sm:$0xff]
          %v4263 = vld [vmem:[#allocation2 + $0xa8] sm:$0xff]
          %v4264 = vld [vmem:[#allocation2 + $0xb0] sm:$0xff]
          %v4265 = vld [vmem:[#allocation2 + $0xb8] sm:$0xff]
          %v4266 = vld [vmem:[#allocation2 + $0xc0] sm:$0xff]
          %v4267 = vld [vmem:[#allocation2 + $0xc8] sm:$0xff]
          %v4268 = vld [vmem:[#allocation2 + $0xd0] sm:$0xff]
          %v4269 = vld [vmem:[#allocation2 + $0xd8] sm:$0xff]
          %v4270 = vld [vmem:[#allocation2 + $0xe0] sm:$0xff]
          %v4271 = vld [vmem:[#allocation2 + $0xe8] sm:$0xff]
          %v4272 = vld [vmem:[#allocation2 + $0xf0] sm:$0xff]
          %v4273 = vld [vmem:[#allocation2 + $0xf8] sm:$0xff]
          %v4274 = vld [vmem:[#allocation2 + $0x100] sm:$0xff]
          %v4275 = vld [vmem:[#allocation2 + $0x108] sm:$0xff]
          %v4276 = vld [vmem:[#allocation2 + $0x110] sm:$0xff]
          %v4277 = vld [vmem:[#allocation2 + $0x118] sm:$0xff]
          %v4278 = vld [vmem:[#allocation2 + $0x120] sm:$0xff]
          %v4279 = vld [vmem:[#allocation2 + $0x128] sm:$0xff]
          %v4280 = vld [vmem:[#allocation2 + $0x130] sm:$0xff]
          %v4281 = vld [vmem:[#allocation2 + $0x138] sm:$0xff]
          %v4282 = vld [vmem:[#allocation2 + $0x140] sm:$0xff]
          %v4283 = vld [vmem:[#allocation2 + $0x148] sm:$0xff]
          %v4284 = vld [vmem:[#allocation2 + $0x150] sm:$0xff]
          %v4285 = vld [vmem:[#allocation2 + $0x158] sm:$0xff]
          %v4286 = vld [vmem:[#allocation2 + $0x160] sm:$0xff]
          %v4287 = vld [vmem:[#allocation2 + $0x168] sm:$0xff]
          %v4288 = vld [vmem:[#allocation2 + $0x170] sm:$0xff]
          %v4289 = vld [vmem:[#allocation2 + $0x178] sm:$0xff]
          %v4290 = vld [vmem:[#allocation2 + $0x180] sm:$0xff]
          %v4291 = vld [vmem:[#allocation2 + $0x188] sm:$0xff]
          %v4292 = vld [vmem:[#allocation2 + $0x190] sm:$0xff]
          %v4293 = vld [vmem:[#allocation2 + $0x198] sm:$0xff]
          %v4294 = vld [vmem:[#allocation2 + $0x1a0] sm:$0xff]
          %v4295 = vld [vmem:[#allocation2 + $0x1a8] sm:$0xff]
          %v4296 = vld [vmem:[#allocation2 + $0x1b0] sm:$0xff]
          %v4297 = vld [vmem:[#allocation2 + $0x1b8] sm:$0xff]
          %v4298 = vld [vmem:[#allocation2 + $0x1c0] sm:$0xff]
          %v4299 = vld [vmem:[#allocation2 + $0x1c8] sm:$0xff]
          %v4300 = vld [vmem:[#allocation2 + $0x1d0] sm:$0xff]
          %v4301 = vld [vmem:[#allocation2 + $0x1d8] sm:$0xff]
          %v4302 = vld [vmem:[#allocation2 + $0x1e0] sm:$0xff]
          %v4303 = vld [vmem:[#allocation2 + $0x1e8] sm:$0xff]
          %v4304 = vld [vmem:[#allocation2 + $0x1f0] sm:$0xff]
          %v4305 = vld [vmem:[#allocation2 + $0x1f8] sm:$0xff]
          %v4306 = vld [vmem:[#allocation2 + $0x200] sm:$0xff]
          %v4307 = vld [vmem:[#allocation2 + $0x208] sm:$0xff]
          %v4308 = vld [vmem:[#allocation2 + $0x210] sm:$0xff]
          %v4309 = vld [vmem:[#allocation2 + $0x218] sm:$0xff]
          %v4310 = vld [vmem:[#allocation2 + $0x220] sm:$0xff]
          %v4311 = vld [vmem:[#allocation2 + $0x228] sm:$0xff]
          %v4312 = vld [vmem:[#allocation2 + $0x230] sm:$0xff]
          %v4313 = vld [vmem:[#allocation2 + $0x238] sm:$0xff]
          %v4314 = vld [vmem:[#allocation2 + $0x240] sm:$0xff]
          %v4315 = vld [vmem:[#allocation2 + $0x248] sm:$0xff]
          %v4316 = vld [vmem:[#allocation2 + $0x250] sm:$0xff]
          %v4317 = vld [vmem:[#allocation2 + $0x258] sm:$0xff]
          %v4318 = vld [vmem:[#allocation2 + $0x260] sm:$0xff]
          %v4319 = vld [vmem:[#allocation2 + $0x268] sm:$0xff]
          %v4320 = vld [vmem:[#allocation2 + $0x270] sm:$0xff]
          %v4321 = vld [vmem:[#allocation2 + $0x278] sm:$0xff]
          %v4322 = vld [vmem:[#allocation2 + $0x280] sm:$0xff]
          %v4323 = vld [vmem:[#allocation2 + $0x288] sm:$0xff]
          %v4324 = vld [vmem:[#allocation2 + $0x290] sm:$0xff]
          %v4325 = vld [vmem:[#allocation2 + $0x298] sm:$0xff]
          %v4326 = vld [vmem:[#allocation2 + $0x2a0] sm:$0xff]
          %v4327 = vld [vmem:[#allocation2 + $0x2a8] sm:$0xff]
          %v4328 = vld [vmem:[#allocation2 + $0x2b0] sm:$0xff]
          %v4329 = vld [vmem:[#allocation2 + $0x2b8] sm:$0xff]
          %v4330 = vld [vmem:[#allocation2 + $0x2c0] sm:$0xff]
          %v4331 = vld [vmem:[#allocation2 + $0x2c8] sm:$0xff]
          %v4332 = vld [vmem:[#allocation2 + $0x2d0] sm:$0xff]
          %v4333 = vld [vmem:[#allocation2 + $0x2d8] sm:$0xff]
          %v4334 = vld [vmem:[#allocation2 + $0x2e0] sm:$0xff]
          %v4335 = vld [vmem:[#allocation2 + $0x2e8] sm:$0xff]
          %v4336 = vld [vmem:[#allocation2 + $0x2f0] sm:$0xff]
          %v4337 = vld [vmem:[#allocation2 + $0x2f8] sm:$0xff]
          %v4338 = vld [vmem:[#allocation2 + $0x300] sm:$0xff]
          %v4339 = vld [vmem:[#allocation2 + $0x308] sm:$0xff]
          %v4340 = vld [vmem:[#allocation2 + $0x310] sm:$0xff]
          %v4341 = vld [vmem:[#allocation2 + $0x318] sm:$0xff]
          %v4342 = vld [vmem:[#allocation2 + $0x320] sm:$0xff]
          %v4343 = vld [vmem:[#allocation2 + $0x328] sm:$0xff]
          %v4344 = vld [vmem:[#allocation2 + $0x330] sm:$0xff]
          %v4345 = vld [vmem:[#allocation2 + $0x338] sm:$0xff]
          %v4346 = vld [vmem:[#allocation2 + $0x340] sm:$0xff]
          %v4347 = vld [vmem:[#allocation2 + $0x348] sm:$0xff]
          %v4348 = vld [vmem:[#allocation2 + $0x350] sm:$0xff]
          %v4349 = vld [vmem:[#allocation2 + $0x358] sm:$0xff]
          %v4350 = vld [vmem:[#allocation2 + $0x360] sm:$0xff]
          %v4351 = vld [vmem:[#allocation2 + $0x368] sm:$0xff]
          %v4352 = vld [vmem:[#allocation2 + $0x370] sm:$0xff]
          %v4353 = vld [vmem:[#allocation2 + $0x378] sm:$0xff]
          %v4354 = vld [vmem:[#allocation2 + $0x380] sm:$0xff]
          %v4355 = vld [vmem:[#allocation2 + $0x388] sm:$0xff]
          %v4356 = vld [vmem:[#allocation2 + $0x390] sm:$0xff]
          %v4357 = vld [vmem:[#allocation2 + $0x398] sm:$0xff]
          %v4358 = vld [vmem:[#allocation2 + $0x3a0] sm:$0xff]
          %v4359 = vld [vmem:[#allocation2 + $0x3a8] sm:$0xff]
          %v4360 = vld [vmem:[#allocation2 + $0x3b0] sm:$0xff]
          %v4361 = vld [vmem:[#allocation2 + $0x3b8] sm:$0xff]
          %v4362 = vld [vmem:[#allocation2 + $0x3c0] sm:$0xff]
          %v4363 = vld [vmem:[#allocation2 + $0x3c8] sm:$0xff]
          %v4364 = vld [vmem:[#allocation2 + $0x3d0] sm:$0xff]
          %v4365 = vld [vmem:[#allocation2 + $0x3d8] sm:$0xff]
          %v4366 = vld [vmem:[#allocation2 + $0x3e0] sm:$0xff]
          %v4367 = vld [vmem:[#allocation2 + $0x3e8] sm:$0xff]
          %v4368 = vld [vmem:[#allocation2 + $0x3f0] sm:$0xff]
          %v4369 = vld [vmem:[#allocation2 + $0x3f8] sm:$0xff]
          %v4370 = vld [vmem:[%s819] sm:$0xff]
          %v4371 = vld [vmem:[%s819 + $0x8] sm:$0xff]
          %v4372 = vld [vmem:[%s819 + $0x10] sm:$0xff]
          %v4373 = vld [vmem:[%s819 + $0x18] sm:$0xff]
          %v4374 = vld [vmem:[%s819 + $0x20] sm:$0xff]
          %v4375 = vld [vmem:[%s819 + $0x28] sm:$0xff]
          %v4376 = vld [vmem:[%s819 + $0x30] sm:$0xff]
          %v4377 = vld [vmem:[%s819 + $0x38] sm:$0xff]
          %v4378 = vld [vmem:[%s819 + $0x40] sm:$0xff]
          %v4379 = vld [vmem:[%s819 + $0x48] sm:$0xff]
          %v4380 = vld [vmem:[%s819 + $0x50] sm:$0xff]
          %v4381 = vld [vmem:[%s819 + $0x58] sm:$0xff]
          %v4382 = vld [vmem:[%s819 + $0x60] sm:$0xff]
          %v4383 = vld [vmem:[%s819 + $0x68] sm:$0xff]
          %v4384 = vld [vmem:[%s819 + $0x70] sm:$0xff]
          %v4385 = vld [vmem:[%s819 + $0x78] sm:$0xff]
          %v4386 = vld [vmem:[%s819 + $0x80] sm:$0xff]
          %v4387 = vld [vmem:[%s819 + $0x88] sm:$0xff]
          %v4388 = vld [vmem:[%s819 + $0x90] sm:$0xff]
          %v4389 = vld [vmem:[%s819 + $0x98] sm:$0xff]
          %v4390 = vld [vmem:[%s819 + $0xa0] sm:$0xff]
          %v4391 = vld [vmem:[%s819 + $0xa8] sm:$0xff]
          %v4392 = vld [vmem:[%s819 + $0xb0] sm:$0xff]
          %v4393 = vld [vmem:[%s819 + $0xb8] sm:$0xff]
          %v4394 = vld [vmem:[%s819 + $0xc0] sm:$0xff]
          %v4395 = vld [vmem:[%s819 + $0xc8] sm:$0xff]
          %v4396 = vld [vmem:[%s819 + $0xd0] sm:$0xff]
          %v4397 = vld [vmem:[%s819 + $0xd8] sm:$0xff]
          %v4398 = vld [vmem:[%s819 + $0xe0] sm:$0xff]
          %v4399 = vld [vmem:[%s819 + $0xe8] sm:$0xff]
          %v4400 = vld [vmem:[%s819 + $0xf0] sm:$0xff]
          %v4401 = vld [vmem:[%s819 + $0xf8] sm:$0xff]
          %v4402 = vld [vmem:[%s819 + $0x100] sm:$0xff]
          %v4403 = vld [vmem:[%s819 + $0x108] sm:$0xff]
          %v4404 = vld [vmem:[%s819 + $0x110] sm:$0xff]
          %v4405 = vld [vmem:[%s819 + $0x118] sm:$0xff]
          %v4406 = vld [vmem:[%s819 + $0x120] sm:$0xff]
          %v4407 = vld [vmem:[%s819 + $0x128] sm:$0xff]
          %v4408 = vld [vmem:[%s819 + $0x130] sm:$0xff]
          %v4409 = vld [vmem:[%s819 + $0x138] sm:$0xff]
          %v4410 = vld [vmem:[%s819 + $0x140] sm:$0xff]
          %v4411 = vld [vmem:[%s819 + $0x148] sm:$0xff]
          %v4412 = vld [vmem:[%s819 + $0x150] sm:$0xff]
          %v4413 = vld [vmem:[%s819 + $0x158] sm:$0xff]
          %v4414 = vld [vmem:[%s819 + $0x160] sm:$0xff]
          %v4415 = vld [vmem:[%s819 + $0x168] sm:$0xff]
          %v4416 = vld [vmem:[%s819 + $0x170] sm:$0xff]
          %v4417 = vld [vmem:[%s819 + $0x178] sm:$0xff]
          %v4418 = vld [vmem:[%s819 + $0x180] sm:$0xff]
          %v4419 = vld [vmem:[%s819 + $0x188] sm:$0xff]
          %v4420 = vld [vmem:[%s819 + $0x190] sm:$0xff]
          %v4421 = vld [vmem:[%s819 + $0x198] sm:$0xff]
          %v4422 = vld [vmem:[%s819 + $0x1a0] sm:$0xff]
          %v4423 = vld [vmem:[%s819 + $0x1a8] sm:$0xff]
          %v4424 = vld [vmem:[%s819 + $0x1b0] sm:$0xff]
          %v4425 = vld [vmem:[%s819 + $0x1b8] sm:$0xff]
          %v4426 = vld [vmem:[%s819 + $0x1c0] sm:$0xff]
          %v4427 = vld [vmem:[%s819 + $0x1c8] sm:$0xff]
          %v4428 = vld [vmem:[%s819 + $0x1d0] sm:$0xff]
          %v4429 = vld [vmem:[%s819 + $0x1d8] sm:$0xff]
          %v4430 = vld [vmem:[%s819 + $0x1e0] sm:$0xff]
          %v4431 = vld [vmem:[%s819 + $0x1e8] sm:$0xff]
          %v4432 = vld [vmem:[%s819 + $0x1f0] sm:$0xff]
          %v4433 = vld [vmem:[%s819 + $0x1f8] sm:$0xff]
          %v4434 = vld [vmem:[%s819 + $0x200] sm:$0xff]
          %v4435 = vld [vmem:[%s819 + $0x208] sm:$0xff]
          %v4436 = vld [vmem:[%s819 + $0x210] sm:$0xff]
          %v4437 = vld [vmem:[%s819 + $0x218] sm:$0xff]
          %v4438 = vld [vmem:[%s819 + $0x220] sm:$0xff]
          %v4439 = vld [vmem:[%s819 + $0x228] sm:$0xff]
          %v4440 = vld [vmem:[%s819 + $0x230] sm:$0xff]
          %v4441 = vld [vmem:[%s819 + $0x238] sm:$0xff]
          %v4442 = vld [vmem:[%s819 + $0x240] sm:$0xff]
          %v4443 = vld [vmem:[%s819 + $0x248] sm:$0xff]
          %v4444 = vld [vmem:[%s819 + $0x250] sm:$0xff]
          %v4445 = vld [vmem:[%s819 + $0x258] sm:$0xff]
          %v4446 = vld [vmem:[%s819 + $0x260] sm:$0xff]
          %v4447 = vld [vmem:[%s819 + $0x268] sm:$0xff]
          %v4448 = vld [vmem:[%s819 + $0x270] sm:$0xff]
          %v4449 = vld [vmem:[%s819 + $0x278] sm:$0xff]
          %v4450 = vld [vmem:[%s819 + $0x280] sm:$0xff]
          %v4451 = vld [vmem:[%s819 + $0x288] sm:$0xff]
          %v4452 = vld [vmem:[%s819 + $0x290] sm:$0xff]
          %v4453 = vld [vmem:[%s819 + $0x298] sm:$0xff]
          %v4454 = vld [vmem:[%s819 + $0x2a0] sm:$0xff]
          %v4455 = vld [vmem:[%s819 + $0x2a8] sm:$0xff]
          %v4456 = vld [vmem:[%s819 + $0x2b0] sm:$0xff]
          %v4457 = vld [vmem:[%s819 + $0x2b8] sm:$0xff]
          %v4458 = vld [vmem:[%s819 + $0x2c0] sm:$0xff]
          %v4459 = vld [vmem:[%s819 + $0x2c8] sm:$0xff]
          %v4460 = vld [vmem:[%s819 + $0x2d0] sm:$0xff]
          %v4461 = vld [vmem:[%s819 + $0x2d8] sm:$0xff]
          %v4462 = vld [vmem:[%s819 + $0x2e0] sm:$0xff]
          %v4463 = vld [vmem:[%s819 + $0x2e8] sm:$0xff]
          %v4464 = vld [vmem:[%s819 + $0x2f0] sm:$0xff]
          %v4465 = vld [vmem:[%s819 + $0x2f8] sm:$0xff]
          %v4466 = vld [vmem:[%s819 + $0x300] sm:$0xff]
          %v4467 = vld [vmem:[%s819 + $0x308] sm:$0xff]
          %v4468 = vld [vmem:[%s819 + $0x310] sm:$0xff]
          %v4469 = vld [vmem:[%s819 + $0x318] sm:$0xff]
          %v4470 = vld [vmem:[%s819 + $0x320] sm:$0xff]
          %v4471 = vld [vmem:[%s819 + $0x328] sm:$0xff]
          %v4472 = vld [vmem:[%s819 + $0x330] sm:$0xff]
          %v4473 = vld [vmem:[%s819 + $0x338] sm:$0xff]
          %v4474 = vld [vmem:[%s819 + $0x340] sm:$0xff]
          %v4475 = vld [vmem:[%s819 + $0x348] sm:$0xff]
          %v4476 = vld [vmem:[%s819 + $0x350] sm:$0xff]
          %v4477 = vld [vmem:[%s819 + $0x358] sm:$0xff]
          %v4478 = vld [vmem:[%s819 + $0x360] sm:$0xff]
          %v4479 = vld [vmem:[%s819 + $0x368] sm:$0xff]
          %v4480 = vld [vmem:[%s819 + $0x370] sm:$0xff]
          %v4481 = vld [vmem:[%s819 + $0x378] sm:$0xff]
          %v4482 = vld [vmem:[%s819 + $0x380] sm:$0xff]
          %v4483 = vld [vmem:[%s819 + $0x388] sm:$0xff]
          %v4484 = vld [vmem:[%s819 + $0x390] sm:$0xff]
          %v4485 = vld [vmem:[%s819 + $0x398] sm:$0xff]
          %v4486 = vld [vmem:[%s819 + $0x3a0] sm:$0xff]
          %v4487 = vld [vmem:[%s819 + $0x3a8] sm:$0xff]
          %v4488 = vld [vmem:[%s819 + $0x3b0] sm:$0xff]
          %v4489 = vld [vmem:[%s819 + $0x3b8] sm:$0xff]
          %v4490 = vld [vmem:[%s819 + $0x3c0] sm:$0xff]
          %v4491 = vld [vmem:[%s819 + $0x3c8] sm:$0xff]
          %v4492 = vld [vmem:[%s819 + $0x3d0] sm:$0xff]
          %v4493 = vld [vmem:[%s819 + $0x3d8] sm:$0xff]
          %v4494 = vld [vmem:[%s819 + $0x3e0] sm:$0xff]
          %v4495 = vld [vmem:[%s819 + $0x3e8] sm:$0xff]
          %v4496 = vld [vmem:[%s819 + $0x3f0] sm:$0xff]
          %v4497 = vld [vmem:[%s819 + $0x3f8] sm:$0xff]
          %v4498 = vadd.f32 %v4370, %v4242
          %v4499 = vadd.f32 %v4371, %v4243
          %v4500 = vadd.f32 %v4372, %v4244
          %v4501 = vadd.f32 %v4373, %v4245
          %v4502 = vadd.f32 %v4374, %v4246
          %v4503 = vadd.f32 %v4375, %v4247
          %v4504 = vadd.f32 %v4376, %v4248
          %v4505 = vadd.f32 %v4377, %v4249
          %v4506 = vadd.f32 %v4378, %v4250
          %v4507 = vadd.f32 %v4379, %v4251
          %v4508 = vadd.f32 %v4380, %v4252
          %v4509 = vadd.f32 %v4381, %v4253
          %v4510 = vadd.f32 %v4382, %v4254
          %v4511 = vadd.f32 %v4383, %v4255
          %v4512 = vadd.f32 %v4384, %v4256
          %v4513 = vadd.f32 %v4385, %v4257
          %v4514 = vadd.f32 %v4386, %v4258
          %v4515 = vadd.f32 %v4387, %v4259
          %v4516 = vadd.f32 %v4388, %v4260
          %v4517 = vadd.f32 %v4389, %v4261
          %v4518 = vadd.f32 %v4390, %v4262
          %v4519 = vadd.f32 %v4391, %v4263
          %v4520 = vadd.f32 %v4392, %v4264
          %v4521 = vadd.f32 %v4393, %v4265
          %v4522 = vadd.f32 %v4394, %v4266
          %v4523 = vadd.f32 %v4395, %v4267
          %v4524 = vadd.f32 %v4396, %v4268
          %v4525 = vadd.f32 %v4397, %v4269
          %v4526 = vadd.f32 %v4398, %v4270
          %v4527 = vadd.f32 %v4399, %v4271
          %v4528 = vadd.f32 %v4400, %v4272
          %v4529 = vadd.f32 %v4401, %v4273
          %v4530 = vadd.f32 %v4402, %v4274
          %v4531 = vadd.f32 %v4403, %v4275
          %v4532 = vadd.f32 %v4404, %v4276
          %v4533 = vadd.f32 %v4405, %v4277
          %v4534 = vadd.f32 %v4406, %v4278
          %v4535 = vadd.f32 %v4407, %v4279
          %v4536 = vadd.f32 %v4408, %v4280
          %v4537 = vadd.f32 %v4409, %v4281
          %v4538 = vadd.f32 %v4410, %v4282
          %v4539 = vadd.f32 %v4411, %v4283
          %v4540 = vadd.f32 %v4412, %v4284
          %v4541 = vadd.f32 %v4413, %v4285
          %v4542 = vadd.f32 %v4414, %v4286
          %v4543 = vadd.f32 %v4415, %v4287
          %v4544 = vadd.f32 %v4416, %v4288
          %v4545 = vadd.f32 %v4417, %v4289
          %v4546 = vadd.f32 %v4418, %v4290
          %v4547 = vadd.f32 %v4419, %v4291
          %v4548 = vadd.f32 %v4420, %v4292
          %v4549 = vadd.f32 %v4421, %v4293
          %v4550 = vadd.f32 %v4422, %v4294
          %v4551 = vadd.f32 %v4423, %v4295
          %v4552 = vadd.f32 %v4424, %v4296
          %v4553 = vadd.f32 %v4425, %v4297
          %v4554 = vadd.f32 %v4426, %v4298
          %v4555 = vadd.f32 %v4427, %v4299
          %v4556 = vadd.f32 %v4428, %v4300
          %v4557 = vadd.f32 %v4429, %v4301
          %v4558 = vadd.f32 %v4430, %v4302
          %v4559 = vadd.f32 %v4431, %v4303
          %v4560 = vadd.f32 %v4432, %v4304
          %v4561 = vadd.f32 %v4433, %v4305
          %v4562 = vadd.f32 %v4434, %v4306
          %v4563 = vadd.f32 %v4435, %v4307
          %v4564 = vadd.f32 %v4436, %v4308
          %v4565 = vadd.f32 %v4437, %v4309
          %v4566 = vadd.f32 %v4438, %v4310
          %v4567 = vadd.f32 %v4439, %v4311
          %v4568 = vadd.f32 %v4440, %v4312
          %v4569 = vadd.f32 %v4441, %v4313
          %v4570 = vadd.f32 %v4442, %v4314
          %v4571 = vadd.f32 %v4443, %v4315
          %v4572 = vadd.f32 %v4444, %v4316
          %v4573 = vadd.f32 %v4445, %v4317
          %v4574 = vadd.f32 %v4446, %v4318
          %v4575 = vadd.f32 %v4447, %v4319
          %v4576 = vadd.f32 %v4448, %v4320
          %v4577 = vadd.f32 %v4449, %v4321
          %v4578 = vadd.f32 %v4450, %v4322
          %v4579 = vadd.f32 %v4451, %v4323
          %v4580 = vadd.f32 %v4452, %v4324
          %v4581 = vadd.f32 %v4453, %v4325
          %v4582 = vadd.f32 %v4454, %v4326
          %v4583 = vadd.f32 %v4455, %v4327
          %v4584 = vadd.f32 %v4456, %v4328
          %v4585 = vadd.f32 %v4457, %v4329
          %v4586 = vadd.f32 %v4458, %v4330
          %v4587 = vadd.f32 %v4459, %v4331
          %v4588 = vadd.f32 %v4460, %v4332
          %v4589 = vadd.f32 %v4461, %v4333
          %v4590 = vadd.f32 %v4462, %v4334
          %v4591 = vadd.f32 %v4463, %v4335
          %v4592 = vadd.f32 %v4464, %v4336
          %v4593 = vadd.f32 %v4465, %v4337
          %v4594 = vadd.f32 %v4466, %v4338
          %v4595 = vadd.f32 %v4467, %v4339
          %v4596 = vadd.f32 %v4468, %v4340
          %v4597 = vadd.f32 %v4469, %v4341
          %v4598 = vadd.f32 %v4470, %v4342
          %v4599 = vadd.f32 %v4471, %v4343
          %v4600 = vadd.f32 %v4472, %v4344
          %v4601 = vadd.f32 %v4473, %v4345
          %v4602 = vadd.f32 %v4474, %v4346
          %v4603 = vadd.f32 %v4475, %v4347
          %v4604 = vadd.f32 %v4476, %v4348
          %v4605 = vadd.f32 %v4477, %v4349
          %v4606 = vadd.f32 %v4478, %v4350
          %v4607 = vadd.f32 %v4479, %v4351
          %v4608 = vadd.f32 %v4480, %v4352
          %v4609 = vadd.f32 %v4481, %v4353
          %v4610 = vadd.f32 %v4482, %v4354
          %v4611 = vadd.f32 %v4483, %v4355
          %v4612 = vadd.f32 %v4484, %v4356
          %v4613 = vadd.f32 %v4485, %v4357
          %v4614 = vadd.f32 %v4486, %v4358
          %v4615 = vadd.f32 %v4487, %v4359
          %v4616 = vadd.f32 %v4488, %v4360
          %v4617 = vadd.f32 %v4489, %v4361
          %v4618 = vadd.f32 %v4490, %v4362
          %v4619 = vadd.f32 %v4491, %v4363
          %v4620 = vadd.f32 %v4492, %v4364
          %v4621 = vadd.f32 %v4493, %v4365
          %v4622 = vadd.f32 %v4494, %v4366
          %v4623 = vadd.f32 %v4495, %v4367
          %v4624 = vadd.f32 %v4496, %v4368
          %v4625 = vadd.f32 %v4497, %v4369
          %4626 = vst.msk [vmem:[%s829] sm:$0xff] %vm4109, %v4498
          %4627 = vst.msk [vmem:[%s829 + $0x8] sm:$0xff] %vm4109, %v4499
          %4628 = vst.msk [vmem:[%s829 + $0x10] sm:$0xff] %vm4109, %v4500
          %4629 = vst.msk [vmem:[%s829 + $0x18] sm:$0xff] %vm4109, %v4501
          %4630 = vst.msk [vmem:[%s829 + $0x20] sm:$0xff] %vm4109, %v4502
          %4631 = vst.msk [vmem:[%s829 + $0x28] sm:$0xff] %vm4109, %v4503
          %4632 = vst.msk [vmem:[%s829 + $0x30] sm:$0xff] %vm4109, %v4504
          %4633 = vst.msk [vmem:[%s829 + $0x38] sm:$0xff] %vm4109, %v4505
          %4634 = vst.msk [vmem:[%s829 + $0x40] sm:$0xff] %vm4109, %v4506
          %4635 = vst.msk [vmem:[%s829 + $0x48] sm:$0xff] %vm4109, %v4507
          %4636 = vst.msk [vmem:[%s829 + $0x50] sm:$0xff] %vm4109, %v4508
          %4637 = vst.msk [vmem:[%s829 + $0x58] sm:$0xff] %vm4109, %v4509
          %4638 = vst.msk [vmem:[%s829 + $0x60] sm:$0xff] %vm4109, %v4510
          %4639 = vst.msk [vmem:[%s829 + $0x68] sm:$0xff] %vm4109, %v4511
          %4640 = vst.msk [vmem:[%s829 + $0x70] sm:$0xff] %vm4109, %v4512
          %4641 = vst.msk [vmem:[%s829 + $0x78] sm:$0xff] %vm4109, %v4513
          %4642 = vst.msk [vmem:[%s829 + $0x80] sm:$0xff] %vm4109, %v4514
          %4643 = vst.msk [vmem:[%s829 + $0x88] sm:$0xff] %vm4109, %v4515
          %4644 = vst.msk [vmem:[%s829 + $0x90] sm:$0xff] %vm4109, %v4516
          %4645 = vst.msk [vmem:[%s829 + $0x98] sm:$0xff] %vm4109, %v4517
          %4646 = vst.msk [vmem:[%s829 + $0xa0] sm:$0xff] %vm4109, %v4518
          %4647 = vst.msk [vmem:[%s829 + $0xa8] sm:$0xff] %vm4109, %v4519
          %4648 = vst.msk [vmem:[%s829 + $0xb0] sm:$0xff] %vm4109, %v4520
          %4649 = vst.msk [vmem:[%s829 + $0xb8] sm:$0xff] %vm4109, %v4521
          %4650 = vst.msk [vmem:[%s829 + $0xc0] sm:$0xff] %vm4109, %v4522
          %4651 = vst.msk [vmem:[%s829 + $0xc8] sm:$0xff] %vm4109, %v4523
          %4652 = vst.msk [vmem:[%s829 + $0xd0] sm:$0xff] %vm4109, %v4524
          %4653 = vst.msk [vmem:[%s829 + $0xd8] sm:$0xff] %vm4109, %v4525
          %4654 = vst.msk [vmem:[%s829 + $0xe0] sm:$0xff] %vm4109, %v4526
          %4655 = vst.msk [vmem:[%s829 + $0xe8] sm:$0xff] %vm4109, %v4527
          %4656 = vst.msk [vmem:[%s829 + $0xf0] sm:$0xff] %vm4109, %v4528
          %4657 = vst.msk [vmem:[%s829 + $0xf8] sm:$0xff] %vm4109, %v4529
          %4658 = vst.msk [vmem:[%s829 + $0x100] sm:$0xff] %vm4109, %v4530
          %4659 = vst.msk [vmem:[%s829 + $0x108] sm:$0xff] %vm4109, %v4531
          %4660 = vst.msk [vmem:[%s829 + $0x110] sm:$0xff] %vm4109, %v4532
          %4661 = vst.msk [vmem:[%s829 + $0x118] sm:$0xff] %vm4109, %v4533
          %4662 = vst.msk [vmem:[%s829 + $0x120] sm:$0xff] %vm4109, %v4534
          %4663 = vst.msk [vmem:[%s829 + $0x128] sm:$0xff] %vm4109, %v4535
          %4664 = vst.msk [vmem:[%s829 + $0x130] sm:$0xff] %vm4109, %v4536
          %4665 = vst.msk [vmem:[%s829 + $0x138] sm:$0xff] %vm4109, %v4537
          %4666 = vst.msk [vmem:[%s829 + $0x140] sm:$0xff] %vm4109, %v4538
          %4667 = vst.msk [vmem:[%s829 + $0x148] sm:$0xff] %vm4109, %v4539
          %4668 = vst.msk [vmem:[%s829 + $0x150] sm:$0xff] %vm4109, %v4540
          %4669 = vst.msk [vmem:[%s829 + $0x158] sm:$0xff] %vm4109, %v4541
          %4670 = vst.msk [vmem:[%s829 + $0x160] sm:$0xff] %vm4109, %v4542
          %4671 = vst.msk [vmem:[%s829 + $0x168] sm:$0xff] %vm4109, %v4543
          %4672 = vst.msk [vmem:[%s829 + $0x170] sm:$0xff] %vm4109, %v4544
          %4673 = vst.msk [vmem:[%s829 + $0x178] sm:$0xff] %vm4109, %v4545
          %4674 = vst.msk [vmem:[%s829 + $0x180] sm:$0xff] %vm4109, %v4546
          %4675 = vst.msk [vmem:[%s829 + $0x188] sm:$0xff] %vm4109, %v4547
          %4676 = vst.msk [vmem:[%s829 + $0x190] sm:$0xff] %vm4109, %v4548
          %4677 = vst.msk [vmem:[%s829 + $0x198] sm:$0xff] %vm4109, %v4549
          %4678 = vst.msk [vmem:[%s829 + $0x1a0] sm:$0xff] %vm4109, %v4550
          %4679 = vst.msk [vmem:[%s829 + $0x1a8] sm:$0xff] %vm4109, %v4551
          %4680 = vst.msk [vmem:[%s829 + $0x1b0] sm:$0xff] %vm4109, %v4552
          %4681 = vst.msk [vmem:[%s829 + $0x1b8] sm:$0xff] %vm4109, %v4553
          %4682 = vst.msk [vmem:[%s829 + $0x1c0] sm:$0xff] %vm4109, %v4554
          %4683 = vst.msk [vmem:[%s829 + $0x1c8] sm:$0xff] %vm4109, %v4555
          %4684 = vst.msk [vmem:[%s829 + $0x1d0] sm:$0xff] %vm4109, %v4556
          %4685 = vst.msk [vmem:[%s829 + $0x1d8] sm:$0xff] %vm4109, %v4557
          %4686 = vst.msk [vmem:[%s829 + $0x1e0] sm:$0xff] %vm4109, %v4558
          %4687 = vst.msk [vmem:[%s829 + $0x1e8] sm:$0xff] %vm4109, %v4559
          %4688 = vst.msk [vmem:[%s829 + $0x1f0] sm:$0xff] %vm4109, %v4560
          %4689 = vst.msk [vmem:[%s829 + $0x1f8] sm:$0xff] %vm4109, %v4561
          %4690 = vst.msk [vmem:[%s829 + $0x200] sm:$0xff] %vm4109, %v4562
          %4691 = vst.msk [vmem:[%s829 + $0x208] sm:$0xff] %vm4109, %v4563
          %4692 = vst.msk [vmem:[%s829 + $0x210] sm:$0xff] %vm4109, %v4564
          %4693 = vst.msk [vmem:[%s829 + $0x218] sm:$0xff] %vm4109, %v4565
          %4694 = vst.msk [vmem:[%s829 + $0x220] sm:$0xff] %vm4109, %v4566
          %4695 = vst.msk [vmem:[%s829 + $0x228] sm:$0xff] %vm4109, %v4567
          %4696 = vst.msk [vmem:[%s829 + $0x230] sm:$0xff] %vm4109, %v4568
          %4697 = vst.msk [vmem:[%s829 + $0x238] sm:$0xff] %vm4109, %v4569
          %4698 = vst.msk [vmem:[%s829 + $0x240] sm:$0xff] %vm4109, %v4570
          %4699 = vst.msk [vmem:[%s829 + $0x248] sm:$0xff] %vm4109, %v4571
          %4700 = vst.msk [vmem:[%s829 + $0x250] sm:$0xff] %vm4109, %v4572
          %4701 = vst.msk [vmem:[%s829 + $0x258] sm:$0xff] %vm4109, %v4573
          %4702 = vst.msk [vmem:[%s829 + $0x260] sm:$0xff] %vm4109, %v4574
          %4703 = vst.msk [vmem:[%s829 + $0x268] sm:$0xff] %vm4109, %v4575
          %4704 = vst.msk [vmem:[%s829 + $0x270] sm:$0xff] %vm4109, %v4576
          %4705 = vst.msk [vmem:[%s829 + $0x278] sm:$0xff] %vm4109, %v4577
          %4706 = vst.msk [vmem:[%s829 + $0x280] sm:$0xff] %vm4109, %v4578
          %4707 = vst.msk [vmem:[%s829 + $0x288] sm:$0xff] %vm4109, %v4579
          %4708 = vst.msk [vmem:[%s829 + $0x290] sm:$0xff] %vm4109, %v4580
          %4709 = vst.msk [vmem:[%s829 + $0x298] sm:$0xff] %vm4109, %v4581
          %4710 = vst.msk [vmem:[%s829 + $0x2a0] sm:$0xff] %vm4109, %v4582
          %4711 = vst.msk [vmem:[%s829 + $0x2a8] sm:$0xff] %vm4109, %v4583
          %4712 = vst.msk [vmem:[%s829 + $0x2b0] sm:$0xff] %vm4109, %v4584
          %4713 = vst.msk [vmem:[%s829 + $0x2b8] sm:$0xff] %vm4109, %v4585
          %4714 = vst.msk [vmem:[%s829 + $0x2c0] sm:$0xff] %vm4109, %v4586
          %4715 = vst.msk [vmem:[%s829 + $0x2c8] sm:$0xff] %vm4109, %v4587
          %4716 = vst.msk [vmem:[%s829 + $0x2d0] sm:$0xff] %vm4109, %v4588
          %4717 = vst.msk [vmem:[%s829 + $0x2d8] sm:$0xff] %vm4109, %v4589
          %4718 = vst.msk [vmem:[%s829 + $0x2e0] sm:$0xff] %vm4109, %v4590
          %4719 = vst.msk [vmem:[%s829 + $0x2e8] sm:$0xff] %vm4109, %v4591
          %4720 = vst.msk [vmem:[%s829 + $0x2f0] sm:$0xff] %vm4109, %v4592
          %4721 = vst.msk [vmem:[%s829 + $0x2f8] sm:$0xff] %vm4109, %v4593
          %4722 = vst.msk [vmem:[%s829 + $0x300] sm:$0xff] %vm4109, %v4594
          %4723 = vst.msk [vmem:[%s829 + $0x308] sm:$0xff] %vm4109, %v4595
          %4724 = vst.msk [vmem:[%s829 + $0x310] sm:$0xff] %vm4109, %v4596
          %4725 = vst.msk [vmem:[%s829 + $0x318] sm:$0xff] %vm4109, %v4597
          %4726 = vst.msk [vmem:[%s829 + $0x320] sm:$0xff] %vm4109, %v4598
          %4727 = vst.msk [vmem:[%s829 + $0x328] sm:$0xff] %vm4109, %v4599
          %4728 = vst.msk [vmem:[%s829 + $0x330] sm:$0xff] %vm4109, %v4600
          %4729 = vst.msk [vmem:[%s829 + $0x338] sm:$0xff] %vm4109, %v4601
          %4730 = vst.msk [vmem:[%s829 + $0x340] sm:$0xff] %vm4109, %v4602
          %4731 = vst.msk [vmem:[%s829 + $0x348] sm:$0xff] %vm4109, %v4603
          %4732 = vst.msk [vmem:[%s829 + $0x350] sm:$0xff] %vm4109, %v4604
          %4733 = vst.msk [vmem:[%s829 + $0x358] sm:$0xff] %vm4109, %v4605
          %4734 = vst.msk [vmem:[%s829 + $0x360] sm:$0xff] %vm4109, %v4606
          %4735 = vst.msk [vmem:[%s829 + $0x368] sm:$0xff] %vm4109, %v4607
          %4736 = vst.msk [vmem:[%s829 + $0x370] sm:$0xff] %vm4109, %v4608
          %4737 = vst.msk [vmem:[%s829 + $0x378] sm:$0xff] %vm4109, %v4609
          %4738 = vst.msk [vmem:[%s829 + $0x380] sm:$0xff] %vm4109, %v4610
          %4739 = vst.msk [vmem:[%s829 + $0x388] sm:$0xff] %vm4109, %v4611
          %4740 = vst.msk [vmem:[%s829 + $0x390] sm:$0xff] %vm4109, %v4612
          %4741 = vst.msk [vmem:[%s829 + $0x398] sm:$0xff] %vm4109, %v4613
          %4742 = vst.msk [vmem:[%s829 + $0x3a0] sm:$0xff] %vm4109, %v4614
          %4743 = vst.msk [vmem:[%s829 + $0x3a8] sm:$0xff] %vm4109, %v4615
          %4744 = vst.msk [vmem:[%s829 + $0x3b0] sm:$0xff] %vm4109, %v4616
          %4745 = vst.msk [vmem:[%s829 + $0x3b8] sm:$0xff] %vm4109, %v4617
          %4746 = vst.msk [vmem:[%s829 + $0x3c0] sm:$0xff] %vm4109, %v4618
          %4747 = vst.msk [vmem:[%s829 + $0x3c8] sm:$0xff] %vm4109, %v4619
          %4748 = vst.msk [vmem:[%s829 + $0x3d0] sm:$0xff] %vm4109, %v4620
          %4749 = vst.msk [vmem:[%s829 + $0x3d8] sm:$0xff] %vm4109, %v4621
          %4750 = vst.msk [vmem:[%s829 + $0x3e0] sm:$0xff] %vm4109, %v4622
          %4751 = vst.msk [vmem:[%s829 + $0x3e8] sm:$0xff] %vm4109, %v4623
          %4752 = vst.msk [vmem:[%s829 + $0x3f0] sm:$0xff] %vm4109, %v4624
          %4753 = vst.msk [vmem:[%s829 + $0x3f8] sm:$0xff] %vm4109, %v4625
          %v4754 = vpack.c.bf16 %v4243, %v4242
          %v4755 = vpack.c.bf16 %v4245, %v4244
          %v4756 = vpack.c.bf16 %v4247, %v4246
          %v4757 = vpack.c.bf16 %v4249, %v4248
          %v4758 = vpack.c.bf16 %v4251, %v4250
          %v4759 = vpack.c.bf16 %v4253, %v4252
          %v4760 = vpack.c.bf16 %v4255, %v4254
          %v4761 = vpack.c.bf16 %v4257, %v4256
          %v4762 = vpack.c.bf16 %v4259, %v4258
          %v4763 = vpack.c.bf16 %v4261, %v4260
          %v4764 = vpack.c.bf16 %v4263, %v4262
          %v4765 = vpack.c.bf16 %v4265, %v4264
          %v4766 = vpack.c.bf16 %v4267, %v4266
          %v4767 = vpack.c.bf16 %v4269, %v4268
          %v4768 = vpack.c.bf16 %v4271, %v4270
          %v4769 = vpack.c.bf16 %v4273, %v4272
          %v4770 = vpack.c.bf16 %v4275, %v4274
          %v4771 = vpack.c.bf16 %v4277, %v4276
          %v4772 = vpack.c.bf16 %v4279, %v4278
          %v4773 = vpack.c.bf16 %v4281, %v4280
          %v4774 = vpack.c.bf16 %v4283, %v4282
          %v4775 = vpack.c.bf16 %v4285, %v4284
          %v4776 = vpack.c.bf16 %v4287, %v4286
          %v4777 = vpack.c.bf16 %v4289, %v4288
          %v4778 = vpack.c.bf16 %v4291, %v4290
          %v4779 = vpack.c.bf16 %v4293, %v4292
          %v4780 = vpack.c.bf16 %v4295, %v4294
          %v4781 = vpack.c.bf16 %v4297, %v4296
          %v4782 = vpack.c.bf16 %v4299, %v4298
          %v4783 = vpack.c.bf16 %v4301, %v4300
          %v4784 = vpack.c.bf16 %v4303, %v4302
          %v4785 = vpack.c.bf16 %v4305, %v4304
          %v4786 = vpack.c.bf16 %v4307, %v4306
          %v4787 = vpack.c.bf16 %v4309, %v4308
          %v4788 = vpack.c.bf16 %v4311, %v4310
          %v4789 = vpack.c.bf16 %v4313, %v4312
          %v4790 = vpack.c.bf16 %v4315, %v4314
          %v4791 = vpack.c.bf16 %v4317, %v4316
          %v4792 = vpack.c.bf16 %v4319, %v4318
          %v4793 = vpack.c.bf16 %v4321, %v4320
          %v4794 = vpack.c.bf16 %v4323, %v4322
          %v4795 = vpack.c.bf16 %v4325, %v4324
          %v4796 = vpack.c.bf16 %v4327, %v4326
          %v4797 = vpack.c.bf16 %v4329, %v4328
          %v4798 = vpack.c.bf16 %v4331, %v4330
          %v4799 = vpack.c.bf16 %v4333, %v4332
          %v4800 = vpack.c.bf16 %v4335, %v4334
          %v4801 = vpack.c.bf16 %v4337, %v4336
          %v4802 = vpack.c.bf16 %v4339, %v4338
          %v4803 = vpack.c.bf16 %v4341, %v4340
          %v4804 = vpack.c.bf16 %v4343, %v4342
          %v4805 = vpack.c.bf16 %v4345, %v4344
          %v4806 = vpack.c.bf16 %v4347, %v4346
          %v4807 = vpack.c.bf16 %v4349, %v4348
          %v4808 = vpack.c.bf16 %v4351, %v4350
          %v4809 = vpack.c.bf16 %v4353, %v4352
          %v4810 = vpack.c.bf16 %v4355, %v4354
          %v4811 = vpack.c.bf16 %v4357, %v4356
          %v4812 = vpack.c.bf16 %v4359, %v4358
          %v4813 = vpack.c.bf16 %v4361, %v4360
          %v4814 = vpack.c.bf16 %v4363, %v4362
          %v4815 = vpack.c.bf16 %v4365, %v4364
          %v4816 = vpack.c.bf16 %v4367, %v4366
          %v4817 = vpack.c.bf16 %v4369, %v4368
          %v4882 = vunpack.c.l.b16 %v4754
          %v4883 = vunpack.c.h.b16 %v4754
          %v4884 = vunpack.c.l.b16 %v4755
          %v4885 = vunpack.c.h.b16 %v4755
          %v4886 = vunpack.c.l.b16 %v4756
          %v4887 = vunpack.c.h.b16 %v4756
          %v4888 = vunpack.c.l.b16 %v4757
          %v4889 = vunpack.c.h.b16 %v4757
          %v4890 = vunpack.c.l.b16 %v4758
          %v4891 = vunpack.c.h.b16 %v4758
          %v4892 = vunpack.c.l.b16 %v4759
          %v4893 = vunpack.c.h.b16 %v4759
          %v4894 = vunpack.c.l.b16 %v4760
          %v4895 = vunpack.c.h.b16 %v4760
          %v4896 = vunpack.c.l.b16 %v4761
          %v4897 = vunpack.c.h.b16 %v4761
          %v4898 = vunpack.c.l.b16 %v4762
          %v4899 = vunpack.c.h.b16 %v4762
          %v4900 = vunpack.c.l.b16 %v4763
          %v4901 = vunpack.c.h.b16 %v4763
          %v4902 = vunpack.c.l.b16 %v4764
          %v4903 = vunpack.c.h.b16 %v4764
          %v4904 = vunpack.c.l.b16 %v4765
          %v4905 = vunpack.c.h.b16 %v4765
          %v4906 = vunpack.c.l.b16 %v4766
          %v4907 = vunpack.c.h.b16 %v4766
          %v4908 = vunpack.c.l.b16 %v4767
          %v4909 = vunpack.c.h.b16 %v4767
          %v4910 = vunpack.c.l.b16 %v4768
          %v4911 = vunpack.c.h.b16 %v4768
          %v4912 = vunpack.c.l.b16 %v4769
          %v4913 = vunpack.c.h.b16 %v4769
          %v4914 = vunpack.c.l.b16 %v4770
          %v4915 = vunpack.c.h.b16 %v4770
          %v4916 = vunpack.c.l.b16 %v4771
          %v4917 = vunpack.c.h.b16 %v4771
          %v4918 = vunpack.c.l.b16 %v4772
          %v4919 = vunpack.c.h.b16 %v4772
          %v4920 = vunpack.c.l.b16 %v4773
          %v4921 = vunpack.c.h.b16 %v4773
          %v4922 = vunpack.c.l.b16 %v4774
          %v4923 = vunpack.c.h.b16 %v4774
          %v4924 = vunpack.c.l.b16 %v4775
          %v4925 = vunpack.c.h.b16 %v4775
          %v4926 = vunpack.c.l.b16 %v4776
          %v4927 = vunpack.c.h.b16 %v4776
          %v4928 = vunpack.c.l.b16 %v4777
          %v4929 = vunpack.c.h.b16 %v4777
          %v4930 = vunpack.c.l.b16 %v4778
          %v4931 = vunpack.c.h.b16 %v4778
          %v4932 = vunpack.c.l.b16 %v4779
          %v4933 = vunpack.c.h.b16 %v4779
          %v4934 = vunpack.c.l.b16 %v4780
          %v4935 = vunpack.c.h.b16 %v4780
          %v4936 = vunpack.c.l.b16 %v4781
          %v4937 = vunpack.c.h.b16 %v4781
          %v4938 = vunpack.c.l.b16 %v4782
          %v4939 = vunpack.c.h.b16 %v4782
          %v4940 = vunpack.c.l.b16 %v4783
          %v4941 = vunpack.c.h.b16 %v4783
          %v4942 = vunpack.c.l.b16 %v4784
          %v4943 = vunpack.c.h.b16 %v4784
          %v4944 = vunpack.c.l.b16 %v4785
          %v4945 = vunpack.c.h.b16 %v4785
          %v4946 = vunpack.c.l.b16 %v4786
          %v4947 = vunpack.c.h.b16 %v4786
          %v4948 = vunpack.c.l.b16 %v4787
          %v4949 = vunpack.c.h.b16 %v4787
          %v4950 = vunpack.c.l.b16 %v4788
          %v4951 = vunpack.c.h.b16 %v4788
          %v4952 = vunpack.c.l.b16 %v4789
          %v4953 = vunpack.c.h.b16 %v4789
          %v4954 = vunpack.c.l.b16 %v4790
          %v4955 = vunpack.c.h.b16 %v4790
          %v4956 = vunpack.c.l.b16 %v4791
          %v4957 = vunpack.c.h.b16 %v4791
          %v4958 = vunpack.c.l.b16 %v4792
          %v4959 = vunpack.c.h.b16 %v4792
          %v4960 = vunpack.c.l.b16 %v4793
          %v4961 = vunpack.c.h.b16 %v4793
          %v4962 = vunpack.c.l.b16 %v4794
          %v4963 = vunpack.c.h.b16 %v4794
          %v4964 = vunpack.c.l.b16 %v4795
          %v4965 = vunpack.c.h.b16 %v4795
          %v4966 = vunpack.c.l.b16 %v4796
          %v4967 = vunpack.c.h.b16 %v4796
          %v4968 = vunpack.c.l.b16 %v4797
          %v4969 = vunpack.c.h.b16 %v4797
          %v4970 = vunpack.c.l.b16 %v4798
          %v4971 = vunpack.c.h.b16 %v4798
          %v4972 = vunpack.c.l.b16 %v4799
          %v4973 = vunpack.c.h.b16 %v4799
          %v4974 = vunpack.c.l.b16 %v4800
          %v4975 = vunpack.c.h.b16 %v4800
          %v4976 = vunpack.c.l.b16 %v4801
          %v4977 = vunpack.c.h.b16 %v4801
          %v4978 = vunpack.c.l.b16 %v4802
          %v4979 = vunpack.c.h.b16 %v4802
          %v4980 = vunpack.c.l.b16 %v4803
          %v4981 = vunpack.c.h.b16 %v4803
          %v4982 = vunpack.c.l.b16 %v4804
          %v4983 = vunpack.c.h.b16 %v4804
          %v4984 = vunpack.c.l.b16 %v4805
          %v4985 = vunpack.c.h.b16 %v4805
          %v4986 = vunpack.c.l.b16 %v4806
          %v4987 = vunpack.c.h.b16 %v4806
          %v4988 = vunpack.c.l.b16 %v4807
          %v4989 = vunpack.c.h.b16 %v4807
          %v4990 = vunpack.c.l.b16 %v4808
          %v4991 = vunpack.c.h.b16 %v4808
          %v4992 = vunpack.c.l.b16 %v4809
          %v4993 = vunpack.c.h.b16 %v4809
          %v4994 = vunpack.c.l.b16 %v4810
          %v4995 = vunpack.c.h.b16 %v4810
          %v4996 = vunpack.c.l.b16 %v4811
          %v4997 = vunpack.c.h.b16 %v4811
          %v4998 = vunpack.c.l.b16 %v4812
          %v4999 = vunpack.c.h.b16 %v4812
          %v5000 = vunpack.c.l.b16 %v4813
          %v5001 = vunpack.c.h.b16 %v4813
          %v5002 = vunpack.c.l.b16 %v4814
          %v5003 = vunpack.c.h.b16 %v4814
          %v5004 = vunpack.c.l.b16 %v4815
          %v5005 = vunpack.c.h.b16 %v4815
          %v5006 = vunpack.c.l.b16 %v4816
          %v5007 = vunpack.c.h.b16 %v4816
          %v5008 = vunpack.c.l.b16 %v4817
          %v5009 = vunpack.c.h.b16 %v4817
          %v5010 = vpack.c.b16 %v4882, %v4882
          %v5011 = vpack.c.b16 %v4883, %v4883
          %v5012 = vpack.c.b16 %v4884, %v4884
          %v5013 = vpack.c.b16 %v4885, %v4885
          %v5014 = vpack.c.b16 %v4886, %v4886
          %v5015 = vpack.c.b16 %v4887, %v4887
          %v5016 = vpack.c.b16 %v4888, %v4888
          %v5017 = vpack.c.b16 %v4889, %v4889
          %v5018 = vpack.c.b16 %v4890, %v4890
          %v5019 = vpack.c.b16 %v4891, %v4891
          %v5020 = vpack.c.b16 %v4892, %v4892
          %v5021 = vpack.c.b16 %v4893, %v4893
          %v5022 = vpack.c.b16 %v4894, %v4894
          %v5023 = vpack.c.b16 %v4895, %v4895
          %v5024 = vpack.c.b16 %v4896, %v4896
          %v5025 = vpack.c.b16 %v4897, %v4897
          %v5026 = vpack.c.b16 %v4898, %v4898
          %v5027 = vpack.c.b16 %v4899, %v4899
          %v5028 = vpack.c.b16 %v4900, %v4900
          %v5029 = vpack.c.b16 %v4901, %v4901
          %v5030 = vpack.c.b16 %v4902, %v4902
          %v5031 = vpack.c.b16 %v4903, %v4903
          %v5032 = vpack.c.b16 %v4904, %v4904
          %v5033 = vpack.c.b16 %v4905, %v4905
          %v5034 = vpack.c.b16 %v4906, %v4906
          %v5035 = vpack.c.b16 %v4907, %v4907
          %v5036 = vpack.c.b16 %v4908, %v4908
          %v5037 = vpack.c.b16 %v4909, %v4909
          %v5038 = vpack.c.b16 %v4910, %v4910
          %v5039 = vpack.c.b16 %v4911, %v4911
          %v5040 = vpack.c.b16 %v4912, %v4912
          %v5041 = vpack.c.b16 %v4913, %v4913
          %v5042 = vpack.c.b16 %v4914, %v4914
          %v5043 = vpack.c.b16 %v4915, %v4915
          %v5044 = vpack.c.b16 %v4916, %v4916
          %v5045 = vpack.c.b16 %v4917, %v4917
          %v5046 = vpack.c.b16 %v4918, %v4918
          %v5047 = vpack.c.b16 %v4919, %v4919
          %v5048 = vpack.c.b16 %v4920, %v4920
          %v5049 = vpack.c.b16 %v4921, %v4921
          %v5050 = vpack.c.b16 %v4922, %v4922
          %v5051 = vpack.c.b16 %v4923, %v4923
          %v5052 = vpack.c.b16 %v4924, %v4924
          %v5053 = vpack.c.b16 %v4925, %v4925
          %v5054 = vpack.c.b16 %v4926, %v4926
          %v5055 = vpack.c.b16 %v4927, %v4927
          %v5056 = vpack.c.b16 %v4928, %v4928
          %v5057 = vpack.c.b16 %v4929, %v4929
          %v5058 = vpack.c.b16 %v4930, %v4930
          %v5059 = vpack.c.b16 %v4931, %v4931
          %v5060 = vpack.c.b16 %v4932, %v4932
          %v5061 = vpack.c.b16 %v4933, %v4933
          %v5062 = vpack.c.b16 %v4934, %v4934
          %v5063 = vpack.c.b16 %v4935, %v4935
          %v5064 = vpack.c.b16 %v4936, %v4936
          %v5065 = vpack.c.b16 %v4937, %v4937
          %v5066 = vpack.c.b16 %v4938, %v4938
          %v5067 = vpack.c.b16 %v4939, %v4939
          %v5068 = vpack.c.b16 %v4940, %v4940
          %v5069 = vpack.c.b16 %v4941, %v4941
          %v5070 = vpack.c.b16 %v4942, %v4942
          %v5071 = vpack.c.b16 %v4943, %v4943
          %v5072 = vpack.c.b16 %v4944, %v4944
          %v5073 = vpack.c.b16 %v4945, %v4945
          %v5074 = vpack.c.b16 %v4946, %v4946
          %v5075 = vpack.c.b16 %v4947, %v4947
          %v5076 = vpack.c.b16 %v4948, %v4948
          %v5077 = vpack.c.b16 %v4949, %v4949
          %v5078 = vpack.c.b16 %v4950, %v4950
          %v5079 = vpack.c.b16 %v4951, %v4951
          %v5080 = vpack.c.b16 %v4952, %v4952
          %v5081 = vpack.c.b16 %v4953, %v4953
          %v5082 = vpack.c.b16 %v4954, %v4954
          %v5083 = vpack.c.b16 %v4955, %v4955
          %v5084 = vpack.c.b16 %v4956, %v4956
          %v5085 = vpack.c.b16 %v4957, %v4957
          %v5086 = vpack.c.b16 %v4958, %v4958
          %v5087 = vpack.c.b16 %v4959, %v4959
          %v5088 = vpack.c.b16 %v4960, %v4960
          %v5089 = vpack.c.b16 %v4961, %v4961
          %v5090 = vpack.c.b16 %v4962, %v4962
          %v5091 = vpack.c.b16 %v4963, %v4963
          %v5092 = vpack.c.b16 %v4964, %v4964
          %v5093 = vpack.c.b16 %v4965, %v4965
          %v5094 = vpack.c.b16 %v4966, %v4966
          %v5095 = vpack.c.b16 %v4967, %v4967
          %v5096 = vpack.c.b16 %v4968, %v4968
          %v5097 = vpack.c.b16 %v4969, %v4969
          %v5098 = vpack.c.b16 %v4970, %v4970
          %v5099 = vpack.c.b16 %v4971, %v4971
          %v5100 = vpack.c.b16 %v4972, %v4972
          %v5101 = vpack.c.b16 %v4973, %v4973
          %v5102 = vpack.c.b16 %v4974, %v4974
          %v5103 = vpack.c.b16 %v4975, %v4975
          %v5104 = vpack.c.b16 %v4976, %v4976
          %v5105 = vpack.c.b16 %v4977, %v4977
          %v5106 = vpack.c.b16 %v4978, %v4978
          %v5107 = vpack.c.b16 %v4979, %v4979
          %v5108 = vpack.c.b16 %v4980, %v4980
          %v5109 = vpack.c.b16 %v4981, %v4981
          %v5110 = vpack.c.b16 %v4982, %v4982
          %v5111 = vpack.c.b16 %v4983, %v4983
          %v5112 = vpack.c.b16 %v4984, %v4984
          %v5113 = vpack.c.b16 %v4985, %v4985
          %v5114 = vpack.c.b16 %v4986, %v4986
          %v5115 = vpack.c.b16 %v4987, %v4987
          %v5116 = vpack.c.b16 %v4988, %v4988
          %v5117 = vpack.c.b16 %v4989, %v4989
          %v5118 = vpack.c.b16 %v4990, %v4990
          %v5119 = vpack.c.b16 %v4991, %v4991
          %v5120 = vpack.c.b16 %v4992, %v4992
          %v5121 = vpack.c.b16 %v4993, %v4993
          %v5122 = vpack.c.b16 %v4994, %v4994
          %v5123 = vpack.c.b16 %v4995, %v4995
          %v5124 = vpack.c.b16 %v4996, %v4996
          %v5125 = vpack.c.b16 %v4997, %v4997
          %v5126 = vpack.c.b16 %v4998, %v4998
          %v5127 = vpack.c.b16 %v4999, %v4999
          %v5128 = vpack.c.b16 %v5000, %v5000
          %v5129 = vpack.c.b16 %v5001, %v5001
          %v5130 = vpack.c.b16 %v5002, %v5002
          %v5131 = vpack.c.b16 %v5003, %v5003
          %v5132 = vpack.c.b16 %v5004, %v5004
          %v5133 = vpack.c.b16 %v5005, %v5005
          %v5134 = vpack.c.b16 %v5006, %v5006
          %v5135 = vpack.c.b16 %v5007, %v5007
          %v5136 = vpack.c.b16 %v5008, %v5008
          %v5137 = vpack.c.b16 %v5009, %v5009
          %vm5266 = vcmask 257024
          %5267 = vst.msk [vmem:[#allocation4] sm:$0xf] %vm5266, %v5010
          %5268 = vst.msk [vmem:[#allocation4 + $0x4] sm:$0xf] %vm5266, %v5011
          %5269 = vst.msk [vmem:[#allocation4 + $0x8] sm:$0xf] %vm5266, %v5012
          %5270 = vst.msk [vmem:[#allocation4 + $0xc] sm:$0xf] %vm5266, %v5013
          %5271 = vst.msk [vmem:[#allocation4 + $0x10] sm:$0xf] %vm5266, %v5014
          %5272 = vst.msk [vmem:[#allocation4 + $0x14] sm:$0xf] %vm5266, %v5015
          %5273 = vst.msk [vmem:[#allocation4 + $0x18] sm:$0xf] %vm5266, %v5016
          %5274 = vst.msk [vmem:[#allocation4 + $0x1c] sm:$0xf] %vm5266, %v5017
          %5275 = vst.msk [vmem:[#allocation4 + $0x20] sm:$0xf] %vm5266, %v5018
          %5276 = vst.msk [vmem:[#allocation4 + $0x24] sm:$0xf] %vm5266, %v5019
          %5277 = vst.msk [vmem:[#allocation4 + $0x28] sm:$0xf] %vm5266, %v5020
          %5278 = vst.msk [vmem:[#allocation4 + $0x2c] sm:$0xf] %vm5266, %v5021
          %5279 = vst.msk [vmem:[#allocation4 + $0x30] sm:$0xf] %vm5266, %v5022
          %5280 = vst.msk [vmem:[#allocation4 + $0x34] sm:$0xf] %vm5266, %v5023
          %5281 = vst.msk [vmem:[#allocation4 + $0x38] sm:$0xf] %vm5266, %v5024
          %5282 = vst.msk [vmem:[#allocation4 + $0x3c] sm:$0xf] %vm5266, %v5025
          %5283 = vst.msk [vmem:[#allocation4 + $0x40] sm:$0xf] %vm5266, %v5026
          %5284 = vst.msk [vmem:[#allocation4 + $0x44] sm:$0xf] %vm5266, %v5027
          %5285 = vst.msk [vmem:[#allocation4 + $0x48] sm:$0xf] %vm5266, %v5028
          %5286 = vst.msk [vmem:[#allocation4 + $0x4c] sm:$0xf] %vm5266, %v5029
          %5287 = vst.msk [vmem:[#allocation4 + $0x50] sm:$0xf] %vm5266, %v5030
          %5288 = vst.msk [vmem:[#allocation4 + $0x54] sm:$0xf] %vm5266, %v5031
          %5289 = vst.msk [vmem:[#allocation4 + $0x58] sm:$0xf] %vm5266, %v5032
          %5290 = vst.msk [vmem:[#allocation4 + $0x5c] sm:$0xf] %vm5266, %v5033
          %5291 = vst.msk [vmem:[#allocation4 + $0x60] sm:$0xf] %vm5266, %v5034
          %5292 = vst.msk [vmem:[#allocation4 + $0x64] sm:$0xf] %vm5266, %v5035
          %5293 = vst.msk [vmem:[#allocation4 + $0x68] sm:$0xf] %vm5266, %v5036
          %5294 = vst.msk [vmem:[#allocation4 + $0x6c] sm:$0xf] %vm5266, %v5037
          %5295 = vst.msk [vmem:[#allocation4 + $0x70] sm:$0xf] %vm5266, %v5038
          %5296 = vst.msk [vmem:[#allocation4 + $0x74] sm:$0xf] %vm5266, %v5039
          %5297 = vst.msk [vmem:[#allocation4 + $0x78] sm:$0xf] %vm5266, %v5040
          %5298 = vst.msk [vmem:[#allocation4 + $0x7c] sm:$0xf] %vm5266, %v5041
          %5299 = vst.msk [vmem:[#allocation4 + $0x80] sm:$0xf] %vm5266, %v5042
          %5300 = vst.msk [vmem:[#allocation4 + $0x84] sm:$0xf] %vm5266, %v5043
          %5301 = vst.msk [vmem:[#allocation4 + $0x88] sm:$0xf] %vm5266, %v5044
          %5302 = vst.msk [vmem:[#allocation4 + $0x8c] sm:$0xf] %vm5266, %v5045
          %5303 = vst.msk [vmem:[#allocation4 + $0x90] sm:$0xf] %vm5266, %v5046
          %5304 = vst.msk [vmem:[#allocation4 + $0x94] sm:$0xf] %vm5266, %v5047
          %5305 = vst.msk [vmem:[#allocation4 + $0x98] sm:$0xf] %vm5266, %v5048
          %5306 = vst.msk [vmem:[#allocation4 + $0x9c] sm:$0xf] %vm5266, %v5049
          %5307 = vst.msk [vmem:[#allocation4 + $0xa0] sm:$0xf] %vm5266, %v5050
          %5308 = vst.msk [vmem:[#allocation4 + $0xa4] sm:$0xf] %vm5266, %v5051
          %5309 = vst.msk [vmem:[#allocation4 + $0xa8] sm:$0xf] %vm5266, %v5052
          %5310 = vst.msk [vmem:[#allocation4 + $0xac] sm:$0xf] %vm5266, %v5053
          %5311 = vst.msk [vmem:[#allocation4 + $0xb0] sm:$0xf] %vm5266, %v5054
          %5312 = vst.msk [vmem:[#allocation4 + $0xb4] sm:$0xf] %vm5266, %v5055
          %5313 = vst.msk [vmem:[#allocation4 + $0xb8] sm:$0xf] %vm5266, %v5056
          %5314 = vst.msk [vmem:[#allocation4 + $0xbc] sm:$0xf] %vm5266, %v5057
          %5315 = vst.msk [vmem:[#allocation4 + $0xc0] sm:$0xf] %vm5266, %v5058
          %5316 = vst.msk [vmem:[#allocation4 + $0xc4] sm:$0xf] %vm5266, %v5059
          %5317 = vst.msk [vmem:[#allocation4 + $0xc8] sm:$0xf] %vm5266, %v5060
          %5318 = vst.msk [vmem:[#allocation4 + $0xcc] sm:$0xf] %vm5266, %v5061
          %5319 = vst.msk [vmem:[#allocation4 + $0xd0] sm:$0xf] %vm5266, %v5062
          %5320 = vst.msk [vmem:[#allocation4 + $0xd4] sm:$0xf] %vm5266, %v5063
          %5321 = vst.msk [vmem:[#allocation4 + $0xd8] sm:$0xf] %vm5266, %v5064
          %5322 = vst.msk [vmem:[#allocation4 + $0xdc] sm:$0xf] %vm5266, %v5065
          %5323 = vst.msk [vmem:[#allocation4 + $0xe0] sm:$0xf] %vm5266, %v5066
          %5324 = vst.msk [vmem:[#allocation4 + $0xe4] sm:$0xf] %vm5266, %v5067
          %5325 = vst.msk [vmem:[#allocation4 + $0xe8] sm:$0xf] %vm5266, %v5068
          %5326 = vst.msk [vmem:[#allocation4 + $0xec] sm:$0xf] %vm5266, %v5069
          %5327 = vst.msk [vmem:[#allocation4 + $0xf0] sm:$0xf] %vm5266, %v5070
          %5328 = vst.msk [vmem:[#allocation4 + $0xf4] sm:$0xf] %vm5266, %v5071
          %5329 = vst.msk [vmem:[#allocation4 + $0xf8] sm:$0xf] %vm5266, %v5072
          %5330 = vst.msk [vmem:[#allocation4 + $0xfc] sm:$0xf] %vm5266, %v5073
          %5331 = vst.msk [vmem:[#allocation4 + $0x100] sm:$0xf] %vm5266, %v5074
          %5332 = vst.msk [vmem:[#allocation4 + $0x104] sm:$0xf] %vm5266, %v5075
          %5333 = vst.msk [vmem:[#allocation4 + $0x108] sm:$0xf] %vm5266, %v5076
          %5334 = vst.msk [vmem:[#allocation4 + $0x10c] sm:$0xf] %vm5266, %v5077
          %5335 = vst.msk [vmem:[#allocation4 + $0x110] sm:$0xf] %vm5266, %v5078
          %5336 = vst.msk [vmem:[#allocation4 + $0x114] sm:$0xf] %vm5266, %v5079
          %5337 = vst.msk [vmem:[#allocation4 + $0x118] sm:$0xf] %vm5266, %v5080
          %5338 = vst.msk [vmem:[#allocation4 + $0x11c] sm:$0xf] %vm5266, %v5081
          %5339 = vst.msk [vmem:[#allocation4 + $0x120] sm:$0xf] %vm5266, %v5082
          %5340 = vst.msk [vmem:[#allocation4 + $0x124] sm:$0xf] %vm5266, %v5083
          %5341 = vst.msk [vmem:[#allocation4 + $0x128] sm:$0xf] %vm5266, %v5084
          %5342 = vst.msk [vmem:[#allocation4 + $0x12c] sm:$0xf] %vm5266, %v5085
          %5343 = vst.msk [vmem:[#allocation4 + $0x130] sm:$0xf] %vm5266, %v5086
          %5344 = vst.msk [vmem:[#allocation4 + $0x134] sm:$0xf] %vm5266, %v5087
          %5345 = vst.msk [vmem:[#allocation4 + $0x138] sm:$0xf] %vm5266, %v5088
          %5346 = vst.msk [vmem:[#allocation4 + $0x13c] sm:$0xf] %vm5266, %v5089
          %5347 = vst.msk [vmem:[#allocation4 + $0x140] sm:$0xf] %vm5266, %v5090
          %5348 = vst.msk [vmem:[#allocation4 + $0x144] sm:$0xf] %vm5266, %v5091
          %5349 = vst.msk [vmem:[#allocation4 + $0x148] sm:$0xf] %vm5266, %v5092
          %5350 = vst.msk [vmem:[#allocation4 + $0x14c] sm:$0xf] %vm5266, %v5093
          %5351 = vst.msk [vmem:[#allocation4 + $0x150] sm:$0xf] %vm5266, %v5094
          %5352 = vst.msk [vmem:[#allocation4 + $0x154] sm:$0xf] %vm5266, %v5095
          %5353 = vst.msk [vmem:[#allocation4 + $0x158] sm:$0xf] %vm5266, %v5096
          %5354 = vst.msk [vmem:[#allocation4 + $0x15c] sm:$0xf] %vm5266, %v5097
          %5355 = vst.msk [vmem:[#allocation4 + $0x160] sm:$0xf] %vm5266, %v5098
          %5356 = vst.msk [vmem:[#allocation4 + $0x164] sm:$0xf] %vm5266, %v5099
          %5357 = vst.msk [vmem:[#allocation4 + $0x168] sm:$0xf] %vm5266, %v5100
          %5358 = vst.msk [vmem:[#allocation4 + $0x16c] sm:$0xf] %vm5266, %v5101
          %5359 = vst.msk [vmem:[#allocation4 + $0x170] sm:$0xf] %vm5266, %v5102
          %5360 = vst.msk [vmem:[#allocation4 + $0x174] sm:$0xf] %vm5266, %v5103
          %5361 = vst.msk [vmem:[#allocation4 + $0x178] sm:$0xf] %vm5266, %v5104
          %5362 = vst.msk [vmem:[#allocation4 + $0x17c] sm:$0xf] %vm5266, %v5105
          %5363 = vst.msk [vmem:[#allocation4 + $0x180] sm:$0xf] %vm5266, %v5106
          %5364 = vst.msk [vmem:[#allocation4 + $0x184] sm:$0xf] %vm5266, %v5107
          %5365 = vst.msk [vmem:[#allocation4 + $0x188] sm:$0xf] %vm5266, %v5108
          %5366 = vst.msk [vmem:[#allocation4 + $0x18c] sm:$0xf] %vm5266, %v5109
          %5367 = vst.msk [vmem:[#allocation4 + $0x190] sm:$0xf] %vm5266, %v5110
          %5368 = vst.msk [vmem:[#allocation4 + $0x194] sm:$0xf] %vm5266, %v5111
          %5369 = vst.msk [vmem:[#allocation4 + $0x198] sm:$0xf] %vm5266, %v5112
          %5370 = vst.msk [vmem:[#allocation4 + $0x19c] sm:$0xf] %vm5266, %v5113
          %5371 = vst.msk [vmem:[#allocation4 + $0x1a0] sm:$0xf] %vm5266, %v5114
          %5372 = vst.msk [vmem:[#allocation4 + $0x1a4] sm:$0xf] %vm5266, %v5115
          %5373 = vst.msk [vmem:[#allocation4 + $0x1a8] sm:$0xf] %vm5266, %v5116
          %5374 = vst.msk [vmem:[#allocation4 + $0x1ac] sm:$0xf] %vm5266, %v5117
          %5375 = vst.msk [vmem:[#allocation4 + $0x1b0] sm:$0xf] %vm5266, %v5118
          %5376 = vst.msk [vmem:[#allocation4 + $0x1b4] sm:$0xf] %vm5266, %v5119
          %5377 = vst.msk [vmem:[#allocation4 + $0x1b8] sm:$0xf] %vm5266, %v5120
          %5378 = vst.msk [vmem:[#allocation4 + $0x1bc] sm:$0xf] %vm5266, %v5121
          %5379 = vst.msk [vmem:[#allocation4 + $0x1c0] sm:$0xf] %vm5266, %v5122
          %5380 = vst.msk [vmem:[#allocation4 + $0x1c4] sm:$0xf] %vm5266, %v5123
          %5381 = vst.msk [vmem:[#allocation4 + $0x1c8] sm:$0xf] %vm5266, %v5124
          %5382 = vst.msk [vmem:[#allocation4 + $0x1cc] sm:$0xf] %vm5266, %v5125
          %5383 = vst.msk [vmem:[#allocation4 + $0x1d0] sm:$0xf] %vm5266, %v5126
          %5384 = vst.msk [vmem:[#allocation4 + $0x1d4] sm:$0xf] %vm5266, %v5127
          %5385 = vst.msk [vmem:[#allocation4 + $0x1d8] sm:$0xf] %vm5266, %v5128
          %5386 = vst.msk [vmem:[#allocation4 + $0x1dc] sm:$0xf] %vm5266, %v5129
          %5387 = vst.msk [vmem:[#allocation4 + $0x1e0] sm:$0xf] %vm5266, %v5130
          %5388 = vst.msk [vmem:[#allocation4 + $0x1e4] sm:$0xf] %vm5266, %v5131
          %5389 = vst.msk [vmem:[#allocation4 + $0x1e8] sm:$0xf] %vm5266, %v5132
          %5390 = vst.msk [vmem:[#allocation4 + $0x1ec] sm:$0xf] %vm5266, %v5133
          %5391 = vst.msk [vmem:[#allocation4 + $0x1f0] sm:$0xf] %vm5266, %v5134
          %5392 = vst.msk [vmem:[#allocation4 + $0x1f4] sm:$0xf] %vm5266, %v5135
          %5393 = vst.msk [vmem:[#allocation4 + $0x1f8] sm:$0xf] %vm5266, %v5136
          %5394 = vst.msk [vmem:[#allocation4 + $0x1fc] sm:$0xf] %vm5266, %v5137
        $region63: #{gcn_propagate.3} parent=50 // pred_fallthru
          _
        %s5395 = smul.u32 128, %s23
        %p5396 = scmp.lt.s32.totalorder %s22, 0
        %s5397 = scalar_select %p5396, %s22, 0
        %p5398 = scmp.lt.s32.totalorder %s5395, 127
        %s5399 = scalar_select %p5398, %s5395, 127
        %s5400 = smul.addr %s5397, 128
        %s5401 = sadd.s32 %s5399, %s5400
        %s5402 = smul.addr %s5401, 8
        %s5403 = scalar_lea.vmem %s3, %s5402
        // Predicated region
        $region64: #{gcn_propagate.3} parent=50 // pred_check
          %p5404 = pneg %p140
        $region65: #{gcn_propagate.3} parent=50 // pred_check_branch
          %5406 = sbr.rel (%p5404) target = $region67
        $region66: #{gcn_propagate.3} parent=50 // pred_region
          %s5407 = smul.u32 128, %s23
        $region67: #{gcn_propagate.3} parent=50 // pred_fallthru
          _
        // Predicated region
        $region68: #{gcn_propagate.3} parent=50 // pred_check
          %p5408 = pneg %p168
        $region69: #{gcn_propagate.3} parent=50 // pred_check_branch
          %5410 = sbr.rel (%p5408) target = $region71
        $region70: #{gcn_propagate.3} parent=50 // pred_region
          %s5411 = smul.u32 128, %s23
          %s5413 = ssub.s32 8192, 8192
          %5414 = vsyncadd [#allocation5], %s5413
          %s5415 = smul.addr %s22, 128
          %s5416 = sadd.s32 %s5411, %s5415
          %s5417 = smul.addr %s5416, 64
          %s5418 = scalar_lea.hbm %s4, %s5417
          %s5419 = sshll.u32 [#allocation4], 4
          %s5420 = int_to_ptr.vmem [resolvable:$true] %s5419
          %5425 = dma.vmem_to_hbm [thread:$0]  %s5420, 8192, %s5418, [#allocation5], 64, 64, 4
        $region71: #{gcn_propagate.3} parent=50 // pred_fallthru
          _
        // Predicated region
        $region72: #{gcn_propagate.3} parent=50 // pred_check
          %p5426 = pneg %p140
        $region73: #{gcn_propagate.3} parent=50 // pred_check_branch
          %5428 = sbr.rel (%p5426) target = $region75
        $region74: #{gcn_propagate.3} parent=50 // pred_region
          %s5429 = smul.u32 128, %s23
          %p5430 = scmp.lt.s32.totalorder %s22, 0
          %s5431 = scalar_select %p5430, %s22, 0
          %p5432 = scmp.lt.s32.totalorder %s5429, 127
          %s5433 = scalar_select %p5432, %s5429, 127
          %s5434 = smul.addr %s5431, 128
          %s5435 = sadd.s32 %s5433, %s5434
          %s5436 = smul.addr %s5435, 8
          %s5437 = scalar_lea.vmem %s3, %s5436
        $region75: #{gcn_propagate.3} parent=50 // pred_fallthru
          _
        // Predicated region
        $region76: #{gcn_propagate.3} parent=50 // pred_check
          %p5438 = pneg %p168
        $region77: #{gcn_propagate.3} parent=50 // pred_check_branch
          %5440 = sbr.rel (%p5438) target = $region79
        $region78: #{gcn_propagate.3} parent=50 // pred_region
          %5441 = dma.done [#allocation5], 8192
        $region79: #{gcn_propagate.3} parent=50 // pred_fallthru
          _
      $region51: #{gcn_propagate.3} parent=5 // pred_fallthru
        _
      %p5442 = scmp.le.s32.totalorder 2, %s12
      // Predicated region
      $region80: #{gcn_propagate.3} parent=5 // pred_check
        %p5443 = pneg %p5442
      $region81: #{gcn_propagate.3} parent=5 // pred_check_branch
        %5445 = sbr.rel (%p5443) target = $region83
      $region82: #{gcn_propagate.3} parent=5 // pred_region
        %s5446 = ssub.s32 %s12, 2
      $region83: #{gcn_propagate.3} parent=5 // pred_fallthru
        _
    $region6: #{gcn_propagate.3} parent=1 // loop_footer
      %s16 = sadd.s32 1, %s12
    $region7: #{gcn_propagate.3} parent=1 // loop_footer_branch
      %11 = sbr.rel target = $region3
    $region8: #{gcn_propagate.3} parent=1 // loop_exit
      _
    %5447 = vsyncpa [#allocation5], 1
    %s5448 = scalar_lea.sflag [#allocation5], 1
    %5449 = vsyncpa %s5448, 1

</llo_original>
